<compile_context>
chip_gen: v6e
topology: v6e:2x2x1
jax: 0.10.0
libtpu: 0.0.40
codegen_flags: <defaults>
</compile_context>

<pallas_src>
import jax
import jax.numpy as jnp
from jax.experimental import pallas as pl
from jax.experimental.pallas import tpu as pltpu


# ----------------------------------------------------------------------------
# Pallas kernels
# ----------------------------------------------------------------------------
def _conv_pool_kernel(p_ref, w_ref, b_ref, o_ref):
    """Fused 3x3 conv (im2col matmul) + bias + ReLU + MaxPool2d(2).

    p_ref: (4, QP, K) bf16 im2col patches; parity block q holds the patches of
           conv-output pixels at pool-window offset (q // 2, q % 2).
    w_ref: (K, C) bf16,  b_ref: (1, C) f32,  o_ref: (QP, C) bf16.
    Uses maxpool(relu(x + b)) == relu(maxpool(x) + b), so bias/ReLU run once.
    """
    acc = jnp.dot(p_ref[0], w_ref[...], preferred_element_type=jnp.float32)
    for q in range(1, 4):
        acc = jnp.maximum(
            acc,
            jnp.dot(p_ref[q], w_ref[...], preferred_element_type=jnp.float32))
    o_ref[...] = jnp.maximum(acc + b_ref[...], 0.0).astype(o_ref.dtype)


def _head_kernel(f_ref, wfc_ref, bfc_ref, w1_ref, b1_ref, w2_ref, b2_ref,
                 o_ref):
    """Per-branch Linear(3136->128)+ReLU, concat, Linear(384->128)+ReLU,
    Linear(128->num_classes).  Dropout is inference-mode identity."""
    feats = []
    for s in range(3):
        y = jnp.dot(f_ref[s], wfc_ref[s], preferred_element_type=jnp.float32)
        feats.append(jnp.maximum(y + bfc_ref[s], 0.0))
    fused = jnp.concatenate(feats, axis=-1)                      # (N, 384) f32
    h = jnp.dot(fused.astype(jnp.bfloat16), w1_ref[...],
                preferred_element_type=jnp.float32) + b1_ref[...]
    h = jnp.maximum(h, 0.0)
    out = jnp.dot(h.astype(jnp.bfloat16), w2_ref[...],
                  preferred_element_type=jnp.float32) + b2_ref[...]
    o_ref[...] = out.astype(o_ref.dtype)


# ----------------------------------------------------------------------------
# Pallas wrappers
# ----------------------------------------------------------------------------
def _conv_relu_pool(patches, wmat, bias):
    """patches: (S, 4, QP, K) bf16; wmat: (S, K, C) bf16; bias: (S, 1, C) f32.

    Returns (S, QP, C) bf16: conv3x3(pad=1)+ReLU+MaxPool2d(2) output with rows
    ordered (n, ho, wo).  One grid step per stream (megacore-parallel).
    """
    s, _, qp, k = patches.shape
    c = wmat.shape[-1]
    cost = pl.CostEstimate(
        flops=2 * s * 4 * qp * k * c,
        transcendentals=0,
        bytes_accessed=2 * (patches.size + wmat.size + s * qp * c)
        + 4 * bias.size)
    return pl.pallas_call(
        _conv_pool_kernel,
        out_shape=jax.ShapeDtypeStruct((s, qp, c), jnp.bfloat16),
        grid=(s,),
        in_specs=[
            pl.BlockSpec((None, 4, qp, k), lambda i: (i, 0, 0, 0)),
            pl.BlockSpec((None, k, c), lambda i: (i, 0, 0)),
            pl.BlockSpec((None, 1, c), lambda i: (i, 0, 0)),
        ],
        out_specs=pl.BlockSpec((None, qp, c), lambda i: (i, 0, 0)),
        compiler_params=pltpu.CompilerParams(
            dimension_semantics=("parallel",)),
        cost_estimate=cost,
    )(patches, wmat, bias)


def _head(feats, wfc, bfc, wf1, bf1, wf2, bf2):
    """feats: (3, N, 3136) bf16; per-branch FC + fusion MLP in one kernel."""
    s, n, kf = feats.shape
    nc = wf2.shape[-1]
    cost = pl.CostEstimate(
        flops=2 * n * (s * kf * 128 + 3 * 128 * 128 + 128 * nc),
        transcendentals=0,
        bytes_accessed=2 * (feats.size + wfc.size + wf1.size + wf2.size)
        + 4 * (bfc.size + bf1.size + bf2.size + n * nc))
    vmem = pl.BlockSpec(memory_space=pltpu.MemorySpace.VMEM)
    return pl.pallas_call(
        _head_kernel,
        out_shape=jax.ShapeDtypeStruct((n, nc), jnp.float32),
        in_specs=[vmem] * 7,
        out_specs=vmem,
        cost_estimate=cost,
    )(feats, wfc, bfc, wf1, bf1, wf2, bf2)


# ----------------------------------------------------------------------------
# Layout helpers (XLA-side, tiny tensors)
# ----------------------------------------------------------------------------
def _pool_parity_patches(x, dtype=jnp.bfloat16):
    """3x3 im2col (padding=1) with rows grouped by 2x2 max-pool position.

    x: (S, N, H, W, C).  Returns (S, 4, N*(H//2)*(W//2), 9*C); parity block
    q = hp*2 + wp holds the patch of conv-output pixel (2*ho+hp, 2*wo+wp) at
    row (n*Ho + ho)*Wo + wo.  Patch columns ordered (ky, kx, cin) to match the
    conv weight matrix.
    """
    s, n, h, w, c = x.shape
    ho, wo = h // 2, w // 2
    xp = jnp.pad(x.astype(dtype), ((0, 0), (0, 0), (1, 1), (1, 1), (0, 0)))
    taps = [xp[:, :, dy:dy + 2 * ho, dx:dx + 2 * wo, :]
            for dy in range(3) for dx in range(3)]
    p = jnp.stack(taps, axis=4)                     # (S, N, 2Ho, 2Wo, 9, C)
    p = p.reshape(s, n, ho, 2, wo, 2, 9 * c)
    p = jnp.transpose(p, (0, 3, 5, 1, 2, 4, 6))     # (S, hp, wp, N, Ho, Wo, 9C)
    return p.reshape(s, 4, n * ho * wo, 9 * c)


def _conv_weight_matrix(w_pt):
    """PyTorch conv weight (Cout, Cin, 3, 3) -> (9*Cin, Cout) im2col matrix."""
    cout, cin = w_pt.shape[0], w_pt.shape[1]
    return jnp.transpose(w_pt, (2, 3, 1, 0)).reshape(9 * cin, cout)


def _adaptive_avg_pool_7(x):
    """nn.AdaptiveAvgPool2d((7,7)) on (S, N, H, W, C); PyTorch index formula."""
    s, n, h, w, c = x.shape
    if (h, w) == (7, 7):
        return x
    rows = []
    for i in range(7):
        h0, h1 = (i * h) // 7, -(-((i + 1) * h) // 7)
        cols = []
        for j in range(7):
            w0, w1 = (j * w) // 7, -(-((j + 1) * w) // 7)
            cols.append(jnp.mean(x[:, :, h0:h1, w0:w1, :], axis=(2, 3)))
        rows.append(jnp.stack(cols, axis=2))
    return jnp.stack(rows, axis=2)                  # (S, N, 7, 7, C)


# ----------------------------------------------------------------------------
# Model
# ----------------------------------------------------------------------------
def model_forward(params, spatial, temporal, pose):
    bf16 = jnp.bfloat16
    n = spatial.shape[0]
    h, w = spatial.shape[2], spatial.shape[3]

    # Stack the three streams on a leading "branch" axis; NCHW -> NHWC.
    x = jnp.stack([spatial, temporal, pose], axis=0)        # (3, N, 3, H, W)
    x = jnp.transpose(x, (0, 1, 3, 4, 2))                   # (3, N, H, W, 3)

    branches = [params["spatial"], params["temporal"], params["pose"]]

    def stack_b(fn):
        return jnp.stack([fn(p) for p in branches], axis=0)

    cw1 = stack_b(lambda p: _conv_weight_matrix(p["conv1_w"])).astype(bf16)
    cb1 = stack_b(lambda p: p["conv1_b"].reshape(1, -1)).astype(jnp.float32)
    cw2 = stack_b(lambda p: _conv_weight_matrix(p["conv2_w"])).astype(bf16)
    cb2 = stack_b(lambda p: p["conv2_b"].reshape(1, -1)).astype(jnp.float32)

    # fc weight permuted so it consumes (h, w, c)-ordered flattened features
    # (equivalent to PyTorch's (c, h, w) Flatten followed by nn.Linear).
    def fc_mat(p):
        wf = p["fc_w"].reshape(128, 64, 7, 7)                # (out, c, h, w)
        return jnp.transpose(wf, (2, 3, 1, 0)).reshape(7 * 7 * 64, 128)

    wfc = stack_b(fc_mat).astype(bf16)
    bfc = stack_b(lambda p: p["fc_b"].reshape(1, -1)).astype(jnp.float32)

    # ---- Conv1 + ReLU + MaxPool2d(2): all 3 streams in one pallas_call ----
    p1 = _pool_parity_patches(x)                             # (3,4,N*H1*W1,27)
    y1 = _conv_relu_pool(p1, cw1, cb1)                       # (3, N*H1*W1, 32)
    h1, w1 = h // 2, w // 2

    # ---- Conv2 + ReLU + MaxPool2d(2) ----
    y1 = y1.reshape(3, n, h1, w1, 32)
    p2 = _pool_parity_patches(y1)                            # (3,4,N*H2*W2,288)
    y2 = _conv_relu_pool(p2, cw2, cb2)                       # (3, N*H2*W2, 64)
    h2, w2 = h1 // 2, w1 // 2

    # ---- AdaptiveAvgPool2d((7, 7)) (identity at the 28x28 test size) ----
    y2 = _adaptive_avg_pool_7(y2.reshape(3, n, h2, w2, 64))  # (3, N, 7, 7, 64)

    # ---- Per-branch FC(+ReLU) + concat + fusion MLP: one pallas_call ----
    feats = y2.reshape(3, n, 7 * 7 * 64).astype(bf16)        # (h, w, c) order
    wf1 = params["fusion1_w"].T.astype(bf16)                 # (384, 128)
    bf1 = params["fusion1_b"].reshape(1, -1).astype(jnp.float32)
    wf2 = params["fusion2_w"].T.astype(bf16)                 # (128, NC)
    bf2 = params["fusion2_b"].reshape(1, -1).astype(jnp.float32)
    return _head(feats, wfc, bfc, wf1, bf1, wf2, bf2)


def init_params(key, num_classes):
    def branch_params(k):
        k1, k2, k3, k4, k5, k6 = jax.random.split(k, 6)
        return {
            "conv1_w": jax.random.normal(k1, (32, 3, 3, 3), jnp.float32)
            * (1.0 / (3 * 9) ** 0.5),
            "conv1_b": jax.random.normal(k2, (32,), jnp.float32) * 0.01,
            "conv2_w": jax.random.normal(k3, (64, 32, 3, 3), jnp.float32)
            * (1.0 / (32 * 9) ** 0.5),
            "conv2_b": jax.random.normal(k4, (64,), jnp.float32) * 0.01,
            "fc_w": jax.random.normal(k5, (128, 64 * 7 * 7), jnp.float32)
            * (1.0 / (64 * 7 * 7) ** 0.5),
            "fc_b": jax.random.normal(k6, (128,), jnp.float32) * 0.01,
        }

    ks, kt, kp, k1, k2, k3, k4 = jax.random.split(key, 7)
    return {
        "spatial": branch_params(ks),
        "temporal": branch_params(kt),
        "pose": branch_params(kp),
        "fusion1_w": jax.random.normal(k1, (128, 128 * 3), jnp.float32)
        * (1.0 / (128 * 3) ** 0.5),
        "fusion1_b": jax.random.normal(k2, (128,), jnp.float32) * 0.01,
        "fusion2_w": jax.random.normal(k3, (num_classes, 128), jnp.float32)
        * (1.0 / 128 ** 0.5),
        "fusion2_b": jax.random.normal(k4, (num_classes,), jnp.float32) * 0.01,
    }


if __name__ == "__main__":
    batch, img_h, img_w, num_classes = 2, 28, 28, 5
    key = jax.random.PRNGKey(0)
    kparam, ks, kt, kp = jax.random.split(key, 4)

    params = init_params(kparam, num_classes)
    spatial = jax.random.normal(ks, (batch, 3, img_h, img_w), jnp.float32)
    temporal = jax.random.normal(kt, (batch, 3, img_h, img_w), jnp.float32)
    pose = jax.random.normal(kp, (batch, 3, img_h, img_w), jnp.float32)

    fwd = jax.jit(model_forward)
    out = jax.block_until_ready(fwd(params, spatial, temporal, pose))

    assert out.shape == (batch, num_classes), out.shape
    assert bool(jnp.all(jnp.isfinite(out)))
    print("KERNEL_OK")
</pallas_src>

<mosaic_0001>
module attributes {stable_mosaic.version = 11 : i64} {
  func.func @_conv_pool_kernel(%arg0: i32, %arg1: memref<1x4x392x27xbf16, #tpu.memory_space<vmem>>, %arg2: memref<1x27x32xbf16, #tpu.memory_space<vmem>>, %arg3: memref<1x1x32xf32, #tpu.memory_space<vmem>>, %arg4: memref<1x392x32xbf16, #tpu.memory_space<vmem>>) attributes {dimension_semantics = [#tpu.dimension_semantics<parallel>], iteration_bounds = array<i64: 3>, scalar_prefetch = 0 : i64, scratch_operands = 0 : i64, tpu.core_type = #tpu.core_type<tc>, window_params = [{transform_indices = @transform_0, window_bounds = array<i64: 1, 4, 392, 27>}, {transform_indices = @transform_1, window_bounds = array<i64: 1, 27, 32>}, {transform_indices = @transform_2, window_bounds = array<i64: 1, 1, 32>}, {transform_indices = @transform_3, window_bounds = array<i64: 1, 392, 32>}]} {
    %c0 = arith.constant 0 : index
    %c0_0 = arith.constant 0 : index
    %c0_1 = arith.constant 0 : index
    %c0_2 = arith.constant 0 : index
    %0 = vector.load %arg1[%c0, %c0_0, %c0_1, %c0_2] : memref<1x4x392x27xbf16, #tpu.memory_space<vmem>>, vector<1x1x392x27xbf16>
    %1 = vector.shape_cast %0 : vector<1x1x392x27xbf16> to vector<392x27xbf16>
    %c0_3 = arith.constant 0 : index
    %c0_4 = arith.constant 0 : index
    %c0_5 = arith.constant 0 : index
    %2 = vector.load %arg2[%c0_3, %c0_4, %c0_5] : memref<1x27x32xbf16, #tpu.memory_space<vmem>>, vector<1x27x32xbf16>
    %3 = vector.shape_cast %2 : vector<1x27x32xbf16> to vector<27x32xbf16>
    %cst = arith.constant dense<0.000000e+00> : vector<392x32xf32>
    %4 = tpu.matmul %1, %3, %cst {dimension_numbers = #tpu.dot_dimension_numbers<[1], [0], [0], [1], [0, 0, 1, 1], [], []>} : vector<392x27xbf16>, vector<27x32xbf16>, vector<392x32xf32> -> vector<392x32xf32>
    %c0_6 = arith.constant 0 : index
    %c1 = arith.constant 1 : index
    %c0_7 = arith.constant 0 : index
    %c0_8 = arith.constant 0 : index
    %5 = vector.load %arg1[%c0_6, %c1, %c0_7, %c0_8] : memref<1x4x392x27xbf16, #tpu.memory_space<vmem>>, vector<1x1x392x27xbf16>
    %6 = vector.shape_cast %5 : vector<1x1x392x27xbf16> to vector<392x27xbf16>
    %c0_9 = arith.constant 0 : index
    %c0_10 = arith.constant 0 : index
    %c0_11 = arith.constant 0 : index
    %7 = vector.load %arg2[%c0_9, %c0_10, %c0_11] : memref<1x27x32xbf16, #tpu.memory_space<vmem>>, vector<1x27x32xbf16>
    %8 = vector.shape_cast %7 : vector<1x27x32xbf16> to vector<27x32xbf16>
    %cst_12 = arith.constant dense<0.000000e+00> : vector<392x32xf32>
    %9 = tpu.matmul %6, %8, %cst_12 {dimension_numbers = #tpu.dot_dimension_numbers<[1], [0], [0], [1], [0, 0, 1, 1], [], []>} : vector<392x27xbf16>, vector<27x32xbf16>, vector<392x32xf32> -> vector<392x32xf32>
    %10 = arith.maximumf %4, %9 : vector<392x32xf32>
    %c0_13 = arith.constant 0 : index
    %c2 = arith.constant 2 : index
    %c0_14 = arith.constant 0 : index
    %c0_15 = arith.constant 0 : index
    %11 = vector.load %arg1[%c0_13, %c2, %c0_14, %c0_15] : memref<1x4x392x27xbf16, #tpu.memory_space<vmem>>, vector<1x1x392x27xbf16>
    %12 = vector.shape_cast %11 : vector<1x1x392x27xbf16> to vector<392x27xbf16>
    %c0_16 = arith.constant 0 : index
    %c0_17 = arith.constant 0 : index
    %c0_18 = arith.constant 0 : index
    %13 = vector.load %arg2[%c0_16, %c0_17, %c0_18] : memref<1x27x32xbf16, #tpu.memory_space<vmem>>, vector<1x27x32xbf16>
    %14 = vector.shape_cast %13 : vector<1x27x32xbf16> to vector<27x32xbf16>
    %cst_19 = arith.constant dense<0.000000e+00> : vector<392x32xf32>
    %15 = tpu.matmul %12, %14, %cst_19 {dimension_numbers = #tpu.dot_dimension_numbers<[1], [0], [0], [1], [0, 0, 1, 1], [], []>} : vector<392x27xbf16>, vector<27x32xbf16>, vector<392x32xf32> -> vector<392x32xf32>
    %16 = arith.maximumf %10, %15 : vector<392x32xf32>
    %c0_20 = arith.constant 0 : index
    %c3 = arith.constant 3 : index
    %c0_21 = arith.constant 0 : index
    %c0_22 = arith.constant 0 : index
    %17 = vector.load %arg1[%c0_20, %c3, %c0_21, %c0_22] : memref<1x4x392x27xbf16, #tpu.memory_space<vmem>>, vector<1x1x392x27xbf16>
    %18 = vector.shape_cast %17 : vector<1x1x392x27xbf16> to vector<392x27xbf16>
    %c0_23 = arith.constant 0 : index
    %c0_24 = arith.constant 0 : index
    %c0_25 = arith.constant 0 : index
    %19 = vector.load %arg2[%c0_23, %c0_24, %c0_25] : memref<1x27x32xbf16, #tpu.memory_space<vmem>>, vector<1x27x32xbf16>
    %20 = vector.shape_cast %19 : vector<1x27x32xbf16> to vector<27x32xbf16>
    %cst_26 = arith.constant dense<0.000000e+00> : vector<392x32xf32>
    %21 = tpu.matmul %18, %20, %cst_26 {dimension_numbers = #tpu.dot_dimension_numbers<[1], [0], [0], [1], [0, 0, 1, 1], [], []>} : vector<392x27xbf16>, vector<27x32xbf16>, vector<392x32xf32> -> vector<392x32xf32>
    %22 = arith.maximumf %16, %21 : vector<392x32xf32>
    %c0_27 = arith.constant 0 : index
    %c0_28 = arith.constant 0 : index
    %c0_29 = arith.constant 0 : index
    %23 = vector.load %arg3[%c0_27, %c0_28, %c0_29] : memref<1x1x32xf32, #tpu.memory_space<vmem>>, vector<1x1x32xf32>
    %24 = vector.shape_cast %23 : vector<1x1x32xf32> to vector<1x32xf32>
    %25 = vector.broadcast %24 : vector<1x32xf32> to vector<392x32xf32>
    %26 = arith.addf %22, %25 : vector<392x32xf32>
    %cst_30 = arith.constant 0.000000e+00 : f32
    %27 = vector.broadcast %cst_30 : f32 to vector<392x32xf32>
    %28 = arith.maximumf %26, %27 : vector<392x32xf32>
    %29 = arith.truncf %28 : vector<392x32xf32> to vector<392x32xbf16>
    %c0_31 = arith.constant 0 : index
    %c0_32 = arith.constant 0 : index
    %c0_33 = arith.constant 0 : index
    %30 = vector.load %arg4[%c0_31, %c0_32, %c0_33] : memref<1x392x32xbf16, #tpu.memory_space<vmem>>, vector<1x392x32xbf16>
    %31 = vector.shape_cast %30 : vector<1x392x32xbf16> to vector<392x32xbf16>
    %32 = vector.shape_cast %29 : vector<392x32xbf16> to vector<1x392x32xbf16>
    tpu.vector_store %arg4[%c0_31, %c0_32, %c0_33], %32 {strides = array<i32>} : memref<1x392x32xbf16, #tpu.memory_space<vmem>>, vector<1x392x32xbf16>,
    return
  }
  func.func @transform_0(%arg0: i32) -> (i32, i32, i32, i32) {
    %c0_i32 = arith.constant 0 : i32
    %c0_i32_0 = arith.constant 0 : i32
    %c0_i32_1 = arith.constant 0 : i32
    %c0_i32_2 = arith.constant 0 : i32
    return %arg0, %c0_i32, %c0_i32_0, %c0_i32_1 : i32, i32, i32, i32
  }
  func.func @transform_1(%arg0: i32) -> (i32, i32, i32) {
    %c0_i32 = arith.constant 0 : i32
    %c0_i32_0 = arith.constant 0 : i32
    %c0_i32_1 = arith.constant 0 : i32
    return %arg0, %c0_i32, %c0_i32_0 : i32, i32, i32
  }
  func.func @transform_2(%arg0: i32) -> (i32, i32, i32) {
    %c0_i32 = arith.constant 0 : i32
    %c0_i32_0 = arith.constant 0 : i32
    %c0_i32_1 = arith.constant 0 : i32
    return %arg0, %c0_i32, %c0_i32_0 : i32, i32, i32
  }
  func.func @transform_3(%arg0: i32) -> (i32, i32, i32) {
    %c0_i32 = arith.constant 0 : i32
    %c0_i32_0 = arith.constant 0 : i32
    %c0_i32_1 = arith.constant 0 : i32
    return %arg0, %c0_i32, %c0_i32_0 : i32, i32, i32
  }
}

module attributes {stable_mosaic.version = 11 : i64} {
  func.func @_conv_pool_kernel(%arg0: i32, %arg1: memref<1x4x98x288xbf16, #tpu.memory_space<vmem>>, %arg2: memref<1x288x64xbf16, #tpu.memory_space<vmem>>, %arg3: memref<1x1x64xf32, #tpu.memory_space<vmem>>, %arg4: memref<1x98x64xbf16, #tpu.memory_space<vmem>>) attributes {dimension_semantics = [#tpu.dimension_semantics<parallel>], iteration_bounds = array<i64: 3>, scalar_prefetch = 0 : i64, scratch_operands = 0 : i64, tpu.core_type = #tpu.core_type<tc>, window_params = [{transform_indices = @transform_0, window_bounds = array<i64: 1, 4, 98, 288>}, {transform_indices = @transform_1, window_bounds = array<i64: 1, 288, 64>}, {transform_indices = @transform_2, window_bounds = array<i64: 1, 1, 64>}, {transform_indices = @transform_3, window_bounds = array<i64: 1, 98, 64>}]} {
    %c0 = arith.constant 0 : index
    %c0_0 = arith.constant 0 : index
    %c0_1 = arith.constant 0 : index
    %c0_2 = arith.constant 0 : index
    %0 = vector.load %arg1[%c0, %c0_0, %c0_1, %c0_2] : memref<1x4x98x288xbf16, #tpu.memory_space<vmem>>, vector<1x1x98x288xbf16>
    %1 = vector.shape_cast %0 : vector<1x1x98x288xbf16> to vector<98x288xbf16>
    %c0_3 = arith.constant 0 : index
    %c0_4 = arith.constant 0 : index
    %c0_5 = arith.constant 0 : index
    %2 = vector.load %arg2[%c0_3, %c0_4, %c0_5] : memref<1x288x64xbf16, #tpu.memory_space<vmem>>, vector<1x288x64xbf16>
    %3 = vector.shape_cast %2 : vector<1x288x64xbf16> to vector<288x64xbf16>
    %cst = arith.constant dense<0.000000e+00> : vector<98x64xf32>
    %4 = tpu.matmul %1, %3, %cst {dimension_numbers = #tpu.dot_dimension_numbers<[1], [0], [0], [1], [0, 0, 1, 1], [], []>} : vector<98x288xbf16>, vector<288x64xbf16>, vector<98x64xf32> -> vector<98x64xf32>
    %c0_6 = arith.constant 0 : index
    %c1 = arith.constant 1 : index
    %c0_7 = arith.constant 0 : index
    %c0_8 = arith.constant 0 : index
    %5 = vector.load %arg1[%c0_6, %c1, %c0_7, %c0_8] : memref<1x4x98x288xbf16, #tpu.memory_space<vmem>>, vector<1x1x98x288xbf16>
    %6 = vector.shape_cast %5 : vector<1x1x98x288xbf16> to vector<98x288xbf16>
    %c0_9 = arith.constant 0 : index
    %c0_10 = arith.constant 0 : index
    %c0_11 = arith.constant 0 : index
    %7 = vector.load %arg2[%c0_9, %c0_10, %c0_11] : memref<1x288x64xbf16, #tpu.memory_space<vmem>>, vector<1x288x64xbf16>
    %8 = vector.shape_cast %7 : vector<1x288x64xbf16> to vector<288x64xbf16>
    %cst_12 = arith.constant dense<0.000000e+00> : vector<98x64xf32>
    %9 = tpu.matmul %6, %8, %cst_12 {dimension_numbers = #tpu.dot_dimension_numbers<[1], [0], [0], [1], [0, 0, 1, 1], [], []>} : vector<98x288xbf16>, vector<288x64xbf16>, vector<98x64xf32> -> vector<98x64xf32>
    %10 = arith.maximumf %4, %9 : vector<98x64xf32>
    %c0_13 = arith.constant 0 : index
    %c2 = arith.constant 2 : index
    %c0_14 = arith.constant 0 : index
    %c0_15 = arith.constant 0 : index
    %11 = vector.load %arg1[%c0_13, %c2, %c0_14, %c0_15] : memref<1x4x98x288xbf16, #tpu.memory_space<vmem>>, vector<1x1x98x288xbf16>
    %12 = vector.shape_cast %11 : vector<1x1x98x288xbf16> to vector<98x288xbf16>
    %c0_16 = arith.constant 0 : index
    %c0_17 = arith.constant 0 : index
    %c0_18 = arith.constant 0 : index
    %13 = vector.load %arg2[%c0_16, %c0_17, %c0_18] : memref<1x288x64xbf16, #tpu.memory_space<vmem>>, vector<1x288x64xbf16>
    %14 = vector.shape_cast %13 : vector<1x288x64xbf16> to vector<288x64xbf16>
    %cst_19 = arith.constant dense<0.000000e+00> : vector<98x64xf32>
    %15 = tpu.matmul %12, %14, %cst_19 {dimension_numbers = #tpu.dot_dimension_numbers<[1], [0], [0], [1], [0, 0, 1, 1], [], []>} : vector<98x288xbf16>, vector<288x64xbf16>, vector<98x64xf32> -> vector<98x64xf32>
    %16 = arith.maximumf %10, %15 : vector<98x64xf32>
    %c0_20 = arith.constant 0 : index
    %c3 = arith.constant 3 : index
    %c0_21 = arith.constant 0 : index
    %c0_22 = arith.constant 0 : index
    %17 = vector.load %arg1[%c0_20, %c3, %c0_21, %c0_22] : memref<1x4x98x288xbf16, #tpu.memory_space<vmem>>, vector<1x1x98x288xbf16>
    %18 = vector.shape_cast %17 : vector<1x1x98x288xbf16> to vector<98x288xbf16>
    %c0_23 = arith.constant 0 : index
    %c0_24 = arith.constant 0 : index
    %c0_25 = arith.constant 0 : index
    %19 = vector.load %arg2[%c0_23, %c0_24, %c0_25] : memref<1x288x64xbf16, #tpu.memory_space<vmem>>, vector<1x288x64xbf16>
    %20 = vector.shape_cast %19 : vector<1x288x64xbf16> to vector<288x64xbf16>
    %cst_26 = arith.constant dense<0.000000e+00> : vector<98x64xf32>
    %21 = tpu.matmul %18, %20, %cst_26 {dimension_numbers = #tpu.dot_dimension_numbers<[1], [0], [0], [1], [0, 0, 1, 1], [], []>} : vector<98x288xbf16>, vector<288x64xbf16>, vector<98x64xf32> -> vector<98x64xf32>
    %22 = arith.maximumf %16, %21 : vector<98x64xf32>
    %c0_27 = arith.constant 0 : index
    %c0_28 = arith.constant 0 : index
    %c0_29 = arith.constant 0 : index
    %23 = vector.load %arg3[%c0_27, %c0_28, %c0_29] : memref<1x1x64xf32, #tpu.memory_space<vmem>>, vector<1x1x64xf32>
    %24 = vector.shape_cast %23 : vector<1x1x64xf32> to vector<1x64xf32>
    %25 = vector.broadcast %24 : vector<1x64xf32> to vector<98x64xf32>
    %26 = arith.addf %22, %25 : vector<98x64xf32>
    %cst_30 = arith.constant 0.000000e+00 : f32
    %27 = vector.broadcast %cst_30 : f32 to vector<98x64xf32>
    %28 = arith.maximumf %26, %27 : vector<98x64xf32>
    %29 = arith.truncf %28 : vector<98x64xf32> to vector<98x64xbf16>
    %c0_31 = arith.constant 0 : index
    %c0_32 = arith.constant 0 : index
    %c0_33 = arith.constant 0 : index
    %30 = vector.load %arg4[%c0_31, %c0_32, %c0_33] : memref<1x98x64xbf16, #tpu.memory_space<vmem>>, vector<1x98x64xbf16>
    %31 = vector.shape_cast %30 : vector<1x98x64xbf16> to vector<98x64xbf16>
    %32 = vector.shape_cast %29 : vector<98x64xbf16> to vector<1x98x64xbf16>
    tpu.vector_store %arg4[%c0_31, %c0_32, %c0_33], %32 {strides = array<i32>} : memref<1x98x64xbf16, #tpu.memory_space<vmem>>, vector<1x98x64xbf16>,
    return
  }
  func.func @transform_0(%arg0: i32) -> (i32, i32, i32, i32) {
    %c0_i32 = arith.constant 0 : i32
    %c0_i32_0 = arith.constant 0 : i32
    %c0_i32_1 = arith.constant 0 : i32
    %c0_i32_2 = arith.constant 0 : i32
    return %arg0, %c0_i32, %c0_i32_0, %c0_i32_1 : i32, i32, i32, i32
  }
  func.func @transform_1(%arg0: i32) -> (i32, i32, i32) {
    %c0_i32 = arith.constant 0 : i32
    %c0_i32_0 = arith.constant 0 : i32
    %c0_i32_1 = arith.constant 0 : i32
    return %arg0, %c0_i32, %c0_i32_0 : i32, i32, i32
  }
  func.func @transform_2(%arg0: i32) -> (i32, i32, i32) {
    %c0_i32 = arith.constant 0 : i32
    %c0_i32_0 = arith.constant 0 : i32
    %c0_i32_1 = arith.constant 0 : i32
    return %arg0, %c0_i32, %c0_i32_0 : i32, i32, i32
  }
  func.func @transform_3(%arg0: i32) -> (i32, i32, i32) {
    %c0_i32 = arith.constant 0 : i32
    %c0_i32_0 = arith.constant 0 : i32
    %c0_i32_1 = arith.constant 0 : i32
    return %arg0, %c0_i32, %c0_i32_0 : i32, i32, i32
  }
}

module attributes {stable_mosaic.version = 11 : i64} {
  func.func @_head_kernel(%arg0: memref<3x2x3136xbf16, #tpu.memory_space<vmem>>, %arg1: memref<3x3136x128xbf16, #tpu.memory_space<vmem>>, %arg2: memref<3x1x128xf32, #tpu.memory_space<vmem>>, %arg3: memref<384x128xbf16, #tpu.memory_space<vmem>>, %arg4: memref<1x128xf32, #tpu.memory_space<vmem>>, %arg5: memref<128x5xbf16, #tpu.memory_space<vmem>>, %arg6: memref<1x5xf32, #tpu.memory_space<vmem>>, %arg7: memref<2x5xf32, #tpu.memory_space<vmem>>) attributes {dimension_semantics = [], scalar_prefetch = 0 : i64, scratch_operands = 0 : i64, tpu.core_type = #tpu.core_type<tc>} {
    %c0 = arith.constant 0 : index
    %c0_0 = arith.constant 0 : index
    %c0_1 = arith.constant 0 : index
    %0 = vector.load %arg0[%c0, %c0_0, %c0_1] : memref<3x2x3136xbf16, #tpu.memory_space<vmem>>, vector<1x2x3136xbf16>
    %1 = vector.shape_cast %0 : vector<1x2x3136xbf16> to vector<2x3136xbf16>
    %c0_2 = arith.constant 0 : index
    %c0_3 = arith.constant 0 : index
    %c0_4 = arith.constant 0 : index
    %2 = vector.load %arg1[%c0_2, %c0_3, %c0_4] : memref<3x3136x128xbf16, #tpu.memory_space<vmem>>, vector<1x3136x128xbf16>
    %3 = vector.shape_cast %2 : vector<1x3136x128xbf16> to vector<3136x128xbf16>
    %cst = arith.constant dense<0.000000e+00> : vector<2x128xf32>
    %4 = tpu.matmul %1, %3, %cst {dimension_numbers = #tpu.dot_dimension_numbers<[1], [0], [0], [1], [0, 0, 1, 1], [], []>} : vector<2x3136xbf16>, vector<3136x128xbf16>, vector<2x128xf32> -> vector<2x128xf32>
    %c0_5 = arith.constant 0 : index
    %c0_6 = arith.constant 0 : index
    %c0_7 = arith.constant 0 : index
    %5 = vector.load %arg2[%c0_5, %c0_6, %c0_7] : memref<3x1x128xf32, #tpu.memory_space<vmem>>, vector<1x1x128xf32>
    %6 = vector.shape_cast %5 : vector<1x1x128xf32> to vector<1x128xf32>
    %7 = vector.broadcast %6 : vector<1x128xf32> to vector<2x128xf32>
    %8 = arith.addf %4, %7 : vector<2x128xf32>
    %cst_8 = arith.constant 0.000000e+00 : f32
    %9 = vector.broadcast %cst_8 : f32 to vector<2x128xf32>
    %10 = arith.maximumf %8, %9 : vector<2x128xf32>
    %c1 = arith.constant 1 : index
    %c0_9 = arith.constant 0 : index
    %c0_10 = arith.constant 0 : index
    %11 = vector.load %arg0[%c1, %c0_9, %c0_10] : memref<3x2x3136xbf16, #tpu.memory_space<vmem>>, vector<1x2x3136xbf16>
    %12 = vector.shape_cast %11 : vector<1x2x3136xbf16> to vector<2x3136xbf16>
    %c1_11 = arith.constant 1 : index
    %c0_12 = arith.constant 0 : index
    %c0_13 = arith.constant 0 : index
    %13 = vector.load %arg1[%c1_11, %c0_12, %c0_13] : memref<3x3136x128xbf16, #tpu.memory_space<vmem>>, vector<1x3136x128xbf16>
    %14 = vector.shape_cast %13 : vector<1x3136x128xbf16> to vector<3136x128xbf16>
    %cst_14 = arith.constant dense<0.000000e+00> : vector<2x128xf32>
    %15 = tpu.matmul %12, %14, %cst_14 {dimension_numbers = #tpu.dot_dimension_numbers<[1], [0], [0], [1], [0, 0, 1, 1], [], []>} : vector<2x3136xbf16>, vector<3136x128xbf16>, vector<2x128xf32> -> vector<2x128xf32>
    %c1_15 = arith.constant 1 : index
    %c0_16 = arith.constant 0 : index
    %c0_17 = arith.constant 0 : index
    %16 = vector.load %arg2[%c1_15, %c0_16, %c0_17] : memref<3x1x128xf32, #tpu.memory_space<vmem>>, vector<1x1x128xf32>
    %17 = vector.shape_cast %16 : vector<1x1x128xf32> to vector<1x128xf32>
    %18 = vector.broadcast %17 : vector<1x128xf32> to vector<2x128xf32>
    %19 = arith.addf %15, %18 : vector<2x128xf32>
    %cst_18 = arith.constant 0.000000e+00 : f32
    %20 = vector.broadcast %cst_18 : f32 to vector<2x128xf32>
    %21 = arith.maximumf %19, %20 : vector<2x128xf32>
    %c2 = arith.constant 2 : index
    %c0_19 = arith.constant 0 : index
    %c0_20 = arith.constant 0 : index
    %22 = vector.load %arg0[%c2, %c0_19, %c0_20] : memref<3x2x3136xbf16, #tpu.memory_space<vmem>>, vector<1x2x3136xbf16>
    %23 = vector.shape_cast %22 : vector<1x2x3136xbf16> to vector<2x3136xbf16>
    %c2_21 = arith.constant 2 : index
    %c0_22 = arith.constant 0 : index
    %c0_23 = arith.constant 0 : index
    %24 = vector.load %arg1[%c2_21, %c0_22, %c0_23] : memref<3x3136x128xbf16, #tpu.memory_space<vmem>>, vector<1x3136x128xbf16>
    %25 = vector.shape_cast %24 : vector<1x3136x128xbf16> to vector<3136x128xbf16>
    %cst_24 = arith.constant dense<0.000000e+00> : vector<2x128xf32>
    %26 = tpu.matmul %23, %25, %cst_24 {dimension_numbers = #tpu.dot_dimension_numbers<[1], [0], [0], [1], [0, 0, 1, 1], [], []>} : vector<2x3136xbf16>, vector<3136x128xbf16>, vector<2x128xf32> -> vector<2x128xf32>
    %c2_25 = arith.constant 2 : index
    %c0_26 = arith.constant 0 : index
    %c0_27 = arith.constant 0 : index
    %27 = vector.load %arg2[%c2_25, %c0_26, %c0_27] : memref<3x1x128xf32, #tpu.memory_space<vmem>>, vector<1x1x128xf32>
    %28 = vector.shape_cast %27 : vector<1x1x128xf32> to vector<1x128xf32>
    %29 = vector.broadcast %28 : vector<1x128xf32> to vector<2x128xf32>
    %30 = arith.addf %26, %29 : vector<2x128xf32>
    %cst_28 = arith.constant 0.000000e+00 : f32
    %31 = vector.broadcast %cst_28 : f32 to vector<2x128xf32>
    %32 = arith.maximumf %30, %31 : vector<2x128xf32>
    %33 = tpu.concatenate %10, %21, %32 in 1 : vector<2x128xf32>, vector<2x128xf32>, vector<2x128xf32> -> vector<2x384xf32>
    %34 = arith.truncf %33 : vector<2x384xf32> to vector<2x384xbf16>
    %c0_29 = arith.constant 0 : index
    %c0_30 = arith.constant 0 : index
    %35 = vector.load %arg3[%c0_29, %c0_30] : memref<384x128xbf16, #tpu.memory_space<vmem>>, vector<384x128xbf16>
    %cst_31 = arith.constant dense<0.000000e+00> : vector<2x128xf32>
    %36 = tpu.matmul %34, %35, %cst_31 {dimension_numbers = #tpu.dot_dimension_numbers<[1], [0], [0], [1], [0, 0, 1, 1], [], []>} : vector<2x384xbf16>, vector<384x128xbf16>, vector<2x128xf32> -> vector<2x128xf32>
    %c0_32 = arith.constant 0 : index
    %c0_33 = arith.constant 0 : index
    %37 = vector.load %arg4[%c0_32, %c0_33] : memref<1x128xf32, #tpu.memory_space<vmem>>, vector<1x128xf32>
    %38 = vector.broadcast %37 : vector<1x128xf32> to vector<2x128xf32>
    %39 = arith.addf %36, %38 : vector<2x128xf32>
    %cst_34 = arith.constant 0.000000e+00 : f32
    %40 = vector.broadcast %cst_34 : f32 to vector<2x128xf32>
    %41 = arith.maximumf %39, %40 : vector<2x128xf32>
    %42 = arith.truncf %41 : vector<2x128xf32> to vector<2x128xbf16>
    %c0_35 = arith.constant 0 : index
    %c0_36 = arith.constant 0 : index
    %43 = vector.load %arg5[%c0_35, %c0_36] : memref<128x5xbf16, #tpu.memory_space<vmem>>, vector<128x5xbf16>
    %cst_37 = arith.constant dense<0.000000e+00> : vector<2x5xf32>
    %44 = tpu.matmul %42, %43, %cst_37 {dimension_numbers = #tpu.dot_dimension_numbers<[1], [0], [0], [1], [0, 0, 1, 1], [], []>} : vector<2x128xbf16>, vector<128x5xbf16>, vector<2x5xf32> -> vector<2x5xf32>
    %c0_38 = arith.constant 0 : index
    %c0_39 = arith.constant 0 : index
    %45 = vector.load %arg6[%c0_38, %c0_39] : memref<1x5xf32, #tpu.memory_space<vmem>>, vector<1x5xf32>
    %46 = vector.broadcast %45 : vector<1x5xf32> to vector<2x5xf32>
    %47 = arith.addf %44, %46 : vector<2x5xf32>
    %c0_40 = arith.constant 0 : index
    %c0_41 = arith.constant 0 : index
    %48 = vector.load %arg7[%c0_40, %c0_41] : memref<2x5xf32, #tpu.memory_space<vmem>>, vector<2x5xf32>
    tpu.vector_store %arg7[%c0_40, %c0_41], %47 {strides = array<i32>} : memref<2x5xf32, #tpu.memory_space<vmem>>, vector<2x5xf32>,
    return
  }
}

</mosaic_0001>

<llo_original>
// kernel: model_forward.3
$region0: #{model_forward.3}
  #allocation0 [shape = 'u32[]', space=smem, size = 0x4, offset = 0x4, fixed_abs, tag = 'smem constant byte address 0x4 - core index']
  #allocation1 [shape = 'u32[144,128]{1,0:T(1,128)}', space=vmem, size = 0x12000, scoped, tag = 'internal scratch']
  %s0 = inlined_call_operand.vmem [shape: bf16[3,4,392,27], index: 0, kind: input, shape index: {}]
  %s1 = inlined_call_operand.vmem [shape: bf16[3,27,32], index: 1, kind: input, shape index: {}]
  %s2 = inlined_call_operand.vmem [shape: f32[3,1,32], index: 2, kind: input, shape index: {}]
  %s3 = inlined_call_operand.vmem [shape: bf16[3,392,32], index: 3, kind: output, shape index: {}]
  %s4 = sld [smem:[#allocation0]]
  $region45: #{model_forward.3} parent=0
    _
  %s6 = ssub.s32 1, %s4
  %s7 = scalar_select 0, %s6, %s4
  loop: start=0, step=1, limit=5
  $region2: #{model_forward.3} parent=0 // loop_pre_header
    _
  $region3: #{model_forward.3} parent=0 // loop_header
    %s9 = sphi 0, %s13
    %p10 = scmp.ge.s32.totalorder %s9, 5
    %s19 = sphi 0, %s21
    %s22 = sphi 0, %s19
    %s23 = sphi 0, %s22
    %s39 = sphi 0, %s23
    %s45 = sphi 0, %s47
    %s48 = sphi 0, %s45
    %s49 = sphi 0, %s48
    %s65 = sphi 0, %s49
    %s71 = sphi 0, %s73
    %s74 = sphi 0, %s71
    %s75 = sphi 0, %s74
    %s91 = sphi 0, %s75
    %s97 = sphi 0, %s99
    %s100 = sphi 0, %s97
    %s101 = sphi 0, %s100
    %s117 = sphi 0, %s101
  $region4: #{model_forward.3} parent=0 // loop_header_branch
    %12 = sbr.rel (%p10) target = $region8
  $region5: #{model_forward.3} parent=0 // loop_body
    %s14 = ssub.s32 %s9, 1
    %s15 = ssub.s32 %s9, 2
    %s16 = sadd.s32 %s9, 1
    %s17 = ssub.s32 %s9, %s16
    %p18 = scmp.eq.s32.totalorder %s17, 0
    %s20 = sadd.s32 %s19, 1
    %s21 = scalar_select %p18, %s19, %s20
    %p24 = pneg %p18
    %p25 = scmp.eq.s32.totalorder %s9, 2
    %p26 = por %p24, %p25
    %p27 = scmp.ne.s32.totalorder %s19, %s22
    %p28 = scmp.eq.s32.totalorder %s9, 0
    %p29 = por %p27, %p28
    %p30 = scmp.ne.s32.totalorder %s19, %s22
    %p31 = scmp.eq.s32.totalorder %s14, 2
    %p32 = por %p30, %p31
    %p33 = scmp.ne.s32.totalorder %s22, %s23
    %p34 = scmp.eq.s32.totalorder %s14, 0
    %p35 = por %p33, %p34
    %p36 = scmp.ne.s32.totalorder %s22, %s23
    %p37 = scmp.eq.s32.totalorder %s15, 2
    %p38 = por %p36, %p37
    %p40 = scmp.ne.s32.totalorder %s23, %s39
    %p41 = scmp.eq.s32.totalorder %s15, 0
    %p42 = por %p40, %p41
    %s43 = ssub.s32 %s9, %s16
    %p44 = scmp.eq.s32.totalorder %s43, 0
    %s46 = sadd.s32 %s45, 1
    %s47 = scalar_select %p44, %s45, %s46
    %p50 = pneg %p44
    %p51 = scmp.eq.s32.totalorder %s9, 2
    %p52 = por %p50, %p51
    %p53 = scmp.ne.s32.totalorder %s45, %s48
    %p54 = scmp.eq.s32.totalorder %s9, 0
    %p55 = por %p53, %p54
    %p56 = scmp.ne.s32.totalorder %s45, %s48
    %p57 = scmp.eq.s32.totalorder %s14, 2
    %p58 = por %p56, %p57
    %p59 = scmp.ne.s32.totalorder %s48, %s49
    %p60 = scmp.eq.s32.totalorder %s14, 0
    %p61 = por %p59, %p60
    %p62 = scmp.ne.s32.totalorder %s48, %s49
    %p63 = scmp.eq.s32.totalorder %s15, 2
    %p64 = por %p62, %p63
    %p66 = scmp.ne.s32.totalorder %s49, %s65
    %p67 = scmp.eq.s32.totalorder %s15, 0
    %p68 = por %p66, %p67
    %s69 = ssub.s32 %s9, %s16
    %p70 = scmp.eq.s32.totalorder %s69, 0
    %s72 = sadd.s32 %s71, 1
    %s73 = scalar_select %p70, %s71, %s72
    %p76 = pneg %p70
    %p77 = scmp.eq.s32.totalorder %s9, 2
    %p78 = por %p76, %p77
    %p79 = scmp.ne.s32.totalorder %s71, %s74
    %p80 = scmp.eq.s32.totalorder %s9, 0
    %p81 = por %p79, %p80
    %p82 = scmp.ne.s32.totalorder %s71, %s74
    %p83 = scmp.eq.s32.totalorder %s14, 2
    %p84 = por %p82, %p83
    %p85 = scmp.ne.s32.totalorder %s74, %s75
    %p86 = scmp.eq.s32.totalorder %s14, 0
    %p87 = por %p85, %p86
    %p88 = scmp.ne.s32.totalorder %s74, %s75
    %p89 = scmp.eq.s32.totalorder %s15, 2
    %p90 = por %p88, %p89
    %p92 = scmp.ne.s32.totalorder %s75, %s91
    %p93 = scmp.eq.s32.totalorder %s15, 0
    %p94 = por %p92, %p93
    %s95 = ssub.s32 %s9, %s16
    %p96 = scmp.eq.s32.totalorder %s95, 0
    %s98 = sadd.s32 %s97, 1
    %s99 = scalar_select %p96, %s97, %s98
    %p102 = pneg %p96
    %p103 = scmp.eq.s32.totalorder %s9, 2
    %p104 = por %p102, %p103
    %p105 = scmp.ne.s32.totalorder %s97, %s100
    %p106 = scmp.eq.s32.totalorder %s9, 0
    %p107 = por %p105, %p106
    %p108 = scmp.ne.s32.totalorder %s97, %s100
    %p109 = scmp.eq.s32.totalorder %s14, 2
    %p110 = por %p108, %p109
    %p111 = scmp.ne.s32.totalorder %s100, %s101
    %p112 = scmp.eq.s32.totalorder %s14, 0
    %p113 = por %p111, %p112
    %p114 = scmp.ne.s32.totalorder %s100, %s101
    %p115 = scmp.eq.s32.totalorder %s15, 2
    %p116 = por %p114, %p115
    %p118 = scmp.ne.s32.totalorder %s101, %s117
    %p119 = scmp.eq.s32.totalorder %s15, 0
    %p120 = por %p118, %p119
    %p121 = scmp.le.s32.totalorder 1, %s9
    %p122 = scmp.lt.s32.totalorder %s9, 4
    %p123 = pnand %p121, %p122
    %p124 = pneg %p123
    // Predicated region
    $region9: #{model_forward.3} parent=5 // pred_check
      _
    $region10: #{model_forward.3} parent=5 // pred_check_branch
      %126 = sbr.rel (%p123) target = $region12
    $region11: #{model_forward.3} parent=5 // pred_region
      %s127 = ssub.s32 %s9, 1
    $region12: #{model_forward.3} parent=5 // pred_fallthru
      _
    %p128 = scmp.lt.s32.totalorder %s9, 3
    // Predicated region
    $region13: #{model_forward.3} parent=5 // pred_check
      %p129 = pneg %p128
    $region14: #{model_forward.3} parent=5 // pred_check_branch
      %131 = sbr.rel (%p129) target = $region16
    $region15: #{model_forward.3} parent=5 // pred_region
      // Predicated region
      $region17: #{model_forward.3} parent=15 // pred_check
        %p132 = pneg %p29
      $region18: #{model_forward.3} parent=15 // pred_check_branch
        %134 = sbr.rel (%p132) target = $region20
      $region19: #{model_forward.3} parent=15 // pred_region
        %p135 = scmp.lt.s32.totalorder %s9, 2
        %s136 = scalar_select %p135, %s9, 2
        %s137 = smul.addr %s136, 196
        %s138 = smul.addr %s137, 4
        %s139 = scalar_lea.vmem %s0, %s138
      $region20: #{model_forward.3} parent=15 // pred_fallthru
        _
      // Predicated region
      $region21: #{model_forward.3} parent=15 // pred_check
        %p140 = pneg %p55
      $region22: #{model_forward.3} parent=15 // pred_check_branch
        %142 = sbr.rel (%p140) target = $region24
      $region23: #{model_forward.3} parent=15 // pred_region
        %p143 = scmp.lt.s32.totalorder %s9, 2
        %s144 = scalar_select %p143, %s9, 2
        %s145 = smul.addr %s144, 4
        %s146 = smul.addr %s145, 4
        %s147 = scalar_lea.vmem %s1, %s146
      $region24: #{model_forward.3} parent=15 // pred_fallthru
        _
      // Predicated region
      $region25: #{model_forward.3} parent=15 // pred_check
        %p148 = pneg %p81
      $region26: #{model_forward.3} parent=15 // pred_check_branch
        %150 = sbr.rel (%p148) target = $region28
      $region27: #{model_forward.3} parent=15 // pred_region
        %p151 = scmp.lt.s32.totalorder %s9, 2
        %s152 = scalar_select %p151, %s9, 2
        %s153 = scalar_lea.vmem %s2, %s152
      $region28: #{model_forward.3} parent=15 // pred_fallthru
        _
    $region16: #{model_forward.3} parent=5 // pred_fallthru
      _
    %p154 = scmp.le.s32.totalorder 1, %s9
    %p155 = scmp.lt.s32.totalorder %s9, 4
    %p156 = pnand %p154, %p155
    %p157 = pneg %p156
    // Predicated region
    $region29: #{model_forward.3} parent=5 // pred_check
      _
    $region30: #{model_forward.3} parent=5 // pred_check_branch
      %159 = sbr.rel (%p156) target = $region32
    $region31: #{model_forward.3} parent=5 // pred_region
      %s160 = ssub.s32 %s9, 1
      %p161 = scmp.lt.s32.totalorder %s14, 2
      %s162 = scalar_select %p161, %s14, 2
      %s163 = smul.addr %s162, 196
      %s164 = smul.addr %s163, 4
      %s165 = scalar_lea.vmem %s0, %s164
      %p166 = pneg %p35
      %p167 = pneg %p32
      %p168 = scmp.lt.s32.totalorder %s14, 2
      %s169 = scalar_select %p168, %s14, 2
      %s170 = smul.addr %s169, 4
      %s171 = smul.addr %s170, 4
      %s172 = scalar_lea.vmem %s1, %s171
      %p173 = pneg %p61
      %p174 = pneg %p58
      %p175 = scmp.lt.s32.totalorder %s14, 2
      %s176 = scalar_select %p175, %s14, 2
      %s177 = scalar_lea.vmem %s2, %s176
      %p178 = pneg %p87
      %p179 = pneg %p84
      %p180 = pneg %p113
      %p181 = pneg %p110
      %p182 = scmp.lt.s32.totalorder %s14, 2
      %s183 = scalar_select %p182, %s14, 2
      %s184 = smul.addr %s183, 49
      %s185 = smul.addr %s184, 4
      %s186 = scalar_lea.vmem %s3, %s185
      %p187 = scmp.lt.s32.totalorder %s14, 2
      %s188 = scalar_select %p187, %s14, 2
      %s189 = smul.addr %s188, 196
      %s190 = smul.addr %s189, 4
      %s191 = scalar_lea.vmem %s0, %s190
      %p192 = scmp.lt.s32.totalorder %s14, 2
      %s193 = scalar_select %p192, %s14, 2
      %s194 = smul.addr %s193, 4
      %s195 = smul.addr %s194, 4
      %s196 = scalar_lea.vmem %s1, %s195
      %p197 = scmp.lt.s32.totalorder %s14, 2
      %s198 = scalar_select %p197, %s14, 2
      %s199 = scalar_lea.vmem %s2, %s198
      %p200 = scmp.lt.s32.totalorder %s14, 2
      %s201 = scalar_select %p200, %s14, 2
      %s202 = smul.addr %s201, 49
      %s203 = smul.addr %s202, 4
      %s204 = scalar_lea.vmem %s3, %s203
      %v206 = vld [vmem:[%s191] sm:$0xf]
      %v207 = vld [vmem:[%s191 + $0x4] sm:$0xf]
      %v208 = vld [vmem:[%s191 + $0x8] sm:$0xf]
      %v209 = vld [vmem:[%s191 + $0xc] sm:$0xf]
      %v210 = vld [vmem:[%s191 + $0x10] sm:$0xf]
      %v211 = vld [vmem:[%s191 + $0x14] sm:$0xf]
      %v212 = vld [vmem:[%s191 + $0x18] sm:$0xf]
      %v213 = vld [vmem:[%s191 + $0x1c] sm:$0xf]
      %v214 = vld [vmem:[%s191 + $0x20] sm:$0xf]
      %v215 = vld [vmem:[%s191 + $0x24] sm:$0xf]
      %v216 = vld [vmem:[%s191 + $0x28] sm:$0xf]
      %v217 = vld [vmem:[%s191 + $0x2c] sm:$0xf]
      %v218 = vld [vmem:[%s191 + $0x30] sm:$0xf]
      %v219 = vld [vmem:[%s191 + $0x34] sm:$0xf]
      %v220 = vld [vmem:[%s191 + $0x38] sm:$0xf]
      %v221 = vld [vmem:[%s191 + $0x3c] sm:$0xf]
      %v222 = vld [vmem:[%s191 + $0x40] sm:$0xf]
      %v223 = vld [vmem:[%s191 + $0x44] sm:$0xf]
      %v224 = vld [vmem:[%s191 + $0x48] sm:$0xf]
      %v225 = vld [vmem:[%s191 + $0x4c] sm:$0xf]
      %v226 = vld [vmem:[%s191 + $0x50] sm:$0xf]
      %v227 = vld [vmem:[%s191 + $0x54] sm:$0xf]
      %v228 = vld [vmem:[%s191 + $0x58] sm:$0xf]
      %v229 = vld [vmem:[%s191 + $0x5c] sm:$0xf]
      %v230 = vld [vmem:[%s191 + $0x60] sm:$0xf]
      %v231 = vld [vmem:[%s191 + $0x64] sm:$0xf]
      %v232 = vld [vmem:[%s191 + $0x68] sm:$0xf]
      %v233 = vld [vmem:[%s191 + $0x6c] sm:$0xf]
      %v234 = vld [vmem:[%s191 + $0x70] sm:$0xf]
      %v235 = vld [vmem:[%s191 + $0x74] sm:$0xf]
      %v236 = vld [vmem:[%s191 + $0x78] sm:$0xf]
      %v237 = vld [vmem:[%s191 + $0x7c] sm:$0xf]
      %v238 = vld [vmem:[%s191 + $0x80] sm:$0xf]
      %v239 = vld [vmem:[%s191 + $0x84] sm:$0xf]
      %v240 = vld [vmem:[%s191 + $0x88] sm:$0xf]
      %v241 = vld [vmem:[%s191 + $0x8c] sm:$0xf]
      %v242 = vld [vmem:[%s191 + $0x90] sm:$0xf]
      %v243 = vld [vmem:[%s191 + $0x94] sm:$0xf]
      %v244 = vld [vmem:[%s191 + $0x98] sm:$0xf]
      %v245 = vld [vmem:[%s191 + $0x9c] sm:$0xf]
      %v246 = vld [vmem:[%s191 + $0xa0] sm:$0xf]
      %v247 = vld [vmem:[%s191 + $0xa4] sm:$0xf]
      %v248 = vld [vmem:[%s191 + $0xa8] sm:$0xf]
      %v249 = vld [vmem:[%s191 + $0xac] sm:$0xf]
      %v250 = vld [vmem:[%s191 + $0xb0] sm:$0xf]
      %v251 = vld [vmem:[%s191 + $0xb4] sm:$0xf]
      %v252 = vld [vmem:[%s191 + $0xb8] sm:$0xf]
      %v253 = vld [vmem:[%s191 + $0xbc] sm:$0xf]
      %v254 = vld [vmem:[%s191 + $0xc0] sm:$0xf]
      %v255 = vld [vmem:[%s196] sm:$0xf]
      %v256 = vld [vmem:[%s196 + $0x4] sm:$0xf]
      %v257 = vld [vmem:[%s196 + $0x8] sm:$0xf]
      %v258 = vld [vmem:[%s196 + $0xc] sm:$0x3]
      %v308 = vunpack.c.l.b16 %v206
      %v309 = vunpack.c.l.b16 %v207
      %v310 = vunpack.c.l.b16 %v208
      %v311 = vunpack.c.l.b16 %v209
      %v312 = vunpack.c.l.b16 %v210
      %v313 = vunpack.c.l.b16 %v211
      %v314 = vunpack.c.l.b16 %v212
      %v315 = vunpack.c.l.b16 %v213
      %v316 = vunpack.c.l.b16 %v214
      %v317 = vunpack.c.l.b16 %v215
      %v318 = vunpack.c.l.b16 %v216
      %v319 = vunpack.c.l.b16 %v217
      %v320 = vunpack.c.l.b16 %v218
      %v321 = vunpack.c.l.b16 %v219
      %v322 = vunpack.c.l.b16 %v220
      %v323 = vunpack.c.l.b16 %v221
      %v324 = vunpack.c.l.b16 %v222
      %v325 = vunpack.c.l.b16 %v223
      %v326 = vunpack.c.l.b16 %v224
      %v327 = vunpack.c.l.b16 %v225
      %v328 = vunpack.c.l.b16 %v226
      %v329 = vunpack.c.l.b16 %v227
      %v330 = vunpack.c.l.b16 %v228
      %v331 = vunpack.c.l.b16 %v229
      %v332 = vunpack.c.l.b16 %v230
      %v333 = vunpack.c.l.b16 %v231
      %v334 = vunpack.c.l.b16 %v232
      %v335 = vunpack.c.l.b16 %v233
      %v336 = vunpack.c.l.b16 %v234
      %v337 = vunpack.c.l.b16 %v235
      %v338 = vunpack.c.l.b16 %v236
      %v339 = vunpack.c.l.b16 %v237
      %v340 = vunpack.c.l.b16 %v238
      %v341 = vunpack.c.l.b16 %v239
      %v342 = vunpack.c.l.b16 %v240
      %v343 = vunpack.c.l.b16 %v241
      %v344 = vunpack.c.l.b16 %v242
      %v345 = vunpack.c.l.b16 %v243
      %v346 = vunpack.c.l.b16 %v244
      %v347 = vunpack.c.l.b16 %v245
      %v348 = vunpack.c.l.b16 %v246
      %v349 = vunpack.c.l.b16 %v247
      %v350 = vunpack.c.l.b16 %v248
      %v351 = vunpack.c.l.b16 %v249
      %v352 = vunpack.c.l.b16 %v250
      %v353 = vunpack.c.l.b16 %v251
      %v354 = vunpack.c.l.b16 %v252
      %v355 = vunpack.c.l.b16 %v253
      %v356 = vunpack.c.l.b16 %v254
      %v357 = vpack.c.b16 %v309, %v308
      %v358 = vpack.c.b16 %v311, %v310
      %v359 = vpack.c.b16 %v313, %v312
      %v360 = vpack.c.b16 %v315, %v314
      %v361 = vpack.c.b16 %v317, %v316
      %v362 = vpack.c.b16 %v319, %v318
      %v363 = vpack.c.b16 %v321, %v320
      %v364 = vpack.c.b16 %v323, %v322
      %v365 = vpack.c.b16 %v325, %v324
      %v366 = vpack.c.b16 %v327, %v326
      %v367 = vpack.c.b16 %v329, %v328
      %v368 = vpack.c.b16 %v331, %v330
      %v369 = vpack.c.b16 %v333, %v332
      %v370 = vpack.c.b16 %v335, %v334
      %v371 = vpack.c.b16 %v337, %v336
      %v372 = vpack.c.b16 %v339, %v338
      %v373 = vpack.c.b16 %v341, %v340
      %v374 = vpack.c.b16 %v343, %v342
      %v375 = vpack.c.b16 %v345, %v344
      %v376 = vpack.c.b16 %v347, %v346
      %v377 = vpack.c.b16 %v349, %v348
      %v378 = vpack.c.b16 %v351, %v350
      %v379 = vpack.c.b16 %v353, %v352
      %v380 = vpack.c.b16 %v355, %v354
      %v381 = vpack.c.b16 %v356, %v356
      %v386 = vunpack.c.l.b16 %v255
      %v387 = vunpack.c.l.b16 %v256
      %v388 = vunpack.c.l.b16 %v257
      %v389 = vunpack.c.l.b16 %v258
      %v390 = vpack.c.b16 %v387, %v386
      %v391 = vpack.c.b16 %v389, %v388
      %vm393 = vcmask 220160
      %v395 = vsel %vm393, %v357, 0
      %v398 = vsel %vm393, %v358, 0
      %v401 = vsel %vm393, %v359, 0
      %v404 = vsel %vm393, %v360, 0
      %v407 = vsel %vm393, %v361, 0
      %v410 = vsel %vm393, %v362, 0
      %v413 = vsel %vm393, %v363, 0
      %v416 = vsel %vm393, %v364, 0
      %v419 = vsel %vm393, %v365, 0
      %v422 = vsel %vm393, %v366, 0
      %v425 = vsel %vm393, %v367, 0
      %v428 = vsel %vm393, %v368, 0
      %v431 = vsel %vm393, %v369, 0
      %v434 = vsel %vm393, %v370, 0
      %v437 = vsel %vm393, %v371, 0
      %v440 = vsel %vm393, %v372, 0
      %v443 = vsel %vm393, %v373, 0
      %v446 = vsel %vm393, %v374, 0
      %v449 = vsel %vm393, %v375, 0
      %v452 = vsel %vm393, %v376, 0
      %v455 = vsel %vm393, %v377, 0
      %v458 = vsel %vm393, %v378, 0
      %v461 = vsel %vm393, %v379, 0
      %v464 = vsel %vm393, %v380, 0
      %v467 = vsel %vm393, %v381, 0
      %vm469 = vcmask 1044480
      %vm470 = vcmask 1045504
      %v471 = vsel %vm469, 4294967295, 65535
      %v472 = vsel %vm470, %v471, 0
      %v474 = vand.u32 %v391, %v472
      %476 = vmatprep.subr.bf16.mxu0 0
      %477 = vmatpush1.bf16.msra.mxu0 0
      %478 = vmatprep.subr.bf16.mxu0 0
      %479 = vmatpush1.bf16.msra.mxu0 0
      %480 = vmatprep.subr.bf16.mxu0 0
      %481 = vmatpush1.bf16.msra.mxu0 0
      %482 = vmatprep.subr.bf16.mxu0 0
      %483 = vmatpush1.bf16.msra.mxu0 0
      %484 = vmatprep.subr.bf16.mxu0 0
      %485 = vmatpush1.bf16.msra.mxu0 0
      %486 = vmatprep.subr.bf16.mxu0 0
      %487 = vmatpush1.bf16.msra.mxu0 0
      %488 = vmatprep.subr.bf16.mxu0 0
      %489 = vmatpush1.bf16.msra.mxu0 %v474
      %490 = vmatprep.subr.bf16.mxu0 0
      %491 = vmatpush1.bf16.msra.mxu0 %v390
      %492 = vmatprep.subr.bf16.mxu0 0
      %493 = vmatpush2.bf16.msra.mxu0 0
      %494 = vmatprep.subr.bf16.mxu0 0
      %495 = vmatpush2.bf16.msra.mxu0 0
      %496 = vmatprep.subr.bf16.mxu0 0
      %497 = vmatpush2.bf16.msra.mxu0 0
      %498 = vmatprep.subr.bf16.mxu0 0
      %499 = vmatpush2.bf16.msra.mxu0 0
      %500 = vmatprep.subr.bf16.mxu0 0
      %501 = vmatpush2.bf16.msra.mxu0 0
      %502 = vmatprep.subr.bf16.mxu0 0
      %503 = vmatpush2.bf16.msra.mxu0 0
      %504 = vmatprep.subr.bf16.mxu0 0
      %505 = vmatpush2.bf16.msra.mxu0 0
      %506 = vmatprep.subr.bf16.mxu0 0
      %507 = vmatpush2.bf16.msra.mxu0 0
      %508 = vmatprep.mubr.bf16.mxu0 0
      %509 = vmatmul.mubr.bf16.gmra.mxu0 %v395
      %v510 = vpop.f32.mrf.mxu0
      %v511 = vadd.f32 0.0, %v510
      %v512 = vpop.f32.mrf.mxu0
      %v513 = vpop.f32.mrf.mxu0
      %v514 = vadd.f32 0.0, %v513
      %v515 = vpop.f32.mrf.mxu0
      %516 = vmatprep.mubr.bf16.mxu0 0
      %517 = vmatmul.mubr.bf16.gmra.mxu0 %v398
      %v518 = vpop.f32.mrf.mxu0
      %v519 = vadd.f32 0.0, %v518
      %v520 = vpop.f32.mrf.mxu0
      %v521 = vpop.f32.mrf.mxu0
      %v522 = vadd.f32 0.0, %v521
      %v523 = vpop.f32.mrf.mxu0
      %524 = vmatprep.mubr.bf16.mxu0 0
      %525 = vmatmul.mubr.bf16.gmra.mxu0 %v401
      %v526 = vpop.f32.mrf.mxu0
      %v527 = vadd.f32 0.0, %v526
      %v528 = vpop.f32.mrf.mxu0
      %v529 = vpop.f32.mrf.mxu0
      %v530 = vadd.f32 0.0, %v529
      %v531 = vpop.f32.mrf.mxu0
      %532 = vmatprep.mubr.bf16.mxu0 0
      %533 = vmatmul.mubr.bf16.gmra.mxu0 %v404
      %v534 = vpop.f32.mrf.mxu0
      %v535 = vadd.f32 0.0, %v534
      %v536 = vpop.f32.mrf.mxu0
      %v537 = vpop.f32.mrf.mxu0
      %v538 = vadd.f32 0.0, %v537
      %v539 = vpop.f32.mrf.mxu0
      %540 = vmatprep.mubr.bf16.mxu0 0
      %541 = vmatmul.mubr.bf16.gmra.mxu0 %v407
      %v542 = vpop.f32.mrf.mxu0
      %v543 = vadd.f32 0.0, %v542
      %v544 = vpop.f32.mrf.mxu0
      %v545 = vpop.f32.mrf.mxu0
      %v546 = vadd.f32 0.0, %v545
      %v547 = vpop.f32.mrf.mxu0
      %548 = vmatprep.mubr.bf16.mxu0 0
      %549 = vmatmul.mubr.bf16.gmra.mxu0 %v410
      %v550 = vpop.f32.mrf.mxu0
      %v551 = vadd.f32 0.0, %v550
      %v552 = vpop.f32.mrf.mxu0
      %v553 = vpop.f32.mrf.mxu0
      %v554 = vadd.f32 0.0, %v553
      %v555 = vpop.f32.mrf.mxu0
      %556 = vmatprep.mubr.bf16.mxu0 0
      %557 = vmatmul.mubr.bf16.gmra.mxu0 %v413
      %v558 = vpop.f32.mrf.mxu0
      %v559 = vadd.f32 0.0, %v558
      %v560 = vpop.f32.mrf.mxu0
      %v561 = vpop.f32.mrf.mxu0
      %v562 = vadd.f32 0.0, %v561
      %v563 = vpop.f32.mrf.mxu0
      %564 = vmatprep.mubr.bf16.mxu0 0
      %565 = vmatmul.mubr.bf16.gmra.mxu0 %v416
      %v566 = vpop.f32.mrf.mxu0
      %v567 = vadd.f32 0.0, %v566
      %v568 = vpop.f32.mrf.mxu0
      %v569 = vpop.f32.mrf.mxu0
      %v570 = vadd.f32 0.0, %v569
      %v571 = vpop.f32.mrf.mxu0
      %572 = vmatprep.mubr.bf16.mxu0 0
      %573 = vmatmul.mubr.bf16.gmra.mxu0 %v419
      %v574 = vpop.f32.mrf.mxu0
      %v575 = vadd.f32 0.0, %v574
      %v576 = vpop.f32.mrf.mxu0
      %v577 = vpop.f32.mrf.mxu0
      %v578 = vadd.f32 0.0, %v577
      %v579 = vpop.f32.mrf.mxu0
      %580 = vmatprep.mubr.bf16.mxu0 0
      %581 = vmatmul.mubr.bf16.gmra.mxu0 %v422
      %v582 = vpop.f32.mrf.mxu0
      %v583 = vadd.f32 0.0, %v582
      %v584 = vpop.f32.mrf.mxu0
      %v585 = vpop.f32.mrf.mxu0
      %v586 = vadd.f32 0.0, %v585
      %v587 = vpop.f32.mrf.mxu0
      %588 = vmatprep.mubr.bf16.mxu0 0
      %589 = vmatmul.mubr.bf16.gmra.mxu0 %v425
      %v590 = vpop.f32.mrf.mxu0
      %v591 = vadd.f32 0.0, %v590
      %v592 = vpop.f32.mrf.mxu0
      %v593 = vpop.f32.mrf.mxu0
      %v594 = vadd.f32 0.0, %v593
      %v595 = vpop.f32.mrf.mxu0
      %596 = vmatprep.mubr.bf16.mxu0 0
      %597 = vmatmul.mubr.bf16.gmra.mxu0 %v428
      %v598 = vpop.f32.mrf.mxu0
      %v599 = vadd.f32 0.0, %v598
      %v600 = vpop.f32.mrf.mxu0
      %v601 = vpop.f32.mrf.mxu0
      %v602 = vadd.f32 0.0, %v601
      %v603 = vpop.f32.mrf.mxu0
      %604 = vmatprep.mubr.bf16.mxu0 0
      %605 = vmatmul.mubr.bf16.gmra.mxu0 %v431
      %v606 = vpop.f32.mrf.mxu0
      %v607 = vadd.f32 0.0, %v606
      %v608 = vpop.f32.mrf.mxu0
      %v609 = vpop.f32.mrf.mxu0
      %v610 = vadd.f32 0.0, %v609
      %v611 = vpop.f32.mrf.mxu0
      %612 = vmatprep.mubr.bf16.mxu0 0
      %613 = vmatmul.mubr.bf16.gmra.mxu0 %v434
      %v614 = vpop.f32.mrf.mxu0
      %v615 = vadd.f32 0.0, %v614
      %v616 = vpop.f32.mrf.mxu0
      %v617 = vpop.f32.mrf.mxu0
      %v618 = vadd.f32 0.0, %v617
      %v619 = vpop.f32.mrf.mxu0
      %620 = vmatprep.mubr.bf16.mxu0 0
      %621 = vmatmul.mubr.bf16.gmra.mxu0 %v437
      %v622 = vpop.f32.mrf.mxu0
      %v623 = vadd.f32 0.0, %v622
      %v624 = vpop.f32.mrf.mxu0
      %v625 = vpop.f32.mrf.mxu0
      %v626 = vadd.f32 0.0, %v625
      %v627 = vpop.f32.mrf.mxu0
      %628 = vmatprep.mubr.bf16.mxu0 0
      %629 = vmatmul.mubr.bf16.gmra.mxu0 %v440
      %v630 = vpop.f32.mrf.mxu0
      %v631 = vadd.f32 0.0, %v630
      %v632 = vpop.f32.mrf.mxu0
      %v633 = vpop.f32.mrf.mxu0
      %v634 = vadd.f32 0.0, %v633
      %v635 = vpop.f32.mrf.mxu0
      %636 = vmatprep.mubr.bf16.mxu0 0
      %637 = vmatmul.mubr.bf16.gmra.mxu0 %v443
      %v638 = vpop.f32.mrf.mxu0
      %v639 = vadd.f32 0.0, %v638
      %v640 = vpop.f32.mrf.mxu0
      %v641 = vpop.f32.mrf.mxu0
      %v642 = vadd.f32 0.0, %v641
      %v643 = vpop.f32.mrf.mxu0
      %644 = vmatprep.mubr.bf16.mxu0 0
      %645 = vmatmul.mubr.bf16.gmra.mxu0 %v446
      %v646 = vpop.f32.mrf.mxu0
      %v647 = vadd.f32 0.0, %v646
      %v648 = vpop.f32.mrf.mxu0
      %v649 = vpop.f32.mrf.mxu0
      %v650 = vadd.f32 0.0, %v649
      %v651 = vpop.f32.mrf.mxu0
      %652 = vmatprep.mubr.bf16.mxu0 0
      %653 = vmatmul.mubr.bf16.gmra.mxu0 %v449
      %v654 = vpop.f32.mrf.mxu0
      %v655 = vadd.f32 0.0, %v654
      %v656 = vpop.f32.mrf.mxu0
      %v657 = vpop.f32.mrf.mxu0
      %v658 = vadd.f32 0.0, %v657
      %v659 = vpop.f32.mrf.mxu0
      %660 = vmatprep.mubr.bf16.mxu0 0
      %661 = vmatmul.mubr.bf16.gmra.mxu0 %v452
      %v662 = vpop.f32.mrf.mxu0
      %v663 = vadd.f32 0.0, %v662
      %v664 = vpop.f32.mrf.mxu0
      %v665 = vpop.f32.mrf.mxu0
      %v666 = vadd.f32 0.0, %v665
      %v667 = vpop.f32.mrf.mxu0
      %668 = vmatprep.mubr.bf16.mxu0 0
      %669 = vmatmul.mubr.bf16.gmra.mxu0 %v455
      %v670 = vpop.f32.mrf.mxu0
      %v671 = vadd.f32 0.0, %v670
      %v672 = vpop.f32.mrf.mxu0
      %v673 = vpop.f32.mrf.mxu0
      %v674 = vadd.f32 0.0, %v673
      %v675 = vpop.f32.mrf.mxu0
      %676 = vmatprep.mubr.bf16.mxu0 0
      %677 = vmatmul.mubr.bf16.gmra.mxu0 %v458
      %v678 = vpop.f32.mrf.mxu0
      %v679 = vadd.f32 0.0, %v678
      %v680 = vpop.f32.mrf.mxu0
      %v681 = vpop.f32.mrf.mxu0
      %v682 = vadd.f32 0.0, %v681
      %v683 = vpop.f32.mrf.mxu0
      %684 = vmatprep.mubr.bf16.mxu0 0
      %685 = vmatmul.mubr.bf16.gmra.mxu0 %v461
      %v686 = vpop.f32.mrf.mxu0
      %v687 = vadd.f32 0.0, %v686
      %v688 = vpop.f32.mrf.mxu0
      %v689 = vpop.f32.mrf.mxu0
      %v690 = vadd.f32 0.0, %v689
      %v691 = vpop.f32.mrf.mxu0
      %692 = vmatprep.mubr.bf16.mxu0 0
      %693 = vmatmul.mubr.bf16.gmra.mxu0 %v464
      %v694 = vpop.f32.mrf.mxu0
      %v695 = vadd.f32 0.0, %v694
      %v696 = vpop.f32.mrf.mxu0
      %v697 = vpop.f32.mrf.mxu0
      %v698 = vadd.f32 0.0, %v697
      %v699 = vpop.f32.mrf.mxu0
      %700 = vmatprep.mubr.bf16.mxu0 0
      %701 = vmatmul.mubr.bf16.gmra.mxu0 %v467
      %v702 = vpop.f32.mrf.mxu0
      %v703 = vadd.f32 0.0, %v702
      %v704 = vpop.f32.mrf.mxu0
      %v705 = vpop.f32.mrf.mxu0
      %v706 = vpop.f32.mrf.mxu0
      %707 = vdwg.mxu0
      %s708 = scalar_lea.vmem %s191, 196
      %v709 = vld [vmem:[%s708] sm:$0xf]
      %v710 = vld [vmem:[%s708 + $0x4] sm:$0xf]
      %v711 = vld [vmem:[%s708 + $0x8] sm:$0xf]
      %v712 = vld [vmem:[%s708 + $0xc] sm:$0xf]
      %v713 = vld [vmem:[%s708 + $0x10] sm:$0xf]
      %v714 = vld [vmem:[%s708 + $0x14] sm:$0xf]
      %v715 = vld [vmem:[%s708 + $0x18] sm:$0xf]
      %v716 = vld [vmem:[%s708 + $0x1c] sm:$0xf]
      %v717 = vld [vmem:[%s708 + $0x20] sm:$0xf]
      %v718 = vld [vmem:[%s708 + $0x24] sm:$0xf]
      %v719 = vld [vmem:[%s708 + $0x28] sm:$0xf]
      %v720 = vld [vmem:[%s708 + $0x2c] sm:$0xf]
      %v721 = vld [vmem:[%s708 + $0x30] sm:$0xf]
      %v722 = vld [vmem:[%s708 + $0x34] sm:$0xf]
      %v723 = vld [vmem:[%s708 + $0x38] sm:$0xf]
      %v724 = vld [vmem:[%s708 + $0x3c] sm:$0xf]
      %v725 = vld [vmem:[%s708 + $0x40] sm:$0xf]
      %v726 = vld [vmem:[%s708 + $0x44] sm:$0xf]
      %v727 = vld [vmem:[%s708 + $0x48] sm:$0xf]
      %v728 = vld [vmem:[%s708 + $0x4c] sm:$0xf]
      %v729 = vld [vmem:[%s708 + $0x50] sm:$0xf]
      %v730 = vld [vmem:[%s708 + $0x54] sm:$0xf]
      %v731 = vld [vmem:[%s708 + $0x58] sm:$0xf]
      %v732 = vld [vmem:[%s708 + $0x5c] sm:$0xf]
      %v733 = vld [vmem:[%s708 + $0x60] sm:$0xf]
      %v734 = vld [vmem:[%s708 + $0x64] sm:$0xf]
      %v735 = vld [vmem:[%s708 + $0x68] sm:$0xf]
      %v736 = vld [vmem:[%s708 + $0x6c] sm:$0xf]
      %v737 = vld [vmem:[%s708 + $0x70] sm:$0xf]
      %v738 = vld [vmem:[%s708 + $0x74] sm:$0xf]
      %v739 = vld [vmem:[%s708 + $0x78] sm:$0xf]
      %v740 = vld [vmem:[%s708 + $0x7c] sm:$0xf]
      %v741 = vld [vmem:[%s708 + $0x80] sm:$0xf]
      %v742 = vld [vmem:[%s708 + $0x84] sm:$0xf]
      %v743 = vld [vmem:[%s708 + $0x88] sm:$0xf]
      %v744 = vld [vmem:[%s708 + $0x8c] sm:$0xf]
      %v745 = vld [vmem:[%s708 + $0x90] sm:$0xf]
      %v746 = vld [vmem:[%s708 + $0x94] sm:$0xf]
      %v747 = vld [vmem:[%s708 + $0x98] sm:$0xf]
      %v748 = vld [vmem:[%s708 + $0x9c] sm:$0xf]
      %v749 = vld [vmem:[%s708 + $0xa0] sm:$0xf]
      %v750 = vld [vmem:[%s708 + $0xa4] sm:$0xf]
      %v751 = vld [vmem:[%s708 + $0xa8] sm:$0xf]
      %v752 = vld [vmem:[%s708 + $0xac] sm:$0xf]
      %v753 = vld [vmem:[%s708 + $0xb0] sm:$0xf]
      %v754 = vld [vmem:[%s708 + $0xb4] sm:$0xf]
      %v755 = vld [vmem:[%s708 + $0xb8] sm:$0xf]
      %v756 = vld [vmem:[%s708 + $0xbc] sm:$0xf]
      %v757 = vld [vmem:[%s708 + $0xc0] sm:$0xf]
      %v807 = vunpack.c.l.b16 %v709
      %v808 = vunpack.c.l.b16 %v710
      %v809 = vunpack.c.l.b16 %v711
      %v810 = vunpack.c.l.b16 %v712
      %v811 = vunpack.c.l.b16 %v713
      %v812 = vunpack.c.l.b16 %v714
      %v813 = vunpack.c.l.b16 %v715
      %v814 = vunpack.c.l.b16 %v716
      %v815 = vunpack.c.l.b16 %v717
      %v816 = vunpack.c.l.b16 %v718
      %v817 = vunpack.c.l.b16 %v719
      %v818 = vunpack.c.l.b16 %v720
      %v819 = vunpack.c.l.b16 %v721
      %v820 = vunpack.c.l.b16 %v722
      %v821 = vunpack.c.l.b16 %v723
      %v822 = vunpack.c.l.b16 %v724
      %v823 = vunpack.c.l.b16 %v725
      %v824 = vunpack.c.l.b16 %v726
      %v825 = vunpack.c.l.b16 %v727
      %v826 = vunpack.c.l.b16 %v728
      %v827 = vunpack.c.l.b16 %v729
      %v828 = vunpack.c.l.b16 %v730
      %v829 = vunpack.c.l.b16 %v731
      %v830 = vunpack.c.l.b16 %v732
      %v831 = vunpack.c.l.b16 %v733
      %v832 = vunpack.c.l.b16 %v734
      %v833 = vunpack.c.l.b16 %v735
      %v834 = vunpack.c.l.b16 %v736
      %v835 = vunpack.c.l.b16 %v737
      %v836 = vunpack.c.l.b16 %v738
      %v837 = vunpack.c.l.b16 %v739
      %v838 = vunpack.c.l.b16 %v740
      %v839 = vunpack.c.l.b16 %v741
      %v840 = vunpack.c.l.b16 %v742
      %v841 = vunpack.c.l.b16 %v743
      %v842 = vunpack.c.l.b16 %v744
      %v843 = vunpack.c.l.b16 %v745
      %v844 = vunpack.c.l.b16 %v746
      %v845 = vunpack.c.l.b16 %v747
      %v846 = vunpack.c.l.b16 %v748
      %v847 = vunpack.c.l.b16 %v749
      %v848 = vunpack.c.l.b16 %v750
      %v849 = vunpack.c.l.b16 %v751
      %v850 = vunpack.c.l.b16 %v752
      %v851 = vunpack.c.l.b16 %v753
      %v852 = vunpack.c.l.b16 %v754
      %v853 = vunpack.c.l.b16 %v755
      %v854 = vunpack.c.l.b16 %v756
      %v855 = vunpack.c.l.b16 %v757
      %v856 = vpack.c.b16 %v808, %v807
      %v857 = vpack.c.b16 %v810, %v809
      %v858 = vpack.c.b16 %v812, %v811
      %v859 = vpack.c.b16 %v814, %v813
      %v860 = vpack.c.b16 %v816, %v815
      %v861 = vpack.c.b16 %v818, %v817
      %v862 = vpack.c.b16 %v820, %v819
      %v863 = vpack.c.b16 %v822, %v821
      %v864 = vpack.c.b16 %v824, %v823
      %v865 = vpack.c.b16 %v826, %v825
      %v866 = vpack.c.b16 %v828, %v827
      %v867 = vpack.c.b16 %v830, %v829
      %v868 = vpack.c.b16 %v832, %v831
      %v869 = vpack.c.b16 %v834, %v833
      %v870 = vpack.c.b16 %v836, %v835
      %v871 = vpack.c.b16 %v838, %v837
      %v872 = vpack.c.b16 %v840, %v839
      %v873 = vpack.c.b16 %v842, %v841
      %v874 = vpack.c.b16 %v844, %v843
      %v875 = vpack.c.b16 %v846, %v845
      %v876 = vpack.c.b16 %v848, %v847
      %v877 = vpack.c.b16 %v850, %v849
      %v878 = vpack.c.b16 %v852, %v851
      %v879 = vpack.c.b16 %v854, %v853
      %v880 = vpack.c.b16 %v855, %v855
      %v882 = vsel %vm393, %v856, 0
      %v885 = vsel %vm393, %v857, 0
      %v888 = vsel %vm393, %v858, 0
      %v891 = vsel %vm393, %v859, 0
      %v894 = vsel %vm393, %v860, 0
      %v897 = vsel %vm393, %v861, 0
      %v900 = vsel %vm393, %v862, 0
      %v903 = vsel %vm393, %v863, 0
      %v906 = vsel %vm393, %v864, 0
      %v909 = vsel %vm393, %v865, 0
      %v912 = vsel %vm393, %v866, 0
      %v915 = vsel %vm393, %v867, 0
      %v918 = vsel %vm393, %v868, 0
      %v921 = vsel %vm393, %v869, 0
      %v924 = vsel %vm393, %v870, 0
      %v927 = vsel %vm393, %v871, 0
      %v930 = vsel %vm393, %v872, 0
      %v933 = vsel %vm393, %v873, 0
      %v936 = vsel %vm393, %v874, 0
      %v939 = vsel %vm393, %v875, 0
      %v942 = vsel %vm393, %v876, 0
      %v945 = vsel %vm393, %v877, 0
      %v948 = vsel %vm393, %v878, 0
      %v951 = vsel %vm393, %v879, 0
      %v954 = vsel %vm393, %v880, 0
      %956 = vmatprep.subr.bf16.mxu0 0
      %957 = vmatpush1.bf16.msra.mxu0 0
      %958 = vmatprep.subr.bf16.mxu0 0
      %959 = vmatpush1.bf16.msra.mxu0 0
      %960 = vmatprep.subr.bf16.mxu0 0
      %961 = vmatpush1.bf16.msra.mxu0 0
      %962 = vmatprep.subr.bf16.mxu0 0
      %963 = vmatpush1.bf16.msra.mxu0 0
      %964 = vmatprep.subr.bf16.mxu0 0
      %965 = vmatpush1.bf16.msra.mxu0 0
      %966 = vmatprep.subr.bf16.mxu0 0
      %967 = vmatpush1.bf16.msra.mxu0 0
      %968 = vmatprep.subr.bf16.mxu0 0
      %969 = vmatpush1.bf16.msra.mxu0 %v474
      %970 = vmatprep.subr.bf16.mxu0 0
      %971 = vmatpush1.bf16.msra.mxu0 %v390
      %972 = vmatprep.subr.bf16.mxu0 0
      %973 = vmatpush2.bf16.msra.mxu0 0
      %974 = vmatprep.subr.bf16.mxu0 0
      %975 = vmatpush2.bf16.msra.mxu0 0
      %976 = vmatprep.subr.bf16.mxu0 0
      %977 = vmatpush2.bf16.msra.mxu0 0
      %978 = vmatprep.subr.bf16.mxu0 0
      %979 = vmatpush2.bf16.msra.mxu0 0
      %980 = vmatprep.subr.bf16.mxu0 0
      %981 = vmatpush2.bf16.msra.mxu0 0
      %982 = vmatprep.subr.bf16.mxu0 0
      %983 = vmatpush2.bf16.msra.mxu0 0
      %984 = vmatprep.subr.bf16.mxu0 0
      %985 = vmatpush2.bf16.msra.mxu0 0
      %986 = vmatprep.subr.bf16.mxu0 0
      %987 = vmatpush2.bf16.msra.mxu0 0
      %988 = vmatprep.mubr.bf16.mxu0 0
      %989 = vmatmul.mubr.bf16.gmra.mxu0 %v882
      %v990 = vpop.f32.mrf.mxu0
      %v991 = vadd.f32 0.0, %v990
      %v992 = vpop.f32.mrf.mxu0
      %v993 = vpop.f32.mrf.mxu0
      %v994 = vadd.f32 0.0, %v993
      %v995 = vpop.f32.mrf.mxu0
      %996 = vmatprep.mubr.bf16.mxu0 0
      %997 = vmatmul.mubr.bf16.gmra.mxu0 %v885
      %v998 = vpop.f32.mrf.mxu0
      %v999 = vadd.f32 0.0, %v998
      %v1000 = vpop.f32.mrf.mxu0
      %v1001 = vpop.f32.mrf.mxu0
      %v1002 = vadd.f32 0.0, %v1001
      %v1003 = vpop.f32.mrf.mxu0
      %1004 = vmatprep.mubr.bf16.mxu0 0
      %1005 = vmatmul.mubr.bf16.gmra.mxu0 %v888
      %v1006 = vpop.f32.mrf.mxu0
      %v1007 = vadd.f32 0.0, %v1006
      %v1008 = vpop.f32.mrf.mxu0
      %v1009 = vpop.f32.mrf.mxu0
      %v1010 = vadd.f32 0.0, %v1009
      %v1011 = vpop.f32.mrf.mxu0
      %1012 = vmatprep.mubr.bf16.mxu0 0
      %1013 = vmatmul.mubr.bf16.gmra.mxu0 %v891
      %v1014 = vpop.f32.mrf.mxu0
      %v1015 = vadd.f32 0.0, %v1014
      %v1016 = vpop.f32.mrf.mxu0
      %v1017 = vpop.f32.mrf.mxu0
      %v1018 = vadd.f32 0.0, %v1017
      %v1019 = vpop.f32.mrf.mxu0
      %1020 = vmatprep.mubr.bf16.mxu0 0
      %1021 = vmatmul.mubr.bf16.gmra.mxu0 %v894
      %v1022 = vpop.f32.mrf.mxu0
      %v1023 = vadd.f32 0.0, %v1022
      %v1024 = vpop.f32.mrf.mxu0
      %v1025 = vpop.f32.mrf.mxu0
      %v1026 = vadd.f32 0.0, %v1025
      %v1027 = vpop.f32.mrf.mxu0
      %1028 = vmatprep.mubr.bf16.mxu0 0
      %1029 = vmatmul.mubr.bf16.gmra.mxu0 %v897
      %v1030 = vpop.f32.mrf.mxu0
      %v1031 = vadd.f32 0.0, %v1030
      %v1032 = vpop.f32.mrf.mxu0
      %v1033 = vpop.f32.mrf.mxu0
      %v1034 = vadd.f32 0.0, %v1033
      %v1035 = vpop.f32.mrf.mxu0
      %1036 = vmatprep.mubr.bf16.mxu0 0
      %1037 = vmatmul.mubr.bf16.gmra.mxu0 %v900
      %v1038 = vpop.f32.mrf.mxu0
      %v1039 = vadd.f32 0.0, %v1038
      %v1040 = vpop.f32.mrf.mxu0
      %v1041 = vpop.f32.mrf.mxu0
      %v1042 = vadd.f32 0.0, %v1041
      %v1043 = vpop.f32.mrf.mxu0
      %1044 = vmatprep.mubr.bf16.mxu0 0
      %1045 = vmatmul.mubr.bf16.gmra.mxu0 %v903
      %v1046 = vpop.f32.mrf.mxu0
      %v1047 = vadd.f32 0.0, %v1046
      %v1048 = vpop.f32.mrf.mxu0
      %v1049 = vpop.f32.mrf.mxu0
      %v1050 = vadd.f32 0.0, %v1049
      %v1051 = vpop.f32.mrf.mxu0
      %1052 = vmatprep.mubr.bf16.mxu0 0
      %1053 = vmatmul.mubr.bf16.gmra.mxu0 %v906
      %v1054 = vpop.f32.mrf.mxu0
      %v1055 = vadd.f32 0.0, %v1054
      %v1056 = vpop.f32.mrf.mxu0
      %v1057 = vpop.f32.mrf.mxu0
      %v1058 = vadd.f32 0.0, %v1057
      %v1059 = vpop.f32.mrf.mxu0
      %1060 = vmatprep.mubr.bf16.mxu0 0
      %1061 = vmatmul.mubr.bf16.gmra.mxu0 %v909
      %v1062 = vpop.f32.mrf.mxu0
      %v1063 = vadd.f32 0.0, %v1062
      %v1064 = vpop.f32.mrf.mxu0
      %v1065 = vpop.f32.mrf.mxu0
      %v1066 = vadd.f32 0.0, %v1065
      %v1067 = vpop.f32.mrf.mxu0
      %1068 = vmatprep.mubr.bf16.mxu0 0
      %1069 = vmatmul.mubr.bf16.gmra.mxu0 %v912
      %v1070 = vpop.f32.mrf.mxu0
      %v1071 = vadd.f32 0.0, %v1070
      %v1072 = vpop.f32.mrf.mxu0
      %v1073 = vpop.f32.mrf.mxu0
      %v1074 = vadd.f32 0.0, %v1073
      %v1075 = vpop.f32.mrf.mxu0
      %1076 = vmatprep.mubr.bf16.mxu0 0
      %1077 = vmatmul.mubr.bf16.gmra.mxu0 %v915
      %v1078 = vpop.f32.mrf.mxu0
      %v1079 = vadd.f32 0.0, %v1078
      %v1080 = vpop.f32.mrf.mxu0
      %v1081 = vpop.f32.mrf.mxu0
      %v1082 = vadd.f32 0.0, %v1081
      %v1083 = vpop.f32.mrf.mxu0
      %1084 = vmatprep.mubr.bf16.mxu0 0
      %1085 = vmatmul.mubr.bf16.gmra.mxu0 %v918
      %v1086 = vpop.f32.mrf.mxu0
      %v1087 = vadd.f32 0.0, %v1086
      %v1088 = vpop.f32.mrf.mxu0
      %v1089 = vpop.f32.mrf.mxu0
      %v1090 = vadd.f32 0.0, %v1089
      %v1091 = vpop.f32.mrf.mxu0
      %1092 = vmatprep.mubr.bf16.mxu0 0
      %1093 = vmatmul.mubr.bf16.gmra.mxu0 %v921
      %v1094 = vpop.f32.mrf.mxu0
      %v1095 = vadd.f32 0.0, %v1094
      %v1096 = vpop.f32.mrf.mxu0
      %v1097 = vpop.f32.mrf.mxu0
      %v1098 = vadd.f32 0.0, %v1097
      %v1099 = vpop.f32.mrf.mxu0
      %1100 = vmatprep.mubr.bf16.mxu0 0
      %1101 = vmatmul.mubr.bf16.gmra.mxu0 %v924
      %v1102 = vpop.f32.mrf.mxu0
      %v1103 = vadd.f32 0.0, %v1102
      %v1104 = vpop.f32.mrf.mxu0
      %v1105 = vpop.f32.mrf.mxu0
      %v1106 = vadd.f32 0.0, %v1105
      %v1107 = vpop.f32.mrf.mxu0
      %1108 = vmatprep.mubr.bf16.mxu0 0
      %1109 = vmatmul.mubr.bf16.gmra.mxu0 %v927
      %v1110 = vpop.f32.mrf.mxu0
      %v1111 = vadd.f32 0.0, %v1110
      %v1112 = vpop.f32.mrf.mxu0
      %v1113 = vpop.f32.mrf.mxu0
      %v1114 = vadd.f32 0.0, %v1113
      %v1115 = vpop.f32.mrf.mxu0
      %1116 = vmatprep.mubr.bf16.mxu0 0
      %1117 = vmatmul.mubr.bf16.gmra.mxu0 %v930
      %v1118 = vpop.f32.mrf.mxu0
      %v1119 = vadd.f32 0.0, %v1118
      %v1120 = vpop.f32.mrf.mxu0
      %v1121 = vpop.f32.mrf.mxu0
      %v1122 = vadd.f32 0.0, %v1121
      %v1123 = vpop.f32.mrf.mxu0
      %1124 = vmatprep.mubr.bf16.mxu0 0
      %1125 = vmatmul.mubr.bf16.gmra.mxu0 %v933
      %v1126 = vpop.f32.mrf.mxu0
      %v1127 = vadd.f32 0.0, %v1126
      %v1128 = vpop.f32.mrf.mxu0
      %v1129 = vpop.f32.mrf.mxu0
      %v1130 = vadd.f32 0.0, %v1129
      %v1131 = vpop.f32.mrf.mxu0
      %1132 = vmatprep.mubr.bf16.mxu0 0
      %1133 = vmatmul.mubr.bf16.gmra.mxu0 %v936
      %v1134 = vpop.f32.mrf.mxu0
      %v1135 = vadd.f32 0.0, %v1134
      %v1136 = vpop.f32.mrf.mxu0
      %v1137 = vpop.f32.mrf.mxu0
      %v1138 = vadd.f32 0.0, %v1137
      %v1139 = vpop.f32.mrf.mxu0
      %1140 = vmatprep.mubr.bf16.mxu0 0
      %1141 = vmatmul.mubr.bf16.gmra.mxu0 %v939
      %v1142 = vpop.f32.mrf.mxu0
      %v1143 = vadd.f32 0.0, %v1142
      %v1144 = vpop.f32.mrf.mxu0
      %v1145 = vpop.f32.mrf.mxu0
      %v1146 = vadd.f32 0.0, %v1145
      %v1147 = vpop.f32.mrf.mxu0
      %1148 = vmatprep.mubr.bf16.mxu0 0
      %1149 = vmatmul.mubr.bf16.gmra.mxu0 %v942
      %v1150 = vpop.f32.mrf.mxu0
      %v1151 = vadd.f32 0.0, %v1150
      %v1152 = vpop.f32.mrf.mxu0
      %v1153 = vpop.f32.mrf.mxu0
      %v1154 = vadd.f32 0.0, %v1153
      %v1155 = vpop.f32.mrf.mxu0
      %1156 = vmatprep.mubr.bf16.mxu0 0
      %1157 = vmatmul.mubr.bf16.gmra.mxu0 %v945
      %v1158 = vpop.f32.mrf.mxu0
      %v1159 = vadd.f32 0.0, %v1158
      %v1160 = vpop.f32.mrf.mxu0
      %v1161 = vpop.f32.mrf.mxu0
      %v1162 = vadd.f32 0.0, %v1161
      %v1163 = vpop.f32.mrf.mxu0
      %1164 = vmatprep.mubr.bf16.mxu0 0
      %1165 = vmatmul.mubr.bf16.gmra.mxu0 %v948
      %v1166 = vpop.f32.mrf.mxu0
      %v1167 = vadd.f32 0.0, %v1166
      %v1168 = vpop.f32.mrf.mxu0
      %v1169 = vpop.f32.mrf.mxu0
      %v1170 = vadd.f32 0.0, %v1169
      %v1171 = vpop.f32.mrf.mxu0
      %1172 = vmatprep.mubr.bf16.mxu0 0
      %1173 = vmatmul.mubr.bf16.gmra.mxu0 %v951
      %v1174 = vpop.f32.mrf.mxu0
      %v1175 = vadd.f32 0.0, %v1174
      %v1176 = vpop.f32.mrf.mxu0
      %v1177 = vpop.f32.mrf.mxu0
      %v1178 = vadd.f32 0.0, %v1177
      %v1179 = vpop.f32.mrf.mxu0
      %1180 = vmatprep.mubr.bf16.mxu0 0
      %1181 = vmatmul.mubr.bf16.gmra.mxu0 %v954
      %v1182 = vpop.f32.mrf.mxu0
      %v1183 = vadd.f32 0.0, %v1182
      %v1184 = vpop.f32.mrf.mxu0
      %v1185 = vpop.f32.mrf.mxu0
      %v1186 = vpop.f32.mrf.mxu0
      %1187 = vdwg.mxu0
      %v1188 = vmax.f32 %v511, %v991
      %v1189 = vmax.f32 %v514, %v994
      %v1190 = vmax.f32 %v519, %v999
      %v1191 = vmax.f32 %v522, %v1002
      %v1192 = vmax.f32 %v527, %v1007
      %v1193 = vmax.f32 %v530, %v1010
      %v1194 = vmax.f32 %v535, %v1015
      %v1195 = vmax.f32 %v538, %v1018
      %v1196 = vmax.f32 %v543, %v1023
      %v1197 = vmax.f32 %v546, %v1026
      %v1198 = vmax.f32 %v551, %v1031
      %v1199 = vmax.f32 %v554, %v1034
      %v1200 = vmax.f32 %v559, %v1039
      %v1201 = vmax.f32 %v562, %v1042
      %v1202 = vmax.f32 %v567, %v1047
      %v1203 = vmax.f32 %v570, %v1050
      %v1204 = vmax.f32 %v575, %v1055
      %v1205 = vmax.f32 %v578, %v1058
      %v1206 = vmax.f32 %v583, %v1063
      %v1207 = vmax.f32 %v586, %v1066
      %v1208 = vmax.f32 %v591, %v1071
      %v1209 = vmax.f32 %v594, %v1074
      %v1210 = vmax.f32 %v599, %v1079
      %v1211 = vmax.f32 %v602, %v1082
      %v1212 = vmax.f32 %v607, %v1087
      %v1213 = vmax.f32 %v610, %v1090
      %v1214 = vmax.f32 %v615, %v1095
      %v1215 = vmax.f32 %v618, %v1098
      %v1216 = vmax.f32 %v623, %v1103
      %v1217 = vmax.f32 %v626, %v1106
      %v1218 = vmax.f32 %v631, %v1111
      %v1219 = vmax.f32 %v634, %v1114
      %v1220 = vmax.f32 %v639, %v1119
      %v1221 = vmax.f32 %v642, %v1122
      %v1222 = vmax.f32 %v647, %v1127
      %v1223 = vmax.f32 %v650, %v1130
      %v1224 = vmax.f32 %v655, %v1135
      %v1225 = vmax.f32 %v658, %v1138
      %v1226 = vmax.f32 %v663, %v1143
      %v1227 = vmax.f32 %v666, %v1146
      %v1228 = vmax.f32 %v671, %v1151
      %v1229 = vmax.f32 %v674, %v1154
      %v1230 = vmax.f32 %v679, %v1159
      %v1231 = vmax.f32 %v682, %v1162
      %v1232 = vmax.f32 %v687, %v1167
      %v1233 = vmax.f32 %v690, %v1170
      %v1234 = vmax.f32 %v695, %v1175
      %v1235 = vmax.f32 %v698, %v1178
      %v1236 = vmax.f32 %v703, %v1183
      %s1237 = scalar_lea.vmem %s191, 392
      %v1238 = vld [vmem:[%s1237] sm:$0xf]
      %v1239 = vld [vmem:[%s1237 + $0x4] sm:$0xf]
      %v1240 = vld [vmem:[%s1237 + $0x8] sm:$0xf]
      %v1241 = vld [vmem:[%s1237 + $0xc] sm:$0xf]
      %v1242 = vld [vmem:[%s1237 + $0x10] sm:$0xf]
      %v1243 = vld [vmem:[%s1237 + $0x14] sm:$0xf]
      %v1244 = vld [vmem:[%s1237 + $0x18] sm:$0xf]
      %v1245 = vld [vmem:[%s1237 + $0x1c] sm:$0xf]
      %v1246 = vld [vmem:[%s1237 + $0x20] sm:$0xf]
      %v1247 = vld [vmem:[%s1237 + $0x24] sm:$0xf]
      %v1248 = vld [vmem:[%s1237 + $0x28] sm:$0xf]
      %v1249 = vld [vmem:[%s1237 + $0x2c] sm:$0xf]
      %v1250 = vld [vmem:[%s1237 + $0x30] sm:$0xf]
      %v1251 = vld [vmem:[%s1237 + $0x34] sm:$0xf]
      %v1252 = vld [vmem:[%s1237 + $0x38] sm:$0xf]
      %v1253 = vld [vmem:[%s1237 + $0x3c] sm:$0xf]
      %v1254 = vld [vmem:[%s1237 + $0x40] sm:$0xf]
      %v1255 = vld [vmem:[%s1237 + $0x44] sm:$0xf]
      %v1256 = vld [vmem:[%s1237 + $0x48] sm:$0xf]
      %v1257 = vld [vmem:[%s1237 + $0x4c] sm:$0xf]
      %v1258 = vld [vmem:[%s1237 + $0x50] sm:$0xf]
      %v1259 = vld [vmem:[%s1237 + $0x54] sm:$0xf]
      %v1260 = vld [vmem:[%s1237 + $0x58] sm:$0xf]
      %v1261 = vld [vmem:[%s1237 + $0x5c] sm:$0xf]
      %v1262 = vld [vmem:[%s1237 + $0x60] sm:$0xf]
      %v1263 = vld [vmem:[%s1237 + $0x64] sm:$0xf]
      %v1264 = vld [vmem:[%s1237 + $0x68] sm:$0xf]
      %v1265 = vld [vmem:[%s1237 + $0x6c] sm:$0xf]
      %v1266 = vld [vmem:[%s1237 + $0x70] sm:$0xf]
      %v1267 = vld [vmem:[%s1237 + $0x74] sm:$0xf]
      %v1268 = vld [vmem:[%s1237 + $0x78] sm:$0xf]
      %v1269 = vld [vmem:[%s1237 + $0x7c] sm:$0xf]
      %v1270 = vld [vmem:[%s1237 + $0x80] sm:$0xf]
      %v1271 = vld [vmem:[%s1237 + $0x84] sm:$0xf]
      %v1272 = vld [vmem:[%s1237 + $0x88] sm:$0xf]
      %v1273 = vld [vmem:[%s1237 + $0x8c] sm:$0xf]
      %v1274 = vld [vmem:[%s1237 + $0x90] sm:$0xf]
      %v1275 = vld [vmem:[%s1237 + $0x94] sm:$0xf]
      %v1276 = vld [vmem:[%s1237 + $0x98] sm:$0xf]
      %v1277 = vld [vmem:[%s1237 + $0x9c] sm:$0xf]
      %v1278 = vld [vmem:[%s1237 + $0xa0] sm:$0xf]
      %v1279 = vld [vmem:[%s1237 + $0xa4] sm:$0xf]
      %v1280 = vld [vmem:[%s1237 + $0xa8] sm:$0xf]
      %v1281 = vld [vmem:[%s1237 + $0xac] sm:$0xf]
      %v1282 = vld [vmem:[%s1237 + $0xb0] sm:$0xf]
      %v1283 = vld [vmem:[%s1237 + $0xb4] sm:$0xf]
      %v1284 = vld [vmem:[%s1237 + $0xb8] sm:$0xf]
      %v1285 = vld [vmem:[%s1237 + $0xbc] sm:$0xf]
      %v1286 = vld [vmem:[%s1237 + $0xc0] sm:$0xf]
      %v1336 = vunpack.c.l.b16 %v1238
      %v1337 = vunpack.c.l.b16 %v1239
      %v1338 = vunpack.c.l.b16 %v1240
      %v1339 = vunpack.c.l.b16 %v1241
      %v1340 = vunpack.c.l.b16 %v1242
      %v1341 = vunpack.c.l.b16 %v1243
      %v1342 = vunpack.c.l.b16 %v1244
      %v1343 = vunpack.c.l.b16 %v1245
      %v1344 = vunpack.c.l.b16 %v1246
      %v1345 = vunpack.c.l.b16 %v1247
      %v1346 = vunpack.c.l.b16 %v1248
      %v1347 = vunpack.c.l.b16 %v1249
      %v1348 = vunpack.c.l.b16 %v1250
      %v1349 = vunpack.c.l.b16 %v1251
      %v1350 = vunpack.c.l.b16 %v1252
      %v1351 = vunpack.c.l.b16 %v1253
      %v1352 = vunpack.c.l.b16 %v1254
      %v1353 = vunpack.c.l.b16 %v1255
      %v1354 = vunpack.c.l.b16 %v1256
      %v1355 = vunpack.c.l.b16 %v1257
      %v1356 = vunpack.c.l.b16 %v1258
      %v1357 = vunpack.c.l.b16 %v1259
      %v1358 = vunpack.c.l.b16 %v1260
      %v1359 = vunpack.c.l.b16 %v1261
      %v1360 = vunpack.c.l.b16 %v1262
      %v1361 = vunpack.c.l.b16 %v1263
      %v1362 = vunpack.c.l.b16 %v1264
      %v1363 = vunpack.c.l.b16 %v1265
      %v1364 = vunpack.c.l.b16 %v1266
      %v1365 = vunpack.c.l.b16 %v1267
      %v1366 = vunpack.c.l.b16 %v1268
      %v1367 = vunpack.c.l.b16 %v1269
      %v1368 = vunpack.c.l.b16 %v1270
      %v1369 = vunpack.c.l.b16 %v1271
      %v1370 = vunpack.c.l.b16 %v1272
      %v1371 = vunpack.c.l.b16 %v1273
      %v1372 = vunpack.c.l.b16 %v1274
      %v1373 = vunpack.c.l.b16 %v1275
      %v1374 = vunpack.c.l.b16 %v1276
      %v1375 = vunpack.c.l.b16 %v1277
      %v1376 = vunpack.c.l.b16 %v1278
      %v1377 = vunpack.c.l.b16 %v1279
      %v1378 = vunpack.c.l.b16 %v1280
      %v1379 = vunpack.c.l.b16 %v1281
      %v1380 = vunpack.c.l.b16 %v1282
      %v1381 = vunpack.c.l.b16 %v1283
      %v1382 = vunpack.c.l.b16 %v1284
      %v1383 = vunpack.c.l.b16 %v1285
      %v1384 = vunpack.c.l.b16 %v1286
      %v1385 = vpack.c.b16 %v1337, %v1336
      %v1386 = vpack.c.b16 %v1339, %v1338
      %v1387 = vpack.c.b16 %v1341, %v1340
      %v1388 = vpack.c.b16 %v1343, %v1342
      %v1389 = vpack.c.b16 %v1345, %v1344
      %v1390 = vpack.c.b16 %v1347, %v1346
      %v1391 = vpack.c.b16 %v1349, %v1348
      %v1392 = vpack.c.b16 %v1351, %v1350
      %v1393 = vpack.c.b16 %v1353, %v1352
      %v1394 = vpack.c.b16 %v1355, %v1354
      %v1395 = vpack.c.b16 %v1357, %v1356
      %v1396 = vpack.c.b16 %v1359, %v1358
      %v1397 = vpack.c.b16 %v1361, %v1360
      %v1398 = vpack.c.b16 %v1363, %v1362
      %v1399 = vpack.c.b16 %v1365, %v1364
      %v1400 = vpack.c.b16 %v1367, %v1366
      %v1401 = vpack.c.b16 %v1369, %v1368
      %v1402 = vpack.c.b16 %v1371, %v1370
      %v1403 = vpack.c.b16 %v1373, %v1372
      %v1404 = vpack.c.b16 %v1375, %v1374
      %v1405 = vpack.c.b16 %v1377, %v1376
      %v1406 = vpack.c.b16 %v1379, %v1378
      %v1407 = vpack.c.b16 %v1381, %v1380
      %v1408 = vpack.c.b16 %v1383, %v1382
      %v1409 = vpack.c.b16 %v1384, %v1384
      %v1411 = vsel %vm393, %v1385, 0
      %v1414 = vsel %vm393, %v1386, 0
      %v1417 = vsel %vm393, %v1387, 0
      %v1420 = vsel %vm393, %v1388, 0
      %v1423 = vsel %vm393, %v1389, 0
      %v1426 = vsel %vm393, %v1390, 0
      %v1429 = vsel %vm393, %v1391, 0
      %v1432 = vsel %vm393, %v1392, 0
      %v1435 = vsel %vm393, %v1393, 0
      %v1438 = vsel %vm393, %v1394, 0
      %v1441 = vsel %vm393, %v1395, 0
      %v1444 = vsel %vm393, %v1396, 0
      %v1447 = vsel %vm393, %v1397, 0
      %v1450 = vsel %vm393, %v1398, 0
      %v1453 = vsel %vm393, %v1399, 0
      %v1456 = vsel %vm393, %v1400, 0
      %v1459 = vsel %vm393, %v1401, 0
      %v1462 = vsel %vm393, %v1402, 0
      %v1465 = vsel %vm393, %v1403, 0
      %v1468 = vsel %vm393, %v1404, 0
      %v1471 = vsel %vm393, %v1405, 0
      %v1474 = vsel %vm393, %v1406, 0
      %v1477 = vsel %vm393, %v1407, 0
      %v1480 = vsel %vm393, %v1408, 0
      %v1483 = vsel %vm393, %v1409, 0
      %1485 = vmatprep.subr.bf16.mxu0 0
      %1486 = vmatpush1.bf16.msra.mxu0 0
      %1487 = vmatprep.subr.bf16.mxu0 0
      %1488 = vmatpush1.bf16.msra.mxu0 0
      %1489 = vmatprep.subr.bf16.mxu0 0
      %1490 = vmatpush1.bf16.msra.mxu0 0
      %1491 = vmatprep.subr.bf16.mxu0 0
      %1492 = vmatpush1.bf16.msra.mxu0 0
      %1493 = vmatprep.subr.bf16.mxu0 0
      %1494 = vmatpush1.bf16.msra.mxu0 0
      %1495 = vmatprep.subr.bf16.mxu0 0
      %1496 = vmatpush1.bf16.msra.mxu0 0
      %1497 = vmatprep.subr.bf16.mxu0 0
      %1498 = vmatpush1.bf16.msra.mxu0 %v474
      %1499 = vmatprep.subr.bf16.mxu0 0
      %1500 = vmatpush1.bf16.msra.mxu0 %v390
      %1501 = vmatprep.subr.bf16.mxu0 0
      %1502 = vmatpush2.bf16.msra.mxu0 0
      %1503 = vmatprep.subr.bf16.mxu0 0
      %1504 = vmatpush2.bf16.msra.mxu0 0
      %1505 = vmatprep.subr.bf16.mxu0 0
      %1506 = vmatpush2.bf16.msra.mxu0 0
      %1507 = vmatprep.subr.bf16.mxu0 0
      %1508 = vmatpush2.bf16.msra.mxu0 0
      %1509 = vmatprep.subr.bf16.mxu0 0
      %1510 = vmatpush2.bf16.msra.mxu0 0
      %1511 = vmatprep.subr.bf16.mxu0 0
      %1512 = vmatpush2.bf16.msra.mxu0 0
      %1513 = vmatprep.subr.bf16.mxu0 0
      %1514 = vmatpush2.bf16.msra.mxu0 0
      %1515 = vmatprep.subr.bf16.mxu0 0
      %1516 = vmatpush2.bf16.msra.mxu0 0
      %1517 = vmatprep.mubr.bf16.mxu0 0
      %1518 = vmatmul.mubr.bf16.gmra.mxu0 %v1411
      %v1519 = vpop.f32.mrf.mxu0
      %v1520 = vadd.f32 0.0, %v1519
      %v1521 = vpop.f32.mrf.mxu0
      %v1522 = vpop.f32.mrf.mxu0
      %v1523 = vadd.f32 0.0, %v1522
      %v1524 = vpop.f32.mrf.mxu0
      %1525 = vmatprep.mubr.bf16.mxu0 0
      %1526 = vmatmul.mubr.bf16.gmra.mxu0 %v1414
      %v1527 = vpop.f32.mrf.mxu0
      %v1528 = vadd.f32 0.0, %v1527
      %v1529 = vpop.f32.mrf.mxu0
      %v1530 = vpop.f32.mrf.mxu0
      %v1531 = vadd.f32 0.0, %v1530
      %v1532 = vpop.f32.mrf.mxu0
      %1533 = vmatprep.mubr.bf16.mxu0 0
      %1534 = vmatmul.mubr.bf16.gmra.mxu0 %v1417
      %v1535 = vpop.f32.mrf.mxu0
      %v1536 = vadd.f32 0.0, %v1535
      %v1537 = vpop.f32.mrf.mxu0
      %v1538 = vpop.f32.mrf.mxu0
      %v1539 = vadd.f32 0.0, %v1538
      %v1540 = vpop.f32.mrf.mxu0
      %1541 = vmatprep.mubr.bf16.mxu0 0
      %1542 = vmatmul.mubr.bf16.gmra.mxu0 %v1420
      %v1543 = vpop.f32.mrf.mxu0
      %v1544 = vadd.f32 0.0, %v1543
      %v1545 = vpop.f32.mrf.mxu0
      %v1546 = vpop.f32.mrf.mxu0
      %v1547 = vadd.f32 0.0, %v1546
      %v1548 = vpop.f32.mrf.mxu0
      %1549 = vmatprep.mubr.bf16.mxu0 0
      %1550 = vmatmul.mubr.bf16.gmra.mxu0 %v1423
      %v1551 = vpop.f32.mrf.mxu0
      %v1552 = vadd.f32 0.0, %v1551
      %v1553 = vpop.f32.mrf.mxu0
      %v1554 = vpop.f32.mrf.mxu0
      %v1555 = vadd.f32 0.0, %v1554
      %v1556 = vpop.f32.mrf.mxu0
      %1557 = vmatprep.mubr.bf16.mxu0 0
      %1558 = vmatmul.mubr.bf16.gmra.mxu0 %v1426
      %v1559 = vpop.f32.mrf.mxu0
      %v1560 = vadd.f32 0.0, %v1559
      %v1561 = vpop.f32.mrf.mxu0
      %v1562 = vpop.f32.mrf.mxu0
      %v1563 = vadd.f32 0.0, %v1562
      %v1564 = vpop.f32.mrf.mxu0
      %1565 = vmatprep.mubr.bf16.mxu0 0
      %1566 = vmatmul.mubr.bf16.gmra.mxu0 %v1429
      %v1567 = vpop.f32.mrf.mxu0
      %v1568 = vadd.f32 0.0, %v1567
      %v1569 = vpop.f32.mrf.mxu0
      %v1570 = vpop.f32.mrf.mxu0
      %v1571 = vadd.f32 0.0, %v1570
      %v1572 = vpop.f32.mrf.mxu0
      %1573 = vmatprep.mubr.bf16.mxu0 0
      %1574 = vmatmul.mubr.bf16.gmra.mxu0 %v1432
      %v1575 = vpop.f32.mrf.mxu0
      %v1576 = vadd.f32 0.0, %v1575
      %v1577 = vpop.f32.mrf.mxu0
      %v1578 = vpop.f32.mrf.mxu0
      %v1579 = vadd.f32 0.0, %v1578
      %v1580 = vpop.f32.mrf.mxu0
      %1581 = vmatprep.mubr.bf16.mxu0 0
      %1582 = vmatmul.mubr.bf16.gmra.mxu0 %v1435
      %v1583 = vpop.f32.mrf.mxu0
      %v1584 = vadd.f32 0.0, %v1583
      %v1585 = vpop.f32.mrf.mxu0
      %v1586 = vpop.f32.mrf.mxu0
      %v1587 = vadd.f32 0.0, %v1586
      %v1588 = vpop.f32.mrf.mxu0
      %1589 = vmatprep.mubr.bf16.mxu0 0
      %1590 = vmatmul.mubr.bf16.gmra.mxu0 %v1438
      %v1591 = vpop.f32.mrf.mxu0
      %v1592 = vadd.f32 0.0, %v1591
      %v1593 = vpop.f32.mrf.mxu0
      %v1594 = vpop.f32.mrf.mxu0
      %v1595 = vadd.f32 0.0, %v1594
      %v1596 = vpop.f32.mrf.mxu0
      %1597 = vmatprep.mubr.bf16.mxu0 0
      %1598 = vmatmul.mubr.bf16.gmra.mxu0 %v1441
      %v1599 = vpop.f32.mrf.mxu0
      %v1600 = vadd.f32 0.0, %v1599
      %v1601 = vpop.f32.mrf.mxu0
      %v1602 = vpop.f32.mrf.mxu0
      %v1603 = vadd.f32 0.0, %v1602
      %v1604 = vpop.f32.mrf.mxu0
      %1605 = vmatprep.mubr.bf16.mxu0 0
      %1606 = vmatmul.mubr.bf16.gmra.mxu0 %v1444
      %v1607 = vpop.f32.mrf.mxu0
      %v1608 = vadd.f32 0.0, %v1607
      %v1609 = vpop.f32.mrf.mxu0
      %v1610 = vpop.f32.mrf.mxu0
      %v1611 = vadd.f32 0.0, %v1610
      %v1612 = vpop.f32.mrf.mxu0
      %1613 = vmatprep.mubr.bf16.mxu0 0
      %1614 = vmatmul.mubr.bf16.gmra.mxu0 %v1447
      %v1615 = vpop.f32.mrf.mxu0
      %v1616 = vadd.f32 0.0, %v1615
      %v1617 = vpop.f32.mrf.mxu0
      %v1618 = vpop.f32.mrf.mxu0
      %v1619 = vadd.f32 0.0, %v1618
      %v1620 = vpop.f32.mrf.mxu0
      %1621 = vmatprep.mubr.bf16.mxu0 0
      %1622 = vmatmul.mubr.bf16.gmra.mxu0 %v1450
      %v1623 = vpop.f32.mrf.mxu0
      %v1624 = vadd.f32 0.0, %v1623
      %v1625 = vpop.f32.mrf.mxu0
      %v1626 = vpop.f32.mrf.mxu0
      %v1627 = vadd.f32 0.0, %v1626
      %v1628 = vpop.f32.mrf.mxu0
      %1629 = vmatprep.mubr.bf16.mxu0 0
      %1630 = vmatmul.mubr.bf16.gmra.mxu0 %v1453
      %v1631 = vpop.f32.mrf.mxu0
      %v1632 = vadd.f32 0.0, %v1631
      %v1633 = vpop.f32.mrf.mxu0
      %v1634 = vpop.f32.mrf.mxu0
      %v1635 = vadd.f32 0.0, %v1634
      %v1636 = vpop.f32.mrf.mxu0
      %1637 = vmatprep.mubr.bf16.mxu0 0
      %1638 = vmatmul.mubr.bf16.gmra.mxu0 %v1456
      %v1639 = vpop.f32.mrf.mxu0
      %v1640 = vadd.f32 0.0, %v1639
      %v1641 = vpop.f32.mrf.mxu0
      %v1642 = vpop.f32.mrf.mxu0
      %v1643 = vadd.f32 0.0, %v1642
      %v1644 = vpop.f32.mrf.mxu0
      %1645 = vmatprep.mubr.bf16.mxu0 0
      %1646 = vmatmul.mubr.bf16.gmra.mxu0 %v1459
      %v1647 = vpop.f32.mrf.mxu0
      %v1648 = vadd.f32 0.0, %v1647
      %v1649 = vpop.f32.mrf.mxu0
      %v1650 = vpop.f32.mrf.mxu0
      %v1651 = vadd.f32 0.0, %v1650
      %v1652 = vpop.f32.mrf.mxu0
      %1653 = vmatprep.mubr.bf16.mxu0 0
      %1654 = vmatmul.mubr.bf16.gmra.mxu0 %v1462
      %v1655 = vpop.f32.mrf.mxu0
      %v1656 = vadd.f32 0.0, %v1655
      %v1657 = vpop.f32.mrf.mxu0
      %v1658 = vpop.f32.mrf.mxu0
      %v1659 = vadd.f32 0.0, %v1658
      %v1660 = vpop.f32.mrf.mxu0
      %1661 = vmatprep.mubr.bf16.mxu0 0
      %1662 = vmatmul.mubr.bf16.gmra.mxu0 %v1465
      %v1663 = vpop.f32.mrf.mxu0
      %v1664 = vadd.f32 0.0, %v1663
      %v1665 = vpop.f32.mrf.mxu0
      %v1666 = vpop.f32.mrf.mxu0
      %v1667 = vadd.f32 0.0, %v1666
      %v1668 = vpop.f32.mrf.mxu0
      %1669 = vmatprep.mubr.bf16.mxu0 0
      %1670 = vmatmul.mubr.bf16.gmra.mxu0 %v1468
      %v1671 = vpop.f32.mrf.mxu0
      %v1672 = vadd.f32 0.0, %v1671
      %v1673 = vpop.f32.mrf.mxu0
      %v1674 = vpop.f32.mrf.mxu0
      %v1675 = vadd.f32 0.0, %v1674
      %v1676 = vpop.f32.mrf.mxu0
      %1677 = vmatprep.mubr.bf16.mxu0 0
      %1678 = vmatmul.mubr.bf16.gmra.mxu0 %v1471
      %v1679 = vpop.f32.mrf.mxu0
      %v1680 = vadd.f32 0.0, %v1679
      %v1681 = vpop.f32.mrf.mxu0
      %v1682 = vpop.f32.mrf.mxu0
      %v1683 = vadd.f32 0.0, %v1682
      %v1684 = vpop.f32.mrf.mxu0
      %1685 = vmatprep.mubr.bf16.mxu0 0
      %1686 = vmatmul.mubr.bf16.gmra.mxu0 %v1474
      %v1687 = vpop.f32.mrf.mxu0
      %v1688 = vadd.f32 0.0, %v1687
      %v1689 = vpop.f32.mrf.mxu0
      %v1690 = vpop.f32.mrf.mxu0
      %v1691 = vadd.f32 0.0, %v1690
      %v1692 = vpop.f32.mrf.mxu0
      %1693 = vmatprep.mubr.bf16.mxu0 0
      %1694 = vmatmul.mubr.bf16.gmra.mxu0 %v1477
      %v1695 = vpop.f32.mrf.mxu0
      %v1696 = vadd.f32 0.0, %v1695
      %v1697 = vpop.f32.mrf.mxu0
      %v1698 = vpop.f32.mrf.mxu0
      %v1699 = vadd.f32 0.0, %v1698
      %v1700 = vpop.f32.mrf.mxu0
      %1701 = vmatprep.mubr.bf16.mxu0 0
      %1702 = vmatmul.mubr.bf16.gmra.mxu0 %v1480
      %v1703 = vpop.f32.mrf.mxu0
      %v1704 = vadd.f32 0.0, %v1703
      %v1705 = vpop.f32.mrf.mxu0
      %v1706 = vpop.f32.mrf.mxu0
      %v1707 = vadd.f32 0.0, %v1706
      %v1708 = vpop.f32.mrf.mxu0
      %1709 = vmatprep.mubr.bf16.mxu0 0
      %1710 = vmatmul.mubr.bf16.gmra.mxu0 %v1483
      %v1711 = vpop.f32.mrf.mxu0
      %v1712 = vadd.f32 0.0, %v1711
      %v1713 = vpop.f32.mrf.mxu0
      %v1714 = vpop.f32.mrf.mxu0
      %v1715 = vpop.f32.mrf.mxu0
      %1716 = vdwg.mxu0
      %v1717 = vmax.f32 %v1188, %v1520
      %v1718 = vmax.f32 %v1189, %v1523
      %v1719 = vmax.f32 %v1190, %v1528
      %v1720 = vmax.f32 %v1191, %v1531
      %v1721 = vmax.f32 %v1192, %v1536
      %v1722 = vmax.f32 %v1193, %v1539
      %v1723 = vmax.f32 %v1194, %v1544
      %v1724 = vmax.f32 %v1195, %v1547
      %v1725 = vmax.f32 %v1196, %v1552
      %v1726 = vmax.f32 %v1197, %v1555
      %v1727 = vmax.f32 %v1198, %v1560
      %v1728 = vmax.f32 %v1199, %v1563
      %v1729 = vmax.f32 %v1200, %v1568
      %v1730 = vmax.f32 %v1201, %v1571
      %v1731 = vmax.f32 %v1202, %v1576
      %v1732 = vmax.f32 %v1203, %v1579
      %v1733 = vmax.f32 %v1204, %v1584
      %v1734 = vmax.f32 %v1205, %v1587
      %v1735 = vmax.f32 %v1206, %v1592
      %v1736 = vmax.f32 %v1207, %v1595
      %v1737 = vmax.f32 %v1208, %v1600
      %v1738 = vmax.f32 %v1209, %v1603
      %v1739 = vmax.f32 %v1210, %v1608
      %v1740 = vmax.f32 %v1211, %v1611
      %v1741 = vmax.f32 %v1212, %v1616
      %v1742 = vmax.f32 %v1213, %v1619
      %v1743 = vmax.f32 %v1214, %v1624
      %v1744 = vmax.f32 %v1215, %v1627
      %v1745 = vmax.f32 %v1216, %v1632
      %v1746 = vmax.f32 %v1217, %v1635
      %v1747 = vmax.f32 %v1218, %v1640
      %v1748 = vmax.f32 %v1219, %v1643
      %v1749 = vmax.f32 %v1220, %v1648
      %v1750 = vmax.f32 %v1221, %v1651
      %v1751 = vmax.f32 %v1222, %v1656
      %v1752 = vmax.f32 %v1223, %v1659
      %v1753 = vmax.f32 %v1224, %v1664
      %v1754 = vmax.f32 %v1225, %v1667
      %v1755 = vmax.f32 %v1226, %v1672
      %v1756 = vmax.f32 %v1227, %v1675
      %v1757 = vmax.f32 %v1228, %v1680
      %v1758 = vmax.f32 %v1229, %v1683
      %v1759 = vmax.f32 %v1230, %v1688
      %v1760 = vmax.f32 %v1231, %v1691
      %v1761 = vmax.f32 %v1232, %v1696
      %v1762 = vmax.f32 %v1233, %v1699
      %v1763 = vmax.f32 %v1234, %v1704
      %v1764 = vmax.f32 %v1235, %v1707
      %v1765 = vmax.f32 %v1236, %v1712
      %s1766 = scalar_lea.vmem %s191, 588
      %v1767 = vld [vmem:[%s1766] sm:$0xf]
      %v1768 = vld [vmem:[%s1766 + $0x4] sm:$0xf]
      %v1769 = vld [vmem:[%s1766 + $0x8] sm:$0xf]
      %v1770 = vld [vmem:[%s1766 + $0xc] sm:$0xf]
      %v1771 = vld [vmem:[%s1766 + $0x10] sm:$0xf]
      %v1772 = vld [vmem:[%s1766 + $0x14] sm:$0xf]
      %v1773 = vld [vmem:[%s1766 + $0x18] sm:$0xf]
      %v1774 = vld [vmem:[%s1766 + $0x1c] sm:$0xf]
      %v1775 = vld [vmem:[%s1766 + $0x20] sm:$0xf]
      %v1776 = vld [vmem:[%s1766 + $0x24] sm:$0xf]
      %v1777 = vld [vmem:[%s1766 + $0x28] sm:$0xf]
      %v1778 = vld [vmem:[%s1766 + $0x2c] sm:$0xf]
      %v1779 = vld [vmem:[%s1766 + $0x30] sm:$0xf]
      %v1780 = vld [vmem:[%s1766 + $0x34] sm:$0xf]
      %v1781 = vld [vmem:[%s1766 + $0x38] sm:$0xf]
      %v1782 = vld [vmem:[%s1766 + $0x3c] sm:$0xf]
      %v1783 = vld [vmem:[%s1766 + $0x40] sm:$0xf]
      %v1784 = vld [vmem:[%s1766 + $0x44] sm:$0xf]
      %v1785 = vld [vmem:[%s1766 + $0x48] sm:$0xf]
      %v1786 = vld [vmem:[%s1766 + $0x4c] sm:$0xf]
      %v1787 = vld [vmem:[%s1766 + $0x50] sm:$0xf]
      %v1788 = vld [vmem:[%s1766 + $0x54] sm:$0xf]
      %v1789 = vld [vmem:[%s1766 + $0x58] sm:$0xf]
      %v1790 = vld [vmem:[%s1766 + $0x5c] sm:$0xf]
      %v1791 = vld [vmem:[%s1766 + $0x60] sm:$0xf]
      %v1792 = vld [vmem:[%s1766 + $0x64] sm:$0xf]
      %v1793 = vld [vmem:[%s1766 + $0x68] sm:$0xf]
      %v1794 = vld [vmem:[%s1766 + $0x6c] sm:$0xf]
      %v1795 = vld [vmem:[%s1766 + $0x70] sm:$0xf]
      %v1796 = vld [vmem:[%s1766 + $0x74] sm:$0xf]
      %v1797 = vld [vmem:[%s1766 + $0x78] sm:$0xf]
      %v1798 = vld [vmem:[%s1766 + $0x7c] sm:$0xf]
      %v1799 = vld [vmem:[%s1766 + $0x80] sm:$0xf]
      %v1800 = vld [vmem:[%s1766 + $0x84] sm:$0xf]
      %v1801 = vld [vmem:[%s1766 + $0x88] sm:$0xf]
      %v1802 = vld [vmem:[%s1766 + $0x8c] sm:$0xf]
      %v1803 = vld [vmem:[%s1766 + $0x90] sm:$0xf]
      %v1804 = vld [vmem:[%s1766 + $0x94] sm:$0xf]
      %v1805 = vld [vmem:[%s1766 + $0x98] sm:$0xf]
      %v1806 = vld [vmem:[%s1766 + $0x9c] sm:$0xf]
      %v1807 = vld [vmem:[%s1766 + $0xa0] sm:$0xf]
      %v1808 = vld [vmem:[%s1766 + $0xa4] sm:$0xf]
      %v1809 = vld [vmem:[%s1766 + $0xa8] sm:$0xf]
      %v1810 = vld [vmem:[%s1766 + $0xac] sm:$0xf]
      %v1811 = vld [vmem:[%s1766 + $0xb0] sm:$0xf]
      %v1812 = vld [vmem:[%s1766 + $0xb4] sm:$0xf]
      %v1813 = vld [vmem:[%s1766 + $0xb8] sm:$0xf]
      %v1814 = vld [vmem:[%s1766 + $0xbc] sm:$0xf]
      %v1815 = vld [vmem:[%s1766 + $0xc0] sm:$0xf]
      %v1865 = vunpack.c.l.b16 %v1767
      %v1866 = vunpack.c.l.b16 %v1768
      %v1867 = vunpack.c.l.b16 %v1769
      %v1868 = vunpack.c.l.b16 %v1770
      %v1869 = vunpack.c.l.b16 %v1771
      %v1870 = vunpack.c.l.b16 %v1772
      %v1871 = vunpack.c.l.b16 %v1773
      %v1872 = vunpack.c.l.b16 %v1774
      %v1873 = vunpack.c.l.b16 %v1775
      %v1874 = vunpack.c.l.b16 %v1776
      %v1875 = vunpack.c.l.b16 %v1777
      %v1876 = vunpack.c.l.b16 %v1778
      %v1877 = vunpack.c.l.b16 %v1779
      %v1878 = vunpack.c.l.b16 %v1780
      %v1879 = vunpack.c.l.b16 %v1781
      %v1880 = vunpack.c.l.b16 %v1782
      %v1881 = vunpack.c.l.b16 %v1783
      %v1882 = vunpack.c.l.b16 %v1784
      %v1883 = vunpack.c.l.b16 %v1785
      %v1884 = vunpack.c.l.b16 %v1786
      %v1885 = vunpack.c.l.b16 %v1787
      %v1886 = vunpack.c.l.b16 %v1788
      %v1887 = vunpack.c.l.b16 %v1789
      %v1888 = vunpack.c.l.b16 %v1790
      %v1889 = vunpack.c.l.b16 %v1791
      %v1890 = vunpack.c.l.b16 %v1792
      %v1891 = vunpack.c.l.b16 %v1793
      %v1892 = vunpack.c.l.b16 %v1794
      %v1893 = vunpack.c.l.b16 %v1795
      %v1894 = vunpack.c.l.b16 %v1796
      %v1895 = vunpack.c.l.b16 %v1797
      %v1896 = vunpack.c.l.b16 %v1798
      %v1897 = vunpack.c.l.b16 %v1799
      %v1898 = vunpack.c.l.b16 %v1800
      %v1899 = vunpack.c.l.b16 %v1801
      %v1900 = vunpack.c.l.b16 %v1802
      %v1901 = vunpack.c.l.b16 %v1803
      %v1902 = vunpack.c.l.b16 %v1804
      %v1903 = vunpack.c.l.b16 %v1805
      %v1904 = vunpack.c.l.b16 %v1806
      %v1905 = vunpack.c.l.b16 %v1807
      %v1906 = vunpack.c.l.b16 %v1808
      %v1907 = vunpack.c.l.b16 %v1809
      %v1908 = vunpack.c.l.b16 %v1810
      %v1909 = vunpack.c.l.b16 %v1811
      %v1910 = vunpack.c.l.b16 %v1812
      %v1911 = vunpack.c.l.b16 %v1813
      %v1912 = vunpack.c.l.b16 %v1814
      %v1913 = vunpack.c.l.b16 %v1815
      %v1914 = vpack.c.b16 %v1866, %v1865
      %v1915 = vpack.c.b16 %v1868, %v1867
      %v1916 = vpack.c.b16 %v1870, %v1869
      %v1917 = vpack.c.b16 %v1872, %v1871
      %v1918 = vpack.c.b16 %v1874, %v1873
      %v1919 = vpack.c.b16 %v1876, %v1875
      %v1920 = vpack.c.b16 %v1878, %v1877
      %v1921 = vpack.c.b16 %v1880, %v1879
      %v1922 = vpack.c.b16 %v1882, %v1881
      %v1923 = vpack.c.b16 %v1884, %v1883
      %v1924 = vpack.c.b16 %v1886, %v1885
      %v1925 = vpack.c.b16 %v1888, %v1887
      %v1926 = vpack.c.b16 %v1890, %v1889
      %v1927 = vpack.c.b16 %v1892, %v1891
      %v1928 = vpack.c.b16 %v1894, %v1893
      %v1929 = vpack.c.b16 %v1896, %v1895
      %v1930 = vpack.c.b16 %v1898, %v1897
      %v1931 = vpack.c.b16 %v1900, %v1899
      %v1932 = vpack.c.b16 %v1902, %v1901
      %v1933 = vpack.c.b16 %v1904, %v1903
      %v1934 = vpack.c.b16 %v1906, %v1905
      %v1935 = vpack.c.b16 %v1908, %v1907
      %v1936 = vpack.c.b16 %v1910, %v1909
      %v1937 = vpack.c.b16 %v1912, %v1911
      %v1938 = vpack.c.b16 %v1913, %v1913
      %v1940 = vsel %vm393, %v1914, 0
      %v1943 = vsel %vm393, %v1915, 0
      %v1946 = vsel %vm393, %v1916, 0
      %v1949 = vsel %vm393, %v1917, 0
      %v1952 = vsel %vm393, %v1918, 0
      %v1955 = vsel %vm393, %v1919, 0
      %v1958 = vsel %vm393, %v1920, 0
      %v1961 = vsel %vm393, %v1921, 0
      %v1964 = vsel %vm393, %v1922, 0
      %v1967 = vsel %vm393, %v1923, 0
      %v1970 = vsel %vm393, %v1924, 0
      %v1973 = vsel %vm393, %v1925, 0
      %v1976 = vsel %vm393, %v1926, 0
      %v1979 = vsel %vm393, %v1927, 0
      %v1982 = vsel %vm393, %v1928, 0
      %v1985 = vsel %vm393, %v1929, 0
      %v1988 = vsel %vm393, %v1930, 0
      %v1991 = vsel %vm393, %v1931, 0
      %v1994 = vsel %vm393, %v1932, 0
      %v1997 = vsel %vm393, %v1933, 0
      %v2000 = vsel %vm393, %v1934, 0
      %v2003 = vsel %vm393, %v1935, 0
      %v2006 = vsel %vm393, %v1936, 0
      %v2009 = vsel %vm393, %v1937, 0
      %v2012 = vsel %vm393, %v1938, 0
      %2014 = vmatprep.subr.bf16.mxu0 0
      %2015 = vmatpush1.bf16.msra.mxu0 0
      %2016 = vmatprep.subr.bf16.mxu0 0
      %2017 = vmatpush1.bf16.msra.mxu0 0
      %2018 = vmatprep.subr.bf16.mxu0 0
      %2019 = vmatpush1.bf16.msra.mxu0 0
      %2020 = vmatprep.subr.bf16.mxu0 0
      %2021 = vmatpush1.bf16.msra.mxu0 0
      %2022 = vmatprep.subr.bf16.mxu0 0
      %2023 = vmatpush1.bf16.msra.mxu0 0
      %2024 = vmatprep.subr.bf16.mxu0 0
      %2025 = vmatpush1.bf16.msra.mxu0 0
      %2026 = vmatprep.subr.bf16.mxu0 0
      %2027 = vmatpush1.bf16.msra.mxu0 %v474
      %2028 = vmatprep.subr.bf16.mxu0 0
      %2029 = vmatpush1.bf16.msra.mxu0 %v390
      %2030 = vmatprep.subr.bf16.mxu0 0
      %2031 = vmatpush2.bf16.msra.mxu0 0
      %2032 = vmatprep.subr.bf16.mxu0 0
      %2033 = vmatpush2.bf16.msra.mxu0 0
      %2034 = vmatprep.subr.bf16.mxu0 0
      %2035 = vmatpush2.bf16.msra.mxu0 0
      %2036 = vmatprep.subr.bf16.mxu0 0
      %2037 = vmatpush2.bf16.msra.mxu0 0
      %2038 = vmatprep.subr.bf16.mxu0 0
      %2039 = vmatpush2.bf16.msra.mxu0 0
      %2040 = vmatprep.subr.bf16.mxu0 0
      %2041 = vmatpush2.bf16.msra.mxu0 0
      %2042 = vmatprep.subr.bf16.mxu0 0
      %2043 = vmatpush2.bf16.msra.mxu0 0
      %2044 = vmatprep.subr.bf16.mxu0 0
      %2045 = vmatpush2.bf16.msra.mxu0 0
      %2046 = vmatprep.mubr.bf16.mxu0 0
      %2047 = vmatmul.mubr.bf16.gmra.mxu0 %v1940
      %v2048 = vpop.f32.mrf.mxu0
      %v2049 = vadd.f32 0.0, %v2048
      %v2050 = vpop.f32.mrf.mxu0
      %v2051 = vpop.f32.mrf.mxu0
      %v2052 = vadd.f32 0.0, %v2051
      %v2053 = vpop.f32.mrf.mxu0
      %2054 = vmatprep.mubr.bf16.mxu0 0
      %2055 = vmatmul.mubr.bf16.gmra.mxu0 %v1943
      %v2056 = vpop.f32.mrf.mxu0
      %v2057 = vadd.f32 0.0, %v2056
      %v2058 = vpop.f32.mrf.mxu0
      %v2059 = vpop.f32.mrf.mxu0
      %v2060 = vadd.f32 0.0, %v2059
      %v2061 = vpop.f32.mrf.mxu0
      %2062 = vmatprep.mubr.bf16.mxu0 0
      %2063 = vmatmul.mubr.bf16.gmra.mxu0 %v1946
      %v2064 = vpop.f32.mrf.mxu0
      %v2065 = vadd.f32 0.0, %v2064
      %v2066 = vpop.f32.mrf.mxu0
      %v2067 = vpop.f32.mrf.mxu0
      %v2068 = vadd.f32 0.0, %v2067
      %v2069 = vpop.f32.mrf.mxu0
      %2070 = vmatprep.mubr.bf16.mxu0 0
      %2071 = vmatmul.mubr.bf16.gmra.mxu0 %v1949
      %v2072 = vpop.f32.mrf.mxu0
      %v2073 = vadd.f32 0.0, %v2072
      %v2074 = vpop.f32.mrf.mxu0
      %v2075 = vpop.f32.mrf.mxu0
      %v2076 = vadd.f32 0.0, %v2075
      %v2077 = vpop.f32.mrf.mxu0
      %2078 = vmatprep.mubr.bf16.mxu0 0
      %2079 = vmatmul.mubr.bf16.gmra.mxu0 %v1952
      %v2080 = vpop.f32.mrf.mxu0
      %v2081 = vadd.f32 0.0, %v2080
      %v2082 = vpop.f32.mrf.mxu0
      %v2083 = vpop.f32.mrf.mxu0
      %v2084 = vadd.f32 0.0, %v2083
      %v2085 = vpop.f32.mrf.mxu0
      %2086 = vmatprep.mubr.bf16.mxu0 0
      %2087 = vmatmul.mubr.bf16.gmra.mxu0 %v1955
      %v2088 = vpop.f32.mrf.mxu0
      %v2089 = vadd.f32 0.0, %v2088
      %v2090 = vpop.f32.mrf.mxu0
      %v2091 = vpop.f32.mrf.mxu0
      %v2092 = vadd.f32 0.0, %v2091
      %v2093 = vpop.f32.mrf.mxu0
      %2094 = vmatprep.mubr.bf16.mxu0 0
      %2095 = vmatmul.mubr.bf16.gmra.mxu0 %v1958
      %v2096 = vpop.f32.mrf.mxu0
      %v2097 = vadd.f32 0.0, %v2096
      %v2098 = vpop.f32.mrf.mxu0
      %v2099 = vpop.f32.mrf.mxu0
      %v2100 = vadd.f32 0.0, %v2099
      %v2101 = vpop.f32.mrf.mxu0
      %2102 = vmatprep.mubr.bf16.mxu0 0
      %2103 = vmatmul.mubr.bf16.gmra.mxu0 %v1961
      %v2104 = vpop.f32.mrf.mxu0
      %v2105 = vadd.f32 0.0, %v2104
      %v2106 = vpop.f32.mrf.mxu0
      %v2107 = vpop.f32.mrf.mxu0
      %v2108 = vadd.f32 0.0, %v2107
      %v2109 = vpop.f32.mrf.mxu0
      %2110 = vmatprep.mubr.bf16.mxu0 0
      %2111 = vmatmul.mubr.bf16.gmra.mxu0 %v1964
      %v2112 = vpop.f32.mrf.mxu0
      %v2113 = vadd.f32 0.0, %v2112
      %v2114 = vpop.f32.mrf.mxu0
      %v2115 = vpop.f32.mrf.mxu0
      %v2116 = vadd.f32 0.0, %v2115
      %v2117 = vpop.f32.mrf.mxu0
      %2118 = vmatprep.mubr.bf16.mxu0 0
      %2119 = vmatmul.mubr.bf16.gmra.mxu0 %v1967
      %v2120 = vpop.f32.mrf.mxu0
      %v2121 = vadd.f32 0.0, %v2120
      %v2122 = vpop.f32.mrf.mxu0
      %v2123 = vpop.f32.mrf.mxu0
      %v2124 = vadd.f32 0.0, %v2123
      %v2125 = vpop.f32.mrf.mxu0
      %2126 = vmatprep.mubr.bf16.mxu0 0
      %2127 = vmatmul.mubr.bf16.gmra.mxu0 %v1970
      %v2128 = vpop.f32.mrf.mxu0
      %v2129 = vadd.f32 0.0, %v2128
      %v2130 = vpop.f32.mrf.mxu0
      %v2131 = vpop.f32.mrf.mxu0
      %v2132 = vadd.f32 0.0, %v2131
      %v2133 = vpop.f32.mrf.mxu0
      %2134 = vmatprep.mubr.bf16.mxu0 0
      %2135 = vmatmul.mubr.bf16.gmra.mxu0 %v1973
      %v2136 = vpop.f32.mrf.mxu0
      %v2137 = vadd.f32 0.0, %v2136
      %v2138 = vpop.f32.mrf.mxu0
      %v2139 = vpop.f32.mrf.mxu0
      %v2140 = vadd.f32 0.0, %v2139
      %v2141 = vpop.f32.mrf.mxu0
      %2142 = vmatprep.mubr.bf16.mxu0 0
      %2143 = vmatmul.mubr.bf16.gmra.mxu0 %v1976
      %v2144 = vpop.f32.mrf.mxu0
      %v2145 = vadd.f32 0.0, %v2144
      %v2146 = vpop.f32.mrf.mxu0
      %v2147 = vpop.f32.mrf.mxu0
      %v2148 = vadd.f32 0.0, %v2147
      %v2149 = vpop.f32.mrf.mxu0
      %2150 = vmatprep.mubr.bf16.mxu0 0
      %2151 = vmatmul.mubr.bf16.gmra.mxu0 %v1979
      %v2152 = vpop.f32.mrf.mxu0
      %v2153 = vadd.f32 0.0, %v2152
      %v2154 = vpop.f32.mrf.mxu0
      %v2155 = vpop.f32.mrf.mxu0
      %v2156 = vadd.f32 0.0, %v2155
      %v2157 = vpop.f32.mrf.mxu0
      %2158 = vmatprep.mubr.bf16.mxu0 0
      %2159 = vmatmul.mubr.bf16.gmra.mxu0 %v1982
      %v2160 = vpop.f32.mrf.mxu0
      %v2161 = vadd.f32 0.0, %v2160
      %v2162 = vpop.f32.mrf.mxu0
      %v2163 = vpop.f32.mrf.mxu0
      %v2164 = vadd.f32 0.0, %v2163
      %v2165 = vpop.f32.mrf.mxu0
      %2166 = vmatprep.mubr.bf16.mxu0 0
      %2167 = vmatmul.mubr.bf16.gmra.mxu0 %v1985
      %v2168 = vpop.f32.mrf.mxu0
      %v2169 = vadd.f32 0.0, %v2168
      %v2170 = vpop.f32.mrf.mxu0
      %v2171 = vpop.f32.mrf.mxu0
      %v2172 = vadd.f32 0.0, %v2171
      %v2173 = vpop.f32.mrf.mxu0
      %2174 = vmatprep.mubr.bf16.mxu0 0
      %2175 = vmatmul.mubr.bf16.gmra.mxu0 %v1988
      %v2176 = vpop.f32.mrf.mxu0
      %v2177 = vadd.f32 0.0, %v2176
      %v2178 = vpop.f32.mrf.mxu0
      %v2179 = vpop.f32.mrf.mxu0
      %v2180 = vadd.f32 0.0, %v2179
      %v2181 = vpop.f32.mrf.mxu0
      %2182 = vmatprep.mubr.bf16.mxu0 0
      %2183 = vmatmul.mubr.bf16.gmra.mxu0 %v1991
      %v2184 = vpop.f32.mrf.mxu0
      %v2185 = vadd.f32 0.0, %v2184
      %v2186 = vpop.f32.mrf.mxu0
      %v2187 = vpop.f32.mrf.mxu0
      %v2188 = vadd.f32 0.0, %v2187
      %v2189 = vpop.f32.mrf.mxu0
      %2190 = vmatprep.mubr.bf16.mxu0 0
      %2191 = vmatmul.mubr.bf16.gmra.mxu0 %v1994
      %v2192 = vpop.f32.mrf.mxu0
      %v2193 = vadd.f32 0.0, %v2192
      %v2194 = vpop.f32.mrf.mxu0
      %v2195 = vpop.f32.mrf.mxu0
      %v2196 = vadd.f32 0.0, %v2195
      %v2197 = vpop.f32.mrf.mxu0
      %2198 = vmatprep.mubr.bf16.mxu0 0
      %2199 = vmatmul.mubr.bf16.gmra.mxu0 %v1997
      %v2200 = vpop.f32.mrf.mxu0
      %v2201 = vadd.f32 0.0, %v2200
      %v2202 = vpop.f32.mrf.mxu0
      %v2203 = vpop.f32.mrf.mxu0
      %v2204 = vadd.f32 0.0, %v2203
      %v2205 = vpop.f32.mrf.mxu0
      %2206 = vmatprep.mubr.bf16.mxu0 0
      %2207 = vmatmul.mubr.bf16.gmra.mxu0 %v2000
      %v2208 = vpop.f32.mrf.mxu0
      %v2209 = vadd.f32 0.0, %v2208
      %v2210 = vpop.f32.mrf.mxu0
      %v2211 = vpop.f32.mrf.mxu0
      %v2212 = vadd.f32 0.0, %v2211
      %v2213 = vpop.f32.mrf.mxu0
      %2214 = vmatprep.mubr.bf16.mxu0 0
      %2215 = vmatmul.mubr.bf16.gmra.mxu0 %v2003
      %v2216 = vpop.f32.mrf.mxu0
      %v2217 = vadd.f32 0.0, %v2216
      %v2218 = vpop.f32.mrf.mxu0
      %v2219 = vpop.f32.mrf.mxu0
      %v2220 = vadd.f32 0.0, %v2219
      %v2221 = vpop.f32.mrf.mxu0
      %2222 = vmatprep.mubr.bf16.mxu0 0
      %2223 = vmatmul.mubr.bf16.gmra.mxu0 %v2006
      %v2224 = vpop.f32.mrf.mxu0
      %v2225 = vadd.f32 0.0, %v2224
      %v2226 = vpop.f32.mrf.mxu0
      %v2227 = vpop.f32.mrf.mxu0
      %v2228 = vadd.f32 0.0, %v2227
      %v2229 = vpop.f32.mrf.mxu0
      %2230 = vmatprep.mubr.bf16.mxu0 0
      %2231 = vmatmul.mubr.bf16.gmra.mxu0 %v2009
      %v2232 = vpop.f32.mrf.mxu0
      %v2233 = vadd.f32 0.0, %v2232
      %v2234 = vpop.f32.mrf.mxu0
      %v2235 = vpop.f32.mrf.mxu0
      %v2236 = vadd.f32 0.0, %v2235
      %v2237 = vpop.f32.mrf.mxu0
      %2238 = vmatprep.mubr.bf16.mxu0 0
      %2239 = vmatmul.mubr.bf16.gmra.mxu0 %v2012
      %v2240 = vpop.f32.mrf.mxu0
      %v2241 = vadd.f32 0.0, %v2240
      %v2242 = vpop.f32.mrf.mxu0
      %v2243 = vpop.f32.mrf.mxu0
      %v2244 = vpop.f32.mrf.mxu0
      %2245 = vdwg.mxu0
      %v2246 = vmax.f32 %v1717, %v2049
      %v2247 = vmax.f32 %v1718, %v2052
      %v2248 = vmax.f32 %v1719, %v2057
      %v2249 = vmax.f32 %v1720, %v2060
      %v2250 = vmax.f32 %v1721, %v2065
      %v2251 = vmax.f32 %v1722, %v2068
      %v2252 = vmax.f32 %v1723, %v2073
      %v2253 = vmax.f32 %v1724, %v2076
      %v2254 = vmax.f32 %v1725, %v2081
      %v2255 = vmax.f32 %v1726, %v2084
      %v2256 = vmax.f32 %v1727, %v2089
      %v2257 = vmax.f32 %v1728, %v2092
      %v2258 = vmax.f32 %v1729, %v2097
      %v2259 = vmax.f32 %v1730, %v2100
      %v2260 = vmax.f32 %v1731, %v2105
      %v2261 = vmax.f32 %v1732, %v2108
      %v2262 = vmax.f32 %v1733, %v2113
      %v2263 = vmax.f32 %v1734, %v2116
      %v2264 = vmax.f32 %v1735, %v2121
      %v2265 = vmax.f32 %v1736, %v2124
      %v2266 = vmax.f32 %v1737, %v2129
      %v2267 = vmax.f32 %v1738, %v2132
      %v2268 = vmax.f32 %v1739, %v2137
      %v2269 = vmax.f32 %v1740, %v2140
      %v2270 = vmax.f32 %v1741, %v2145
      %v2271 = vmax.f32 %v1742, %v2148
      %v2272 = vmax.f32 %v1743, %v2153
      %v2273 = vmax.f32 %v1744, %v2156
      %v2274 = vmax.f32 %v1745, %v2161
      %v2275 = vmax.f32 %v1746, %v2164
      %v2276 = vmax.f32 %v1747, %v2169
      %v2277 = vmax.f32 %v1748, %v2172
      %v2278 = vmax.f32 %v1749, %v2177
      %v2279 = vmax.f32 %v1750, %v2180
      %v2280 = vmax.f32 %v1751, %v2185
      %v2281 = vmax.f32 %v1752, %v2188
      %v2282 = vmax.f32 %v1753, %v2193
      %v2283 = vmax.f32 %v1754, %v2196
      %v2284 = vmax.f32 %v1755, %v2201
      %v2285 = vmax.f32 %v1756, %v2204
      %v2286 = vmax.f32 %v1757, %v2209
      %v2287 = vmax.f32 %v1758, %v2212
      %v2288 = vmax.f32 %v1759, %v2217
      %v2289 = vmax.f32 %v1760, %v2220
      %v2290 = vmax.f32 %v1761, %v2225
      %v2291 = vmax.f32 %v1762, %v2228
      %v2292 = vmax.f32 %v1763, %v2233
      %v2293 = vmax.f32 %v1764, %v2236
      %v2294 = vmax.f32 %v1765, %v2241
      %v2295 = vld [vmem:[%s199] sm:$0x1]
      %v2297 = vlaneseq
      %v2298 = vshrl.u32 %v2297, 7
      %v2299 = vsub.s32 0, %v2298
      %v2300 = vrot.slane %v2295, %v2299
      %v2302 = vadd.f32 %v2246, %v2300
      %v2303 = vadd.f32 %v2247, %v2300
      %v2304 = vadd.f32 %v2248, %v2300
      %v2305 = vadd.f32 %v2249, %v2300
      %v2306 = vadd.f32 %v2250, %v2300
      %v2307 = vadd.f32 %v2251, %v2300
      %v2308 = vadd.f32 %v2252, %v2300
      %v2309 = vadd.f32 %v2253, %v2300
      %v2310 = vadd.f32 %v2254, %v2300
      %v2311 = vadd.f32 %v2255, %v2300
      %v2312 = vadd.f32 %v2256, %v2300
      %v2313 = vadd.f32 %v2257, %v2300
      %v2314 = vadd.f32 %v2258, %v2300
      %v2315 = vadd.f32 %v2259, %v2300
      %v2316 = vadd.f32 %v2260, %v2300
      %v2317 = vadd.f32 %v2261, %v2300
      %v2318 = vadd.f32 %v2262, %v2300
      %v2319 = vadd.f32 %v2263, %v2300
      %v2320 = vadd.f32 %v2264, %v2300
      %v2321 = vadd.f32 %v2265, %v2300
      %v2322 = vadd.f32 %v2266, %v2300
      %v2323 = vadd.f32 %v2267, %v2300
      %v2324 = vadd.f32 %v2268, %v2300
      %v2325 = vadd.f32 %v2269, %v2300
      %v2326 = vadd.f32 %v2270, %v2300
      %v2327 = vadd.f32 %v2271, %v2300
      %v2328 = vadd.f32 %v2272, %v2300
      %v2329 = vadd.f32 %v2273, %v2300
      %v2330 = vadd.f32 %v2274, %v2300
      %v2331 = vadd.f32 %v2275, %v2300
      %v2332 = vadd.f32 %v2276, %v2300
      %v2333 = vadd.f32 %v2277, %v2300
      %v2334 = vadd.f32 %v2278, %v2300
      %v2335 = vadd.f32 %v2279, %v2300
      %v2336 = vadd.f32 %v2280, %v2300
      %v2337 = vadd.f32 %v2281, %v2300
      %v2338 = vadd.f32 %v2282, %v2300
      %v2339 = vadd.f32 %v2283, %v2300
      %v2340 = vadd.f32 %v2284, %v2300
      %v2341 = vadd.f32 %v2285, %v2300
      %v2342 = vadd.f32 %v2286, %v2300
      %v2343 = vadd.f32 %v2287, %v2300
      %v2344 = vadd.f32 %v2288, %v2300
      %v2345 = vadd.f32 %v2289, %v2300
      %v2346 = vadd.f32 %v2290, %v2300
      %v2347 = vadd.f32 %v2291, %v2300
      %v2348 = vadd.f32 %v2292, %v2300
      %v2349 = vadd.f32 %v2293, %v2300
      %v2350 = vadd.f32 %v2294, %v2300
      %v2351 = vmax.f32 %v2302, 0.0
      %v2352 = vmax.f32 %v2303, 0.0
      %v2353 = vmax.f32 %v2304, 0.0
      %v2354 = vmax.f32 %v2305, 0.0
      %v2355 = vmax.f32 %v2306, 0.0
      %v2356 = vmax.f32 %v2307, 0.0
      %v2357 = vmax.f32 %v2308, 0.0
      %v2358 = vmax.f32 %v2309, 0.0
      %v2359 = vmax.f32 %v2310, 0.0
      %v2360 = vmax.f32 %v2311, 0.0
      %v2361 = vmax.f32 %v2312, 0.0
      %v2362 = vmax.f32 %v2313, 0.0
      %v2363 = vmax.f32 %v2314, 0.0
      %v2364 = vmax.f32 %v2315, 0.0
      %v2365 = vmax.f32 %v2316, 0.0
      %v2366 = vmax.f32 %v2317, 0.0
      %v2367 = vmax.f32 %v2318, 0.0
      %v2368 = vmax.f32 %v2319, 0.0
      %v2369 = vmax.f32 %v2320, 0.0
      %v2370 = vmax.f32 %v2321, 0.0
      %v2371 = vmax.f32 %v2322, 0.0
      %v2372 = vmax.f32 %v2323, 0.0
      %v2373 = vmax.f32 %v2324, 0.0
      %v2374 = vmax.f32 %v2325, 0.0
      %v2375 = vmax.f32 %v2326, 0.0
      %v2376 = vmax.f32 %v2327, 0.0
      %v2377 = vmax.f32 %v2328, 0.0
      %v2378 = vmax.f32 %v2329, 0.0
      %v2379 = vmax.f32 %v2330, 0.0
      %v2380 = vmax.f32 %v2331, 0.0
      %v2381 = vmax.f32 %v2332, 0.0
      %v2382 = vmax.f32 %v2333, 0.0
      %v2383 = vmax.f32 %v2334, 0.0
      %v2384 = vmax.f32 %v2335, 0.0
      %v2385 = vmax.f32 %v2336, 0.0
      %v2386 = vmax.f32 %v2337, 0.0
      %v2387 = vmax.f32 %v2338, 0.0
      %v2388 = vmax.f32 %v2339, 0.0
      %v2389 = vmax.f32 %v2340, 0.0
      %v2390 = vmax.f32 %v2341, 0.0
      %v2391 = vmax.f32 %v2342, 0.0
      %v2392 = vmax.f32 %v2343, 0.0
      %v2393 = vmax.f32 %v2344, 0.0
      %v2394 = vmax.f32 %v2345, 0.0
      %v2395 = vmax.f32 %v2346, 0.0
      %v2396 = vmax.f32 %v2347, 0.0
      %v2397 = vmax.f32 %v2348, 0.0
      %v2398 = vmax.f32 %v2349, 0.0
      %v2399 = vmax.f32 %v2350, 0.0
      %v2400 = vpack.c.bf16 %v2352, %v2351
      %v2401 = vpack.c.bf16 %v2354, %v2353
      %v2402 = vpack.c.bf16 %v2356, %v2355
      %v2403 = vpack.c.bf16 %v2358, %v2357
      %v2404 = vpack.c.bf16 %v2360, %v2359
      %v2405 = vpack.c.bf16 %v2362, %v2361
      %v2406 = vpack.c.bf16 %v2364, %v2363
      %v2407 = vpack.c.bf16 %v2366, %v2365
      %v2408 = vpack.c.bf16 %v2368, %v2367
      %v2409 = vpack.c.bf16 %v2370, %v2369
      %v2410 = vpack.c.bf16 %v2372, %v2371
      %v2411 = vpack.c.bf16 %v2374, %v2373
      %v2412 = vpack.c.bf16 %v2376, %v2375
      %v2413 = vpack.c.bf16 %v2378, %v2377
      %v2414 = vpack.c.bf16 %v2380, %v2379
      %v2415 = vpack.c.bf16 %v2382, %v2381
      %v2416 = vpack.c.bf16 %v2384, %v2383
      %v2417 = vpack.c.bf16 %v2386, %v2385
      %v2418 = vpack.c.bf16 %v2388, %v2387
      %v2419 = vpack.c.bf16 %v2390, %v2389
      %v2420 = vpack.c.bf16 %v2392, %v2391
      %v2421 = vpack.c.bf16 %v2394, %v2393
      %v2422 = vpack.c.bf16 %v2396, %v2395
      %v2423 = vpack.c.bf16 %v2398, %v2397
      %v2424 = vpack.c.bf16 %v2399, %v2399
      %v2450 = vunpack.c.l.b16 %v2400
      %v2451 = vunpack.c.h.b16 %v2400
      %v2452 = vunpack.c.l.b16 %v2401
      %v2453 = vunpack.c.h.b16 %v2401
      %v2454 = vunpack.c.l.b16 %v2402
      %v2455 = vunpack.c.h.b16 %v2402
      %v2456 = vunpack.c.l.b16 %v2403
      %v2457 = vunpack.c.h.b16 %v2403
      %v2458 = vunpack.c.l.b16 %v2404
      %v2459 = vunpack.c.h.b16 %v2404
      %v2460 = vunpack.c.l.b16 %v2405
      %v2461 = vunpack.c.h.b16 %v2405
      %v2462 = vunpack.c.l.b16 %v2406
      %v2463 = vunpack.c.h.b16 %v2406
      %v2464 = vunpack.c.l.b16 %v2407
      %v2465 = vunpack.c.h.b16 %v2407
      %v2466 = vunpack.c.l.b16 %v2408
      %v2467 = vunpack.c.h.b16 %v2408
      %v2468 = vunpack.c.l.b16 %v2409
      %v2469 = vunpack.c.h.b16 %v2409
      %v2470 = vunpack.c.l.b16 %v2410
      %v2471 = vunpack.c.h.b16 %v2410
      %v2472 = vunpack.c.l.b16 %v2411
      %v2473 = vunpack.c.h.b16 %v2411
      %v2474 = vunpack.c.l.b16 %v2412
      %v2475 = vunpack.c.h.b16 %v2412
      %v2476 = vunpack.c.l.b16 %v2413
      %v2477 = vunpack.c.h.b16 %v2413
      %v2478 = vunpack.c.l.b16 %v2414
      %v2479 = vunpack.c.h.b16 %v2414
      %v2480 = vunpack.c.l.b16 %v2415
      %v2481 = vunpack.c.h.b16 %v2415
      %v2482 = vunpack.c.l.b16 %v2416
      %v2483 = vunpack.c.h.b16 %v2416
      %v2484 = vunpack.c.l.b16 %v2417
      %v2485 = vunpack.c.h.b16 %v2417
      %v2486 = vunpack.c.l.b16 %v2418
      %v2487 = vunpack.c.h.b16 %v2418
      %v2488 = vunpack.c.l.b16 %v2419
      %v2489 = vunpack.c.h.b16 %v2419
      %v2490 = vunpack.c.l.b16 %v2420
      %v2491 = vunpack.c.h.b16 %v2420
      %v2492 = vunpack.c.l.b16 %v2421
      %v2493 = vunpack.c.h.b16 %v2421
      %v2494 = vunpack.c.l.b16 %v2422
      %v2495 = vunpack.c.h.b16 %v2422
      %v2496 = vunpack.c.l.b16 %v2423
      %v2497 = vunpack.c.h.b16 %v2423
      %v2498 = vunpack.c.l.b16 %v2424
      %v2499 = vpack.c.b16 %v2450, %v2450
      %v2500 = vpack.c.b16 %v2451, %v2451
      %v2501 = vpack.c.b16 %v2452, %v2452
      %v2502 = vpack.c.b16 %v2453, %v2453
      %v2503 = vpack.c.b16 %v2454, %v2454
      %v2504 = vpack.c.b16 %v2455, %v2455
      %v2505 = vpack.c.b16 %v2456, %v2456
      %v2506 = vpack.c.b16 %v2457, %v2457
      %v2507 = vpack.c.b16 %v2458, %v2458
      %v2508 = vpack.c.b16 %v2459, %v2459
      %v2509 = vpack.c.b16 %v2460, %v2460
      %v2510 = vpack.c.b16 %v2461, %v2461
      %v2511 = vpack.c.b16 %v2462, %v2462
      %v2512 = vpack.c.b16 %v2463, %v2463
      %v2513 = vpack.c.b16 %v2464, %v2464
      %v2514 = vpack.c.b16 %v2465, %v2465
      %v2515 = vpack.c.b16 %v2466, %v2466
      %v2516 = vpack.c.b16 %v2467, %v2467
      %v2517 = vpack.c.b16 %v2468, %v2468
      %v2518 = vpack.c.b16 %v2469, %v2469
      %v2519 = vpack.c.b16 %v2470, %v2470
      %v2520 = vpack.c.b16 %v2471, %v2471
      %v2521 = vpack.c.b16 %v2472, %v2472
      %v2522 = vpack.c.b16 %v2473, %v2473
      %v2523 = vpack.c.b16 %v2474, %v2474
      %v2524 = vpack.c.b16 %v2475, %v2475
      %v2525 = vpack.c.b16 %v2476, %v2476
      %v2526 = vpack.c.b16 %v2477, %v2477
      %v2527 = vpack.c.b16 %v2478, %v2478
      %v2528 = vpack.c.b16 %v2479, %v2479
      %v2529 = vpack.c.b16 %v2480, %v2480
      %v2530 = vpack.c.b16 %v2481, %v2481
      %v2531 = vpack.c.b16 %v2482, %v2482
      %v2532 = vpack.c.b16 %v2483, %v2483
      %v2533 = vpack.c.b16 %v2484, %v2484
      %v2534 = vpack.c.b16 %v2485, %v2485
      %v2535 = vpack.c.b16 %v2486, %v2486
      %v2536 = vpack.c.b16 %v2487, %v2487
      %v2537 = vpack.c.b16 %v2488, %v2488
      %v2538 = vpack.c.b16 %v2489, %v2489
      %v2539 = vpack.c.b16 %v2490, %v2490
      %v2540 = vpack.c.b16 %v2491, %v2491
      %v2541 = vpack.c.b16 %v2492, %v2492
      %v2542 = vpack.c.b16 %v2493, %v2493
      %v2543 = vpack.c.b16 %v2494, %v2494
      %v2544 = vpack.c.b16 %v2495, %v2495
      %v2545 = vpack.c.b16 %v2496, %v2496
      %v2546 = vpack.c.b16 %v2497, %v2497
      %v2547 = vpack.c.b16 %v2498, %v2498
      %vm2597 = vcmask 257024
      %2598 = vst.msk [vmem:[%s204] sm:$0xf] %vm2597, %v2499
      %2599 = vst.msk [vmem:[%s204 + $0x4] sm:$0xf] %vm2597, %v2500
      %2600 = vst.msk [vmem:[%s204 + $0x8] sm:$0xf] %vm2597, %v2501
      %2601 = vst.msk [vmem:[%s204 + $0xc] sm:$0xf] %vm2597, %v2502
      %2602 = vst.msk [vmem:[%s204 + $0x10] sm:$0xf] %vm2597, %v2503
      %2603 = vst.msk [vmem:[%s204 + $0x14] sm:$0xf] %vm2597, %v2504
      %2604 = vst.msk [vmem:[%s204 + $0x18] sm:$0xf] %vm2597, %v2505
      %2605 = vst.msk [vmem:[%s204 + $0x1c] sm:$0xf] %vm2597, %v2506
      %2606 = vst.msk [vmem:[%s204 + $0x20] sm:$0xf] %vm2597, %v2507
      %2607 = vst.msk [vmem:[%s204 + $0x24] sm:$0xf] %vm2597, %v2508
      %2608 = vst.msk [vmem:[%s204 + $0x28] sm:$0xf] %vm2597, %v2509
      %2609 = vst.msk [vmem:[%s204 + $0x2c] sm:$0xf] %vm2597, %v2510
      %2610 = vst.msk [vmem:[%s204 + $0x30] sm:$0xf] %vm2597, %v2511
      %2611 = vst.msk [vmem:[%s204 + $0x34] sm:$0xf] %vm2597, %v2512
      %2612 = vst.msk [vmem:[%s204 + $0x38] sm:$0xf] %vm2597, %v2513
      %2613 = vst.msk [vmem:[%s204 + $0x3c] sm:$0xf] %vm2597, %v2514
      %2614 = vst.msk [vmem:[%s204 + $0x40] sm:$0xf] %vm2597, %v2515
      %2615 = vst.msk [vmem:[%s204 + $0x44] sm:$0xf] %vm2597, %v2516
      %2616 = vst.msk [vmem:[%s204 + $0x48] sm:$0xf] %vm2597, %v2517
      %2617 = vst.msk [vmem:[%s204 + $0x4c] sm:$0xf] %vm2597, %v2518
      %2618 = vst.msk [vmem:[%s204 + $0x50] sm:$0xf] %vm2597, %v2519
      %2619 = vst.msk [vmem:[%s204 + $0x54] sm:$0xf] %vm2597, %v2520
      %2620 = vst.msk [vmem:[%s204 + $0x58] sm:$0xf] %vm2597, %v2521
      %2621 = vst.msk [vmem:[%s204 + $0x5c] sm:$0xf] %vm2597, %v2522
      %2622 = vst.msk [vmem:[%s204 + $0x60] sm:$0xf] %vm2597, %v2523
      %2623 = vst.msk [vmem:[%s204 + $0x64] sm:$0xf] %vm2597, %v2524
      %2624 = vst.msk [vmem:[%s204 + $0x68] sm:$0xf] %vm2597, %v2525
      %2625 = vst.msk [vmem:[%s204 + $0x6c] sm:$0xf] %vm2597, %v2526
      %2626 = vst.msk [vmem:[%s204 + $0x70] sm:$0xf] %vm2597, %v2527
      %2627 = vst.msk [vmem:[%s204 + $0x74] sm:$0xf] %vm2597, %v2528
      %2628 = vst.msk [vmem:[%s204 + $0x78] sm:$0xf] %vm2597, %v2529
      %2629 = vst.msk [vmem:[%s204 + $0x7c] sm:$0xf] %vm2597, %v2530
      %2630 = vst.msk [vmem:[%s204 + $0x80] sm:$0xf] %vm2597, %v2531
      %2631 = vst.msk [vmem:[%s204 + $0x84] sm:$0xf] %vm2597, %v2532
      %2632 = vst.msk [vmem:[%s204 + $0x88] sm:$0xf] %vm2597, %v2533
      %2633 = vst.msk [vmem:[%s204 + $0x8c] sm:$0xf] %vm2597, %v2534
      %2634 = vst.msk [vmem:[%s204 + $0x90] sm:$0xf] %vm2597, %v2535
      %2635 = vst.msk [vmem:[%s204 + $0x94] sm:$0xf] %vm2597, %v2536
      %2636 = vst.msk [vmem:[%s204 + $0x98] sm:$0xf] %vm2597, %v2537
      %2637 = vst.msk [vmem:[%s204 + $0x9c] sm:$0xf] %vm2597, %v2538
      %2638 = vst.msk [vmem:[%s204 + $0xa0] sm:$0xf] %vm2597, %v2539
      %2639 = vst.msk [vmem:[%s204 + $0xa4] sm:$0xf] %vm2597, %v2540
      %2640 = vst.msk [vmem:[%s204 + $0xa8] sm:$0xf] %vm2597, %v2541
      %2641 = vst.msk [vmem:[%s204 + $0xac] sm:$0xf] %vm2597, %v2542
      %2642 = vst.msk [vmem:[%s204 + $0xb0] sm:$0xf] %vm2597, %v2543
      %2643 = vst.msk [vmem:[%s204 + $0xb4] sm:$0xf] %vm2597, %v2544
      %2644 = vst.msk [vmem:[%s204 + $0xb8] sm:$0xf] %vm2597, %v2545
      %2645 = vst.msk [vmem:[%s204 + $0xbc] sm:$0xf] %vm2597, %v2546
      %2646 = vst.msk [vmem:[%s204 + $0xc0] sm:$0xf] %vm2597, %v2547
      %p2647 = scmp.lt.s32.totalorder %s14, 2
      %s2648 = scalar_select %p2647, %s14, 2
      %s2649 = smul.addr %s2648, 49
      %s2650 = smul.addr %s2649, 4
      %s2651 = scalar_lea.vmem %s3, %s2650
      // Predicated region
      $region33: #{model_forward.3} parent=31 // pred_check
        %p2652 = pneg %p110
      $region34: #{model_forward.3} parent=31 // pred_check_branch
        %2654 = sbr.rel (%p2652) target = $region36
      $region35: #{model_forward.3} parent=31 // pred_region
        _
      $region36: #{model_forward.3} parent=31 // pred_fallthru
        _
    $region32: #{model_forward.3} parent=5 // pred_fallthru
      _
    %p2655 = scmp.le.s32.totalorder 2, %s9
    // Predicated region
    $region37: #{model_forward.3} parent=5 // pred_check
      %p2656 = pneg %p2655
    $region38: #{model_forward.3} parent=5 // pred_check_branch
      %2658 = sbr.rel (%p2656) target = $region40
    $region39: #{model_forward.3} parent=5 // pred_region
      %s2659 = ssub.s32 %s9, 2
      // Predicated region
      $region41: #{model_forward.3} parent=39 // pred_check
        %p2660 = pneg %p116
      $region42: #{model_forward.3} parent=39 // pred_check_branch
        %2662 = sbr.rel (%p2660) target = $region44
      $region43: #{model_forward.3} parent=39 // pred_region
        %p2663 = scmp.lt.s32.totalorder %s15, 2
        %s2664 = scalar_select %p2663, %s15, 2
        %s2665 = smul.addr %s2664, 49
        %s2666 = smul.addr %s2665, 4
        %s2667 = scalar_lea.vmem %s3, %s2666
      $region44: #{model_forward.3} parent=39 // pred_fallthru
        _
    $region40: #{model_forward.3} parent=5 // pred_fallthru
      _
  $region6: #{model_forward.3} parent=0 // loop_footer
    %s13 = sadd.s32 1, %s9
  $region7: #{model_forward.3} parent=0 // loop_footer_branch
    %8 = sbr.rel target = $region3
  $region8: #{model_forward.3} parent=0 // loop_exit
    _

// kernel: model_forward.4
$region0: #{model_forward.4}
  #allocation0 [shape = 'u32[]', space=smem, size = 0x4, offset = 0x4, fixed_abs, tag = 'smem constant byte address 0x4 - core index']
  #allocation1 [shape = 'u32[144,128]{1,0:T(1,128)}', space=vmem, size = 0x12000, scoped, tag = 'internal scratch']
  %s0 = inlined_call_operand.vmem [shape: bf16[3,4,98,288], index: 0, kind: input, shape index: {}]
  %s1 = inlined_call_operand.vmem [shape: bf16[3,288,64], index: 1, kind: input, shape index: {}]
  %s2 = inlined_call_operand.vmem [shape: f32[3,1,64], index: 2, kind: input, shape index: {}]
  %s3 = inlined_call_operand.vmem [shape: bf16[3,98,64], index: 3, kind: output, shape index: {}]
  %s4 = sld [smem:[#allocation0]]
  $region45: #{model_forward.4} parent=0
    _
  %s6 = ssub.s32 1, %s4
  %s7 = scalar_select 0, %s6, %s4
  loop: start=0, step=1, limit=5
  $region2: #{model_forward.4} parent=0 // loop_pre_header
    _
  $region3: #{model_forward.4} parent=0 // loop_header
    %s9 = sphi 0, %s13
    %p10 = scmp.ge.s32.totalorder %s9, 5
    %s19 = sphi 0, %s21
    %s22 = sphi 0, %s19
    %s23 = sphi 0, %s22
    %s39 = sphi 0, %s23
    %s45 = sphi 0, %s47
    %s48 = sphi 0, %s45
    %s49 = sphi 0, %s48
    %s65 = sphi 0, %s49
    %s71 = sphi 0, %s73
    %s74 = sphi 0, %s71
    %s75 = sphi 0, %s74
    %s91 = sphi 0, %s75
    %s97 = sphi 0, %s99
    %s100 = sphi 0, %s97
    %s101 = sphi 0, %s100
    %s117 = sphi 0, %s101
  $region4: #{model_forward.4} parent=0 // loop_header_branch
    %12 = sbr.rel (%p10) target = $region8
  $region5: #{model_forward.4} parent=0 // loop_body
    %s14 = ssub.s32 %s9, 1
    %s15 = ssub.s32 %s9, 2
    %s16 = sadd.s32 %s9, 1
    %s17 = ssub.s32 %s9, %s16
    %p18 = scmp.eq.s32.totalorder %s17, 0
    %s20 = sadd.s32 %s19, 1
    %s21 = scalar_select %p18, %s19, %s20
    %p24 = pneg %p18
    %p25 = scmp.eq.s32.totalorder %s9, 2
    %p26 = por %p24, %p25
    %p27 = scmp.ne.s32.totalorder %s19, %s22
    %p28 = scmp.eq.s32.totalorder %s9, 0
    %p29 = por %p27, %p28
    %p30 = scmp.ne.s32.totalorder %s19, %s22
    %p31 = scmp.eq.s32.totalorder %s14, 2
    %p32 = por %p30, %p31
    %p33 = scmp.ne.s32.totalorder %s22, %s23
    %p34 = scmp.eq.s32.totalorder %s14, 0
    %p35 = por %p33, %p34
    %p36 = scmp.ne.s32.totalorder %s22, %s23
    %p37 = scmp.eq.s32.totalorder %s15, 2
    %p38 = por %p36, %p37
    %p40 = scmp.ne.s32.totalorder %s23, %s39
    %p41 = scmp.eq.s32.totalorder %s15, 0
    %p42 = por %p40, %p41
    %s43 = ssub.s32 %s9, %s16
    %p44 = scmp.eq.s32.totalorder %s43, 0
    %s46 = sadd.s32 %s45, 1
    %s47 = scalar_select %p44, %s45, %s46
    %p50 = pneg %p44
    %p51 = scmp.eq.s32.totalorder %s9, 2
    %p52 = por %p50, %p51
    %p53 = scmp.ne.s32.totalorder %s45, %s48
    %p54 = scmp.eq.s32.totalorder %s9, 0
    %p55 = por %p53, %p54
    %p56 = scmp.ne.s32.totalorder %s45, %s48
    %p57 = scmp.eq.s32.totalorder %s14, 2
    %p58 = por %p56, %p57
    %p59 = scmp.ne.s32.totalorder %s48, %s49
    %p60 = scmp.eq.s32.totalorder %s14, 0
    %p61 = por %p59, %p60
    %p62 = scmp.ne.s32.totalorder %s48, %s49
    %p63 = scmp.eq.s32.totalorder %s15, 2
    %p64 = por %p62, %p63
    %p66 = scmp.ne.s32.totalorder %s49, %s65
    %p67 = scmp.eq.s32.totalorder %s15, 0
    %p68 = por %p66, %p67
    %s69 = ssub.s32 %s9, %s16
    %p70 = scmp.eq.s32.totalorder %s69, 0
    %s72 = sadd.s32 %s71, 1
    %s73 = scalar_select %p70, %s71, %s72
    %p76 = pneg %p70
    %p77 = scmp.eq.s32.totalorder %s9, 2
    %p78 = por %p76, %p77
    %p79 = scmp.ne.s32.totalorder %s71, %s74
    %p80 = scmp.eq.s32.totalorder %s9, 0
    %p81 = por %p79, %p80
    %p82 = scmp.ne.s32.totalorder %s71, %s74
    %p83 = scmp.eq.s32.totalorder %s14, 2
    %p84 = por %p82, %p83
    %p85 = scmp.ne.s32.totalorder %s74, %s75
    %p86 = scmp.eq.s32.totalorder %s14, 0
    %p87 = por %p85, %p86
    %p88 = scmp.ne.s32.totalorder %s74, %s75
    %p89 = scmp.eq.s32.totalorder %s15, 2
    %p90 = por %p88, %p89
    %p92 = scmp.ne.s32.totalorder %s75, %s91
    %p93 = scmp.eq.s32.totalorder %s15, 0
    %p94 = por %p92, %p93
    %s95 = ssub.s32 %s9, %s16
    %p96 = scmp.eq.s32.totalorder %s95, 0
    %s98 = sadd.s32 %s97, 1
    %s99 = scalar_select %p96, %s97, %s98
    %p102 = pneg %p96
    %p103 = scmp.eq.s32.totalorder %s9, 2
    %p104 = por %p102, %p103
    %p105 = scmp.ne.s32.totalorder %s97, %s100
    %p106 = scmp.eq.s32.totalorder %s9, 0
    %p107 = por %p105, %p106
    %p108 = scmp.ne.s32.totalorder %s97, %s100
    %p109 = scmp.eq.s32.totalorder %s14, 2
    %p110 = por %p108, %p109
    %p111 = scmp.ne.s32.totalorder %s100, %s101
    %p112 = scmp.eq.s32.totalorder %s14, 0
    %p113 = por %p111, %p112
    %p114 = scmp.ne.s32.totalorder %s100, %s101
    %p115 = scmp.eq.s32.totalorder %s15, 2
    %p116 = por %p114, %p115
    %p118 = scmp.ne.s32.totalorder %s101, %s117
    %p119 = scmp.eq.s32.totalorder %s15, 0
    %p120 = por %p118, %p119
    %p121 = scmp.le.s32.totalorder 1, %s9
    %p122 = scmp.lt.s32.totalorder %s9, 4
    %p123 = pnand %p121, %p122
    %p124 = pneg %p123
    // Predicated region
    $region9: #{model_forward.4} parent=5 // pred_check
      _
    $region10: #{model_forward.4} parent=5 // pred_check_branch
      %126 = sbr.rel (%p123) target = $region12
    $region11: #{model_forward.4} parent=5 // pred_region
      %s127 = ssub.s32 %s9, 1
    $region12: #{model_forward.4} parent=5 // pred_fallthru
      _
    %p128 = scmp.lt.s32.totalorder %s9, 3
    // Predicated region
    $region13: #{model_forward.4} parent=5 // pred_check
      %p129 = pneg %p128
    $region14: #{model_forward.4} parent=5 // pred_check_branch
      %131 = sbr.rel (%p129) target = $region16
    $region15: #{model_forward.4} parent=5 // pred_region
      // Predicated region
      $region17: #{model_forward.4} parent=15 // pred_check
        %p132 = pneg %p29
      $region18: #{model_forward.4} parent=15 // pred_check_branch
        %134 = sbr.rel (%p132) target = $region20
      $region19: #{model_forward.4} parent=15 // pred_region
        %p135 = scmp.lt.s32.totalorder %s9, 2
        %s136 = scalar_select %p135, %s9, 2
        %s137 = smul.addr %s136, 156
        %s138 = smul.addr %s137, 4
        %s139 = scalar_lea.vmem %s0, %s138
      $region20: #{model_forward.4} parent=15 // pred_fallthru
        _
      // Predicated region
      $region21: #{model_forward.4} parent=15 // pred_check
        %p140 = pneg %p55
      $region22: #{model_forward.4} parent=15 // pred_check_branch
        %142 = sbr.rel (%p140) target = $region24
      $region23: #{model_forward.4} parent=15 // pred_region
        %p143 = scmp.lt.s32.totalorder %s9, 2
        %s144 = scalar_select %p143, %s9, 2
        %s145 = smul.addr %s144, 36
        %s146 = smul.addr %s145, 4
        %s147 = scalar_lea.vmem %s1, %s146
      $region24: #{model_forward.4} parent=15 // pred_fallthru
        _
      // Predicated region
      $region25: #{model_forward.4} parent=15 // pred_check
        %p148 = pneg %p81
      $region26: #{model_forward.4} parent=15 // pred_check_branch
        %150 = sbr.rel (%p148) target = $region28
      $region27: #{model_forward.4} parent=15 // pred_region
        %p151 = scmp.lt.s32.totalorder %s9, 2
        %s152 = scalar_select %p151, %s9, 2
        %s153 = scalar_lea.vmem %s2, %s152
      $region28: #{model_forward.4} parent=15 // pred_fallthru
        _
    $region16: #{model_forward.4} parent=5 // pred_fallthru
      _
    %p154 = scmp.le.s32.totalorder 1, %s9
    %p155 = scmp.lt.s32.totalorder %s9, 4
    %p156 = pnand %p154, %p155
    %p157 = pneg %p156
    // Predicated region
    $region29: #{model_forward.4} parent=5 // pred_check
      _
    $region30: #{model_forward.4} parent=5 // pred_check_branch
      %159 = sbr.rel (%p156) target = $region32
    $region31: #{model_forward.4} parent=5 // pred_region
      %s160 = ssub.s32 %s9, 1
      %p161 = scmp.lt.s32.totalorder %s14, 2
      %s162 = scalar_select %p161, %s14, 2
      %s163 = smul.addr %s162, 156
      %s164 = smul.addr %s163, 4
      %s165 = scalar_lea.vmem %s0, %s164
      %p166 = pneg %p35
      %p167 = pneg %p32
      %p168 = scmp.lt.s32.totalorder %s14, 2
      %s169 = scalar_select %p168, %s14, 2
      %s170 = smul.addr %s169, 36
      %s171 = smul.addr %s170, 4
      %s172 = scalar_lea.vmem %s1, %s171
      %p173 = pneg %p61
      %p174 = pneg %p58
      %p175 = scmp.lt.s32.totalorder %s14, 2
      %s176 = scalar_select %p175, %s14, 2
      %s177 = scalar_lea.vmem %s2, %s176
      %p178 = pneg %p87
      %p179 = pneg %p84
      %p180 = pneg %p113
      %p181 = pneg %p110
      %p182 = scmp.lt.s32.totalorder %s14, 2
      %s183 = scalar_select %p182, %s14, 2
      %s184 = smul.addr %s183, 13
      %s185 = smul.addr %s184, 4
      %s186 = scalar_lea.vmem %s3, %s185
      %p187 = scmp.lt.s32.totalorder %s14, 2
      %s188 = scalar_select %p187, %s14, 2
      %s189 = smul.addr %s188, 156
      %s190 = smul.addr %s189, 4
      %s191 = scalar_lea.vmem %s0, %s190
      %p192 = scmp.lt.s32.totalorder %s14, 2
      %s193 = scalar_select %p192, %s14, 2
      %s194 = smul.addr %s193, 36
      %s195 = smul.addr %s194, 4
      %s196 = scalar_lea.vmem %s1, %s195
      %p197 = scmp.lt.s32.totalorder %s14, 2
      %s198 = scalar_select %p197, %s14, 2
      %s199 = scalar_lea.vmem %s2, %s198
      %p200 = scmp.lt.s32.totalorder %s14, 2
      %s201 = scalar_select %p200, %s14, 2
      %s202 = smul.addr %s201, 13
      %s203 = smul.addr %s202, 4
      %s204 = scalar_lea.vmem %s3, %s203
      %v206 = vld [vmem:[%s191] sm:$0xff]
      %v207 = vld [vmem:[%s191 + $0x8] sm:$0xf]
      %v208 = vld [vmem:[%s191 + $0xc] sm:$0xff]
      %v209 = vld [vmem:[%s191 + $0x14] sm:$0xf]
      %v210 = vld [vmem:[%s191 + $0x18] sm:$0xff]
      %v211 = vld [vmem:[%s191 + $0x20] sm:$0xf]
      %v212 = vld [vmem:[%s191 + $0x24] sm:$0xff]
      %v213 = vld [vmem:[%s191 + $0x2c] sm:$0xf]
      %v214 = vld [vmem:[%s191 + $0x30] sm:$0xff]
      %v215 = vld [vmem:[%s191 + $0x38] sm:$0xf]
      %v216 = vld [vmem:[%s191 + $0x3c] sm:$0xff]
      %v217 = vld [vmem:[%s191 + $0x44] sm:$0xf]
      %v218 = vld [vmem:[%s191 + $0x48] sm:$0xff]
      %v219 = vld [vmem:[%s191 + $0x50] sm:$0xf]
      %v220 = vld [vmem:[%s191 + $0x54] sm:$0xff]
      %v221 = vld [vmem:[%s191 + $0x5c] sm:$0xf]
      %v222 = vld [vmem:[%s191 + $0x60] sm:$0xff]
      %v223 = vld [vmem:[%s191 + $0x68] sm:$0xf]
      %v224 = vld [vmem:[%s191 + $0x6c] sm:$0xff]
      %v225 = vld [vmem:[%s191 + $0x74] sm:$0xf]
      %v226 = vld [vmem:[%s191 + $0x78] sm:$0xff]
      %v227 = vld [vmem:[%s191 + $0x80] sm:$0xf]
      %v228 = vld [vmem:[%s191 + $0x84] sm:$0xff]
      %v229 = vld [vmem:[%s191 + $0x8c] sm:$0xf]
      %v230 = vld [vmem:[%s191 + $0x90] sm:$0x11]
      %v231 = vld [vmem:[%s191 + $0x98] sm:$0x1]
      %v232 = vld [vmem:[%s196] sm:$0xf]
      %v233 = vld [vmem:[%s196 + $0x4] sm:$0xf]
      %v234 = vld [vmem:[%s196 + $0x8] sm:$0xf]
      %v235 = vld [vmem:[%s196 + $0xc] sm:$0xf]
      %v236 = vld [vmem:[%s196 + $0x10] sm:$0xf]
      %v237 = vld [vmem:[%s196 + $0x14] sm:$0xf]
      %v238 = vld [vmem:[%s196 + $0x18] sm:$0xf]
      %v239 = vld [vmem:[%s196 + $0x1c] sm:$0xf]
      %v240 = vld [vmem:[%s196 + $0x20] sm:$0xf]
      %v241 = vld [vmem:[%s196 + $0x24] sm:$0xf]
      %v242 = vld [vmem:[%s196 + $0x28] sm:$0xf]
      %v243 = vld [vmem:[%s196 + $0x2c] sm:$0xf]
      %v244 = vld [vmem:[%s196 + $0x30] sm:$0xf]
      %v245 = vld [vmem:[%s196 + $0x34] sm:$0xf]
      %v246 = vld [vmem:[%s196 + $0x38] sm:$0xf]
      %v247 = vld [vmem:[%s196 + $0x3c] sm:$0xf]
      %v248 = vld [vmem:[%s196 + $0x40] sm:$0xf]
      %v249 = vld [vmem:[%s196 + $0x44] sm:$0xf]
      %v250 = vld [vmem:[%s196 + $0x48] sm:$0xf]
      %v251 = vld [vmem:[%s196 + $0x4c] sm:$0xf]
      %v252 = vld [vmem:[%s196 + $0x50] sm:$0xf]
      %v253 = vld [vmem:[%s196 + $0x54] sm:$0xf]
      %v254 = vld [vmem:[%s196 + $0x58] sm:$0xf]
      %v255 = vld [vmem:[%s196 + $0x5c] sm:$0xf]
      %v256 = vld [vmem:[%s196 + $0x60] sm:$0xf]
      %v257 = vld [vmem:[%s196 + $0x64] sm:$0xf]
      %v258 = vld [vmem:[%s196 + $0x68] sm:$0xf]
      %v259 = vld [vmem:[%s196 + $0x6c] sm:$0xf]
      %v260 = vld [vmem:[%s196 + $0x70] sm:$0xf]
      %v261 = vld [vmem:[%s196 + $0x74] sm:$0xf]
      %v262 = vld [vmem:[%s196 + $0x78] sm:$0xf]
      %v263 = vld [vmem:[%s196 + $0x7c] sm:$0xf]
      %v264 = vld [vmem:[%s196 + $0x80] sm:$0xf]
      %v265 = vld [vmem:[%s196 + $0x84] sm:$0xf]
      %v266 = vld [vmem:[%s196 + $0x88] sm:$0xf]
      %v267 = vld [vmem:[%s196 + $0x8c] sm:$0xf]
      %v294 = vunpack.c.l.b16 %v206
      %v295 = vunpack.c.h.b16 %v206
      %v296 = vunpack.c.l.b16 %v207
      %v297 = vunpack.c.l.b16 %v208
      %v298 = vunpack.c.h.b16 %v208
      %v299 = vunpack.c.l.b16 %v209
      %v300 = vunpack.c.l.b16 %v210
      %v301 = vunpack.c.h.b16 %v210
      %v302 = vunpack.c.l.b16 %v211
      %v303 = vunpack.c.l.b16 %v212
      %v304 = vunpack.c.h.b16 %v212
      %v305 = vunpack.c.l.b16 %v213
      %v306 = vunpack.c.l.b16 %v214
      %v307 = vunpack.c.h.b16 %v214
      %v308 = vunpack.c.l.b16 %v215
      %v309 = vunpack.c.l.b16 %v216
      %v310 = vunpack.c.h.b16 %v216
      %v311 = vunpack.c.l.b16 %v217
      %v312 = vunpack.c.l.b16 %v218
      %v313 = vunpack.c.h.b16 %v218
      %v314 = vunpack.c.l.b16 %v219
      %v315 = vunpack.c.l.b16 %v220
      %v316 = vunpack.c.h.b16 %v220
      %v317 = vunpack.c.l.b16 %v221
      %v318 = vunpack.c.l.b16 %v222
      %v319 = vunpack.c.h.b16 %v222
      %v320 = vunpack.c.l.b16 %v223
      %v321 = vunpack.c.l.b16 %v224
      %v322 = vunpack.c.h.b16 %v224
      %v323 = vunpack.c.l.b16 %v225
      %v324 = vunpack.c.l.b16 %v226
      %v325 = vunpack.c.h.b16 %v226
      %v326 = vunpack.c.l.b16 %v227
      %v327 = vunpack.c.l.b16 %v228
      %v328 = vunpack.c.h.b16 %v228
      %v329 = vunpack.c.l.b16 %v229
      %v330 = vunpack.c.l.b16 %v230
      %v331 = vunpack.c.h.b16 %v230
      %v332 = vunpack.c.l.b16 %v231
      %v333 = vpack.c.b16 %v297, %v294
      %v334 = vpack.c.b16 %v298, %v295
      %v335 = vpack.c.b16 %v299, %v296
      %v336 = vpack.c.b16 %v303, %v300
      %v337 = vpack.c.b16 %v304, %v301
      %v338 = vpack.c.b16 %v305, %v302
      %v339 = vpack.c.b16 %v309, %v306
      %v340 = vpack.c.b16 %v310, %v307
      %v341 = vpack.c.b16 %v311, %v308
      %v342 = vpack.c.b16 %v315, %v312
      %v343 = vpack.c.b16 %v316, %v313
      %v344 = vpack.c.b16 %v317, %v314
      %v345 = vpack.c.b16 %v321, %v318
      %v346 = vpack.c.b16 %v322, %v319
      %v347 = vpack.c.b16 %v323, %v320
      %v348 = vpack.c.b16 %v327, %v324
      %v349 = vpack.c.b16 %v328, %v325
      %v350 = vpack.c.b16 %v329, %v326
      %v351 = vpack.c.b16 %v330, %v330
      %v352 = vpack.c.b16 %v331, %v331
      %v353 = vpack.c.b16 %v332, %v332
      %v404 = vunpack.c.l.b16 %v232
      %v405 = vunpack.c.l.b16 %v233
      %v406 = vunpack.c.l.b16 %v234
      %v407 = vunpack.c.l.b16 %v235
      %v408 = vunpack.c.l.b16 %v236
      %v409 = vunpack.c.l.b16 %v237
      %v410 = vunpack.c.l.b16 %v238
      %v411 = vunpack.c.l.b16 %v239
      %v412 = vunpack.c.l.b16 %v240
      %v413 = vunpack.c.l.b16 %v241
      %v414 = vunpack.c.l.b16 %v242
      %v415 = vunpack.c.l.b16 %v243
      %v416 = vunpack.c.l.b16 %v244
      %v417 = vunpack.c.l.b16 %v245
      %v418 = vunpack.c.l.b16 %v246
      %v419 = vunpack.c.l.b16 %v247
      %v420 = vunpack.c.l.b16 %v248
      %v421 = vunpack.c.l.b16 %v249
      %v422 = vunpack.c.l.b16 %v250
      %v423 = vunpack.c.l.b16 %v251
      %v424 = vunpack.c.l.b16 %v252
      %v425 = vunpack.c.l.b16 %v253
      %v426 = vunpack.c.l.b16 %v254
      %v427 = vunpack.c.l.b16 %v255
      %v428 = vunpack.c.l.b16 %v256
      %v429 = vunpack.c.l.b16 %v257
      %v430 = vunpack.c.l.b16 %v258
      %v431 = vunpack.c.l.b16 %v259
      %v432 = vunpack.c.l.b16 %v260
      %v433 = vunpack.c.l.b16 %v261
      %v434 = vunpack.c.l.b16 %v262
      %v435 = vunpack.c.l.b16 %v263
      %v436 = vunpack.c.l.b16 %v264
      %v437 = vunpack.c.l.b16 %v265
      %v438 = vunpack.c.l.b16 %v266
      %v439 = vunpack.c.l.b16 %v267
      %v440 = vpack.c.b16 %v405, %v404
      %v441 = vpack.c.b16 %v407, %v406
      %v442 = vpack.c.b16 %v409, %v408
      %v443 = vpack.c.b16 %v411, %v410
      %v444 = vpack.c.b16 %v413, %v412
      %v445 = vpack.c.b16 %v415, %v414
      %v446 = vpack.c.b16 %v417, %v416
      %v447 = vpack.c.b16 %v419, %v418
      %v448 = vpack.c.b16 %v421, %v420
      %v449 = vpack.c.b16 %v423, %v422
      %v450 = vpack.c.b16 %v425, %v424
      %v451 = vpack.c.b16 %v427, %v426
      %v452 = vpack.c.b16 %v429, %v428
      %v453 = vpack.c.b16 %v431, %v430
      %v454 = vpack.c.b16 %v433, %v432
      %v455 = vpack.c.b16 %v435, %v434
      %v456 = vpack.c.b16 %v437, %v436
      %v457 = vpack.c.b16 %v439, %v438
      %vm476 = vcmask 261120
      %v478 = vsel %vm476, %v335, 0
      %v481 = vsel %vm476, %v338, 0
      %v484 = vsel %vm476, %v341, 0
      %v487 = vsel %vm476, %v344, 0
      %v490 = vsel %vm476, %v347, 0
      %v493 = vsel %vm476, %v350, 0
      %v496 = vsel %vm476, %v353, 0
      %498 = vmatprep.subr.bf16.mxu0 0
      %499 = vmatpush1.bf16.msra.mxu0 %v447
      %500 = vmatprep.subr.bf16.mxu0 0
      %501 = vmatpush1.bf16.msra.mxu0 %v446
      %502 = vmatprep.subr.bf16.mxu0 0
      %503 = vmatpush1.bf16.msra.mxu0 %v445
      %504 = vmatprep.subr.bf16.mxu0 0
      %505 = vmatpush1.bf16.msra.mxu0 %v444
      %506 = vmatprep.subr.bf16.mxu0 0
      %507 = vmatpush1.bf16.msra.mxu0 %v443
      %508 = vmatprep.subr.bf16.mxu0 0
      %509 = vmatpush1.bf16.msra.mxu0 %v442
      %510 = vmatprep.subr.bf16.mxu0 0
      %511 = vmatpush1.bf16.msra.mxu0 %v441
      %512 = vmatprep.subr.bf16.mxu0 0
      %513 = vmatpush1.bf16.msra.mxu0 %v440
      %514 = vmatprep.subr.bf16.mxu0 0
      %515 = vmatpush2.bf16.msra.mxu0 %v455
      %516 = vmatprep.subr.bf16.mxu0 0
      %517 = vmatpush2.bf16.msra.mxu0 %v454
      %518 = vmatprep.subr.bf16.mxu0 0
      %519 = vmatpush2.bf16.msra.mxu0 %v453
      %520 = vmatprep.subr.bf16.mxu0 0
      %521 = vmatpush2.bf16.msra.mxu0 %v452
      %522 = vmatprep.subr.bf16.mxu0 0
      %523 = vmatpush2.bf16.msra.mxu0 %v451
      %524 = vmatprep.subr.bf16.mxu0 0
      %525 = vmatpush2.bf16.msra.mxu0 %v450
      %526 = vmatprep.subr.bf16.mxu0 0
      %527 = vmatpush2.bf16.msra.mxu0 %v449
      %528 = vmatprep.subr.bf16.mxu0 0
      %529 = vmatpush2.bf16.msra.mxu0 %v448
      %530 = vmatprep.mubr.bf16.mxu0 %v334
      %531 = vmatmul.mubr.bf16.gmra.mxu0 %v333
      %v532 = vpop.f32.mrf.mxu0
      %v533 = vadd.f32 0.0, %v532
      %v534 = vpop.f32.mrf.mxu0
      %v535 = vpop.f32.mrf.mxu0
      %v536 = vadd.f32 0.0, %v535
      %v537 = vpop.f32.mrf.mxu0
      %538 = vmatprep.mubr.bf16.mxu0 %v337
      %539 = vmatmul.mubr.bf16.gmra.mxu0 %v336
      %v540 = vpop.f32.mrf.mxu0
      %v541 = vadd.f32 0.0, %v540
      %v542 = vpop.f32.mrf.mxu0
      %v543 = vpop.f32.mrf.mxu0
      %v544 = vadd.f32 0.0, %v543
      %v545 = vpop.f32.mrf.mxu0
      %546 = vmatprep.mubr.bf16.mxu0 %v340
      %547 = vmatmul.mubr.bf16.gmra.mxu0 %v339
      %v548 = vpop.f32.mrf.mxu0
      %v549 = vadd.f32 0.0, %v548
      %v550 = vpop.f32.mrf.mxu0
      %v551 = vpop.f32.mrf.mxu0
      %v552 = vadd.f32 0.0, %v551
      %v553 = vpop.f32.mrf.mxu0
      %554 = vmatprep.mubr.bf16.mxu0 %v343
      %555 = vmatmul.mubr.bf16.gmra.mxu0 %v342
      %v556 = vpop.f32.mrf.mxu0
      %v557 = vadd.f32 0.0, %v556
      %v558 = vpop.f32.mrf.mxu0
      %v559 = vpop.f32.mrf.mxu0
      %v560 = vadd.f32 0.0, %v559
      %v561 = vpop.f32.mrf.mxu0
      %562 = vmatprep.mubr.bf16.mxu0 %v346
      %563 = vmatmul.mubr.bf16.gmra.mxu0 %v345
      %v564 = vpop.f32.mrf.mxu0
      %v565 = vadd.f32 0.0, %v564
      %v566 = vpop.f32.mrf.mxu0
      %v567 = vpop.f32.mrf.mxu0
      %v568 = vadd.f32 0.0, %v567
      %v569 = vpop.f32.mrf.mxu0
      %570 = vmatprep.mubr.bf16.mxu0 %v349
      %571 = vmatmul.mubr.bf16.gmra.mxu0 %v348
      %v572 = vpop.f32.mrf.mxu0
      %v573 = vadd.f32 0.0, %v572
      %v574 = vpop.f32.mrf.mxu0
      %v575 = vpop.f32.mrf.mxu0
      %v576 = vadd.f32 0.0, %v575
      %v577 = vpop.f32.mrf.mxu0
      %578 = vmatprep.mubr.bf16.mxu0 %v352
      %579 = vmatmul.mubr.bf16.gmra.mxu0 %v351
      %v580 = vpop.f32.mrf.mxu0
      %v581 = vadd.f32 0.0, %v580
      %v582 = vpop.f32.mrf.mxu0
      %v583 = vpop.f32.mrf.mxu0
      %v584 = vpop.f32.mrf.mxu0
      %585 = vdwg.mxu0
      %586 = vmatprep.subr.bf16.mxu0 0
      %587 = vmatpush1.bf16.msra.mxu0 0
      %588 = vmatprep.subr.bf16.mxu0 0
      %589 = vmatpush1.bf16.msra.mxu0 0
      %590 = vmatprep.subr.bf16.mxu0 0
      %591 = vmatpush1.bf16.msra.mxu0 0
      %592 = vmatprep.subr.bf16.mxu0 0
      %593 = vmatpush1.bf16.msra.mxu0 0
      %594 = vmatprep.subr.bf16.mxu0 0
      %595 = vmatpush1.bf16.msra.mxu0 0
      %596 = vmatprep.subr.bf16.mxu0 0
      %597 = vmatpush1.bf16.msra.mxu0 0
      %598 = vmatprep.subr.bf16.mxu0 0
      %599 = vmatpush1.bf16.msra.mxu0 %v457
      %600 = vmatprep.subr.bf16.mxu0 0
      %601 = vmatpush1.bf16.msra.mxu0 %v456
      %602 = vmatprep.subr.bf16.mxu0 0
      %603 = vmatpush2.bf16.msra.mxu0 0
      %604 = vmatprep.subr.bf16.mxu0 0
      %605 = vmatpush2.bf16.msra.mxu0 0
      %606 = vmatprep.subr.bf16.mxu0 0
      %607 = vmatpush2.bf16.msra.mxu0 0
      %608 = vmatprep.subr.bf16.mxu0 0
      %609 = vmatpush2.bf16.msra.mxu0 0
      %610 = vmatprep.subr.bf16.mxu0 0
      %611 = vmatpush2.bf16.msra.mxu0 0
      %612 = vmatprep.subr.bf16.mxu0 0
      %613 = vmatpush2.bf16.msra.mxu0 0
      %614 = vmatprep.subr.bf16.mxu0 0
      %615 = vmatpush2.bf16.msra.mxu0 0
      %616 = vmatprep.subr.bf16.mxu0 0
      %617 = vmatpush2.bf16.msra.mxu0 0
      %618 = vmatprep.mubr.bf16.mxu0 0
      %619 = vmatmul.mubr.bf16.gmra.mxu0 %v478
      %v620 = vpop.f32.mrf.mxu0
      %v621 = vadd.f32 %v533, %v620
      %v622 = vpop.f32.mrf.mxu0
      %v623 = vpop.f32.mrf.mxu0
      %v624 = vadd.f32 %v536, %v623
      %v625 = vpop.f32.mrf.mxu0
      %626 = vmatprep.mubr.bf16.mxu0 0
      %627 = vmatmul.mubr.bf16.gmra.mxu0 %v481
      %v628 = vpop.f32.mrf.mxu0
      %v629 = vadd.f32 %v541, %v628
      %v630 = vpop.f32.mrf.mxu0
      %v631 = vpop.f32.mrf.mxu0
      %v632 = vadd.f32 %v544, %v631
      %v633 = vpop.f32.mrf.mxu0
      %634 = vmatprep.mubr.bf16.mxu0 0
      %635 = vmatmul.mubr.bf16.gmra.mxu0 %v484
      %v636 = vpop.f32.mrf.mxu0
      %v637 = vadd.f32 %v549, %v636
      %v638 = vpop.f32.mrf.mxu0
      %v639 = vpop.f32.mrf.mxu0
      %v640 = vadd.f32 %v552, %v639
      %v641 = vpop.f32.mrf.mxu0
      %642 = vmatprep.mubr.bf16.mxu0 0
      %643 = vmatmul.mubr.bf16.gmra.mxu0 %v487
      %v644 = vpop.f32.mrf.mxu0
      %v645 = vadd.f32 %v557, %v644
      %v646 = vpop.f32.mrf.mxu0
      %v647 = vpop.f32.mrf.mxu0
      %v648 = vadd.f32 %v560, %v647
      %v649 = vpop.f32.mrf.mxu0
      %650 = vmatprep.mubr.bf16.mxu0 0
      %651 = vmatmul.mubr.bf16.gmra.mxu0 %v490
      %v652 = vpop.f32.mrf.mxu0
      %v653 = vadd.f32 %v565, %v652
      %v654 = vpop.f32.mrf.mxu0
      %v655 = vpop.f32.mrf.mxu0
      %v656 = vadd.f32 %v568, %v655
      %v657 = vpop.f32.mrf.mxu0
      %658 = vmatprep.mubr.bf16.mxu0 0
      %659 = vmatmul.mubr.bf16.gmra.mxu0 %v493
      %v660 = vpop.f32.mrf.mxu0
      %v661 = vadd.f32 %v573, %v660
      %v662 = vpop.f32.mrf.mxu0
      %v663 = vpop.f32.mrf.mxu0
      %v664 = vadd.f32 %v576, %v663
      %v665 = vpop.f32.mrf.mxu0
      %666 = vmatprep.mubr.bf16.mxu0 0
      %667 = vmatmul.mubr.bf16.gmra.mxu0 %v496
      %v668 = vpop.f32.mrf.mxu0
      %v669 = vadd.f32 %v581, %v668
      %v670 = vpop.f32.mrf.mxu0
      %v671 = vpop.f32.mrf.mxu0
      %v672 = vpop.f32.mrf.mxu0
      %673 = vdwg.mxu0
      %s674 = scalar_lea.vmem %s191, 156
      %v675 = vld [vmem:[%s674] sm:$0xff]
      %v676 = vld [vmem:[%s674 + $0x8] sm:$0xf]
      %v677 = vld [vmem:[%s674 + $0xc] sm:$0xff]
      %v678 = vld [vmem:[%s674 + $0x14] sm:$0xf]
      %v679 = vld [vmem:[%s674 + $0x18] sm:$0xff]
      %v680 = vld [vmem:[%s674 + $0x20] sm:$0xf]
      %v681 = vld [vmem:[%s674 + $0x24] sm:$0xff]
      %v682 = vld [vmem:[%s674 + $0x2c] sm:$0xf]
      %v683 = vld [vmem:[%s674 + $0x30] sm:$0xff]
      %v684 = vld [vmem:[%s674 + $0x38] sm:$0xf]
      %v685 = vld [vmem:[%s674 + $0x3c] sm:$0xff]
      %v686 = vld [vmem:[%s674 + $0x44] sm:$0xf]
      %v687 = vld [vmem:[%s674 + $0x48] sm:$0xff]
      %v688 = vld [vmem:[%s674 + $0x50] sm:$0xf]
      %v689 = vld [vmem:[%s674 + $0x54] sm:$0xff]
      %v690 = vld [vmem:[%s674 + $0x5c] sm:$0xf]
      %v691 = vld [vmem:[%s674 + $0x60] sm:$0xff]
      %v692 = vld [vmem:[%s674 + $0x68] sm:$0xf]
      %v693 = vld [vmem:[%s674 + $0x6c] sm:$0xff]
      %v694 = vld [vmem:[%s674 + $0x74] sm:$0xf]
      %v695 = vld [vmem:[%s674 + $0x78] sm:$0xff]
      %v696 = vld [vmem:[%s674 + $0x80] sm:$0xf]
      %v697 = vld [vmem:[%s674 + $0x84] sm:$0xff]
      %v698 = vld [vmem:[%s674 + $0x8c] sm:$0xf]
      %v699 = vld [vmem:[%s674 + $0x90] sm:$0x11]
      %v700 = vld [vmem:[%s674 + $0x98] sm:$0x1]
      %v727 = vunpack.c.l.b16 %v675
      %v728 = vunpack.c.h.b16 %v675
      %v729 = vunpack.c.l.b16 %v676
      %v730 = vunpack.c.l.b16 %v677
      %v731 = vunpack.c.h.b16 %v677
      %v732 = vunpack.c.l.b16 %v678
      %v733 = vunpack.c.l.b16 %v679
      %v734 = vunpack.c.h.b16 %v679
      %v735 = vunpack.c.l.b16 %v680
      %v736 = vunpack.c.l.b16 %v681
      %v737 = vunpack.c.h.b16 %v681
      %v738 = vunpack.c.l.b16 %v682
      %v739 = vunpack.c.l.b16 %v683
      %v740 = vunpack.c.h.b16 %v683
      %v741 = vunpack.c.l.b16 %v684
      %v742 = vunpack.c.l.b16 %v685
      %v743 = vunpack.c.h.b16 %v685
      %v744 = vunpack.c.l.b16 %v686
      %v745 = vunpack.c.l.b16 %v687
      %v746 = vunpack.c.h.b16 %v687
      %v747 = vunpack.c.l.b16 %v688
      %v748 = vunpack.c.l.b16 %v689
      %v749 = vunpack.c.h.b16 %v689
      %v750 = vunpack.c.l.b16 %v690
      %v751 = vunpack.c.l.b16 %v691
      %v752 = vunpack.c.h.b16 %v691
      %v753 = vunpack.c.l.b16 %v692
      %v754 = vunpack.c.l.b16 %v693
      %v755 = vunpack.c.h.b16 %v693
      %v756 = vunpack.c.l.b16 %v694
      %v757 = vunpack.c.l.b16 %v695
      %v758 = vunpack.c.h.b16 %v695
      %v759 = vunpack.c.l.b16 %v696
      %v760 = vunpack.c.l.b16 %v697
      %v761 = vunpack.c.h.b16 %v697
      %v762 = vunpack.c.l.b16 %v698
      %v763 = vunpack.c.l.b16 %v699
      %v764 = vunpack.c.h.b16 %v699
      %v765 = vunpack.c.l.b16 %v700
      %v766 = vpack.c.b16 %v730, %v727
      %v767 = vpack.c.b16 %v731, %v728
      %v768 = vpack.c.b16 %v732, %v729
      %v769 = vpack.c.b16 %v736, %v733
      %v770 = vpack.c.b16 %v737, %v734
      %v771 = vpack.c.b16 %v738, %v735
      %v772 = vpack.c.b16 %v742, %v739
      %v773 = vpack.c.b16 %v743, %v740
      %v774 = vpack.c.b16 %v744, %v741
      %v775 = vpack.c.b16 %v748, %v745
      %v776 = vpack.c.b16 %v749, %v746
      %v777 = vpack.c.b16 %v750, %v747
      %v778 = vpack.c.b16 %v754, %v751
      %v779 = vpack.c.b16 %v755, %v752
      %v780 = vpack.c.b16 %v756, %v753
      %v781 = vpack.c.b16 %v760, %v757
      %v782 = vpack.c.b16 %v761, %v758
      %v783 = vpack.c.b16 %v762, %v759
      %v784 = vpack.c.b16 %v763, %v763
      %v785 = vpack.c.b16 %v764, %v764
      %v786 = vpack.c.b16 %v765, %v765
      %v802 = vsel %vm476, %v768, 0
      %v805 = vsel %vm476, %v771, 0
      %v808 = vsel %vm476, %v774, 0
      %v811 = vsel %vm476, %v777, 0
      %v814 = vsel %vm476, %v780, 0
      %v817 = vsel %vm476, %v783, 0
      %v820 = vsel %vm476, %v786, 0
      %822 = vmatprep.subr.bf16.mxu0 0
      %823 = vmatpush1.bf16.msra.mxu0 %v447
      %824 = vmatprep.subr.bf16.mxu0 0
      %825 = vmatpush1.bf16.msra.mxu0 %v446
      %826 = vmatprep.subr.bf16.mxu0 0
      %827 = vmatpush1.bf16.msra.mxu0 %v445
      %828 = vmatprep.subr.bf16.mxu0 0
      %829 = vmatpush1.bf16.msra.mxu0 %v444
      %830 = vmatprep.subr.bf16.mxu0 0
      %831 = vmatpush1.bf16.msra.mxu0 %v443
      %832 = vmatprep.subr.bf16.mxu0 0
      %833 = vmatpush1.bf16.msra.mxu0 %v442
      %834 = vmatprep.subr.bf16.mxu0 0
      %835 = vmatpush1.bf16.msra.mxu0 %v441
      %836 = vmatprep.subr.bf16.mxu0 0
      %837 = vmatpush1.bf16.msra.mxu0 %v440
      %838 = vmatprep.subr.bf16.mxu0 0
      %839 = vmatpush2.bf16.msra.mxu0 %v455
      %840 = vmatprep.subr.bf16.mxu0 0
      %841 = vmatpush2.bf16.msra.mxu0 %v454
      %842 = vmatprep.subr.bf16.mxu0 0
      %843 = vmatpush2.bf16.msra.mxu0 %v453
      %844 = vmatprep.subr.bf16.mxu0 0
      %845 = vmatpush2.bf16.msra.mxu0 %v452
      %846 = vmatprep.subr.bf16.mxu0 0
      %847 = vmatpush2.bf16.msra.mxu0 %v451
      %848 = vmatprep.subr.bf16.mxu0 0
      %849 = vmatpush2.bf16.msra.mxu0 %v450
      %850 = vmatprep.subr.bf16.mxu0 0
      %851 = vmatpush2.bf16.msra.mxu0 %v449
      %852 = vmatprep.subr.bf16.mxu0 0
      %853 = vmatpush2.bf16.msra.mxu0 %v448
      %854 = vmatprep.mubr.bf16.mxu0 %v767
      %855 = vmatmul.mubr.bf16.gmra.mxu0 %v766
      %v856 = vpop.f32.mrf.mxu0
      %v857 = vadd.f32 0.0, %v856
      %v858 = vpop.f32.mrf.mxu0
      %v859 = vpop.f32.mrf.mxu0
      %v860 = vadd.f32 0.0, %v859
      %v861 = vpop.f32.mrf.mxu0
      %862 = vmatprep.mubr.bf16.mxu0 %v770
      %863 = vmatmul.mubr.bf16.gmra.mxu0 %v769
      %v864 = vpop.f32.mrf.mxu0
      %v865 = vadd.f32 0.0, %v864
      %v866 = vpop.f32.mrf.mxu0
      %v867 = vpop.f32.mrf.mxu0
      %v868 = vadd.f32 0.0, %v867
      %v869 = vpop.f32.mrf.mxu0
      %870 = vmatprep.mubr.bf16.mxu0 %v773
      %871 = vmatmul.mubr.bf16.gmra.mxu0 %v772
      %v872 = vpop.f32.mrf.mxu0
      %v873 = vadd.f32 0.0, %v872
      %v874 = vpop.f32.mrf.mxu0
      %v875 = vpop.f32.mrf.mxu0
      %v876 = vadd.f32 0.0, %v875
      %v877 = vpop.f32.mrf.mxu0
      %878 = vmatprep.mubr.bf16.mxu0 %v776
      %879 = vmatmul.mubr.bf16.gmra.mxu0 %v775
      %v880 = vpop.f32.mrf.mxu0
      %v881 = vadd.f32 0.0, %v880
      %v882 = vpop.f32.mrf.mxu0
      %v883 = vpop.f32.mrf.mxu0
      %v884 = vadd.f32 0.0, %v883
      %v885 = vpop.f32.mrf.mxu0
      %886 = vmatprep.mubr.bf16.mxu0 %v779
      %887 = vmatmul.mubr.bf16.gmra.mxu0 %v778
      %v888 = vpop.f32.mrf.mxu0
      %v889 = vadd.f32 0.0, %v888
      %v890 = vpop.f32.mrf.mxu0
      %v891 = vpop.f32.mrf.mxu0
      %v892 = vadd.f32 0.0, %v891
      %v893 = vpop.f32.mrf.mxu0
      %894 = vmatprep.mubr.bf16.mxu0 %v782
      %895 = vmatmul.mubr.bf16.gmra.mxu0 %v781
      %v896 = vpop.f32.mrf.mxu0
      %v897 = vadd.f32 0.0, %v896
      %v898 = vpop.f32.mrf.mxu0
      %v899 = vpop.f32.mrf.mxu0
      %v900 = vadd.f32 0.0, %v899
      %v901 = vpop.f32.mrf.mxu0
      %902 = vmatprep.mubr.bf16.mxu0 %v785
      %903 = vmatmul.mubr.bf16.gmra.mxu0 %v784
      %v904 = vpop.f32.mrf.mxu0
      %v905 = vadd.f32 0.0, %v904
      %v906 = vpop.f32.mrf.mxu0
      %v907 = vpop.f32.mrf.mxu0
      %v908 = vpop.f32.mrf.mxu0
      %909 = vdwg.mxu0
      %910 = vmatprep.subr.bf16.mxu0 0
      %911 = vmatpush1.bf16.msra.mxu0 0
      %912 = vmatprep.subr.bf16.mxu0 0
      %913 = vmatpush1.bf16.msra.mxu0 0
      %914 = vmatprep.subr.bf16.mxu0 0
      %915 = vmatpush1.bf16.msra.mxu0 0
      %916 = vmatprep.subr.bf16.mxu0 0
      %917 = vmatpush1.bf16.msra.mxu0 0
      %918 = vmatprep.subr.bf16.mxu0 0
      %919 = vmatpush1.bf16.msra.mxu0 0
      %920 = vmatprep.subr.bf16.mxu0 0
      %921 = vmatpush1.bf16.msra.mxu0 0
      %922 = vmatprep.subr.bf16.mxu0 0
      %923 = vmatpush1.bf16.msra.mxu0 %v457
      %924 = vmatprep.subr.bf16.mxu0 0
      %925 = vmatpush1.bf16.msra.mxu0 %v456
      %926 = vmatprep.subr.bf16.mxu0 0
      %927 = vmatpush2.bf16.msra.mxu0 0
      %928 = vmatprep.subr.bf16.mxu0 0
      %929 = vmatpush2.bf16.msra.mxu0 0
      %930 = vmatprep.subr.bf16.mxu0 0
      %931 = vmatpush2.bf16.msra.mxu0 0
      %932 = vmatprep.subr.bf16.mxu0 0
      %933 = vmatpush2.bf16.msra.mxu0 0
      %934 = vmatprep.subr.bf16.mxu0 0
      %935 = vmatpush2.bf16.msra.mxu0 0
      %936 = vmatprep.subr.bf16.mxu0 0
      %937 = vmatpush2.bf16.msra.mxu0 0
      %938 = vmatprep.subr.bf16.mxu0 0
      %939 = vmatpush2.bf16.msra.mxu0 0
      %940 = vmatprep.subr.bf16.mxu0 0
      %941 = vmatpush2.bf16.msra.mxu0 0
      %942 = vmatprep.mubr.bf16.mxu0 0
      %943 = vmatmul.mubr.bf16.gmra.mxu0 %v802
      %v944 = vpop.f32.mrf.mxu0
      %v945 = vadd.f32 %v857, %v944
      %v946 = vpop.f32.mrf.mxu0
      %v947 = vpop.f32.mrf.mxu0
      %v948 = vadd.f32 %v860, %v947
      %v949 = vpop.f32.mrf.mxu0
      %950 = vmatprep.mubr.bf16.mxu0 0
      %951 = vmatmul.mubr.bf16.gmra.mxu0 %v805
      %v952 = vpop.f32.mrf.mxu0
      %v953 = vadd.f32 %v865, %v952
      %v954 = vpop.f32.mrf.mxu0
      %v955 = vpop.f32.mrf.mxu0
      %v956 = vadd.f32 %v868, %v955
      %v957 = vpop.f32.mrf.mxu0
      %958 = vmatprep.mubr.bf16.mxu0 0
      %959 = vmatmul.mubr.bf16.gmra.mxu0 %v808
      %v960 = vpop.f32.mrf.mxu0
      %v961 = vadd.f32 %v873, %v960
      %v962 = vpop.f32.mrf.mxu0
      %v963 = vpop.f32.mrf.mxu0
      %v964 = vadd.f32 %v876, %v963
      %v965 = vpop.f32.mrf.mxu0
      %966 = vmatprep.mubr.bf16.mxu0 0
      %967 = vmatmul.mubr.bf16.gmra.mxu0 %v811
      %v968 = vpop.f32.mrf.mxu0
      %v969 = vadd.f32 %v881, %v968
      %v970 = vpop.f32.mrf.mxu0
      %v971 = vpop.f32.mrf.mxu0
      %v972 = vadd.f32 %v884, %v971
      %v973 = vpop.f32.mrf.mxu0
      %974 = vmatprep.mubr.bf16.mxu0 0
      %975 = vmatmul.mubr.bf16.gmra.mxu0 %v814
      %v976 = vpop.f32.mrf.mxu0
      %v977 = vadd.f32 %v889, %v976
      %v978 = vpop.f32.mrf.mxu0
      %v979 = vpop.f32.mrf.mxu0
      %v980 = vadd.f32 %v892, %v979
      %v981 = vpop.f32.mrf.mxu0
      %982 = vmatprep.mubr.bf16.mxu0 0
      %983 = vmatmul.mubr.bf16.gmra.mxu0 %v817
      %v984 = vpop.f32.mrf.mxu0
      %v985 = vadd.f32 %v897, %v984
      %v986 = vpop.f32.mrf.mxu0
      %v987 = vpop.f32.mrf.mxu0
      %v988 = vadd.f32 %v900, %v987
      %v989 = vpop.f32.mrf.mxu0
      %990 = vmatprep.mubr.bf16.mxu0 0
      %991 = vmatmul.mubr.bf16.gmra.mxu0 %v820
      %v992 = vpop.f32.mrf.mxu0
      %v993 = vadd.f32 %v905, %v992
      %v994 = vpop.f32.mrf.mxu0
      %v995 = vpop.f32.mrf.mxu0
      %v996 = vpop.f32.mrf.mxu0
      %997 = vdwg.mxu0
      %v998 = vmax.f32 %v621, %v945
      %v999 = vmax.f32 %v624, %v948
      %v1000 = vmax.f32 %v629, %v953
      %v1001 = vmax.f32 %v632, %v956
      %v1002 = vmax.f32 %v637, %v961
      %v1003 = vmax.f32 %v640, %v964
      %v1004 = vmax.f32 %v645, %v969
      %v1005 = vmax.f32 %v648, %v972
      %v1006 = vmax.f32 %v653, %v977
      %v1007 = vmax.f32 %v656, %v980
      %v1008 = vmax.f32 %v661, %v985
      %v1009 = vmax.f32 %v664, %v988
      %v1010 = vmax.f32 %v669, %v993
      %s1011 = scalar_lea.vmem %s191, 312
      %v1012 = vld [vmem:[%s1011] sm:$0xff]
      %v1013 = vld [vmem:[%s1011 + $0x8] sm:$0xf]
      %v1014 = vld [vmem:[%s1011 + $0xc] sm:$0xff]
      %v1015 = vld [vmem:[%s1011 + $0x14] sm:$0xf]
      %v1016 = vld [vmem:[%s1011 + $0x18] sm:$0xff]
      %v1017 = vld [vmem:[%s1011 + $0x20] sm:$0xf]
      %v1018 = vld [vmem:[%s1011 + $0x24] sm:$0xff]
      %v1019 = vld [vmem:[%s1011 + $0x2c] sm:$0xf]
      %v1020 = vld [vmem:[%s1011 + $0x30] sm:$0xff]
      %v1021 = vld [vmem:[%s1011 + $0x38] sm:$0xf]
      %v1022 = vld [vmem:[%s1011 + $0x3c] sm:$0xff]
      %v1023 = vld [vmem:[%s1011 + $0x44] sm:$0xf]
      %v1024 = vld [vmem:[%s1011 + $0x48] sm:$0xff]
      %v1025 = vld [vmem:[%s1011 + $0x50] sm:$0xf]
      %v1026 = vld [vmem:[%s1011 + $0x54] sm:$0xff]
      %v1027 = vld [vmem:[%s1011 + $0x5c] sm:$0xf]
      %v1028 = vld [vmem:[%s1011 + $0x60] sm:$0xff]
      %v1029 = vld [vmem:[%s1011 + $0x68] sm:$0xf]
      %v1030 = vld [vmem:[%s1011 + $0x6c] sm:$0xff]
      %v1031 = vld [vmem:[%s1011 + $0x74] sm:$0xf]
      %v1032 = vld [vmem:[%s1011 + $0x78] sm:$0xff]
      %v1033 = vld [vmem:[%s1011 + $0x80] sm:$0xf]
      %v1034 = vld [vmem:[%s1011 + $0x84] sm:$0xff]
      %v1035 = vld [vmem:[%s1011 + $0x8c] sm:$0xf]
      %v1036 = vld [vmem:[%s1011 + $0x90] sm:$0x11]
      %v1037 = vld [vmem:[%s1011 + $0x98] sm:$0x1]
      %v1064 = vunpack.c.l.b16 %v1012
      %v1065 = vunpack.c.h.b16 %v1012
      %v1066 = vunpack.c.l.b16 %v1013
      %v1067 = vunpack.c.l.b16 %v1014
      %v1068 = vunpack.c.h.b16 %v1014
      %v1069 = vunpack.c.l.b16 %v1015
      %v1070 = vunpack.c.l.b16 %v1016
      %v1071 = vunpack.c.h.b16 %v1016
      %v1072 = vunpack.c.l.b16 %v1017
      %v1073 = vunpack.c.l.b16 %v1018
      %v1074 = vunpack.c.h.b16 %v1018
      %v1075 = vunpack.c.l.b16 %v1019
      %v1076 = vunpack.c.l.b16 %v1020
      %v1077 = vunpack.c.h.b16 %v1020
      %v1078 = vunpack.c.l.b16 %v1021
      %v1079 = vunpack.c.l.b16 %v1022
      %v1080 = vunpack.c.h.b16 %v1022
      %v1081 = vunpack.c.l.b16 %v1023
      %v1082 = vunpack.c.l.b16 %v1024
      %v1083 = vunpack.c.h.b16 %v1024
      %v1084 = vunpack.c.l.b16 %v1025
      %v1085 = vunpack.c.l.b16 %v1026
      %v1086 = vunpack.c.h.b16 %v1026
      %v1087 = vunpack.c.l.b16 %v1027
      %v1088 = vunpack.c.l.b16 %v1028
      %v1089 = vunpack.c.h.b16 %v1028
      %v1090 = vunpack.c.l.b16 %v1029
      %v1091 = vunpack.c.l.b16 %v1030
      %v1092 = vunpack.c.h.b16 %v1030
      %v1093 = vunpack.c.l.b16 %v1031
      %v1094 = vunpack.c.l.b16 %v1032
      %v1095 = vunpack.c.h.b16 %v1032
      %v1096 = vunpack.c.l.b16 %v1033
      %v1097 = vunpack.c.l.b16 %v1034
      %v1098 = vunpack.c.h.b16 %v1034
      %v1099 = vunpack.c.l.b16 %v1035
      %v1100 = vunpack.c.l.b16 %v1036
      %v1101 = vunpack.c.h.b16 %v1036
      %v1102 = vunpack.c.l.b16 %v1037
      %v1103 = vpack.c.b16 %v1067, %v1064
      %v1104 = vpack.c.b16 %v1068, %v1065
      %v1105 = vpack.c.b16 %v1069, %v1066
      %v1106 = vpack.c.b16 %v1073, %v1070
      %v1107 = vpack.c.b16 %v1074, %v1071
      %v1108 = vpack.c.b16 %v1075, %v1072
      %v1109 = vpack.c.b16 %v1079, %v1076
      %v1110 = vpack.c.b16 %v1080, %v1077
      %v1111 = vpack.c.b16 %v1081, %v1078
      %v1112 = vpack.c.b16 %v1085, %v1082
      %v1113 = vpack.c.b16 %v1086, %v1083
      %v1114 = vpack.c.b16 %v1087, %v1084
      %v1115 = vpack.c.b16 %v1091, %v1088
      %v1116 = vpack.c.b16 %v1092, %v1089
      %v1117 = vpack.c.b16 %v1093, %v1090
      %v1118 = vpack.c.b16 %v1097, %v1094
      %v1119 = vpack.c.b16 %v1098, %v1095
      %v1120 = vpack.c.b16 %v1099, %v1096
      %v1121 = vpack.c.b16 %v1100, %v1100
      %v1122 = vpack.c.b16 %v1101, %v1101
      %v1123 = vpack.c.b16 %v1102, %v1102
      %v1139 = vsel %vm476, %v1105, 0
      %v1142 = vsel %vm476, %v1108, 0
      %v1145 = vsel %vm476, %v1111, 0
      %v1148 = vsel %vm476, %v1114, 0
      %v1151 = vsel %vm476, %v1117, 0
      %v1154 = vsel %vm476, %v1120, 0
      %v1157 = vsel %vm476, %v1123, 0
      %1159 = vmatprep.subr.bf16.mxu0 0
      %1160 = vmatpush1.bf16.msra.mxu0 %v447
      %1161 = vmatprep.subr.bf16.mxu0 0
      %1162 = vmatpush1.bf16.msra.mxu0 %v446
      %1163 = vmatprep.subr.bf16.mxu0 0
      %1164 = vmatpush1.bf16.msra.mxu0 %v445
      %1165 = vmatprep.subr.bf16.mxu0 0
      %1166 = vmatpush1.bf16.msra.mxu0 %v444
      %1167 = vmatprep.subr.bf16.mxu0 0
      %1168 = vmatpush1.bf16.msra.mxu0 %v443
      %1169 = vmatprep.subr.bf16.mxu0 0
      %1170 = vmatpush1.bf16.msra.mxu0 %v442
      %1171 = vmatprep.subr.bf16.mxu0 0
      %1172 = vmatpush1.bf16.msra.mxu0 %v441
      %1173 = vmatprep.subr.bf16.mxu0 0
      %1174 = vmatpush1.bf16.msra.mxu0 %v440
      %1175 = vmatprep.subr.bf16.mxu0 0
      %1176 = vmatpush2.bf16.msra.mxu0 %v455
      %1177 = vmatprep.subr.bf16.mxu0 0
      %1178 = vmatpush2.bf16.msra.mxu0 %v454
      %1179 = vmatprep.subr.bf16.mxu0 0
      %1180 = vmatpush2.bf16.msra.mxu0 %v453
      %1181 = vmatprep.subr.bf16.mxu0 0
      %1182 = vmatpush2.bf16.msra.mxu0 %v452
      %1183 = vmatprep.subr.bf16.mxu0 0
      %1184 = vmatpush2.bf16.msra.mxu0 %v451
      %1185 = vmatprep.subr.bf16.mxu0 0
      %1186 = vmatpush2.bf16.msra.mxu0 %v450
      %1187 = vmatprep.subr.bf16.mxu0 0
      %1188 = vmatpush2.bf16.msra.mxu0 %v449
      %1189 = vmatprep.subr.bf16.mxu0 0
      %1190 = vmatpush2.bf16.msra.mxu0 %v448
      %1191 = vmatprep.mubr.bf16.mxu0 %v1104
      %1192 = vmatmul.mubr.bf16.gmra.mxu0 %v1103
      %v1193 = vpop.f32.mrf.mxu0
      %v1194 = vadd.f32 0.0, %v1193
      %v1195 = vpop.f32.mrf.mxu0
      %v1196 = vpop.f32.mrf.mxu0
      %v1197 = vadd.f32 0.0, %v1196
      %v1198 = vpop.f32.mrf.mxu0
      %1199 = vmatprep.mubr.bf16.mxu0 %v1107
      %1200 = vmatmul.mubr.bf16.gmra.mxu0 %v1106
      %v1201 = vpop.f32.mrf.mxu0
      %v1202 = vadd.f32 0.0, %v1201
      %v1203 = vpop.f32.mrf.mxu0
      %v1204 = vpop.f32.mrf.mxu0
      %v1205 = vadd.f32 0.0, %v1204
      %v1206 = vpop.f32.mrf.mxu0
      %1207 = vmatprep.mubr.bf16.mxu0 %v1110
      %1208 = vmatmul.mubr.bf16.gmra.mxu0 %v1109
      %v1209 = vpop.f32.mrf.mxu0
      %v1210 = vadd.f32 0.0, %v1209
      %v1211 = vpop.f32.mrf.mxu0
      %v1212 = vpop.f32.mrf.mxu0
      %v1213 = vadd.f32 0.0, %v1212
      %v1214 = vpop.f32.mrf.mxu0
      %1215 = vmatprep.mubr.bf16.mxu0 %v1113
      %1216 = vmatmul.mubr.bf16.gmra.mxu0 %v1112
      %v1217 = vpop.f32.mrf.mxu0
      %v1218 = vadd.f32 0.0, %v1217
      %v1219 = vpop.f32.mrf.mxu0
      %v1220 = vpop.f32.mrf.mxu0
      %v1221 = vadd.f32 0.0, %v1220
      %v1222 = vpop.f32.mrf.mxu0
      %1223 = vmatprep.mubr.bf16.mxu0 %v1116
      %1224 = vmatmul.mubr.bf16.gmra.mxu0 %v1115
      %v1225 = vpop.f32.mrf.mxu0
      %v1226 = vadd.f32 0.0, %v1225
      %v1227 = vpop.f32.mrf.mxu0
      %v1228 = vpop.f32.mrf.mxu0
      %v1229 = vadd.f32 0.0, %v1228
      %v1230 = vpop.f32.mrf.mxu0
      %1231 = vmatprep.mubr.bf16.mxu0 %v1119
      %1232 = vmatmul.mubr.bf16.gmra.mxu0 %v1118
      %v1233 = vpop.f32.mrf.mxu0
      %v1234 = vadd.f32 0.0, %v1233
      %v1235 = vpop.f32.mrf.mxu0
      %v1236 = vpop.f32.mrf.mxu0
      %v1237 = vadd.f32 0.0, %v1236
      %v1238 = vpop.f32.mrf.mxu0
      %1239 = vmatprep.mubr.bf16.mxu0 %v1122
      %1240 = vmatmul.mubr.bf16.gmra.mxu0 %v1121
      %v1241 = vpop.f32.mrf.mxu0
      %v1242 = vadd.f32 0.0, %v1241
      %v1243 = vpop.f32.mrf.mxu0
      %v1244 = vpop.f32.mrf.mxu0
      %v1245 = vpop.f32.mrf.mxu0
      %1246 = vdwg.mxu0
      %1247 = vmatprep.subr.bf16.mxu0 0
      %1248 = vmatpush1.bf16.msra.mxu0 0
      %1249 = vmatprep.subr.bf16.mxu0 0
      %1250 = vmatpush1.bf16.msra.mxu0 0
      %1251 = vmatprep.subr.bf16.mxu0 0
      %1252 = vmatpush1.bf16.msra.mxu0 0
      %1253 = vmatprep.subr.bf16.mxu0 0
      %1254 = vmatpush1.bf16.msra.mxu0 0
      %1255 = vmatprep.subr.bf16.mxu0 0
      %1256 = vmatpush1.bf16.msra.mxu0 0
      %1257 = vmatprep.subr.bf16.mxu0 0
      %1258 = vmatpush1.bf16.msra.mxu0 0
      %1259 = vmatprep.subr.bf16.mxu0 0
      %1260 = vmatpush1.bf16.msra.mxu0 %v457
      %1261 = vmatprep.subr.bf16.mxu0 0
      %1262 = vmatpush1.bf16.msra.mxu0 %v456
      %1263 = vmatprep.subr.bf16.mxu0 0
      %1264 = vmatpush2.bf16.msra.mxu0 0
      %1265 = vmatprep.subr.bf16.mxu0 0
      %1266 = vmatpush2.bf16.msra.mxu0 0
      %1267 = vmatprep.subr.bf16.mxu0 0
      %1268 = vmatpush2.bf16.msra.mxu0 0
      %1269 = vmatprep.subr.bf16.mxu0 0
      %1270 = vmatpush2.bf16.msra.mxu0 0
      %1271 = vmatprep.subr.bf16.mxu0 0
      %1272 = vmatpush2.bf16.msra.mxu0 0
      %1273 = vmatprep.subr.bf16.mxu0 0
      %1274 = vmatpush2.bf16.msra.mxu0 0
      %1275 = vmatprep.subr.bf16.mxu0 0
      %1276 = vmatpush2.bf16.msra.mxu0 0
      %1277 = vmatprep.subr.bf16.mxu0 0
      %1278 = vmatpush2.bf16.msra.mxu0 0
      %1279 = vmatprep.mubr.bf16.mxu0 0
      %1280 = vmatmul.mubr.bf16.gmra.mxu0 %v1139
      %v1281 = vpop.f32.mrf.mxu0
      %v1282 = vadd.f32 %v1194, %v1281
      %v1283 = vpop.f32.mrf.mxu0
      %v1284 = vpop.f32.mrf.mxu0
      %v1285 = vadd.f32 %v1197, %v1284
      %v1286 = vpop.f32.mrf.mxu0
      %1287 = vmatprep.mubr.bf16.mxu0 0
      %1288 = vmatmul.mubr.bf16.gmra.mxu0 %v1142
      %v1289 = vpop.f32.mrf.mxu0
      %v1290 = vadd.f32 %v1202, %v1289
      %v1291 = vpop.f32.mrf.mxu0
      %v1292 = vpop.f32.mrf.mxu0
      %v1293 = vadd.f32 %v1205, %v1292
      %v1294 = vpop.f32.mrf.mxu0
      %1295 = vmatprep.mubr.bf16.mxu0 0
      %1296 = vmatmul.mubr.bf16.gmra.mxu0 %v1145
      %v1297 = vpop.f32.mrf.mxu0
      %v1298 = vadd.f32 %v1210, %v1297
      %v1299 = vpop.f32.mrf.mxu0
      %v1300 = vpop.f32.mrf.mxu0
      %v1301 = vadd.f32 %v1213, %v1300
      %v1302 = vpop.f32.mrf.mxu0
      %1303 = vmatprep.mubr.bf16.mxu0 0
      %1304 = vmatmul.mubr.bf16.gmra.mxu0 %v1148
      %v1305 = vpop.f32.mrf.mxu0
      %v1306 = vadd.f32 %v1218, %v1305
      %v1307 = vpop.f32.mrf.mxu0
      %v1308 = vpop.f32.mrf.mxu0
      %v1309 = vadd.f32 %v1221, %v1308
      %v1310 = vpop.f32.mrf.mxu0
      %1311 = vmatprep.mubr.bf16.mxu0 0
      %1312 = vmatmul.mubr.bf16.gmra.mxu0 %v1151
      %v1313 = vpop.f32.mrf.mxu0
      %v1314 = vadd.f32 %v1226, %v1313
      %v1315 = vpop.f32.mrf.mxu0
      %v1316 = vpop.f32.mrf.mxu0
      %v1317 = vadd.f32 %v1229, %v1316
      %v1318 = vpop.f32.mrf.mxu0
      %1319 = vmatprep.mubr.bf16.mxu0 0
      %1320 = vmatmul.mubr.bf16.gmra.mxu0 %v1154
      %v1321 = vpop.f32.mrf.mxu0
      %v1322 = vadd.f32 %v1234, %v1321
      %v1323 = vpop.f32.mrf.mxu0
      %v1324 = vpop.f32.mrf.mxu0
      %v1325 = vadd.f32 %v1237, %v1324
      %v1326 = vpop.f32.mrf.mxu0
      %1327 = vmatprep.mubr.bf16.mxu0 0
      %1328 = vmatmul.mubr.bf16.gmra.mxu0 %v1157
      %v1329 = vpop.f32.mrf.mxu0
      %v1330 = vadd.f32 %v1242, %v1329
      %v1331 = vpop.f32.mrf.mxu0
      %v1332 = vpop.f32.mrf.mxu0
      %v1333 = vpop.f32.mrf.mxu0
      %1334 = vdwg.mxu0
      %v1335 = vmax.f32 %v998, %v1282
      %v1336 = vmax.f32 %v999, %v1285
      %v1337 = vmax.f32 %v1000, %v1290
      %v1338 = vmax.f32 %v1001, %v1293
      %v1339 = vmax.f32 %v1002, %v1298
      %v1340 = vmax.f32 %v1003, %v1301
      %v1341 = vmax.f32 %v1004, %v1306
      %v1342 = vmax.f32 %v1005, %v1309
      %v1343 = vmax.f32 %v1006, %v1314
      %v1344 = vmax.f32 %v1007, %v1317
      %v1345 = vmax.f32 %v1008, %v1322
      %v1346 = vmax.f32 %v1009, %v1325
      %v1347 = vmax.f32 %v1010, %v1330
      %s1348 = scalar_lea.vmem %s191, 468
      %v1349 = vld [vmem:[%s1348] sm:$0xff]
      %v1350 = vld [vmem:[%s1348 + $0x8] sm:$0xf]
      %v1351 = vld [vmem:[%s1348 + $0xc] sm:$0xff]
      %v1352 = vld [vmem:[%s1348 + $0x14] sm:$0xf]
      %v1353 = vld [vmem:[%s1348 + $0x18] sm:$0xff]
      %v1354 = vld [vmem:[%s1348 + $0x20] sm:$0xf]
      %v1355 = vld [vmem:[%s1348 + $0x24] sm:$0xff]
      %v1356 = vld [vmem:[%s1348 + $0x2c] sm:$0xf]
      %v1357 = vld [vmem:[%s1348 + $0x30] sm:$0xff]
      %v1358 = vld [vmem:[%s1348 + $0x38] sm:$0xf]
      %v1359 = vld [vmem:[%s1348 + $0x3c] sm:$0xff]
      %v1360 = vld [vmem:[%s1348 + $0x44] sm:$0xf]
      %v1361 = vld [vmem:[%s1348 + $0x48] sm:$0xff]
      %v1362 = vld [vmem:[%s1348 + $0x50] sm:$0xf]
      %v1363 = vld [vmem:[%s1348 + $0x54] sm:$0xff]
      %v1364 = vld [vmem:[%s1348 + $0x5c] sm:$0xf]
      %v1365 = vld [vmem:[%s1348 + $0x60] sm:$0xff]
      %v1366 = vld [vmem:[%s1348 + $0x68] sm:$0xf]
      %v1367 = vld [vmem:[%s1348 + $0x6c] sm:$0xff]
      %v1368 = vld [vmem:[%s1348 + $0x74] sm:$0xf]
      %v1369 = vld [vmem:[%s1348 + $0x78] sm:$0xff]
      %v1370 = vld [vmem:[%s1348 + $0x80] sm:$0xf]
      %v1371 = vld [vmem:[%s1348 + $0x84] sm:$0xff]
      %v1372 = vld [vmem:[%s1348 + $0x8c] sm:$0xf]
      %v1373 = vld [vmem:[%s1348 + $0x90] sm:$0x11]
      %v1374 = vld [vmem:[%s1348 + $0x98] sm:$0x1]
      %v1401 = vunpack.c.l.b16 %v1349
      %v1402 = vunpack.c.h.b16 %v1349
      %v1403 = vunpack.c.l.b16 %v1350
      %v1404 = vunpack.c.l.b16 %v1351
      %v1405 = vunpack.c.h.b16 %v1351
      %v1406 = vunpack.c.l.b16 %v1352
      %v1407 = vunpack.c.l.b16 %v1353
      %v1408 = vunpack.c.h.b16 %v1353
      %v1409 = vunpack.c.l.b16 %v1354
      %v1410 = vunpack.c.l.b16 %v1355
      %v1411 = vunpack.c.h.b16 %v1355
      %v1412 = vunpack.c.l.b16 %v1356
      %v1413 = vunpack.c.l.b16 %v1357
      %v1414 = vunpack.c.h.b16 %v1357
      %v1415 = vunpack.c.l.b16 %v1358
      %v1416 = vunpack.c.l.b16 %v1359
      %v1417 = vunpack.c.h.b16 %v1359
      %v1418 = vunpack.c.l.b16 %v1360
      %v1419 = vunpack.c.l.b16 %v1361
      %v1420 = vunpack.c.h.b16 %v1361
      %v1421 = vunpack.c.l.b16 %v1362
      %v1422 = vunpack.c.l.b16 %v1363
      %v1423 = vunpack.c.h.b16 %v1363
      %v1424 = vunpack.c.l.b16 %v1364
      %v1425 = vunpack.c.l.b16 %v1365
      %v1426 = vunpack.c.h.b16 %v1365
      %v1427 = vunpack.c.l.b16 %v1366
      %v1428 = vunpack.c.l.b16 %v1367
      %v1429 = vunpack.c.h.b16 %v1367
      %v1430 = vunpack.c.l.b16 %v1368
      %v1431 = vunpack.c.l.b16 %v1369
      %v1432 = vunpack.c.h.b16 %v1369
      %v1433 = vunpack.c.l.b16 %v1370
      %v1434 = vunpack.c.l.b16 %v1371
      %v1435 = vunpack.c.h.b16 %v1371
      %v1436 = vunpack.c.l.b16 %v1372
      %v1437 = vunpack.c.l.b16 %v1373
      %v1438 = vunpack.c.h.b16 %v1373
      %v1439 = vunpack.c.l.b16 %v1374
      %v1440 = vpack.c.b16 %v1404, %v1401
      %v1441 = vpack.c.b16 %v1405, %v1402
      %v1442 = vpack.c.b16 %v1406, %v1403
      %v1443 = vpack.c.b16 %v1410, %v1407
      %v1444 = vpack.c.b16 %v1411, %v1408
      %v1445 = vpack.c.b16 %v1412, %v1409
      %v1446 = vpack.c.b16 %v1416, %v1413
      %v1447 = vpack.c.b16 %v1417, %v1414
      %v1448 = vpack.c.b16 %v1418, %v1415
      %v1449 = vpack.c.b16 %v1422, %v1419
      %v1450 = vpack.c.b16 %v1423, %v1420
      %v1451 = vpack.c.b16 %v1424, %v1421
      %v1452 = vpack.c.b16 %v1428, %v1425
      %v1453 = vpack.c.b16 %v1429, %v1426
      %v1454 = vpack.c.b16 %v1430, %v1427
      %v1455 = vpack.c.b16 %v1434, %v1431
      %v1456 = vpack.c.b16 %v1435, %v1432
      %v1457 = vpack.c.b16 %v1436, %v1433
      %v1458 = vpack.c.b16 %v1437, %v1437
      %v1459 = vpack.c.b16 %v1438, %v1438
      %v1460 = vpack.c.b16 %v1439, %v1439
      %v1476 = vsel %vm476, %v1442, 0
      %v1479 = vsel %vm476, %v1445, 0
      %v1482 = vsel %vm476, %v1448, 0
      %v1485 = vsel %vm476, %v1451, 0
      %v1488 = vsel %vm476, %v1454, 0
      %v1491 = vsel %vm476, %v1457, 0
      %v1494 = vsel %vm476, %v1460, 0
      %1496 = vmatprep.subr.bf16.mxu0 0
      %1497 = vmatpush1.bf16.msra.mxu0 %v447
      %1498 = vmatprep.subr.bf16.mxu0 0
      %1499 = vmatpush1.bf16.msra.mxu0 %v446
      %1500 = vmatprep.subr.bf16.mxu0 0
      %1501 = vmatpush1.bf16.msra.mxu0 %v445
      %1502 = vmatprep.subr.bf16.mxu0 0
      %1503 = vmatpush1.bf16.msra.mxu0 %v444
      %1504 = vmatprep.subr.bf16.mxu0 0
      %1505 = vmatpush1.bf16.msra.mxu0 %v443
      %1506 = vmatprep.subr.bf16.mxu0 0
      %1507 = vmatpush1.bf16.msra.mxu0 %v442
      %1508 = vmatprep.subr.bf16.mxu0 0
      %1509 = vmatpush1.bf16.msra.mxu0 %v441
      %1510 = vmatprep.subr.bf16.mxu0 0
      %1511 = vmatpush1.bf16.msra.mxu0 %v440
      %1512 = vmatprep.subr.bf16.mxu0 0
      %1513 = vmatpush2.bf16.msra.mxu0 %v455
      %1514 = vmatprep.subr.bf16.mxu0 0
      %1515 = vmatpush2.bf16.msra.mxu0 %v454
      %1516 = vmatprep.subr.bf16.mxu0 0
      %1517 = vmatpush2.bf16.msra.mxu0 %v453
      %1518 = vmatprep.subr.bf16.mxu0 0
      %1519 = vmatpush2.bf16.msra.mxu0 %v452
      %1520 = vmatprep.subr.bf16.mxu0 0
      %1521 = vmatpush2.bf16.msra.mxu0 %v451
      %1522 = vmatprep.subr.bf16.mxu0 0
      %1523 = vmatpush2.bf16.msra.mxu0 %v450
      %1524 = vmatprep.subr.bf16.mxu0 0
      %1525 = vmatpush2.bf16.msra.mxu0 %v449
      %1526 = vmatprep.subr.bf16.mxu0 0
      %1527 = vmatpush2.bf16.msra.mxu0 %v448
      %1528 = vmatprep.mubr.bf16.mxu0 %v1441
      %1529 = vmatmul.mubr.bf16.gmra.mxu0 %v1440
      %v1530 = vpop.f32.mrf.mxu0
      %v1531 = vadd.f32 0.0, %v1530
      %v1532 = vpop.f32.mrf.mxu0
      %v1533 = vpop.f32.mrf.mxu0
      %v1534 = vadd.f32 0.0, %v1533
      %v1535 = vpop.f32.mrf.mxu0
      %1536 = vmatprep.mubr.bf16.mxu0 %v1444
      %1537 = vmatmul.mubr.bf16.gmra.mxu0 %v1443
      %v1538 = vpop.f32.mrf.mxu0
      %v1539 = vadd.f32 0.0, %v1538
      %v1540 = vpop.f32.mrf.mxu0
      %v1541 = vpop.f32.mrf.mxu0
      %v1542 = vadd.f32 0.0, %v1541
      %v1543 = vpop.f32.mrf.mxu0
      %1544 = vmatprep.mubr.bf16.mxu0 %v1447
      %1545 = vmatmul.mubr.bf16.gmra.mxu0 %v1446
      %v1546 = vpop.f32.mrf.mxu0
      %v1547 = vadd.f32 0.0, %v1546
      %v1548 = vpop.f32.mrf.mxu0
      %v1549 = vpop.f32.mrf.mxu0
      %v1550 = vadd.f32 0.0, %v1549
      %v1551 = vpop.f32.mrf.mxu0
      %1552 = vmatprep.mubr.bf16.mxu0 %v1450
      %1553 = vmatmul.mubr.bf16.gmra.mxu0 %v1449
      %v1554 = vpop.f32.mrf.mxu0
      %v1555 = vadd.f32 0.0, %v1554
      %v1556 = vpop.f32.mrf.mxu0
      %v1557 = vpop.f32.mrf.mxu0
      %v1558 = vadd.f32 0.0, %v1557
      %v1559 = vpop.f32.mrf.mxu0
      %1560 = vmatprep.mubr.bf16.mxu0 %v1453
      %1561 = vmatmul.mubr.bf16.gmra.mxu0 %v1452
      %v1562 = vpop.f32.mrf.mxu0
      %v1563 = vadd.f32 0.0, %v1562
      %v1564 = vpop.f32.mrf.mxu0
      %v1565 = vpop.f32.mrf.mxu0
      %v1566 = vadd.f32 0.0, %v1565
      %v1567 = vpop.f32.mrf.mxu0
      %1568 = vmatprep.mubr.bf16.mxu0 %v1456
      %1569 = vmatmul.mubr.bf16.gmra.mxu0 %v1455
      %v1570 = vpop.f32.mrf.mxu0
      %v1571 = vadd.f32 0.0, %v1570
      %v1572 = vpop.f32.mrf.mxu0
      %v1573 = vpop.f32.mrf.mxu0
      %v1574 = vadd.f32 0.0, %v1573
      %v1575 = vpop.f32.mrf.mxu0
      %1576 = vmatprep.mubr.bf16.mxu0 %v1459
      %1577 = vmatmul.mubr.bf16.gmra.mxu0 %v1458
      %v1578 = vpop.f32.mrf.mxu0
      %v1579 = vadd.f32 0.0, %v1578
      %v1580 = vpop.f32.mrf.mxu0
      %v1581 = vpop.f32.mrf.mxu0
      %v1582 = vpop.f32.mrf.mxu0
      %1583 = vdwg.mxu0
      %1584 = vmatprep.subr.bf16.mxu0 0
      %1585 = vmatpush1.bf16.msra.mxu0 0
      %1586 = vmatprep.subr.bf16.mxu0 0
      %1587 = vmatpush1.bf16.msra.mxu0 0
      %1588 = vmatprep.subr.bf16.mxu0 0
      %1589 = vmatpush1.bf16.msra.mxu0 0
      %1590 = vmatprep.subr.bf16.mxu0 0
      %1591 = vmatpush1.bf16.msra.mxu0 0
      %1592 = vmatprep.subr.bf16.mxu0 0
      %1593 = vmatpush1.bf16.msra.mxu0 0
      %1594 = vmatprep.subr.bf16.mxu0 0
      %1595 = vmatpush1.bf16.msra.mxu0 0
      %1596 = vmatprep.subr.bf16.mxu0 0
      %1597 = vmatpush1.bf16.msra.mxu0 %v457
      %1598 = vmatprep.subr.bf16.mxu0 0
      %1599 = vmatpush1.bf16.msra.mxu0 %v456
      %1600 = vmatprep.subr.bf16.mxu0 0
      %1601 = vmatpush2.bf16.msra.mxu0 0
      %1602 = vmatprep.subr.bf16.mxu0 0
      %1603 = vmatpush2.bf16.msra.mxu0 0
      %1604 = vmatprep.subr.bf16.mxu0 0
      %1605 = vmatpush2.bf16.msra.mxu0 0
      %1606 = vmatprep.subr.bf16.mxu0 0
      %1607 = vmatpush2.bf16.msra.mxu0 0
      %1608 = vmatprep.subr.bf16.mxu0 0
      %1609 = vmatpush2.bf16.msra.mxu0 0
      %1610 = vmatprep.subr.bf16.mxu0 0
      %1611 = vmatpush2.bf16.msra.mxu0 0
      %1612 = vmatprep.subr.bf16.mxu0 0
      %1613 = vmatpush2.bf16.msra.mxu0 0
      %1614 = vmatprep.subr.bf16.mxu0 0
      %1615 = vmatpush2.bf16.msra.mxu0 0
      %1616 = vmatprep.mubr.bf16.mxu0 0
      %1617 = vmatmul.mubr.bf16.gmra.mxu0 %v1476
      %v1618 = vpop.f32.mrf.mxu0
      %v1619 = vadd.f32 %v1531, %v1618
      %v1620 = vpop.f32.mrf.mxu0
      %v1621 = vpop.f32.mrf.mxu0
      %v1622 = vadd.f32 %v1534, %v1621
      %v1623 = vpop.f32.mrf.mxu0
      %1624 = vmatprep.mubr.bf16.mxu0 0
      %1625 = vmatmul.mubr.bf16.gmra.mxu0 %v1479
      %v1626 = vpop.f32.mrf.mxu0
      %v1627 = vadd.f32 %v1539, %v1626
      %v1628 = vpop.f32.mrf.mxu0
      %v1629 = vpop.f32.mrf.mxu0
      %v1630 = vadd.f32 %v1542, %v1629
      %v1631 = vpop.f32.mrf.mxu0
      %1632 = vmatprep.mubr.bf16.mxu0 0
      %1633 = vmatmul.mubr.bf16.gmra.mxu0 %v1482
      %v1634 = vpop.f32.mrf.mxu0
      %v1635 = vadd.f32 %v1547, %v1634
      %v1636 = vpop.f32.mrf.mxu0
      %v1637 = vpop.f32.mrf.mxu0
      %v1638 = vadd.f32 %v1550, %v1637
      %v1639 = vpop.f32.mrf.mxu0
      %1640 = vmatprep.mubr.bf16.mxu0 0
      %1641 = vmatmul.mubr.bf16.gmra.mxu0 %v1485
      %v1642 = vpop.f32.mrf.mxu0
      %v1643 = vadd.f32 %v1555, %v1642
      %v1644 = vpop.f32.mrf.mxu0
      %v1645 = vpop.f32.mrf.mxu0
      %v1646 = vadd.f32 %v1558, %v1645
      %v1647 = vpop.f32.mrf.mxu0
      %1648 = vmatprep.mubr.bf16.mxu0 0
      %1649 = vmatmul.mubr.bf16.gmra.mxu0 %v1488
      %v1650 = vpop.f32.mrf.mxu0
      %v1651 = vadd.f32 %v1563, %v1650
      %v1652 = vpop.f32.mrf.mxu0
      %v1653 = vpop.f32.mrf.mxu0
      %v1654 = vadd.f32 %v1566, %v1653
      %v1655 = vpop.f32.mrf.mxu0
      %1656 = vmatprep.mubr.bf16.mxu0 0
      %1657 = vmatmul.mubr.bf16.gmra.mxu0 %v1491
      %v1658 = vpop.f32.mrf.mxu0
      %v1659 = vadd.f32 %v1571, %v1658
      %v1660 = vpop.f32.mrf.mxu0
      %v1661 = vpop.f32.mrf.mxu0
      %v1662 = vadd.f32 %v1574, %v1661
      %v1663 = vpop.f32.mrf.mxu0
      %1664 = vmatprep.mubr.bf16.mxu0 0
      %1665 = vmatmul.mubr.bf16.gmra.mxu0 %v1494
      %v1666 = vpop.f32.mrf.mxu0
      %v1667 = vadd.f32 %v1579, %v1666
      %v1668 = vpop.f32.mrf.mxu0
      %v1669 = vpop.f32.mrf.mxu0
      %v1670 = vpop.f32.mrf.mxu0
      %1671 = vdwg.mxu0
      %v1672 = vmax.f32 %v1335, %v1619
      %v1673 = vmax.f32 %v1336, %v1622
      %v1674 = vmax.f32 %v1337, %v1627
      %v1675 = vmax.f32 %v1338, %v1630
      %v1676 = vmax.f32 %v1339, %v1635
      %v1677 = vmax.f32 %v1340, %v1638
      %v1678 = vmax.f32 %v1341, %v1643
      %v1679 = vmax.f32 %v1342, %v1646
      %v1680 = vmax.f32 %v1343, %v1651
      %v1681 = vmax.f32 %v1344, %v1654
      %v1682 = vmax.f32 %v1345, %v1659
      %v1683 = vmax.f32 %v1346, %v1662
      %v1684 = vmax.f32 %v1347, %v1667
      %v1685 = vld [vmem:[%s199] sm:$0x1]
      %v1687 = vlaneseq
      %v1688 = vshrl.u32 %v1687, 7
      %v1689 = vsub.s32 0, %v1688
      %v1690 = vrot.slane %v1685, %v1689
      %v1692 = vadd.f32 %v1672, %v1690
      %v1693 = vadd.f32 %v1673, %v1690
      %v1694 = vadd.f32 %v1674, %v1690
      %v1695 = vadd.f32 %v1675, %v1690
      %v1696 = vadd.f32 %v1676, %v1690
      %v1697 = vadd.f32 %v1677, %v1690
      %v1698 = vadd.f32 %v1678, %v1690
      %v1699 = vadd.f32 %v1679, %v1690
      %v1700 = vadd.f32 %v1680, %v1690
      %v1701 = vadd.f32 %v1681, %v1690
      %v1702 = vadd.f32 %v1682, %v1690
      %v1703 = vadd.f32 %v1683, %v1690
      %v1704 = vadd.f32 %v1684, %v1690
      %v1705 = vmax.f32 %v1692, 0.0
      %v1706 = vmax.f32 %v1693, 0.0
      %v1707 = vmax.f32 %v1694, 0.0
      %v1708 = vmax.f32 %v1695, 0.0
      %v1709 = vmax.f32 %v1696, 0.0
      %v1710 = vmax.f32 %v1697, 0.0
      %v1711 = vmax.f32 %v1698, 0.0
      %v1712 = vmax.f32 %v1699, 0.0
      %v1713 = vmax.f32 %v1700, 0.0
      %v1714 = vmax.f32 %v1701, 0.0
      %v1715 = vmax.f32 %v1702, 0.0
      %v1716 = vmax.f32 %v1703, 0.0
      %v1717 = vmax.f32 %v1704, 0.0
      %v1718 = vpack.c.bf16 %v1706, %v1705
      %v1719 = vpack.c.bf16 %v1708, %v1707
      %v1720 = vpack.c.bf16 %v1710, %v1709
      %v1721 = vpack.c.bf16 %v1712, %v1711
      %v1722 = vpack.c.bf16 %v1714, %v1713
      %v1723 = vpack.c.bf16 %v1716, %v1715
      %v1724 = vpack.c.bf16 %v1717, %v1717
      %v1732 = vunpack.c.l.b16 %v1718
      %v1733 = vunpack.c.h.b16 %v1718
      %v1734 = vunpack.c.l.b16 %v1719
      %v1735 = vunpack.c.h.b16 %v1719
      %v1736 = vunpack.c.l.b16 %v1720
      %v1737 = vunpack.c.h.b16 %v1720
      %v1738 = vunpack.c.l.b16 %v1721
      %v1739 = vunpack.c.h.b16 %v1721
      %v1740 = vunpack.c.l.b16 %v1722
      %v1741 = vunpack.c.h.b16 %v1722
      %v1742 = vunpack.c.l.b16 %v1723
      %v1743 = vunpack.c.h.b16 %v1723
      %v1744 = vunpack.c.l.b16 %v1724
      %v1745 = vpack.c.b16 %v1732, %v1732
      %v1746 = vpack.c.b16 %v1733, %v1733
      %v1747 = vpack.c.b16 %v1734, %v1734
      %v1748 = vpack.c.b16 %v1735, %v1735
      %v1749 = vpack.c.b16 %v1736, %v1736
      %v1750 = vpack.c.b16 %v1737, %v1737
      %v1751 = vpack.c.b16 %v1738, %v1738
      %v1752 = vpack.c.b16 %v1739, %v1739
      %v1753 = vpack.c.b16 %v1740, %v1740
      %v1754 = vpack.c.b16 %v1741, %v1741
      %v1755 = vpack.c.b16 %v1742, %v1742
      %v1756 = vpack.c.b16 %v1743, %v1743
      %v1757 = vpack.c.b16 %v1744, %v1744
      %vm1771 = vcmask 519168
      %1772 = vst.msk [vmem:[%s204] sm:$0xf] %vm1771, %v1745
      %1773 = vst.msk [vmem:[%s204 + $0x4] sm:$0xf] %vm1771, %v1746
      %1774 = vst.msk [vmem:[%s204 + $0x8] sm:$0xf] %vm1771, %v1747
      %1775 = vst.msk [vmem:[%s204 + $0xc] sm:$0xf] %vm1771, %v1748
      %1776 = vst.msk [vmem:[%s204 + $0x10] sm:$0xf] %vm1771, %v1749
      %1777 = vst.msk [vmem:[%s204 + $0x14] sm:$0xf] %vm1771, %v1750
      %1778 = vst.msk [vmem:[%s204 + $0x18] sm:$0xf] %vm1771, %v1751
      %1779 = vst.msk [vmem:[%s204 + $0x1c] sm:$0xf] %vm1771, %v1752
      %1780 = vst.msk [vmem:[%s204 + $0x20] sm:$0xf] %vm1771, %v1753
      %1781 = vst.msk [vmem:[%s204 + $0x24] sm:$0xf] %vm1771, %v1754
      %1782 = vst.msk [vmem:[%s204 + $0x28] sm:$0xf] %vm1771, %v1755
      %1783 = vst.msk [vmem:[%s204 + $0x2c] sm:$0xf] %vm1771, %v1756
      %vm1784 = vcmask 516096
      %1785 = vst.msk [vmem:[%s204 + $0x30] sm:$0x1] %vm1784, %v1757
      %p1786 = scmp.lt.s32.totalorder %s14, 2
      %s1787 = scalar_select %p1786, %s14, 2
      %s1788 = smul.addr %s1787, 13
      %s1789 = smul.addr %s1788, 4
      %s1790 = scalar_lea.vmem %s3, %s1789
      // Predicated region
      $region33: #{model_forward.4} parent=31 // pred_check
        %p1791 = pneg %p110
      $region34: #{model_forward.4} parent=31 // pred_check_branch
        %1793 = sbr.rel (%p1791) target = $region36
      $region35: #{model_forward.4} parent=31 // pred_region
        _
      $region36: #{model_forward.4} parent=31 // pred_fallthru
        _
    $region32: #{model_forward.4} parent=5 // pred_fallthru
      _
    %p1794 = scmp.le.s32.totalorder 2, %s9
    // Predicated region
    $region37: #{model_forward.4} parent=5 // pred_check
      %p1795 = pneg %p1794
    $region38: #{model_forward.4} parent=5 // pred_check_branch
      %1797 = sbr.rel (%p1795) target = $region40
    $region39: #{model_forward.4} parent=5 // pred_region
      %s1798 = ssub.s32 %s9, 2
      // Predicated region
      $region41: #{model_forward.4} parent=39 // pred_check
        %p1799 = pneg %p116
      $region42: #{model_forward.4} parent=39 // pred_check_branch
        %1801 = sbr.rel (%p1799) target = $region44
      $region43: #{model_forward.4} parent=39 // pred_region
        %p1802 = scmp.lt.s32.totalorder %s15, 2
        %s1803 = scalar_select %p1802, %s15, 2
        %s1804 = smul.addr %s1803, 13
        %s1805 = smul.addr %s1804, 4
        %s1806 = scalar_lea.vmem %s3, %s1805
      $region44: #{model_forward.4} parent=39 // pred_fallthru
        _
    $region40: #{model_forward.4} parent=5 // pred_fallthru
      _
  $region6: #{model_forward.4} parent=0 // loop_footer
    %s13 = sadd.s32 1, %s9
  $region7: #{model_forward.4} parent=0 // loop_footer_branch
    %8 = sbr.rel target = $region3
  $region8: #{model_forward.4} parent=0 // loop_exit
    _

// kernel: model_forward.5
$region0: #{model_forward.5}
  #allocation0 [shape = 'u32[]', space=smem, size = 0x4, offset = 0x4, fixed_abs, tag = 'smem constant byte address 0x4 - core index']
  #allocation1 [shape = 'u32[144,128]{1,0:T(1,128)}', space=vmem, size = 0x12000, scoped, tag = 'internal scratch']
  %s0 = inlined_call_operand.vmem [shape: bf16[3,2,3136], index: 0, kind: input, shape index: {}]
  %s1 = inlined_call_operand.vmem [shape: bf16[3,3136,128], index: 1, kind: input, shape index: {}]
  %s2 = inlined_call_operand.vmem [shape: f32[3,1,128], index: 2, kind: input, shape index: {}]
  %s3 = inlined_call_operand.vmem [shape: bf16[384,128], index: 3, kind: input, shape index: {}]
  %s4 = inlined_call_operand.vmem [shape: f32[1,128], index: 4, kind: input, shape index: {}]
  %s5 = inlined_call_operand.vmem [shape: bf16[128,5], index: 5, kind: input, shape index: {}]
  %s6 = inlined_call_operand.vmem [shape: f32[1,5], index: 6, kind: input, shape index: {}]
  %s7 = inlined_call_operand.hbm [shape: f32[2,5], index: 7, kind: output, shape index: {}]
  %s8 = sld [smem:[#allocation0]]
  $region38: #{model_forward.5} parent=0
    _
  %s10 = ssub.s32 1, %s8
  %s11 = scalar_select 0, %s10, %s8
  $region1: #{model_forward.5} parent=0
    #allocation2 [shape = 'u8[1024]{0}', space=vmem, size = 0x400, scoped, tag = 'output window, operand 0, single buffered']
    #allocation3 [shape = 's32[1]{0}', space=sflag, size = 0x4, scoped, tag = 'scoped memory for model_forward.5']
    %12 = vsyncpa [#allocation3], 0
    // Predicated region
    $region2: #{model_forward.5} parent=1 // pred_check
      _
    $region3: #{model_forward.5} parent=1 // pred_check_branch
      %14 = sbr.rel (0) target = $region5
    $region4: #{model_forward.5} parent=1 // pred_region
      _
    $region5: #{model_forward.5} parent=1 // pred_fallthru
      _
    // Predicated region
    $region6: #{model_forward.5} parent=1 // pred_check
      _
    $region7: #{model_forward.5} parent=1 // pred_check_branch
      %16 = sbr.rel (0) target = $region9
    $region8: #{model_forward.5} parent=1 // pred_region
      _
    $region9: #{model_forward.5} parent=1 // pred_fallthru
      _
    // Predicated region
    $region10: #{model_forward.5} parent=1 // pred_check
      _
    $region11: #{model_forward.5} parent=1 // pred_check_branch
      %18 = sbr.rel (0) target = $region13
    $region12: #{model_forward.5} parent=1 // pred_region
      _
    $region13: #{model_forward.5} parent=1 // pred_fallthru
      _
    // Predicated region
    $region14: #{model_forward.5} parent=1 // pred_check
      _
    $region15: #{model_forward.5} parent=1 // pred_check_branch
      %20 = sbr.rel (0) target = $region17
    $region16: #{model_forward.5} parent=1 // pred_region
      _
    $region17: #{model_forward.5} parent=1 // pred_fallthru
      _
    // Predicated region
    $region18: #{model_forward.5} parent=1 // pred_check
      _
    $region19: #{model_forward.5} parent=1 // pred_check_branch
      %22 = sbr.rel (0) target = $region21
    $region20: #{model_forward.5} parent=1 // pred_region
      _
    $region21: #{model_forward.5} parent=1 // pred_fallthru
      _
    // Predicated region
    $region22: #{model_forward.5} parent=1 // pred_check
      _
    $region23: #{model_forward.5} parent=1 // pred_check_branch
      %24 = sbr.rel (0) target = $region25
    $region24: #{model_forward.5} parent=1 // pred_region
      _
    $region25: #{model_forward.5} parent=1 // pred_fallthru
      _
    // Predicated region
    $region26: #{model_forward.5} parent=1 // pred_check
      _
    $region27: #{model_forward.5} parent=1 // pred_check_branch
      %26 = sbr.rel (0) target = $region29
    $region28: #{model_forward.5} parent=1 // pred_region
      _
    $region29: #{model_forward.5} parent=1 // pred_fallthru
      _
    %v28 = vld [vmem:[%s0] sm:$0xff]
    %v29 = vld [vmem:[%s0 + $0x8] sm:$0xff]
    %v30 = vld [vmem:[%s0 + $0x10] sm:$0xff]
    %v31 = vld [vmem:[%s0 + $0x18] sm:$0x1]
    %v32 = vld [vmem:[%s1] sm:$0xf]
    %v33 = vld [vmem:[%s1 + $0x4] sm:$0xf]
    %v34 = vld [vmem:[%s1 + $0x8] sm:$0xf]
    %v35 = vld [vmem:[%s1 + $0xc] sm:$0xf]
    %v36 = vld [vmem:[%s1 + $0x10] sm:$0xf]
    %v37 = vld [vmem:[%s1 + $0x14] sm:$0xf]
    %v38 = vld [vmem:[%s1 + $0x18] sm:$0xf]
    %v39 = vld [vmem:[%s1 + $0x1c] sm:$0xf]
    %v40 = vld [vmem:[%s1 + $0x20] sm:$0xf]
    %v41 = vld [vmem:[%s1 + $0x24] sm:$0xf]
    %v42 = vld [vmem:[%s1 + $0x28] sm:$0xf]
    %v43 = vld [vmem:[%s1 + $0x2c] sm:$0xf]
    %v44 = vld [vmem:[%s1 + $0x30] sm:$0xf]
    %v45 = vld [vmem:[%s1 + $0x34] sm:$0xf]
    %v46 = vld [vmem:[%s1 + $0x38] sm:$0xf]
    %v47 = vld [vmem:[%s1 + $0x3c] sm:$0xf]
    %v48 = vld [vmem:[%s1 + $0x40] sm:$0xf]
    %v49 = vld [vmem:[%s1 + $0x44] sm:$0xf]
    %v50 = vld [vmem:[%s1 + $0x48] sm:$0xf]
    %v51 = vld [vmem:[%s1 + $0x4c] sm:$0xf]
    %v52 = vld [vmem:[%s1 + $0x50] sm:$0xf]
    %v53 = vld [vmem:[%s1 + $0x54] sm:$0xf]
    %v54 = vld [vmem:[%s1 + $0x58] sm:$0xf]
    %v55 = vld [vmem:[%s1 + $0x5c] sm:$0xf]
    %v56 = vld [vmem:[%s1 + $0x60] sm:$0xf]
    %v57 = vld [vmem:[%s1 + $0x64] sm:$0xf]
    %v58 = vld [vmem:[%s1 + $0x68] sm:$0xf]
    %v59 = vld [vmem:[%s1 + $0x6c] sm:$0xf]
    %v60 = vld [vmem:[%s1 + $0x70] sm:$0xf]
    %v61 = vld [vmem:[%s1 + $0x74] sm:$0xf]
    %v62 = vld [vmem:[%s1 + $0x78] sm:$0xf]
    %v63 = vld [vmem:[%s1 + $0x7c] sm:$0xf]
    %v64 = vld [vmem:[%s1 + $0x80] sm:$0xf]
    %v65 = vld [vmem:[%s1 + $0x84] sm:$0xf]
    %v66 = vld [vmem:[%s1 + $0x88] sm:$0xf]
    %v67 = vld [vmem:[%s1 + $0x8c] sm:$0xf]
    %v68 = vld [vmem:[%s1 + $0x90] sm:$0xf]
    %v69 = vld [vmem:[%s1 + $0x94] sm:$0xf]
    %v70 = vld [vmem:[%s1 + $0x98] sm:$0xf]
    %v71 = vld [vmem:[%s1 + $0x9c] sm:$0xf]
    %v72 = vld [vmem:[%s1 + $0xa0] sm:$0xf]
    %v73 = vld [vmem:[%s1 + $0xa4] sm:$0xf]
    %v74 = vld [vmem:[%s1 + $0xa8] sm:$0xf]
    %v75 = vld [vmem:[%s1 + $0xac] sm:$0xf]
    %v76 = vld [vmem:[%s1 + $0xb0] sm:$0xf]
    %v77 = vld [vmem:[%s1 + $0xb4] sm:$0xf]
    %v78 = vld [vmem:[%s1 + $0xb8] sm:$0xf]
    %v79 = vld [vmem:[%s1 + $0xbc] sm:$0xf]
    %v80 = vld [vmem:[%s1 + $0xc0] sm:$0xf]
    %v81 = vld [vmem:[%s1 + $0xc4] sm:$0xf]
    %v82 = vld [vmem:[%s1 + $0xc8] sm:$0xf]
    %v83 = vld [vmem:[%s1 + $0xcc] sm:$0xf]
    %v84 = vld [vmem:[%s1 + $0xd0] sm:$0xf]
    %v85 = vld [vmem:[%s1 + $0xd4] sm:$0xf]
    %v86 = vld [vmem:[%s1 + $0xd8] sm:$0xf]
    %v87 = vld [vmem:[%s1 + $0xdc] sm:$0xf]
    %v88 = vld [vmem:[%s1 + $0xe0] sm:$0xf]
    %v89 = vld [vmem:[%s1 + $0xe4] sm:$0xf]
    %v90 = vld [vmem:[%s1 + $0xe8] sm:$0xf]
    %v91 = vld [vmem:[%s1 + $0xec] sm:$0xf]
    %v92 = vld [vmem:[%s1 + $0xf0] sm:$0xf]
    %v93 = vld [vmem:[%s1 + $0xf4] sm:$0xf]
    %v94 = vld [vmem:[%s1 + $0xf8] sm:$0xf]
    %v95 = vld [vmem:[%s1 + $0xfc] sm:$0xf]
    %v96 = vld [vmem:[%s1 + $0x100] sm:$0xf]
    %v97 = vld [vmem:[%s1 + $0x104] sm:$0xf]
    %v98 = vld [vmem:[%s1 + $0x108] sm:$0xf]
    %v99 = vld [vmem:[%s1 + $0x10c] sm:$0xf]
    %v100 = vld [vmem:[%s1 + $0x110] sm:$0xf]
    %v101 = vld [vmem:[%s1 + $0x114] sm:$0xf]
    %v102 = vld [vmem:[%s1 + $0x118] sm:$0xf]
    %v103 = vld [vmem:[%s1 + $0x11c] sm:$0xf]
    %v104 = vld [vmem:[%s1 + $0x120] sm:$0xf]
    %v105 = vld [vmem:[%s1 + $0x124] sm:$0xf]
    %v106 = vld [vmem:[%s1 + $0x128] sm:$0xf]
    %v107 = vld [vmem:[%s1 + $0x12c] sm:$0xf]
    %v108 = vld [vmem:[%s1 + $0x130] sm:$0xf]
    %v109 = vld [vmem:[%s1 + $0x134] sm:$0xf]
    %v110 = vld [vmem:[%s1 + $0x138] sm:$0xf]
    %v111 = vld [vmem:[%s1 + $0x13c] sm:$0xf]
    %v112 = vld [vmem:[%s1 + $0x140] sm:$0xf]
    %v113 = vld [vmem:[%s1 + $0x144] sm:$0xf]
    %v114 = vld [vmem:[%s1 + $0x148] sm:$0xf]
    %v115 = vld [vmem:[%s1 + $0x14c] sm:$0xf]
    %v116 = vld [vmem:[%s1 + $0x150] sm:$0xf]
    %v117 = vld [vmem:[%s1 + $0x154] sm:$0xf]
    %v118 = vld [vmem:[%s1 + $0x158] sm:$0xf]
    %v119 = vld [vmem:[%s1 + $0x15c] sm:$0xf]
    %v120 = vld [vmem:[%s1 + $0x160] sm:$0xf]
    %v121 = vld [vmem:[%s1 + $0x164] sm:$0xf]
    %v122 = vld [vmem:[%s1 + $0x168] sm:$0xf]
    %v123 = vld [vmem:[%s1 + $0x16c] sm:$0xf]
    %v124 = vld [vmem:[%s1 + $0x170] sm:$0xf]
    %v125 = vld [vmem:[%s1 + $0x174] sm:$0xf]
    %v126 = vld [vmem:[%s1 + $0x178] sm:$0xf]
    %v127 = vld [vmem:[%s1 + $0x17c] sm:$0xf]
    %v128 = vld [vmem:[%s1 + $0x180] sm:$0xf]
    %v129 = vld [vmem:[%s1 + $0x184] sm:$0xf]
    %v130 = vld [vmem:[%s1 + $0x188] sm:$0xf]
    %v131 = vld [vmem:[%s1 + $0x18c] sm:$0xf]
    %v132 = vld [vmem:[%s1 + $0x190] sm:$0xf]
    %v133 = vld [vmem:[%s1 + $0x194] sm:$0xf]
    %v134 = vld [vmem:[%s1 + $0x198] sm:$0xf]
    %v135 = vld [vmem:[%s1 + $0x19c] sm:$0xf]
    %v136 = vld [vmem:[%s1 + $0x1a0] sm:$0xf]
    %v137 = vld [vmem:[%s1 + $0x1a4] sm:$0xf]
    %v138 = vld [vmem:[%s1 + $0x1a8] sm:$0xf]
    %v139 = vld [vmem:[%s1 + $0x1ac] sm:$0xf]
    %v140 = vld [vmem:[%s1 + $0x1b0] sm:$0xf]
    %v141 = vld [vmem:[%s1 + $0x1b4] sm:$0xf]
    %v142 = vld [vmem:[%s1 + $0x1b8] sm:$0xf]
    %v143 = vld [vmem:[%s1 + $0x1bc] sm:$0xf]
    %v144 = vld [vmem:[%s1 + $0x1c0] sm:$0xf]
    %v145 = vld [vmem:[%s1 + $0x1c4] sm:$0xf]
    %v146 = vld [vmem:[%s1 + $0x1c8] sm:$0xf]
    %v147 = vld [vmem:[%s1 + $0x1cc] sm:$0xf]
    %v148 = vld [vmem:[%s1 + $0x1d0] sm:$0xf]
    %v149 = vld [vmem:[%s1 + $0x1d4] sm:$0xf]
    %v150 = vld [vmem:[%s1 + $0x1d8] sm:$0xf]
    %v151 = vld [vmem:[%s1 + $0x1dc] sm:$0xf]
    %v152 = vld [vmem:[%s1 + $0x1e0] sm:$0xf]
    %v153 = vld [vmem:[%s1 + $0x1e4] sm:$0xf]
    %v154 = vld [vmem:[%s1 + $0x1e8] sm:$0xf]
    %v155 = vld [vmem:[%s1 + $0x1ec] sm:$0xf]
    %v156 = vld [vmem:[%s1 + $0x1f0] sm:$0xf]
    %v157 = vld [vmem:[%s1 + $0x1f4] sm:$0xf]
    %v158 = vld [vmem:[%s1 + $0x1f8] sm:$0xf]
    %v159 = vld [vmem:[%s1 + $0x1fc] sm:$0xf]
    %v160 = vld [vmem:[%s1 + $0x200] sm:$0xf]
    %v161 = vld [vmem:[%s1 + $0x204] sm:$0xf]
    %v162 = vld [vmem:[%s1 + $0x208] sm:$0xf]
    %v163 = vld [vmem:[%s1 + $0x20c] sm:$0xf]
    %v164 = vld [vmem:[%s1 + $0x210] sm:$0xf]
    %v165 = vld [vmem:[%s1 + $0x214] sm:$0xf]
    %v166 = vld [vmem:[%s1 + $0x218] sm:$0xf]
    %v167 = vld [vmem:[%s1 + $0x21c] sm:$0xf]
    %v168 = vld [vmem:[%s1 + $0x220] sm:$0xf]
    %v169 = vld [vmem:[%s1 + $0x224] sm:$0xf]
    %v170 = vld [vmem:[%s1 + $0x228] sm:$0xf]
    %v171 = vld [vmem:[%s1 + $0x22c] sm:$0xf]
    %v172 = vld [vmem:[%s1 + $0x230] sm:$0xf]
    %v173 = vld [vmem:[%s1 + $0x234] sm:$0xf]
    %v174 = vld [vmem:[%s1 + $0x238] sm:$0xf]
    %v175 = vld [vmem:[%s1 + $0x23c] sm:$0xf]
    %v176 = vld [vmem:[%s1 + $0x240] sm:$0xf]
    %v177 = vld [vmem:[%s1 + $0x244] sm:$0xf]
    %v178 = vld [vmem:[%s1 + $0x248] sm:$0xf]
    %v179 = vld [vmem:[%s1 + $0x24c] sm:$0xf]
    %v180 = vld [vmem:[%s1 + $0x250] sm:$0xf]
    %v181 = vld [vmem:[%s1 + $0x254] sm:$0xf]
    %v182 = vld [vmem:[%s1 + $0x258] sm:$0xf]
    %v183 = vld [vmem:[%s1 + $0x25c] sm:$0xf]
    %v184 = vld [vmem:[%s1 + $0x260] sm:$0xf]
    %v185 = vld [vmem:[%s1 + $0x264] sm:$0xf]
    %v186 = vld [vmem:[%s1 + $0x268] sm:$0xf]
    %v187 = vld [vmem:[%s1 + $0x26c] sm:$0xf]
    %v188 = vld [vmem:[%s1 + $0x270] sm:$0xf]
    %v189 = vld [vmem:[%s1 + $0x274] sm:$0xf]
    %v190 = vld [vmem:[%s1 + $0x278] sm:$0xf]
    %v191 = vld [vmem:[%s1 + $0x27c] sm:$0xf]
    %v192 = vld [vmem:[%s1 + $0x280] sm:$0xf]
    %v193 = vld [vmem:[%s1 + $0x284] sm:$0xf]
    %v194 = vld [vmem:[%s1 + $0x288] sm:$0xf]
    %v195 = vld [vmem:[%s1 + $0x28c] sm:$0xf]
    %v196 = vld [vmem:[%s1 + $0x290] sm:$0xf]
    %v197 = vld [vmem:[%s1 + $0x294] sm:$0xf]
    %v198 = vld [vmem:[%s1 + $0x298] sm:$0xf]
    %v199 = vld [vmem:[%s1 + $0x29c] sm:$0xf]
    %v200 = vld [vmem:[%s1 + $0x2a0] sm:$0xf]
    %v201 = vld [vmem:[%s1 + $0x2a4] sm:$0xf]
    %v202 = vld [vmem:[%s1 + $0x2a8] sm:$0xf]
    %v203 = vld [vmem:[%s1 + $0x2ac] sm:$0xf]
    %v204 = vld [vmem:[%s1 + $0x2b0] sm:$0xf]
    %v205 = vld [vmem:[%s1 + $0x2b4] sm:$0xf]
    %v206 = vld [vmem:[%s1 + $0x2b8] sm:$0xf]
    %v207 = vld [vmem:[%s1 + $0x2bc] sm:$0xf]
    %v208 = vld [vmem:[%s1 + $0x2c0] sm:$0xf]
    %v209 = vld [vmem:[%s1 + $0x2c4] sm:$0xf]
    %v210 = vld [vmem:[%s1 + $0x2c8] sm:$0xf]
    %v211 = vld [vmem:[%s1 + $0x2cc] sm:$0xf]
    %v212 = vld [vmem:[%s1 + $0x2d0] sm:$0xf]
    %v213 = vld [vmem:[%s1 + $0x2d4] sm:$0xf]
    %v214 = vld [vmem:[%s1 + $0x2d8] sm:$0xf]
    %v215 = vld [vmem:[%s1 + $0x2dc] sm:$0xf]
    %v216 = vld [vmem:[%s1 + $0x2e0] sm:$0xf]
    %v217 = vld [vmem:[%s1 + $0x2e4] sm:$0xf]
    %v218 = vld [vmem:[%s1 + $0x2e8] sm:$0xf]
    %v219 = vld [vmem:[%s1 + $0x2ec] sm:$0xf]
    %v220 = vld [vmem:[%s1 + $0x2f0] sm:$0xf]
    %v221 = vld [vmem:[%s1 + $0x2f4] sm:$0xf]
    %v222 = vld [vmem:[%s1 + $0x2f8] sm:$0xf]
    %v223 = vld [vmem:[%s1 + $0x2fc] sm:$0xf]
    %v224 = vld [vmem:[%s1 + $0x300] sm:$0xf]
    %v225 = vld [vmem:[%s1 + $0x304] sm:$0xf]
    %v226 = vld [vmem:[%s1 + $0x308] sm:$0xf]
    %v227 = vld [vmem:[%s1 + $0x30c] sm:$0xf]
    %v228 = vld [vmem:[%s1 + $0x310] sm:$0xf]
    %v229 = vld [vmem:[%s1 + $0x314] sm:$0xf]
    %v230 = vld [vmem:[%s1 + $0x318] sm:$0xf]
    %v231 = vld [vmem:[%s1 + $0x31c] sm:$0xf]
    %v232 = vld [vmem:[%s1 + $0x320] sm:$0xf]
    %v233 = vld [vmem:[%s1 + $0x324] sm:$0xf]
    %v234 = vld [vmem:[%s1 + $0x328] sm:$0xf]
    %v235 = vld [vmem:[%s1 + $0x32c] sm:$0xf]
    %v236 = vld [vmem:[%s1 + $0x330] sm:$0xf]
    %v237 = vld [vmem:[%s1 + $0x334] sm:$0xf]
    %v238 = vld [vmem:[%s1 + $0x338] sm:$0xf]
    %v239 = vld [vmem:[%s1 + $0x33c] sm:$0xf]
    %v240 = vld [vmem:[%s1 + $0x340] sm:$0xf]
    %v241 = vld [vmem:[%s1 + $0x344] sm:$0xf]
    %v242 = vld [vmem:[%s1 + $0x348] sm:$0xf]
    %v243 = vld [vmem:[%s1 + $0x34c] sm:$0xf]
    %v244 = vld [vmem:[%s1 + $0x350] sm:$0xf]
    %v245 = vld [vmem:[%s1 + $0x354] sm:$0xf]
    %v246 = vld [vmem:[%s1 + $0x358] sm:$0xf]
    %v247 = vld [vmem:[%s1 + $0x35c] sm:$0xf]
    %v248 = vld [vmem:[%s1 + $0x360] sm:$0xf]
    %v249 = vld [vmem:[%s1 + $0x364] sm:$0xf]
    %v250 = vld [vmem:[%s1 + $0x368] sm:$0xf]
    %v251 = vld [vmem:[%s1 + $0x36c] sm:$0xf]
    %v252 = vld [vmem:[%s1 + $0x370] sm:$0xf]
    %v253 = vld [vmem:[%s1 + $0x374] sm:$0xf]
    %v254 = vld [vmem:[%s1 + $0x378] sm:$0xf]
    %v255 = vld [vmem:[%s1 + $0x37c] sm:$0xf]
    %v256 = vld [vmem:[%s1 + $0x380] sm:$0xf]
    %v257 = vld [vmem:[%s1 + $0x384] sm:$0xf]
    %v258 = vld [vmem:[%s1 + $0x388] sm:$0xf]
    %v259 = vld [vmem:[%s1 + $0x38c] sm:$0xf]
    %v260 = vld [vmem:[%s1 + $0x390] sm:$0xf]
    %v261 = vld [vmem:[%s1 + $0x394] sm:$0xf]
    %v262 = vld [vmem:[%s1 + $0x398] sm:$0xf]
    %v263 = vld [vmem:[%s1 + $0x39c] sm:$0xf]
    %v264 = vld [vmem:[%s1 + $0x3a0] sm:$0xf]
    %v265 = vld [vmem:[%s1 + $0x3a4] sm:$0xf]
    %v266 = vld [vmem:[%s1 + $0x3a8] sm:$0xf]
    %v267 = vld [vmem:[%s1 + $0x3ac] sm:$0xf]
    %v268 = vld [vmem:[%s1 + $0x3b0] sm:$0xf]
    %v269 = vld [vmem:[%s1 + $0x3b4] sm:$0xf]
    %v270 = vld [vmem:[%s1 + $0x3b8] sm:$0xf]
    %v271 = vld [vmem:[%s1 + $0x3bc] sm:$0xf]
    %v272 = vld [vmem:[%s1 + $0x3c0] sm:$0xf]
    %v273 = vld [vmem:[%s1 + $0x3c4] sm:$0xf]
    %v274 = vld [vmem:[%s1 + $0x3c8] sm:$0xf]
    %v275 = vld [vmem:[%s1 + $0x3cc] sm:$0xf]
    %v276 = vld [vmem:[%s1 + $0x3d0] sm:$0xf]
    %v277 = vld [vmem:[%s1 + $0x3d4] sm:$0xf]
    %v278 = vld [vmem:[%s1 + $0x3d8] sm:$0xf]
    %v279 = vld [vmem:[%s1 + $0x3dc] sm:$0xf]
    %v280 = vld [vmem:[%s1 + $0x3e0] sm:$0xf]
    %v281 = vld [vmem:[%s1 + $0x3e4] sm:$0xf]
    %v282 = vld [vmem:[%s1 + $0x3e8] sm:$0xf]
    %v283 = vld [vmem:[%s1 + $0x3ec] sm:$0xf]
    %v284 = vld [vmem:[%s1 + $0x3f0] sm:$0xf]
    %v285 = vld [vmem:[%s1 + $0x3f4] sm:$0xf]
    %v286 = vld [vmem:[%s1 + $0x3f8] sm:$0xf]
    %v287 = vld [vmem:[%s1 + $0x3fc] sm:$0xf]
    %v288 = vld [vmem:[%s1 + $0x400] sm:$0xf]
    %v289 = vld [vmem:[%s1 + $0x404] sm:$0xf]
    %v290 = vld [vmem:[%s1 + $0x408] sm:$0xf]
    %v291 = vld [vmem:[%s1 + $0x40c] sm:$0xf]
    %v292 = vld [vmem:[%s1 + $0x410] sm:$0xf]
    %v293 = vld [vmem:[%s1 + $0x414] sm:$0xf]
    %v294 = vld [vmem:[%s1 + $0x418] sm:$0xf]
    %v295 = vld [vmem:[%s1 + $0x41c] sm:$0xf]
    %v296 = vld [vmem:[%s1 + $0x420] sm:$0xf]
    %v297 = vld [vmem:[%s1 + $0x424] sm:$0xf]
    %v298 = vld [vmem:[%s1 + $0x428] sm:$0xf]
    %v299 = vld [vmem:[%s1 + $0x42c] sm:$0xf]
    %v300 = vld [vmem:[%s1 + $0x430] sm:$0xf]
    %v301 = vld [vmem:[%s1 + $0x434] sm:$0xf]
    %v302 = vld [vmem:[%s1 + $0x438] sm:$0xf]
    %v303 = vld [vmem:[%s1 + $0x43c] sm:$0xf]
    %v304 = vld [vmem:[%s1 + $0x440] sm:$0xf]
    %v305 = vld [vmem:[%s1 + $0x444] sm:$0xf]
    %v306 = vld [vmem:[%s1 + $0x448] sm:$0xf]
    %v307 = vld [vmem:[%s1 + $0x44c] sm:$0xf]
    %v308 = vld [vmem:[%s1 + $0x450] sm:$0xf]
    %v309 = vld [vmem:[%s1 + $0x454] sm:$0xf]
    %v310 = vld [vmem:[%s1 + $0x458] sm:$0xf]
    %v311 = vld [vmem:[%s1 + $0x45c] sm:$0xf]
    %v312 = vld [vmem:[%s1 + $0x460] sm:$0xf]
    %v313 = vld [vmem:[%s1 + $0x464] sm:$0xf]
    %v314 = vld [vmem:[%s1 + $0x468] sm:$0xf]
    %v315 = vld [vmem:[%s1 + $0x46c] sm:$0xf]
    %v316 = vld [vmem:[%s1 + $0x470] sm:$0xf]
    %v317 = vld [vmem:[%s1 + $0x474] sm:$0xf]
    %v318 = vld [vmem:[%s1 + $0x478] sm:$0xf]
    %v319 = vld [vmem:[%s1 + $0x47c] sm:$0xf]
    %v320 = vld [vmem:[%s1 + $0x480] sm:$0xf]
    %v321 = vld [vmem:[%s1 + $0x484] sm:$0xf]
    %v322 = vld [vmem:[%s1 + $0x488] sm:$0xf]
    %v323 = vld [vmem:[%s1 + $0x48c] sm:$0xf]
    %v324 = vld [vmem:[%s1 + $0x490] sm:$0xf]
    %v325 = vld [vmem:[%s1 + $0x494] sm:$0xf]
    %v326 = vld [vmem:[%s1 + $0x498] sm:$0xf]
    %v327 = vld [vmem:[%s1 + $0x49c] sm:$0xf]
    %v328 = vld [vmem:[%s1 + $0x4a0] sm:$0xf]
    %v329 = vld [vmem:[%s1 + $0x4a4] sm:$0xf]
    %v330 = vld [vmem:[%s1 + $0x4a8] sm:$0xf]
    %v331 = vld [vmem:[%s1 + $0x4ac] sm:$0xf]
    %v332 = vld [vmem:[%s1 + $0x4b0] sm:$0xf]
    %v333 = vld [vmem:[%s1 + $0x4b4] sm:$0xf]
    %v334 = vld [vmem:[%s1 + $0x4b8] sm:$0xf]
    %v335 = vld [vmem:[%s1 + $0x4bc] sm:$0xf]
    %v336 = vld [vmem:[%s1 + $0x4c0] sm:$0xf]
    %v337 = vld [vmem:[%s1 + $0x4c4] sm:$0xf]
    %v338 = vld [vmem:[%s1 + $0x4c8] sm:$0xf]
    %v339 = vld [vmem:[%s1 + $0x4cc] sm:$0xf]
    %v340 = vld [vmem:[%s1 + $0x4d0] sm:$0xf]
    %v341 = vld [vmem:[%s1 + $0x4d4] sm:$0xf]
    %v342 = vld [vmem:[%s1 + $0x4d8] sm:$0xf]
    %v343 = vld [vmem:[%s1 + $0x4dc] sm:$0xf]
    %v344 = vld [vmem:[%s1 + $0x4e0] sm:$0xf]
    %v345 = vld [vmem:[%s1 + $0x4e4] sm:$0xf]
    %v346 = vld [vmem:[%s1 + $0x4e8] sm:$0xf]
    %v347 = vld [vmem:[%s1 + $0x4ec] sm:$0xf]
    %v348 = vld [vmem:[%s1 + $0x4f0] sm:$0xf]
    %v349 = vld [vmem:[%s1 + $0x4f4] sm:$0xf]
    %v350 = vld [vmem:[%s1 + $0x4f8] sm:$0xf]
    %v351 = vld [vmem:[%s1 + $0x4fc] sm:$0xf]
    %v352 = vld [vmem:[%s1 + $0x500] sm:$0xf]
    %v353 = vld [vmem:[%s1 + $0x504] sm:$0xf]
    %v354 = vld [vmem:[%s1 + $0x508] sm:$0xf]
    %v355 = vld [vmem:[%s1 + $0x50c] sm:$0xf]
    %v356 = vld [vmem:[%s1 + $0x510] sm:$0xf]
    %v357 = vld [vmem:[%s1 + $0x514] sm:$0xf]
    %v358 = vld [vmem:[%s1 + $0x518] sm:$0xf]
    %v359 = vld [vmem:[%s1 + $0x51c] sm:$0xf]
    %v360 = vld [vmem:[%s1 + $0x520] sm:$0xf]
    %v361 = vld [vmem:[%s1 + $0x524] sm:$0xf]
    %v362 = vld [vmem:[%s1 + $0x528] sm:$0xf]
    %v363 = vld [vmem:[%s1 + $0x52c] sm:$0xf]
    %v364 = vld [vmem:[%s1 + $0x530] sm:$0xf]
    %v365 = vld [vmem:[%s1 + $0x534] sm:$0xf]
    %v366 = vld [vmem:[%s1 + $0x538] sm:$0xf]
    %v367 = vld [vmem:[%s1 + $0x53c] sm:$0xf]
    %v368 = vld [vmem:[%s1 + $0x540] sm:$0xf]
    %v369 = vld [vmem:[%s1 + $0x544] sm:$0xf]
    %v370 = vld [vmem:[%s1 + $0x548] sm:$0xf]
    %v371 = vld [vmem:[%s1 + $0x54c] sm:$0xf]
    %v372 = vld [vmem:[%s1 + $0x550] sm:$0xf]
    %v373 = vld [vmem:[%s1 + $0x554] sm:$0xf]
    %v374 = vld [vmem:[%s1 + $0x558] sm:$0xf]
    %v375 = vld [vmem:[%s1 + $0x55c] sm:$0xf]
    %v376 = vld [vmem:[%s1 + $0x560] sm:$0xf]
    %v377 = vld [vmem:[%s1 + $0x564] sm:$0xf]
    %v378 = vld [vmem:[%s1 + $0x568] sm:$0xf]
    %v379 = vld [vmem:[%s1 + $0x56c] sm:$0xf]
    %v380 = vld [vmem:[%s1 + $0x570] sm:$0xf]
    %v381 = vld [vmem:[%s1 + $0x574] sm:$0xf]
    %v382 = vld [vmem:[%s1 + $0x578] sm:$0xf]
    %v383 = vld [vmem:[%s1 + $0x57c] sm:$0xf]
    %v384 = vld [vmem:[%s1 + $0x580] sm:$0xf]
    %v385 = vld [vmem:[%s1 + $0x584] sm:$0xf]
    %v386 = vld [vmem:[%s1 + $0x588] sm:$0xf]
    %v387 = vld [vmem:[%s1 + $0x58c] sm:$0xf]
    %v388 = vld [vmem:[%s1 + $0x590] sm:$0xf]
    %v389 = vld [vmem:[%s1 + $0x594] sm:$0xf]
    %v390 = vld [vmem:[%s1 + $0x598] sm:$0xf]
    %v391 = vld [vmem:[%s1 + $0x59c] sm:$0xf]
    %v392 = vld [vmem:[%s1 + $0x5a0] sm:$0xf]
    %v393 = vld [vmem:[%s1 + $0x5a4] sm:$0xf]
    %v394 = vld [vmem:[%s1 + $0x5a8] sm:$0xf]
    %v395 = vld [vmem:[%s1 + $0x5ac] sm:$0xf]
    %v396 = vld [vmem:[%s1 + $0x5b0] sm:$0xf]
    %v397 = vld [vmem:[%s1 + $0x5b4] sm:$0xf]
    %v398 = vld [vmem:[%s1 + $0x5b8] sm:$0xf]
    %v399 = vld [vmem:[%s1 + $0x5bc] sm:$0xf]
    %v400 = vld [vmem:[%s1 + $0x5c0] sm:$0xf]
    %v401 = vld [vmem:[%s1 + $0x5c4] sm:$0xf]
    %v402 = vld [vmem:[%s1 + $0x5c8] sm:$0xf]
    %v403 = vld [vmem:[%s1 + $0x5cc] sm:$0xf]
    %v404 = vld [vmem:[%s1 + $0x5d0] sm:$0xf]
    %v405 = vld [vmem:[%s1 + $0x5d4] sm:$0xf]
    %v406 = vld [vmem:[%s1 + $0x5d8] sm:$0xf]
    %v407 = vld [vmem:[%s1 + $0x5dc] sm:$0xf]
    %v408 = vld [vmem:[%s1 + $0x5e0] sm:$0xf]
    %v409 = vld [vmem:[%s1 + $0x5e4] sm:$0xf]
    %v410 = vld [vmem:[%s1 + $0x5e8] sm:$0xf]
    %v411 = vld [vmem:[%s1 + $0x5ec] sm:$0xf]
    %v412 = vld [vmem:[%s1 + $0x5f0] sm:$0xf]
    %v413 = vld [vmem:[%s1 + $0x5f4] sm:$0xf]
    %v414 = vld [vmem:[%s1 + $0x5f8] sm:$0xf]
    %v415 = vld [vmem:[%s1 + $0x5fc] sm:$0xf]
    %v416 = vld [vmem:[%s1 + $0x600] sm:$0xf]
    %v417 = vld [vmem:[%s1 + $0x604] sm:$0xf]
    %v418 = vld [vmem:[%s1 + $0x608] sm:$0xf]
    %v419 = vld [vmem:[%s1 + $0x60c] sm:$0xf]
    %v420 = vld [vmem:[%s1 + $0x610] sm:$0xf]
    %v421 = vld [vmem:[%s1 + $0x614] sm:$0xf]
    %v422 = vld [vmem:[%s1 + $0x618] sm:$0xf]
    %v423 = vld [vmem:[%s1 + $0x61c] sm:$0xf]
    %v424 = vld [vmem:[%s2] sm:$0x1]
    %v426 = vlaneseq
    %v427 = vshrl.u32 %v426, 7
    %v428 = vsub.s32 0, %v427
    %v429 = vrot.slane %v424, %v428
    %v435 = vcombine.high %v28, %v28
    %v437 = vunpack.c.l.s4 1966171168
    %v438 = vunpack.c.0.s8 %v437
    %v439 = vlaneseq
    %v440 = vshrl.u32 %v439, 7
    %v441 = vsub.s32 %v438, %v440
    %v442 = vrot.slane %v28, %v441
    %v444 = vunpack.c.l.s4 1966171168
    %v445 = vunpack.c.0.s8 %v444
    %v446 = vlaneseq
    %v447 = vshrl.u32 %v446, 7
    %v448 = vsub.s32 %v445, %v447
    %v449 = vrot.slane %v435, %v448
    %v450 = vcombine.high %v442, %v442
    %v451 = vcombine.high %v449, %v449
    %v453 = vunpack.c.l.s4 1966171168
    %v454 = vunpack.c.0.s8 %v453
    %v455 = vlaneseq
    %v456 = vshrl.u32 %v455, 7
    %v457 = vsub.s32 %v454, %v456
    %v458 = vrot.slane %v442, %v457
    %v460 = vunpack.c.l.s4 1966171168
    %v461 = vunpack.c.0.s8 %v460
    %v462 = vlaneseq
    %v463 = vshrl.u32 %v462, 7
    %v464 = vsub.s32 %v461, %v463
    %v465 = vrot.slane %v449, %v464
    %v467 = vunpack.c.l.s4 1966171168
    %v468 = vunpack.c.0.s8 %v467
    %v469 = vlaneseq
    %v470 = vshrl.u32 %v469, 7
    %v471 = vsub.s32 %v468, %v470
    %v472 = vrot.slane %v450, %v471
    %v474 = vunpack.c.l.s4 1966171168
    %v475 = vunpack.c.0.s8 %v474
    %v476 = vlaneseq
    %v477 = vshrl.u32 %v476, 7
    %v478 = vsub.s32 %v475, %v477
    %v479 = vrot.slane %v451, %v478
    %v480 = vcombine.high %v458, %v458
    %v481 = vcombine.high %v465, %v465
    %v482 = vcombine.high %v472, %v472
    %v483 = vcombine.high %v479, %v479
    %v484 = vcombine.high %v29, %v29
    %v486 = vunpack.c.l.s4 1966171168
    %v487 = vunpack.c.0.s8 %v486
    %v488 = vlaneseq
    %v489 = vshrl.u32 %v488, 7
    %v490 = vsub.s32 %v487, %v489
    %v491 = vrot.slane %v29, %v490
    %v493 = vunpack.c.l.s4 1966171168
    %v494 = vunpack.c.0.s8 %v493
    %v495 = vlaneseq
    %v496 = vshrl.u32 %v495, 7
    %v497 = vsub.s32 %v494, %v496
    %v498 = vrot.slane %v484, %v497
    %v499 = vcombine.high %v491, %v491
    %v500 = vcombine.high %v498, %v498
    %v502 = vunpack.c.l.s4 1966171168
    %v503 = vunpack.c.0.s8 %v502
    %v504 = vlaneseq
    %v505 = vshrl.u32 %v504, 7
    %v506 = vsub.s32 %v503, %v505
    %v507 = vrot.slane %v491, %v506
    %v509 = vunpack.c.l.s4 1966171168
    %v510 = vunpack.c.0.s8 %v509
    %v511 = vlaneseq
    %v512 = vshrl.u32 %v511, 7
    %v513 = vsub.s32 %v510, %v512
    %v514 = vrot.slane %v498, %v513
    %v516 = vunpack.c.l.s4 1966171168
    %v517 = vunpack.c.0.s8 %v516
    %v518 = vlaneseq
    %v519 = vshrl.u32 %v518, 7
    %v520 = vsub.s32 %v517, %v519
    %v521 = vrot.slane %v499, %v520
    %v523 = vunpack.c.l.s4 1966171168
    %v524 = vunpack.c.0.s8 %v523
    %v525 = vlaneseq
    %v526 = vshrl.u32 %v525, 7
    %v527 = vsub.s32 %v524, %v526
    %v528 = vrot.slane %v500, %v527
    %v529 = vcombine.high %v507, %v507
    %v530 = vcombine.high %v514, %v514
    %v531 = vcombine.high %v521, %v521
    %v532 = vcombine.high %v528, %v528
    %v533 = vcombine.high %v30, %v30
    %v535 = vunpack.c.l.s4 1966171168
    %v536 = vunpack.c.0.s8 %v535
    %v537 = vlaneseq
    %v538 = vshrl.u32 %v537, 7
    %v539 = vsub.s32 %v536, %v538
    %v540 = vrot.slane %v30, %v539
    %v542 = vunpack.c.l.s4 1966171168
    %v543 = vunpack.c.0.s8 %v542
    %v544 = vlaneseq
    %v545 = vshrl.u32 %v544, 7
    %v546 = vsub.s32 %v543, %v545
    %v547 = vrot.slane %v533, %v546
    %v548 = vcombine.high %v540, %v540
    %v549 = vcombine.high %v547, %v547
    %v551 = vunpack.c.l.s4 1966171168
    %v552 = vunpack.c.0.s8 %v551
    %v553 = vlaneseq
    %v554 = vshrl.u32 %v553, 7
    %v555 = vsub.s32 %v552, %v554
    %v556 = vrot.slane %v540, %v555
    %v558 = vunpack.c.l.s4 1966171168
    %v559 = vunpack.c.0.s8 %v558
    %v560 = vlaneseq
    %v561 = vshrl.u32 %v560, 7
    %v562 = vsub.s32 %v559, %v561
    %v563 = vrot.slane %v547, %v562
    %v565 = vunpack.c.l.s4 1966171168
    %v566 = vunpack.c.0.s8 %v565
    %v567 = vlaneseq
    %v568 = vshrl.u32 %v567, 7
    %v569 = vsub.s32 %v566, %v568
    %v570 = vrot.slane %v548, %v569
    %v572 = vunpack.c.l.s4 1966171168
    %v573 = vunpack.c.0.s8 %v572
    %v574 = vlaneseq
    %v575 = vshrl.u32 %v574, 7
    %v576 = vsub.s32 %v573, %v575
    %v577 = vrot.slane %v549, %v576
    %v578 = vcombine.high %v556, %v556
    %v579 = vcombine.high %v563, %v563
    %v580 = vcombine.high %v570, %v570
    %v581 = vcombine.high %v577, %v577
    %v583 = vunpack.c.l.s4 1966171168
    %v584 = vunpack.c.0.s8 %v583
    %v585 = vlaneseq
    %v586 = vshrl.u32 %v585, 7
    %v587 = vsub.s32 %v584, %v586
    %v588 = vrot.slane %v31, %v587
    %v590 = vunpack.c.l.s4 1966171168
    %v591 = vunpack.c.0.s8 %v590
    %v592 = vlaneseq
    %v593 = vshrl.u32 %v592, 7
    %v594 = vsub.s32 %v591, %v593
    %v595 = vrot.slane %v588, %v594
    %v1012 = vunpack.c.l.b16 %v32
    %v1013 = vunpack.c.l.b16 %v33
    %v1014 = vunpack.c.l.b16 %v34
    %v1015 = vunpack.c.l.b16 %v35
    %v1016 = vunpack.c.l.b16 %v36
    %v1017 = vunpack.c.l.b16 %v37
    %v1018 = vunpack.c.l.b16 %v38
    %v1019 = vunpack.c.l.b16 %v39
    %v1020 = vunpack.c.l.b16 %v40
    %v1021 = vunpack.c.l.b16 %v41
    %v1022 = vunpack.c.l.b16 %v42
    %v1023 = vunpack.c.l.b16 %v43
    %v1024 = vunpack.c.l.b16 %v44
    %v1025 = vunpack.c.l.b16 %v45
    %v1026 = vunpack.c.l.b16 %v46
    %v1027 = vunpack.c.l.b16 %v47
    %v1028 = vunpack.c.l.b16 %v48
    %v1029 = vunpack.c.l.b16 %v49
    %v1030 = vunpack.c.l.b16 %v50
    %v1031 = vunpack.c.l.b16 %v51
    %v1032 = vunpack.c.l.b16 %v52
    %v1033 = vunpack.c.l.b16 %v53
    %v1034 = vunpack.c.l.b16 %v54
    %v1035 = vunpack.c.l.b16 %v55
    %v1036 = vunpack.c.l.b16 %v56
    %v1037 = vunpack.c.l.b16 %v57
    %v1038 = vunpack.c.l.b16 %v58
    %v1039 = vunpack.c.l.b16 %v59
    %v1040 = vunpack.c.l.b16 %v60
    %v1041 = vunpack.c.l.b16 %v61
    %v1042 = vunpack.c.l.b16 %v62
    %v1043 = vunpack.c.l.b16 %v63
    %v1044 = vunpack.c.l.b16 %v64
    %v1045 = vunpack.c.l.b16 %v65
    %v1046 = vunpack.c.l.b16 %v66
    %v1047 = vunpack.c.l.b16 %v67
    %v1048 = vunpack.c.l.b16 %v68
    %v1049 = vunpack.c.l.b16 %v69
    %v1050 = vunpack.c.l.b16 %v70
    %v1051 = vunpack.c.l.b16 %v71
    %v1052 = vunpack.c.l.b16 %v72
    %v1053 = vunpack.c.l.b16 %v73
    %v1054 = vunpack.c.l.b16 %v74
    %v1055 = vunpack.c.l.b16 %v75
    %v1056 = vunpack.c.l.b16 %v76
    %v1057 = vunpack.c.l.b16 %v77
    %v1058 = vunpack.c.l.b16 %v78
    %v1059 = vunpack.c.l.b16 %v79
    %v1060 = vunpack.c.l.b16 %v80
    %v1061 = vunpack.c.l.b16 %v81
    %v1062 = vunpack.c.l.b16 %v82
    %v1063 = vunpack.c.l.b16 %v83
    %v1064 = vunpack.c.l.b16 %v84
    %v1065 = vunpack.c.l.b16 %v85
    %v1066 = vunpack.c.l.b16 %v86
    %v1067 = vunpack.c.l.b16 %v87
    %v1068 = vunpack.c.l.b16 %v88
    %v1069 = vunpack.c.l.b16 %v89
    %v1070 = vunpack.c.l.b16 %v90
    %v1071 = vunpack.c.l.b16 %v91
    %v1072 = vunpack.c.l.b16 %v92
    %v1073 = vunpack.c.l.b16 %v93
    %v1074 = vunpack.c.l.b16 %v94
    %v1075 = vunpack.c.l.b16 %v95
    %v1076 = vunpack.c.l.b16 %v96
    %v1077 = vunpack.c.l.b16 %v97
    %v1078 = vunpack.c.l.b16 %v98
    %v1079 = vunpack.c.l.b16 %v99
    %v1080 = vunpack.c.l.b16 %v100
    %v1081 = vunpack.c.l.b16 %v101
    %v1082 = vunpack.c.l.b16 %v102
    %v1083 = vunpack.c.l.b16 %v103
    %v1084 = vunpack.c.l.b16 %v104
    %v1085 = vunpack.c.l.b16 %v105
    %v1086 = vunpack.c.l.b16 %v106
    %v1087 = vunpack.c.l.b16 %v107
    %v1088 = vunpack.c.l.b16 %v108
    %v1089 = vunpack.c.l.b16 %v109
    %v1090 = vunpack.c.l.b16 %v110
    %v1091 = vunpack.c.l.b16 %v111
    %v1092 = vunpack.c.l.b16 %v112
    %v1093 = vunpack.c.l.b16 %v113
    %v1094 = vunpack.c.l.b16 %v114
    %v1095 = vunpack.c.l.b16 %v115
    %v1096 = vunpack.c.l.b16 %v116
    %v1097 = vunpack.c.l.b16 %v117
    %v1098 = vunpack.c.l.b16 %v118
    %v1099 = vunpack.c.l.b16 %v119
    %v1100 = vunpack.c.l.b16 %v120
    %v1101 = vunpack.c.l.b16 %v121
    %v1102 = vunpack.c.l.b16 %v122
    %v1103 = vunpack.c.l.b16 %v123
    %v1104 = vunpack.c.l.b16 %v124
    %v1105 = vunpack.c.l.b16 %v125
    %v1106 = vunpack.c.l.b16 %v126
    %v1107 = vunpack.c.l.b16 %v127
    %v1108 = vunpack.c.l.b16 %v128
    %v1109 = vunpack.c.l.b16 %v129
    %v1110 = vunpack.c.l.b16 %v130
    %v1111 = vunpack.c.l.b16 %v131
    %v1112 = vunpack.c.l.b16 %v132
    %v1113 = vunpack.c.l.b16 %v133
    %v1114 = vunpack.c.l.b16 %v134
    %v1115 = vunpack.c.l.b16 %v135
    %v1116 = vunpack.c.l.b16 %v136
    %v1117 = vunpack.c.l.b16 %v137
    %v1118 = vunpack.c.l.b16 %v138
    %v1119 = vunpack.c.l.b16 %v139
    %v1120 = vunpack.c.l.b16 %v140
    %v1121 = vunpack.c.l.b16 %v141
    %v1122 = vunpack.c.l.b16 %v142
    %v1123 = vunpack.c.l.b16 %v143
    %v1124 = vunpack.c.l.b16 %v144
    %v1125 = vunpack.c.l.b16 %v145
    %v1126 = vunpack.c.l.b16 %v146
    %v1127 = vunpack.c.l.b16 %v147
    %v1128 = vunpack.c.l.b16 %v148
    %v1129 = vunpack.c.l.b16 %v149
    %v1130 = vunpack.c.l.b16 %v150
    %v1131 = vunpack.c.l.b16 %v151
    %v1132 = vunpack.c.l.b16 %v152
    %v1133 = vunpack.c.l.b16 %v153
    %v1134 = vunpack.c.l.b16 %v154
    %v1135 = vunpack.c.l.b16 %v155
    %v1136 = vunpack.c.l.b16 %v156
    %v1137 = vunpack.c.l.b16 %v157
    %v1138 = vunpack.c.l.b16 %v158
    %v1139 = vunpack.c.l.b16 %v159
    %v1140 = vunpack.c.l.b16 %v160
    %v1141 = vunpack.c.l.b16 %v161
    %v1142 = vunpack.c.l.b16 %v162
    %v1143 = vunpack.c.l.b16 %v163
    %v1144 = vunpack.c.l.b16 %v164
    %v1145 = vunpack.c.l.b16 %v165
    %v1146 = vunpack.c.l.b16 %v166
    %v1147 = vunpack.c.l.b16 %v167
    %v1148 = vunpack.c.l.b16 %v168
    %v1149 = vunpack.c.l.b16 %v169
    %v1150 = vunpack.c.l.b16 %v170
    %v1151 = vunpack.c.l.b16 %v171
    %v1152 = vunpack.c.l.b16 %v172
    %v1153 = vunpack.c.l.b16 %v173
    %v1154 = vunpack.c.l.b16 %v174
    %v1155 = vunpack.c.l.b16 %v175
    %v1156 = vunpack.c.l.b16 %v176
    %v1157 = vunpack.c.l.b16 %v177
    %v1158 = vunpack.c.l.b16 %v178
    %v1159 = vunpack.c.l.b16 %v179
    %v1160 = vunpack.c.l.b16 %v180
    %v1161 = vunpack.c.l.b16 %v181
    %v1162 = vunpack.c.l.b16 %v182
    %v1163 = vunpack.c.l.b16 %v183
    %v1164 = vunpack.c.l.b16 %v184
    %v1165 = vunpack.c.l.b16 %v185
    %v1166 = vunpack.c.l.b16 %v186
    %v1167 = vunpack.c.l.b16 %v187
    %v1168 = vunpack.c.l.b16 %v188
    %v1169 = vunpack.c.l.b16 %v189
    %v1170 = vunpack.c.l.b16 %v190
    %v1171 = vunpack.c.l.b16 %v191
    %v1172 = vunpack.c.l.b16 %v192
    %v1173 = vunpack.c.l.b16 %v193
    %v1174 = vunpack.c.l.b16 %v194
    %v1175 = vunpack.c.l.b16 %v195
    %v1176 = vunpack.c.l.b16 %v196
    %v1177 = vunpack.c.l.b16 %v197
    %v1178 = vunpack.c.l.b16 %v198
    %v1179 = vunpack.c.l.b16 %v199
    %v1180 = vunpack.c.l.b16 %v200
    %v1181 = vunpack.c.l.b16 %v201
    %v1182 = vunpack.c.l.b16 %v202
    %v1183 = vunpack.c.l.b16 %v203
    %v1184 = vunpack.c.l.b16 %v204
    %v1185 = vunpack.c.l.b16 %v205
    %v1186 = vunpack.c.l.b16 %v206
    %v1187 = vunpack.c.l.b16 %v207
    %v1188 = vunpack.c.l.b16 %v208
    %v1189 = vunpack.c.l.b16 %v209
    %v1190 = vunpack.c.l.b16 %v210
    %v1191 = vunpack.c.l.b16 %v211
    %v1192 = vunpack.c.l.b16 %v212
    %v1193 = vunpack.c.l.b16 %v213
    %v1194 = vunpack.c.l.b16 %v214
    %v1195 = vunpack.c.l.b16 %v215
    %v1196 = vunpack.c.l.b16 %v216
    %v1197 = vunpack.c.l.b16 %v217
    %v1198 = vunpack.c.l.b16 %v218
    %v1199 = vunpack.c.l.b16 %v219
    %v1200 = vunpack.c.l.b16 %v220
    %v1201 = vunpack.c.l.b16 %v221
    %v1202 = vunpack.c.l.b16 %v222
    %v1203 = vunpack.c.l.b16 %v223
    %v1204 = vunpack.c.l.b16 %v224
    %v1205 = vunpack.c.l.b16 %v225
    %v1206 = vunpack.c.l.b16 %v226
    %v1207 = vunpack.c.l.b16 %v227
    %v1208 = vunpack.c.l.b16 %v228
    %v1209 = vunpack.c.l.b16 %v229
    %v1210 = vunpack.c.l.b16 %v230
    %v1211 = vunpack.c.l.b16 %v231
    %v1212 = vunpack.c.l.b16 %v232
    %v1213 = vunpack.c.l.b16 %v233
    %v1214 = vunpack.c.l.b16 %v234
    %v1215 = vunpack.c.l.b16 %v235
    %v1216 = vunpack.c.l.b16 %v236
    %v1217 = vunpack.c.l.b16 %v237
    %v1218 = vunpack.c.l.b16 %v238
    %v1219 = vunpack.c.l.b16 %v239
    %v1220 = vunpack.c.l.b16 %v240
    %v1221 = vunpack.c.l.b16 %v241
    %v1222 = vunpack.c.l.b16 %v242
    %v1223 = vunpack.c.l.b16 %v243
    %v1224 = vunpack.c.l.b16 %v244
    %v1225 = vunpack.c.l.b16 %v245
    %v1226 = vunpack.c.l.b16 %v246
    %v1227 = vunpack.c.l.b16 %v247
    %v1228 = vunpack.c.l.b16 %v248
    %v1229 = vunpack.c.l.b16 %v249
    %v1230 = vunpack.c.l.b16 %v250
    %v1231 = vunpack.c.l.b16 %v251
    %v1232 = vunpack.c.l.b16 %v252
    %v1233 = vunpack.c.l.b16 %v253
    %v1234 = vunpack.c.l.b16 %v254
    %v1235 = vunpack.c.l.b16 %v255
    %v1236 = vunpack.c.l.b16 %v256
    %v1237 = vunpack.c.l.b16 %v257
    %v1238 = vunpack.c.l.b16 %v258
    %v1239 = vunpack.c.l.b16 %v259
    %v1240 = vunpack.c.l.b16 %v260
    %v1241 = vunpack.c.l.b16 %v261
    %v1242 = vunpack.c.l.b16 %v262
    %v1243 = vunpack.c.l.b16 %v263
    %v1244 = vunpack.c.l.b16 %v264
    %v1245 = vunpack.c.l.b16 %v265
    %v1246 = vunpack.c.l.b16 %v266
    %v1247 = vunpack.c.l.b16 %v267
    %v1248 = vunpack.c.l.b16 %v268
    %v1249 = vunpack.c.l.b16 %v269
    %v1250 = vunpack.c.l.b16 %v270
    %v1251 = vunpack.c.l.b16 %v271
    %v1252 = vunpack.c.l.b16 %v272
    %v1253 = vunpack.c.l.b16 %v273
    %v1254 = vunpack.c.l.b16 %v274
    %v1255 = vunpack.c.l.b16 %v275
    %v1256 = vunpack.c.l.b16 %v276
    %v1257 = vunpack.c.l.b16 %v277
    %v1258 = vunpack.c.l.b16 %v278
    %v1259 = vunpack.c.l.b16 %v279
    %v1260 = vunpack.c.l.b16 %v280
    %v1261 = vunpack.c.l.b16 %v281
    %v1262 = vunpack.c.l.b16 %v282
    %v1263 = vunpack.c.l.b16 %v283
    %v1264 = vunpack.c.l.b16 %v284
    %v1265 = vunpack.c.l.b16 %v285
    %v1266 = vunpack.c.l.b16 %v286
    %v1267 = vunpack.c.l.b16 %v287
    %v1268 = vunpack.c.l.b16 %v288
    %v1269 = vunpack.c.l.b16 %v289
    %v1270 = vunpack.c.l.b16 %v290
    %v1271 = vunpack.c.l.b16 %v291
    %v1272 = vunpack.c.l.b16 %v292
    %v1273 = vunpack.c.l.b16 %v293
    %v1274 = vunpack.c.l.b16 %v294
    %v1275 = vunpack.c.l.b16 %v295
    %v1276 = vunpack.c.l.b16 %v296
    %v1277 = vunpack.c.l.b16 %v297
    %v1278 = vunpack.c.l.b16 %v298
    %v1279 = vunpack.c.l.b16 %v299
    %v1280 = vunpack.c.l.b16 %v300
    %v1281 = vunpack.c.l.b16 %v301
    %v1282 = vunpack.c.l.b16 %v302
    %v1283 = vunpack.c.l.b16 %v303
    %v1284 = vunpack.c.l.b16 %v304
    %v1285 = vunpack.c.l.b16 %v305
    %v1286 = vunpack.c.l.b16 %v306
    %v1287 = vunpack.c.l.b16 %v307
    %v1288 = vunpack.c.l.b16 %v308
    %v1289 = vunpack.c.l.b16 %v309
    %v1290 = vunpack.c.l.b16 %v310
    %v1291 = vunpack.c.l.b16 %v311
    %v1292 = vunpack.c.l.b16 %v312
    %v1293 = vunpack.c.l.b16 %v313
    %v1294 = vunpack.c.l.b16 %v314
    %v1295 = vunpack.c.l.b16 %v315
    %v1296 = vunpack.c.l.b16 %v316
    %v1297 = vunpack.c.l.b16 %v317
    %v1298 = vunpack.c.l.b16 %v318
    %v1299 = vunpack.c.l.b16 %v319
    %v1300 = vunpack.c.l.b16 %v320
    %v1301 = vunpack.c.l.b16 %v321
    %v1302 = vunpack.c.l.b16 %v322
    %v1303 = vunpack.c.l.b16 %v323
    %v1304 = vunpack.c.l.b16 %v324
    %v1305 = vunpack.c.l.b16 %v325
    %v1306 = vunpack.c.l.b16 %v326
    %v1307 = vunpack.c.l.b16 %v327
    %v1308 = vunpack.c.l.b16 %v328
    %v1309 = vunpack.c.l.b16 %v329
    %v1310 = vunpack.c.l.b16 %v330
    %v1311 = vunpack.c.l.b16 %v331
    %v1312 = vunpack.c.l.b16 %v332
    %v1313 = vunpack.c.l.b16 %v333
    %v1314 = vunpack.c.l.b16 %v334
    %v1315 = vunpack.c.l.b16 %v335
    %v1316 = vunpack.c.l.b16 %v336
    %v1317 = vunpack.c.l.b16 %v337
    %v1318 = vunpack.c.l.b16 %v338
    %v1319 = vunpack.c.l.b16 %v339
    %v1320 = vunpack.c.l.b16 %v340
    %v1321 = vunpack.c.l.b16 %v341
    %v1322 = vunpack.c.l.b16 %v342
    %v1323 = vunpack.c.l.b16 %v343
    %v1324 = vunpack.c.l.b16 %v344
    %v1325 = vunpack.c.l.b16 %v345
    %v1326 = vunpack.c.l.b16 %v346
    %v1327 = vunpack.c.l.b16 %v347
    %v1328 = vunpack.c.l.b16 %v348
    %v1329 = vunpack.c.l.b16 %v349
    %v1330 = vunpack.c.l.b16 %v350
    %v1331 = vunpack.c.l.b16 %v351
    %v1332 = vunpack.c.l.b16 %v352
    %v1333 = vunpack.c.l.b16 %v353
    %v1334 = vunpack.c.l.b16 %v354
    %v1335 = vunpack.c.l.b16 %v355
    %v1336 = vunpack.c.l.b16 %v356
    %v1337 = vunpack.c.l.b16 %v357
    %v1338 = vunpack.c.l.b16 %v358
    %v1339 = vunpack.c.l.b16 %v359
    %v1340 = vunpack.c.l.b16 %v360
    %v1341 = vunpack.c.l.b16 %v361
    %v1342 = vunpack.c.l.b16 %v362
    %v1343 = vunpack.c.l.b16 %v363
    %v1344 = vunpack.c.l.b16 %v364
    %v1345 = vunpack.c.l.b16 %v365
    %v1346 = vunpack.c.l.b16 %v366
    %v1347 = vunpack.c.l.b16 %v367
    %v1348 = vunpack.c.l.b16 %v368
    %v1349 = vunpack.c.l.b16 %v369
    %v1350 = vunpack.c.l.b16 %v370
    %v1351 = vunpack.c.l.b16 %v371
    %v1352 = vunpack.c.l.b16 %v372
    %v1353 = vunpack.c.l.b16 %v373
    %v1354 = vunpack.c.l.b16 %v374
    %v1355 = vunpack.c.l.b16 %v375
    %v1356 = vunpack.c.l.b16 %v376
    %v1357 = vunpack.c.l.b16 %v377
    %v1358 = vunpack.c.l.b16 %v378
    %v1359 = vunpack.c.l.b16 %v379
    %v1360 = vunpack.c.l.b16 %v380
    %v1361 = vunpack.c.l.b16 %v381
    %v1362 = vunpack.c.l.b16 %v382
    %v1363 = vunpack.c.l.b16 %v383
    %v1364 = vunpack.c.l.b16 %v384
    %v1365 = vunpack.c.l.b16 %v385
    %v1366 = vunpack.c.l.b16 %v386
    %v1367 = vunpack.c.l.b16 %v387
    %v1368 = vunpack.c.l.b16 %v388
    %v1369 = vunpack.c.l.b16 %v389
    %v1370 = vunpack.c.l.b16 %v390
    %v1371 = vunpack.c.l.b16 %v391
    %v1372 = vunpack.c.l.b16 %v392
    %v1373 = vunpack.c.l.b16 %v393
    %v1374 = vunpack.c.l.b16 %v394
    %v1375 = vunpack.c.l.b16 %v395
    %v1376 = vunpack.c.l.b16 %v396
    %v1377 = vunpack.c.l.b16 %v397
    %v1378 = vunpack.c.l.b16 %v398
    %v1379 = vunpack.c.l.b16 %v399
    %v1380 = vunpack.c.l.b16 %v400
    %v1381 = vunpack.c.l.b16 %v401
    %v1382 = vunpack.c.l.b16 %v402
    %v1383 = vunpack.c.l.b16 %v403
    %v1384 = vunpack.c.l.b16 %v404
    %v1385 = vunpack.c.l.b16 %v405
    %v1386 = vunpack.c.l.b16 %v406
    %v1387 = vunpack.c.l.b16 %v407
    %v1388 = vunpack.c.l.b16 %v408
    %v1389 = vunpack.c.l.b16 %v409
    %v1390 = vunpack.c.l.b16 %v410
    %v1391 = vunpack.c.l.b16 %v411
    %v1392 = vunpack.c.l.b16 %v412
    %v1393 = vunpack.c.l.b16 %v413
    %v1394 = vunpack.c.l.b16 %v414
    %v1395 = vunpack.c.l.b16 %v415
    %v1396 = vunpack.c.l.b16 %v416
    %v1397 = vunpack.c.l.b16 %v417
    %v1398 = vunpack.c.l.b16 %v418
    %v1399 = vunpack.c.l.b16 %v419
    %v1400 = vunpack.c.l.b16 %v420
    %v1401 = vunpack.c.l.b16 %v421
    %v1402 = vunpack.c.l.b16 %v422
    %v1403 = vunpack.c.l.b16 %v423
    %v1404 = vpack.c.b16 %v1013, %v1012
    %v1405 = vpack.c.b16 %v1015, %v1014
    %v1406 = vpack.c.b16 %v1017, %v1016
    %v1407 = vpack.c.b16 %v1019, %v1018
    %v1408 = vpack.c.b16 %v1021, %v1020
    %v1409 = vpack.c.b16 %v1023, %v1022
    %v1410 = vpack.c.b16 %v1025, %v1024
    %v1411 = vpack.c.b16 %v1027, %v1026
    %v1412 = vpack.c.b16 %v1029, %v1028
    %v1413 = vpack.c.b16 %v1031, %v1030
    %v1414 = vpack.c.b16 %v1033, %v1032
    %v1415 = vpack.c.b16 %v1035, %v1034
    %v1416 = vpack.c.b16 %v1037, %v1036
    %v1417 = vpack.c.b16 %v1039, %v1038
    %v1418 = vpack.c.b16 %v1041, %v1040
    %v1419 = vpack.c.b16 %v1043, %v1042
    %v1420 = vpack.c.b16 %v1045, %v1044
    %v1421 = vpack.c.b16 %v1047, %v1046
    %v1422 = vpack.c.b16 %v1049, %v1048
    %v1423 = vpack.c.b16 %v1051, %v1050
    %v1424 = vpack.c.b16 %v1053, %v1052
    %v1425 = vpack.c.b16 %v1055, %v1054
    %v1426 = vpack.c.b16 %v1057, %v1056
    %v1427 = vpack.c.b16 %v1059, %v1058
    %v1428 = vpack.c.b16 %v1061, %v1060
    %v1429 = vpack.c.b16 %v1063, %v1062
    %v1430 = vpack.c.b16 %v1065, %v1064
    %v1431 = vpack.c.b16 %v1067, %v1066
    %v1432 = vpack.c.b16 %v1069, %v1068
    %v1433 = vpack.c.b16 %v1071, %v1070
    %v1434 = vpack.c.b16 %v1073, %v1072
    %v1435 = vpack.c.b16 %v1075, %v1074
    %v1436 = vpack.c.b16 %v1077, %v1076
    %v1437 = vpack.c.b16 %v1079, %v1078
    %v1438 = vpack.c.b16 %v1081, %v1080
    %v1439 = vpack.c.b16 %v1083, %v1082
    %v1440 = vpack.c.b16 %v1085, %v1084
    %v1441 = vpack.c.b16 %v1087, %v1086
    %v1442 = vpack.c.b16 %v1089, %v1088
    %v1443 = vpack.c.b16 %v1091, %v1090
    %v1444 = vpack.c.b16 %v1093, %v1092
    %v1445 = vpack.c.b16 %v1095, %v1094
    %v1446 = vpack.c.b16 %v1097, %v1096
    %v1447 = vpack.c.b16 %v1099, %v1098
    %v1448 = vpack.c.b16 %v1101, %v1100
    %v1449 = vpack.c.b16 %v1103, %v1102
    %v1450 = vpack.c.b16 %v1105, %v1104
    %v1451 = vpack.c.b16 %v1107, %v1106
    %v1452 = vpack.c.b16 %v1109, %v1108
    %v1453 = vpack.c.b16 %v1111, %v1110
    %v1454 = vpack.c.b16 %v1113, %v1112
    %v1455 = vpack.c.b16 %v1115, %v1114
    %v1456 = vpack.c.b16 %v1117, %v1116
    %v1457 = vpack.c.b16 %v1119, %v1118
    %v1458 = vpack.c.b16 %v1121, %v1120
    %v1459 = vpack.c.b16 %v1123, %v1122
    %v1460 = vpack.c.b16 %v1125, %v1124
    %v1461 = vpack.c.b16 %v1127, %v1126
    %v1462 = vpack.c.b16 %v1129, %v1128
    %v1463 = vpack.c.b16 %v1131, %v1130
    %v1464 = vpack.c.b16 %v1133, %v1132
    %v1465 = vpack.c.b16 %v1135, %v1134
    %v1466 = vpack.c.b16 %v1137, %v1136
    %v1467 = vpack.c.b16 %v1139, %v1138
    %v1468 = vpack.c.b16 %v1141, %v1140
    %v1469 = vpack.c.b16 %v1143, %v1142
    %v1470 = vpack.c.b16 %v1145, %v1144
    %v1471 = vpack.c.b16 %v1147, %v1146
    %v1472 = vpack.c.b16 %v1149, %v1148
    %v1473 = vpack.c.b16 %v1151, %v1150
    %v1474 = vpack.c.b16 %v1153, %v1152
    %v1475 = vpack.c.b16 %v1155, %v1154
    %v1476 = vpack.c.b16 %v1157, %v1156
    %v1477 = vpack.c.b16 %v1159, %v1158
    %v1478 = vpack.c.b16 %v1161, %v1160
    %v1479 = vpack.c.b16 %v1163, %v1162
    %v1480 = vpack.c.b16 %v1165, %v1164
    %v1481 = vpack.c.b16 %v1167, %v1166
    %v1482 = vpack.c.b16 %v1169, %v1168
    %v1483 = vpack.c.b16 %v1171, %v1170
    %v1484 = vpack.c.b16 %v1173, %v1172
    %v1485 = vpack.c.b16 %v1175, %v1174
    %v1486 = vpack.c.b16 %v1177, %v1176
    %v1487 = vpack.c.b16 %v1179, %v1178
    %v1488 = vpack.c.b16 %v1181, %v1180
    %v1489 = vpack.c.b16 %v1183, %v1182
    %v1490 = vpack.c.b16 %v1185, %v1184
    %v1491 = vpack.c.b16 %v1187, %v1186
    %v1492 = vpack.c.b16 %v1189, %v1188
    %v1493 = vpack.c.b16 %v1191, %v1190
    %v1494 = vpack.c.b16 %v1193, %v1192
    %v1495 = vpack.c.b16 %v1195, %v1194
    %v1496 = vpack.c.b16 %v1197, %v1196
    %v1497 = vpack.c.b16 %v1199, %v1198
    %v1498 = vpack.c.b16 %v1201, %v1200
    %v1499 = vpack.c.b16 %v1203, %v1202
    %v1500 = vpack.c.b16 %v1205, %v1204
    %v1501 = vpack.c.b16 %v1207, %v1206
    %v1502 = vpack.c.b16 %v1209, %v1208
    %v1503 = vpack.c.b16 %v1211, %v1210
    %v1504 = vpack.c.b16 %v1213, %v1212
    %v1505 = vpack.c.b16 %v1215, %v1214
    %v1506 = vpack.c.b16 %v1217, %v1216
    %v1507 = vpack.c.b16 %v1219, %v1218
    %v1508 = vpack.c.b16 %v1221, %v1220
    %v1509 = vpack.c.b16 %v1223, %v1222
    %v1510 = vpack.c.b16 %v1225, %v1224
    %v1511 = vpack.c.b16 %v1227, %v1226
    %v1512 = vpack.c.b16 %v1229, %v1228
    %v1513 = vpack.c.b16 %v1231, %v1230
    %v1514 = vpack.c.b16 %v1233, %v1232
    %v1515 = vpack.c.b16 %v1235, %v1234
    %v1516 = vpack.c.b16 %v1237, %v1236
    %v1517 = vpack.c.b16 %v1239, %v1238
    %v1518 = vpack.c.b16 %v1241, %v1240
    %v1519 = vpack.c.b16 %v1243, %v1242
    %v1520 = vpack.c.b16 %v1245, %v1244
    %v1521 = vpack.c.b16 %v1247, %v1246
    %v1522 = vpack.c.b16 %v1249, %v1248
    %v1523 = vpack.c.b16 %v1251, %v1250
    %v1524 = vpack.c.b16 %v1253, %v1252
    %v1525 = vpack.c.b16 %v1255, %v1254
    %v1526 = vpack.c.b16 %v1257, %v1256
    %v1527 = vpack.c.b16 %v1259, %v1258
    %v1528 = vpack.c.b16 %v1261, %v1260
    %v1529 = vpack.c.b16 %v1263, %v1262
    %v1530 = vpack.c.b16 %v1265, %v1264
    %v1531 = vpack.c.b16 %v1267, %v1266
    %v1532 = vpack.c.b16 %v1269, %v1268
    %v1533 = vpack.c.b16 %v1271, %v1270
    %v1534 = vpack.c.b16 %v1273, %v1272
    %v1535 = vpack.c.b16 %v1275, %v1274
    %v1536 = vpack.c.b16 %v1277, %v1276
    %v1537 = vpack.c.b16 %v1279, %v1278
    %v1538 = vpack.c.b16 %v1281, %v1280
    %v1539 = vpack.c.b16 %v1283, %v1282
    %v1540 = vpack.c.b16 %v1285, %v1284
    %v1541 = vpack.c.b16 %v1287, %v1286
    %v1542 = vpack.c.b16 %v1289, %v1288
    %v1543 = vpack.c.b16 %v1291, %v1290
    %v1544 = vpack.c.b16 %v1293, %v1292
    %v1545 = vpack.c.b16 %v1295, %v1294
    %v1546 = vpack.c.b16 %v1297, %v1296
    %v1547 = vpack.c.b16 %v1299, %v1298
    %v1548 = vpack.c.b16 %v1301, %v1300
    %v1549 = vpack.c.b16 %v1303, %v1302
    %v1550 = vpack.c.b16 %v1305, %v1304
    %v1551 = vpack.c.b16 %v1307, %v1306
    %v1552 = vpack.c.b16 %v1309, %v1308
    %v1553 = vpack.c.b16 %v1311, %v1310
    %v1554 = vpack.c.b16 %v1313, %v1312
    %v1555 = vpack.c.b16 %v1315, %v1314
    %v1556 = vpack.c.b16 %v1317, %v1316
    %v1557 = vpack.c.b16 %v1319, %v1318
    %v1558 = vpack.c.b16 %v1321, %v1320
    %v1559 = vpack.c.b16 %v1323, %v1322
    %v1560 = vpack.c.b16 %v1325, %v1324
    %v1561 = vpack.c.b16 %v1327, %v1326
    %v1562 = vpack.c.b16 %v1329, %v1328
    %v1563 = vpack.c.b16 %v1331, %v1330
    %v1564 = vpack.c.b16 %v1333, %v1332
    %v1565 = vpack.c.b16 %v1335, %v1334
    %v1566 = vpack.c.b16 %v1337, %v1336
    %v1567 = vpack.c.b16 %v1339, %v1338
    %v1568 = vpack.c.b16 %v1341, %v1340
    %v1569 = vpack.c.b16 %v1343, %v1342
    %v1570 = vpack.c.b16 %v1345, %v1344
    %v1571 = vpack.c.b16 %v1347, %v1346
    %v1572 = vpack.c.b16 %v1349, %v1348
    %v1573 = vpack.c.b16 %v1351, %v1350
    %v1574 = vpack.c.b16 %v1353, %v1352
    %v1575 = vpack.c.b16 %v1355, %v1354
    %v1576 = vpack.c.b16 %v1357, %v1356
    %v1577 = vpack.c.b16 %v1359, %v1358
    %v1578 = vpack.c.b16 %v1361, %v1360
    %v1579 = vpack.c.b16 %v1363, %v1362
    %v1580 = vpack.c.b16 %v1365, %v1364
    %v1581 = vpack.c.b16 %v1367, %v1366
    %v1582 = vpack.c.b16 %v1369, %v1368
    %v1583 = vpack.c.b16 %v1371, %v1370
    %v1584 = vpack.c.b16 %v1373, %v1372
    %v1585 = vpack.c.b16 %v1375, %v1374
    %v1586 = vpack.c.b16 %v1377, %v1376
    %v1587 = vpack.c.b16 %v1379, %v1378
    %v1588 = vpack.c.b16 %v1381, %v1380
    %v1589 = vpack.c.b16 %v1383, %v1382
    %v1590 = vpack.c.b16 %v1385, %v1384
    %v1591 = vpack.c.b16 %v1387, %v1386
    %v1592 = vpack.c.b16 %v1389, %v1388
    %v1593 = vpack.c.b16 %v1391, %v1390
    %v1594 = vpack.c.b16 %v1393, %v1392
    %v1595 = vpack.c.b16 %v1395, %v1394
    %v1596 = vpack.c.b16 %v1397, %v1396
    %v1597 = vpack.c.b16 %v1399, %v1398
    %v1598 = vpack.c.b16 %v1401, %v1400
    %v1599 = vpack.c.b16 %v1403, %v1402
    %vm1796 = vcmask 523264
    %v1798 = vsel %vm1796, %v595, 0
    %1800 = vmatprep.subr.bf16.mxu0 0
    %1801 = vmatpush1.bf16.msra.mxu0 %v1411
    %1802 = vmatprep.subr.bf16.mxu0 0
    %1803 = vmatpush1.bf16.msra.mxu0 %v1410
    %1804 = vmatprep.subr.bf16.mxu0 0
    %1805 = vmatpush1.bf16.msra.mxu0 %v1409
    %1806 = vmatprep.subr.bf16.mxu0 0
    %1807 = vmatpush1.bf16.msra.mxu0 %v1408
    %1808 = vmatprep.subr.bf16.mxu0 0
    %1809 = vmatpush1.bf16.msra.mxu0 %v1407
    %1810 = vmatprep.subr.bf16.mxu0 0
    %1811 = vmatpush1.bf16.msra.mxu0 %v1406
    %1812 = vmatprep.subr.bf16.mxu0 0
    %1813 = vmatpush1.bf16.msra.mxu0 %v1405
    %1814 = vmatprep.subr.bf16.mxu0 0
    %1815 = vmatpush1.bf16.msra.mxu0 %v1404
    %1816 = vmatprep.subr.bf16.mxu0 0
    %1817 = vmatpush2.bf16.msra.mxu0 %v1419
    %1818 = vmatprep.subr.bf16.mxu0 0
    %1819 = vmatpush2.bf16.msra.mxu0 %v1418
    %1820 = vmatprep.subr.bf16.mxu0 0
    %1821 = vmatpush2.bf16.msra.mxu0 %v1417
    %1822 = vmatprep.subr.bf16.mxu0 0
    %1823 = vmatpush2.bf16.msra.mxu0 %v1416
    %1824 = vmatprep.subr.bf16.mxu0 0
    %1825 = vmatpush2.bf16.msra.mxu0 %v1415
    %1826 = vmatprep.subr.bf16.mxu0 0
    %1827 = vmatpush2.bf16.msra.mxu0 %v1414
    %1828 = vmatprep.subr.bf16.mxu0 0
    %1829 = vmatpush2.bf16.msra.mxu0 %v1413
    %1830 = vmatprep.subr.bf16.mxu0 0
    %1831 = vmatpush2.bf16.msra.mxu0 %v1412
    %1832 = vmatprep.mubr.bf16.mxu0 %v472
    %1833 = vmatmul.mubr.bf16.gmra.mxu0 %v458
    %v1834 = vpop.f32.mrf.mxu0
    %v1835 = vadd.f32 %v429, %v1834
    %v1836 = vpop.f32.mrf.mxu0
    %v1837 = vpop.f32.mrf.mxu0
    %v1838 = vpop.f32.mrf.mxu0
    %1839 = vdwg.mxu0
    %1840 = vmatprep.subr.bf16.mxu0 0
    %1841 = vmatpush1.bf16.msra.mxu0 %v1427
    %1842 = vmatprep.subr.bf16.mxu0 0
    %1843 = vmatpush1.bf16.msra.mxu0 %v1426
    %1844 = vmatprep.subr.bf16.mxu0 0
    %1845 = vmatpush1.bf16.msra.mxu0 %v1425
    %1846 = vmatprep.subr.bf16.mxu0 0
    %1847 = vmatpush1.bf16.msra.mxu0 %v1424
    %1848 = vmatprep.subr.bf16.mxu0 0
    %1849 = vmatpush1.bf16.msra.mxu0 %v1423
    %1850 = vmatprep.subr.bf16.mxu0 0
    %1851 = vmatpush1.bf16.msra.mxu0 %v1422
    %1852 = vmatprep.subr.bf16.mxu0 0
    %1853 = vmatpush1.bf16.msra.mxu0 %v1421
    %1854 = vmatprep.subr.bf16.mxu0 0
    %1855 = vmatpush1.bf16.msra.mxu0 %v1420
    %1856 = vmatprep.subr.bf16.mxu0 0
    %1857 = vmatpush2.bf16.msra.mxu0 %v1435
    %1858 = vmatprep.subr.bf16.mxu0 0
    %1859 = vmatpush2.bf16.msra.mxu0 %v1434
    %1860 = vmatprep.subr.bf16.mxu0 0
    %1861 = vmatpush2.bf16.msra.mxu0 %v1433
    %1862 = vmatprep.subr.bf16.mxu0 0
    %1863 = vmatpush2.bf16.msra.mxu0 %v1432
    %1864 = vmatprep.subr.bf16.mxu0 0
    %1865 = vmatpush2.bf16.msra.mxu0 %v1431
    %1866 = vmatprep.subr.bf16.mxu0 0
    %1867 = vmatpush2.bf16.msra.mxu0 %v1430
    %1868 = vmatprep.subr.bf16.mxu0 0
    %1869 = vmatpush2.bf16.msra.mxu0 %v1429
    %1870 = vmatprep.subr.bf16.mxu0 0
    %1871 = vmatpush2.bf16.msra.mxu0 %v1428
    %1872 = vmatprep.mubr.bf16.mxu0 %v482
    %1873 = vmatmul.mubr.bf16.gmra.mxu0 %v480
    %v1874 = vpop.f32.mrf.mxu0
    %v1875 = vadd.f32 %v1835, %v1874
    %v1876 = vpop.f32.mrf.mxu0
    %v1877 = vpop.f32.mrf.mxu0
    %v1878 = vpop.f32.mrf.mxu0
    %1879 = vdwg.mxu0
    %1880 = vmatprep.subr.bf16.mxu0 0
    %1881 = vmatpush1.bf16.msra.mxu0 %v1443
    %1882 = vmatprep.subr.bf16.mxu0 0
    %1883 = vmatpush1.bf16.msra.mxu0 %v1442
    %1884 = vmatprep.subr.bf16.mxu0 0
    %1885 = vmatpush1.bf16.msra.mxu0 %v1441
    %1886 = vmatprep.subr.bf16.mxu0 0
    %1887 = vmatpush1.bf16.msra.mxu0 %v1440
    %1888 = vmatprep.subr.bf16.mxu0 0
    %1889 = vmatpush1.bf16.msra.mxu0 %v1439
    %1890 = vmatprep.subr.bf16.mxu0 0
    %1891 = vmatpush1.bf16.msra.mxu0 %v1438
    %1892 = vmatprep.subr.bf16.mxu0 0
    %1893 = vmatpush1.bf16.msra.mxu0 %v1437
    %1894 = vmatprep.subr.bf16.mxu0 0
    %1895 = vmatpush1.bf16.msra.mxu0 %v1436
    %1896 = vmatprep.subr.bf16.mxu0 0
    %1897 = vmatpush2.bf16.msra.mxu0 %v1451
    %1898 = vmatprep.subr.bf16.mxu0 0
    %1899 = vmatpush2.bf16.msra.mxu0 %v1450
    %1900 = vmatprep.subr.bf16.mxu0 0
    %1901 = vmatpush2.bf16.msra.mxu0 %v1449
    %1902 = vmatprep.subr.bf16.mxu0 0
    %1903 = vmatpush2.bf16.msra.mxu0 %v1448
    %1904 = vmatprep.subr.bf16.mxu0 0
    %1905 = vmatpush2.bf16.msra.mxu0 %v1447
    %1906 = vmatprep.subr.bf16.mxu0 0
    %1907 = vmatpush2.bf16.msra.mxu0 %v1446
    %1908 = vmatprep.subr.bf16.mxu0 0
    %1909 = vmatpush2.bf16.msra.mxu0 %v1445
    %1910 = vmatprep.subr.bf16.mxu0 0
    %1911 = vmatpush2.bf16.msra.mxu0 %v1444
    %1912 = vmatprep.mubr.bf16.mxu0 %v479
    %1913 = vmatmul.mubr.bf16.gmra.mxu0 %v465
    %v1914 = vpop.f32.mrf.mxu0
    %v1915 = vadd.f32 %v1875, %v1914
    %v1916 = vpop.f32.mrf.mxu0
    %v1917 = vpop.f32.mrf.mxu0
    %v1918 = vpop.f32.mrf.mxu0
    %1919 = vdwg.mxu0
    %1920 = vmatprep.subr.bf16.mxu0 0
    %1921 = vmatpush1.bf16.msra.mxu0 %v1459
    %1922 = vmatprep.subr.bf16.mxu0 0
    %1923 = vmatpush1.bf16.msra.mxu0 %v1458
    %1924 = vmatprep.subr.bf16.mxu0 0
    %1925 = vmatpush1.bf16.msra.mxu0 %v1457
    %1926 = vmatprep.subr.bf16.mxu0 0
    %1927 = vmatpush1.bf16.msra.mxu0 %v1456
    %1928 = vmatprep.subr.bf16.mxu0 0
    %1929 = vmatpush1.bf16.msra.mxu0 %v1455
    %1930 = vmatprep.subr.bf16.mxu0 0
    %1931 = vmatpush1.bf16.msra.mxu0 %v1454
    %1932 = vmatprep.subr.bf16.mxu0 0
    %1933 = vmatpush1.bf16.msra.mxu0 %v1453
    %1934 = vmatprep.subr.bf16.mxu0 0
    %1935 = vmatpush1.bf16.msra.mxu0 %v1452
    %1936 = vmatprep.subr.bf16.mxu0 0
    %1937 = vmatpush2.bf16.msra.mxu0 %v1467
    %1938 = vmatprep.subr.bf16.mxu0 0
    %1939 = vmatpush2.bf16.msra.mxu0 %v1466
    %1940 = vmatprep.subr.bf16.mxu0 0
    %1941 = vmatpush2.bf16.msra.mxu0 %v1465
    %1942 = vmatprep.subr.bf16.mxu0 0
    %1943 = vmatpush2.bf16.msra.mxu0 %v1464
    %1944 = vmatprep.subr.bf16.mxu0 0
    %1945 = vmatpush2.bf16.msra.mxu0 %v1463
    %1946 = vmatprep.subr.bf16.mxu0 0
    %1947 = vmatpush2.bf16.msra.mxu0 %v1462
    %1948 = vmatprep.subr.bf16.mxu0 0
    %1949 = vmatpush2.bf16.msra.mxu0 %v1461
    %1950 = vmatprep.subr.bf16.mxu0 0
    %1951 = vmatpush2.bf16.msra.mxu0 %v1460
    %1952 = vmatprep.mubr.bf16.mxu0 %v483
    %1953 = vmatmul.mubr.bf16.gmra.mxu0 %v481
    %v1954 = vpop.f32.mrf.mxu0
    %v1955 = vadd.f32 %v1915, %v1954
    %v1956 = vpop.f32.mrf.mxu0
    %v1957 = vpop.f32.mrf.mxu0
    %v1958 = vpop.f32.mrf.mxu0
    %1959 = vdwg.mxu0
    %1960 = vmatprep.subr.bf16.mxu0 0
    %1961 = vmatpush1.bf16.msra.mxu0 %v1475
    %1962 = vmatprep.subr.bf16.mxu0 0
    %1963 = vmatpush1.bf16.msra.mxu0 %v1474
    %1964 = vmatprep.subr.bf16.mxu0 0
    %1965 = vmatpush1.bf16.msra.mxu0 %v1473
    %1966 = vmatprep.subr.bf16.mxu0 0
    %1967 = vmatpush1.bf16.msra.mxu0 %v1472
    %1968 = vmatprep.subr.bf16.mxu0 0
    %1969 = vmatpush1.bf16.msra.mxu0 %v1471
    %1970 = vmatprep.subr.bf16.mxu0 0
    %1971 = vmatpush1.bf16.msra.mxu0 %v1470
    %1972 = vmatprep.subr.bf16.mxu0 0
    %1973 = vmatpush1.bf16.msra.mxu0 %v1469
    %1974 = vmatprep.subr.bf16.mxu0 0
    %1975 = vmatpush1.bf16.msra.mxu0 %v1468
    %1976 = vmatprep.subr.bf16.mxu0 0
    %1977 = vmatpush2.bf16.msra.mxu0 %v1483
    %1978 = vmatprep.subr.bf16.mxu0 0
    %1979 = vmatpush2.bf16.msra.mxu0 %v1482
    %1980 = vmatprep.subr.bf16.mxu0 0
    %1981 = vmatpush2.bf16.msra.mxu0 %v1481
    %1982 = vmatprep.subr.bf16.mxu0 0
    %1983 = vmatpush2.bf16.msra.mxu0 %v1480
    %1984 = vmatprep.subr.bf16.mxu0 0
    %1985 = vmatpush2.bf16.msra.mxu0 %v1479
    %1986 = vmatprep.subr.bf16.mxu0 0
    %1987 = vmatpush2.bf16.msra.mxu0 %v1478
    %1988 = vmatprep.subr.bf16.mxu0 0
    %1989 = vmatpush2.bf16.msra.mxu0 %v1477
    %1990 = vmatprep.subr.bf16.mxu0 0
    %1991 = vmatpush2.bf16.msra.mxu0 %v1476
    %1992 = vmatprep.mubr.bf16.mxu0 %v521
    %1993 = vmatmul.mubr.bf16.gmra.mxu0 %v507
    %v1994 = vpop.f32.mrf.mxu0
    %v1995 = vadd.f32 %v1955, %v1994
    %v1996 = vpop.f32.mrf.mxu0
    %v1997 = vpop.f32.mrf.mxu0
    %v1998 = vpop.f32.mrf.mxu0
    %1999 = vdwg.mxu0
    %2000 = vmatprep.subr.bf16.mxu0 0
    %2001 = vmatpush1.bf16.msra.mxu0 %v1491
    %2002 = vmatprep.subr.bf16.mxu0 0
    %2003 = vmatpush1.bf16.msra.mxu0 %v1490
    %2004 = vmatprep.subr.bf16.mxu0 0
    %2005 = vmatpush1.bf16.msra.mxu0 %v1489
    %2006 = vmatprep.subr.bf16.mxu0 0
    %2007 = vmatpush1.bf16.msra.mxu0 %v1488
    %2008 = vmatprep.subr.bf16.mxu0 0
    %2009 = vmatpush1.bf16.msra.mxu0 %v1487
    %2010 = vmatprep.subr.bf16.mxu0 0
    %2011 = vmatpush1.bf16.msra.mxu0 %v1486
    %2012 = vmatprep.subr.bf16.mxu0 0
    %2013 = vmatpush1.bf16.msra.mxu0 %v1485
    %2014 = vmatprep.subr.bf16.mxu0 0
    %2015 = vmatpush1.bf16.msra.mxu0 %v1484
    %2016 = vmatprep.subr.bf16.mxu0 0
    %2017 = vmatpush2.bf16.msra.mxu0 %v1499
    %2018 = vmatprep.subr.bf16.mxu0 0
    %2019 = vmatpush2.bf16.msra.mxu0 %v1498
    %2020 = vmatprep.subr.bf16.mxu0 0
    %2021 = vmatpush2.bf16.msra.mxu0 %v1497
    %2022 = vmatprep.subr.bf16.mxu0 0
    %2023 = vmatpush2.bf16.msra.mxu0 %v1496
    %2024 = vmatprep.subr.bf16.mxu0 0
    %2025 = vmatpush2.bf16.msra.mxu0 %v1495
    %2026 = vmatprep.subr.bf16.mxu0 0
    %2027 = vmatpush2.bf16.msra.mxu0 %v1494
    %2028 = vmatprep.subr.bf16.mxu0 0
    %2029 = vmatpush2.bf16.msra.mxu0 %v1493
    %2030 = vmatprep.subr.bf16.mxu0 0
    %2031 = vmatpush2.bf16.msra.mxu0 %v1492
    %2032 = vmatprep.mubr.bf16.mxu0 %v531
    %2033 = vmatmul.mubr.bf16.gmra.mxu0 %v529
    %v2034 = vpop.f32.mrf.mxu0
    %v2035 = vadd.f32 %v1995, %v2034
    %v2036 = vpop.f32.mrf.mxu0
    %v2037 = vpop.f32.mrf.mxu0
    %v2038 = vpop.f32.mrf.mxu0
    %2039 = vdwg.mxu0
    %2040 = vmatprep.subr.bf16.mxu0 0
    %2041 = vmatpush1.bf16.msra.mxu0 %v1507
    %2042 = vmatprep.subr.bf16.mxu0 0
    %2043 = vmatpush1.bf16.msra.mxu0 %v1506
    %2044 = vmatprep.subr.bf16.mxu0 0
    %2045 = vmatpush1.bf16.msra.mxu0 %v1505
    %2046 = vmatprep.subr.bf16.mxu0 0
    %2047 = vmatpush1.bf16.msra.mxu0 %v1504
    %2048 = vmatprep.subr.bf16.mxu0 0
    %2049 = vmatpush1.bf16.msra.mxu0 %v1503
    %2050 = vmatprep.subr.bf16.mxu0 0
    %2051 = vmatpush1.bf16.msra.mxu0 %v1502
    %2052 = vmatprep.subr.bf16.mxu0 0
    %2053 = vmatpush1.bf16.msra.mxu0 %v1501
    %2054 = vmatprep.subr.bf16.mxu0 0
    %2055 = vmatpush1.bf16.msra.mxu0 %v1500
    %2056 = vmatprep.subr.bf16.mxu0 0
    %2057 = vmatpush2.bf16.msra.mxu0 %v1515
    %2058 = vmatprep.subr.bf16.mxu0 0
    %2059 = vmatpush2.bf16.msra.mxu0 %v1514
    %2060 = vmatprep.subr.bf16.mxu0 0
    %2061 = vmatpush2.bf16.msra.mxu0 %v1513
    %2062 = vmatprep.subr.bf16.mxu0 0
    %2063 = vmatpush2.bf16.msra.mxu0 %v1512
    %2064 = vmatprep.subr.bf16.mxu0 0
    %2065 = vmatpush2.bf16.msra.mxu0 %v1511
    %2066 = vmatprep.subr.bf16.mxu0 0
    %2067 = vmatpush2.bf16.msra.mxu0 %v1510
    %2068 = vmatprep.subr.bf16.mxu0 0
    %2069 = vmatpush2.bf16.msra.mxu0 %v1509
    %2070 = vmatprep.subr.bf16.mxu0 0
    %2071 = vmatpush2.bf16.msra.mxu0 %v1508
    %2072 = vmatprep.mubr.bf16.mxu0 %v528
    %2073 = vmatmul.mubr.bf16.gmra.mxu0 %v514
    %v2074 = vpop.f32.mrf.mxu0
    %v2075 = vadd.f32 %v2035, %v2074
    %v2076 = vpop.f32.mrf.mxu0
    %v2077 = vpop.f32.mrf.mxu0
    %v2078 = vpop.f32.mrf.mxu0
    %2079 = vdwg.mxu0
    %2080 = vmatprep.subr.bf16.mxu0 0
    %2081 = vmatpush1.bf16.msra.mxu0 %v1523
    %2082 = vmatprep.subr.bf16.mxu0 0
    %2083 = vmatpush1.bf16.msra.mxu0 %v1522
    %2084 = vmatprep.subr.bf16.mxu0 0
    %2085 = vmatpush1.bf16.msra.mxu0 %v1521
    %2086 = vmatprep.subr.bf16.mxu0 0
    %2087 = vmatpush1.bf16.msra.mxu0 %v1520
    %2088 = vmatprep.subr.bf16.mxu0 0
    %2089 = vmatpush1.bf16.msra.mxu0 %v1519
    %2090 = vmatprep.subr.bf16.mxu0 0
    %2091 = vmatpush1.bf16.msra.mxu0 %v1518
    %2092 = vmatprep.subr.bf16.mxu0 0
    %2093 = vmatpush1.bf16.msra.mxu0 %v1517
    %2094 = vmatprep.subr.bf16.mxu0 0
    %2095 = vmatpush1.bf16.msra.mxu0 %v1516
    %2096 = vmatprep.subr.bf16.mxu0 0
    %2097 = vmatpush2.bf16.msra.mxu0 %v1531
    %2098 = vmatprep.subr.bf16.mxu0 0
    %2099 = vmatpush2.bf16.msra.mxu0 %v1530
    %2100 = vmatprep.subr.bf16.mxu0 0
    %2101 = vmatpush2.bf16.msra.mxu0 %v1529
    %2102 = vmatprep.subr.bf16.mxu0 0
    %2103 = vmatpush2.bf16.msra.mxu0 %v1528
    %2104 = vmatprep.subr.bf16.mxu0 0
    %2105 = vmatpush2.bf16.msra.mxu0 %v1527
    %2106 = vmatprep.subr.bf16.mxu0 0
    %2107 = vmatpush2.bf16.msra.mxu0 %v1526
    %2108 = vmatprep.subr.bf16.mxu0 0
    %2109 = vmatpush2.bf16.msra.mxu0 %v1525
    %2110 = vmatprep.subr.bf16.mxu0 0
    %2111 = vmatpush2.bf16.msra.mxu0 %v1524
    %2112 = vmatprep.mubr.bf16.mxu0 %v532
    %2113 = vmatmul.mubr.bf16.gmra.mxu0 %v530
    %v2114 = vpop.f32.mrf.mxu0
    %v2115 = vadd.f32 %v2075, %v2114
    %v2116 = vpop.f32.mrf.mxu0
    %v2117 = vpop.f32.mrf.mxu0
    %v2118 = vpop.f32.mrf.mxu0
    %2119 = vdwg.mxu0
    %2120 = vmatprep.subr.bf16.mxu0 0
    %2121 = vmatpush1.bf16.msra.mxu0 %v1539
    %2122 = vmatprep.subr.bf16.mxu0 0
    %2123 = vmatpush1.bf16.msra.mxu0 %v1538
    %2124 = vmatprep.subr.bf16.mxu0 0
    %2125 = vmatpush1.bf16.msra.mxu0 %v1537
    %2126 = vmatprep.subr.bf16.mxu0 0
    %2127 = vmatpush1.bf16.msra.mxu0 %v1536
    %2128 = vmatprep.subr.bf16.mxu0 0
    %2129 = vmatpush1.bf16.msra.mxu0 %v1535
    %2130 = vmatprep.subr.bf16.mxu0 0
    %2131 = vmatpush1.bf16.msra.mxu0 %v1534
    %2132 = vmatprep.subr.bf16.mxu0 0
    %2133 = vmatpush1.bf16.msra.mxu0 %v1533
    %2134 = vmatprep.subr.bf16.mxu0 0
    %2135 = vmatpush1.bf16.msra.mxu0 %v1532
    %2136 = vmatprep.subr.bf16.mxu0 0
    %2137 = vmatpush2.bf16.msra.mxu0 %v1547
    %2138 = vmatprep.subr.bf16.mxu0 0
    %2139 = vmatpush2.bf16.msra.mxu0 %v1546
    %2140 = vmatprep.subr.bf16.mxu0 0
    %2141 = vmatpush2.bf16.msra.mxu0 %v1545
    %2142 = vmatprep.subr.bf16.mxu0 0
    %2143 = vmatpush2.bf16.msra.mxu0 %v1544
    %2144 = vmatprep.subr.bf16.mxu0 0
    %2145 = vmatpush2.bf16.msra.mxu0 %v1543
    %2146 = vmatprep.subr.bf16.mxu0 0
    %2147 = vmatpush2.bf16.msra.mxu0 %v1542
    %2148 = vmatprep.subr.bf16.mxu0 0
    %2149 = vmatpush2.bf16.msra.mxu0 %v1541
    %2150 = vmatprep.subr.bf16.mxu0 0
    %2151 = vmatpush2.bf16.msra.mxu0 %v1540
    %2152 = vmatprep.mubr.bf16.mxu0 %v570
    %2153 = vmatmul.mubr.bf16.gmra.mxu0 %v556
    %v2154 = vpop.f32.mrf.mxu0
    %v2155 = vadd.f32 %v2115, %v2154
    %v2156 = vpop.f32.mrf.mxu0
    %v2157 = vpop.f32.mrf.mxu0
    %v2158 = vpop.f32.mrf.mxu0
    %2159 = vdwg.mxu0
    %2160 = vmatprep.subr.bf16.mxu0 0
    %2161 = vmatpush1.bf16.msra.mxu0 %v1555
    %2162 = vmatprep.subr.bf16.mxu0 0
    %2163 = vmatpush1.bf16.msra.mxu0 %v1554
    %2164 = vmatprep.subr.bf16.mxu0 0
    %2165 = vmatpush1.bf16.msra.mxu0 %v1553
    %2166 = vmatprep.subr.bf16.mxu0 0
    %2167 = vmatpush1.bf16.msra.mxu0 %v1552
    %2168 = vmatprep.subr.bf16.mxu0 0
    %2169 = vmatpush1.bf16.msra.mxu0 %v1551
    %2170 = vmatprep.subr.bf16.mxu0 0
    %2171 = vmatpush1.bf16.msra.mxu0 %v1550
    %2172 = vmatprep.subr.bf16.mxu0 0
    %2173 = vmatpush1.bf16.msra.mxu0 %v1549
    %2174 = vmatprep.subr.bf16.mxu0 0
    %2175 = vmatpush1.bf16.msra.mxu0 %v1548
    %2176 = vmatprep.subr.bf16.mxu0 0
    %2177 = vmatpush2.bf16.msra.mxu0 %v1563
    %2178 = vmatprep.subr.bf16.mxu0 0
    %2179 = vmatpush2.bf16.msra.mxu0 %v1562
    %2180 = vmatprep.subr.bf16.mxu0 0
    %2181 = vmatpush2.bf16.msra.mxu0 %v1561
    %2182 = vmatprep.subr.bf16.mxu0 0
    %2183 = vmatpush2.bf16.msra.mxu0 %v1560
    %2184 = vmatprep.subr.bf16.mxu0 0
    %2185 = vmatpush2.bf16.msra.mxu0 %v1559
    %2186 = vmatprep.subr.bf16.mxu0 0
    %2187 = vmatpush2.bf16.msra.mxu0 %v1558
    %2188 = vmatprep.subr.bf16.mxu0 0
    %2189 = vmatpush2.bf16.msra.mxu0 %v1557
    %2190 = vmatprep.subr.bf16.mxu0 0
    %2191 = vmatpush2.bf16.msra.mxu0 %v1556
    %2192 = vmatprep.mubr.bf16.mxu0 %v580
    %2193 = vmatmul.mubr.bf16.gmra.mxu0 %v578
    %v2194 = vpop.f32.mrf.mxu0
    %v2195 = vadd.f32 %v2155, %v2194
    %v2196 = vpop.f32.mrf.mxu0
    %v2197 = vpop.f32.mrf.mxu0
    %v2198 = vpop.f32.mrf.mxu0
    %2199 = vdwg.mxu0
    %2200 = vmatprep.subr.bf16.mxu0 0
    %2201 = vmatpush1.bf16.msra.mxu0 %v1571
    %2202 = vmatprep.subr.bf16.mxu0 0
    %2203 = vmatpush1.bf16.msra.mxu0 %v1570
    %2204 = vmatprep.subr.bf16.mxu0 0
    %2205 = vmatpush1.bf16.msra.mxu0 %v1569
    %2206 = vmatprep.subr.bf16.mxu0 0
    %2207 = vmatpush1.bf16.msra.mxu0 %v1568
    %2208 = vmatprep.subr.bf16.mxu0 0
    %2209 = vmatpush1.bf16.msra.mxu0 %v1567
    %2210 = vmatprep.subr.bf16.mxu0 0
    %2211 = vmatpush1.bf16.msra.mxu0 %v1566
    %2212 = vmatprep.subr.bf16.mxu0 0
    %2213 = vmatpush1.bf16.msra.mxu0 %v1565
    %2214 = vmatprep.subr.bf16.mxu0 0
    %2215 = vmatpush1.bf16.msra.mxu0 %v1564
    %2216 = vmatprep.subr.bf16.mxu0 0
    %2217 = vmatpush2.bf16.msra.mxu0 %v1579
    %2218 = vmatprep.subr.bf16.mxu0 0
    %2219 = vmatpush2.bf16.msra.mxu0 %v1578
    %2220 = vmatprep.subr.bf16.mxu0 0
    %2221 = vmatpush2.bf16.msra.mxu0 %v1577
    %2222 = vmatprep.subr.bf16.mxu0 0
    %2223 = vmatpush2.bf16.msra.mxu0 %v1576
    %2224 = vmatprep.subr.bf16.mxu0 0
    %2225 = vmatpush2.bf16.msra.mxu0 %v1575
    %2226 = vmatprep.subr.bf16.mxu0 0
    %2227 = vmatpush2.bf16.msra.mxu0 %v1574
    %2228 = vmatprep.subr.bf16.mxu0 0
    %2229 = vmatpush2.bf16.msra.mxu0 %v1573
    %2230 = vmatprep.subr.bf16.mxu0 0
    %2231 = vmatpush2.bf16.msra.mxu0 %v1572
    %2232 = vmatprep.mubr.bf16.mxu0 %v577
    %2233 = vmatmul.mubr.bf16.gmra.mxu0 %v563
    %v2234 = vpop.f32.mrf.mxu0
    %v2235 = vadd.f32 %v2195, %v2234
    %v2236 = vpop.f32.mrf.mxu0
    %v2237 = vpop.f32.mrf.mxu0
    %v2238 = vpop.f32.mrf.mxu0
    %2239 = vdwg.mxu0
    %2240 = vmatprep.subr.bf16.mxu0 0
    %2241 = vmatpush1.bf16.msra.mxu0 %v1587
    %2242 = vmatprep.subr.bf16.mxu0 0
    %2243 = vmatpush1.bf16.msra.mxu0 %v1586
    %2244 = vmatprep.subr.bf16.mxu0 0
    %2245 = vmatpush1.bf16.msra.mxu0 %v1585
    %2246 = vmatprep.subr.bf16.mxu0 0
    %2247 = vmatpush1.bf16.msra.mxu0 %v1584
    %2248 = vmatprep.subr.bf16.mxu0 0
    %2249 = vmatpush1.bf16.msra.mxu0 %v1583
    %2250 = vmatprep.subr.bf16.mxu0 0
    %2251 = vmatpush1.bf16.msra.mxu0 %v1582
    %2252 = vmatprep.subr.bf16.mxu0 0
    %2253 = vmatpush1.bf16.msra.mxu0 %v1581
    %2254 = vmatprep.subr.bf16.mxu0 0
    %2255 = vmatpush1.bf16.msra.mxu0 %v1580
    %2256 = vmatprep.subr.bf16.mxu0 0
    %2257 = vmatpush2.bf16.msra.mxu0 %v1595
    %2258 = vmatprep.subr.bf16.mxu0 0
    %2259 = vmatpush2.bf16.msra.mxu0 %v1594
    %2260 = vmatprep.subr.bf16.mxu0 0
    %2261 = vmatpush2.bf16.msra.mxu0 %v1593
    %2262 = vmatprep.subr.bf16.mxu0 0
    %2263 = vmatpush2.bf16.msra.mxu0 %v1592
    %2264 = vmatprep.subr.bf16.mxu0 0
    %2265 = vmatpush2.bf16.msra.mxu0 %v1591
    %2266 = vmatprep.subr.bf16.mxu0 0
    %2267 = vmatpush2.bf16.msra.mxu0 %v1590
    %2268 = vmatprep.subr.bf16.mxu0 0
    %2269 = vmatpush2.bf16.msra.mxu0 %v1589
    %2270 = vmatprep.subr.bf16.mxu0 0
    %2271 = vmatpush2.bf16.msra.mxu0 %v1588
    %2272 = vmatprep.mubr.bf16.mxu0 %v581
    %2273 = vmatmul.mubr.bf16.gmra.mxu0 %v579
    %v2274 = vpop.f32.mrf.mxu0
    %v2275 = vadd.f32 %v2235, %v2274
    %v2276 = vpop.f32.mrf.mxu0
    %v2277 = vpop.f32.mrf.mxu0
    %v2278 = vpop.f32.mrf.mxu0
    %2279 = vdwg.mxu0
    %2280 = vmatprep.subr.bf16.mxu0 0
    %2281 = vmatpush1.bf16.msra.mxu0 0
    %2282 = vmatprep.subr.bf16.mxu0 0
    %2283 = vmatpush1.bf16.msra.mxu0 0
    %2284 = vmatprep.subr.bf16.mxu0 0
    %2285 = vmatpush1.bf16.msra.mxu0 0
    %2286 = vmatprep.subr.bf16.mxu0 0
    %2287 = vmatpush1.bf16.msra.mxu0 0
    %2288 = vmatprep.subr.bf16.mxu0 0
    %2289 = vmatpush1.bf16.msra.mxu0 %v1599
    %2290 = vmatprep.subr.bf16.mxu0 0
    %2291 = vmatpush1.bf16.msra.mxu0 %v1598
    %2292 = vmatprep.subr.bf16.mxu0 0
    %2293 = vmatpush1.bf16.msra.mxu0 %v1597
    %2294 = vmatprep.subr.bf16.mxu0 0
    %2295 = vmatpush1.bf16.msra.mxu0 %v1596
    %2296 = vmatprep.subr.bf16.mxu0 0
    %2297 = vmatpush2.bf16.msra.mxu0 0
    %2298 = vmatprep.subr.bf16.mxu0 0
    %2299 = vmatpush2.bf16.msra.mxu0 0
    %2300 = vmatprep.subr.bf16.mxu0 0
    %2301 = vmatpush2.bf16.msra.mxu0 0
    %2302 = vmatprep.subr.bf16.mxu0 0
    %2303 = vmatpush2.bf16.msra.mxu0 0
    %2304 = vmatprep.subr.bf16.mxu0 0
    %2305 = vmatpush2.bf16.msra.mxu0 0
    %2306 = vmatprep.subr.bf16.mxu0 0
    %2307 = vmatpush2.bf16.msra.mxu0 0
    %2308 = vmatprep.subr.bf16.mxu0 0
    %2309 = vmatpush2.bf16.msra.mxu0 0
    %2310 = vmatprep.subr.bf16.mxu0 0
    %2311 = vmatpush2.bf16.msra.mxu0 0
    %2312 = vmatprep.mubr.bf16.mxu0 0
    %2313 = vmatmul.mubr.bf16.gmra.mxu0 %v1798
    %v2314 = vpop.f32.mrf.mxu0
    %v2315 = vadd.f32 %v2275, %v2314
    %v2316 = vpop.f32.mrf.mxu0
    %v2317 = vpop.f32.mrf.mxu0
    %v2318 = vpop.f32.mrf.mxu0
    %2319 = vdwg.mxu0
    %v2320 = vmax.f32 %v2315, 0.0
    %s2321 = scalar_lea.vmem %s0, 25
    %v2322 = vld [vmem:[%s2321] sm:$0xff]
    %v2323 = vld [vmem:[%s2321 + $0x8] sm:$0xff]
    %v2324 = vld [vmem:[%s2321 + $0x10] sm:$0xff]
    %v2325 = vld [vmem:[%s2321 + $0x18] sm:$0x1]
    %s2326 = scalar_lea.vmem %s1, 1568
    %v2327 = vld [vmem:[%s2326] sm:$0xf]
    %v2328 = vld [vmem:[%s2326 + $0x4] sm:$0xf]
    %v2329 = vld [vmem:[%s2326 + $0x8] sm:$0xf]
    %v2330 = vld [vmem:[%s2326 + $0xc] sm:$0xf]
    %v2331 = vld [vmem:[%s2326 + $0x10] sm:$0xf]
    %v2332 = vld [vmem:[%s2326 + $0x14] sm:$0xf]
    %v2333 = vld [vmem:[%s2326 + $0x18] sm:$0xf]
    %v2334 = vld [vmem:[%s2326 + $0x1c] sm:$0xf]
    %v2335 = vld [vmem:[%s2326 + $0x20] sm:$0xf]
    %v2336 = vld [vmem:[%s2326 + $0x24] sm:$0xf]
    %v2337 = vld [vmem:[%s2326 + $0x28] sm:$0xf]
    %v2338 = vld [vmem:[%s2326 + $0x2c] sm:$0xf]
    %v2339 = vld [vmem:[%s2326 + $0x30] sm:$0xf]
    %v2340 = vld [vmem:[%s2326 + $0x34] sm:$0xf]
    %v2341 = vld [vmem:[%s2326 + $0x38] sm:$0xf]
    %v2342 = vld [vmem:[%s2326 + $0x3c] sm:$0xf]
    %v2343 = vld [vmem:[%s2326 + $0x40] sm:$0xf]
    %v2344 = vld [vmem:[%s2326 + $0x44] sm:$0xf]
    %v2345 = vld [vmem:[%s2326 + $0x48] sm:$0xf]
    %v2346 = vld [vmem:[%s2326 + $0x4c] sm:$0xf]
    %v2347 = vld [vmem:[%s2326 + $0x50] sm:$0xf]
    %v2348 = vld [vmem:[%s2326 + $0x54] sm:$0xf]
    %v2349 = vld [vmem:[%s2326 + $0x58] sm:$0xf]
    %v2350 = vld [vmem:[%s2326 + $0x5c] sm:$0xf]
    %v2351 = vld [vmem:[%s2326 + $0x60] sm:$0xf]
    %v2352 = vld [vmem:[%s2326 + $0x64] sm:$0xf]
    %v2353 = vld [vmem:[%s2326 + $0x68] sm:$0xf]
    %v2354 = vld [vmem:[%s2326 + $0x6c] sm:$0xf]
    %v2355 = vld [vmem:[%s2326 + $0x70] sm:$0xf]
    %v2356 = vld [vmem:[%s2326 + $0x74] sm:$0xf]
    %v2357 = vld [vmem:[%s2326 + $0x78] sm:$0xf]
    %v2358 = vld [vmem:[%s2326 + $0x7c] sm:$0xf]
    %v2359 = vld [vmem:[%s2326 + $0x80] sm:$0xf]
    %v2360 = vld [vmem:[%s2326 + $0x84] sm:$0xf]
    %v2361 = vld [vmem:[%s2326 + $0x88] sm:$0xf]
    %v2362 = vld [vmem:[%s2326 + $0x8c] sm:$0xf]
    %v2363 = vld [vmem:[%s2326 + $0x90] sm:$0xf]
    %v2364 = vld [vmem:[%s2326 + $0x94] sm:$0xf]
    %v2365 = vld [vmem:[%s2326 + $0x98] sm:$0xf]
    %v2366 = vld [vmem:[%s2326 + $0x9c] sm:$0xf]
    %v2367 = vld [vmem:[%s2326 + $0xa0] sm:$0xf]
    %v2368 = vld [vmem:[%s2326 + $0xa4] sm:$0xf]
    %v2369 = vld [vmem:[%s2326 + $0xa8] sm:$0xf]
    %v2370 = vld [vmem:[%s2326 + $0xac] sm:$0xf]
    %v2371 = vld [vmem:[%s2326 + $0xb0] sm:$0xf]
    %v2372 = vld [vmem:[%s2326 + $0xb4] sm:$0xf]
    %v2373 = vld [vmem:[%s2326 + $0xb8] sm:$0xf]
    %v2374 = vld [vmem:[%s2326 + $0xbc] sm:$0xf]
    %v2375 = vld [vmem:[%s2326 + $0xc0] sm:$0xf]
    %v2376 = vld [vmem:[%s2326 + $0xc4] sm:$0xf]
    %v2377 = vld [vmem:[%s2326 + $0xc8] sm:$0xf]
    %v2378 = vld [vmem:[%s2326 + $0xcc] sm:$0xf]
    %v2379 = vld [vmem:[%s2326 + $0xd0] sm:$0xf]
    %v2380 = vld [vmem:[%s2326 + $0xd4] sm:$0xf]
    %v2381 = vld [vmem:[%s2326 + $0xd8] sm:$0xf]
    %v2382 = vld [vmem:[%s2326 + $0xdc] sm:$0xf]
    %v2383 = vld [vmem:[%s2326 + $0xe0] sm:$0xf]
    %v2384 = vld [vmem:[%s2326 + $0xe4] sm:$0xf]
    %v2385 = vld [vmem:[%s2326 + $0xe8] sm:$0xf]
    %v2386 = vld [vmem:[%s2326 + $0xec] sm:$0xf]
    %v2387 = vld [vmem:[%s2326 + $0xf0] sm:$0xf]
    %v2388 = vld [vmem:[%s2326 + $0xf4] sm:$0xf]
    %v2389 = vld [vmem:[%s2326 + $0xf8] sm:$0xf]
    %v2390 = vld [vmem:[%s2326 + $0xfc] sm:$0xf]
    %v2391 = vld [vmem:[%s2326 + $0x100] sm:$0xf]
    %v2392 = vld [vmem:[%s2326 + $0x104] sm:$0xf]
    %v2393 = vld [vmem:[%s2326 + $0x108] sm:$0xf]
    %v2394 = vld [vmem:[%s2326 + $0x10c] sm:$0xf]
    %v2395 = vld [vmem:[%s2326 + $0x110] sm:$0xf]
    %v2396 = vld [vmem:[%s2326 + $0x114] sm:$0xf]
    %v2397 = vld [vmem:[%s2326 + $0x118] sm:$0xf]
    %v2398 = vld [vmem:[%s2326 + $0x11c] sm:$0xf]
    %v2399 = vld [vmem:[%s2326 + $0x120] sm:$0xf]
    %v2400 = vld [vmem:[%s2326 + $0x124] sm:$0xf]
    %v2401 = vld [vmem:[%s2326 + $0x128] sm:$0xf]
    %v2402 = vld [vmem:[%s2326 + $0x12c] sm:$0xf]
    %v2403 = vld [vmem:[%s2326 + $0x130] sm:$0xf]
    %v2404 = vld [vmem:[%s2326 + $0x134] sm:$0xf]
    %v2405 = vld [vmem:[%s2326 + $0x138] sm:$0xf]
    %v2406 = vld [vmem:[%s2326 + $0x13c] sm:$0xf]
    %v2407 = vld [vmem:[%s2326 + $0x140] sm:$0xf]
    %v2408 = vld [vmem:[%s2326 + $0x144] sm:$0xf]
    %v2409 = vld [vmem:[%s2326 + $0x148] sm:$0xf]
    %v2410 = vld [vmem:[%s2326 + $0x14c] sm:$0xf]
    %v2411 = vld [vmem:[%s2326 + $0x150] sm:$0xf]
    %v2412 = vld [vmem:[%s2326 + $0x154] sm:$0xf]
    %v2413 = vld [vmem:[%s2326 + $0x158] sm:$0xf]
    %v2414 = vld [vmem:[%s2326 + $0x15c] sm:$0xf]
    %v2415 = vld [vmem:[%s2326 + $0x160] sm:$0xf]
    %v2416 = vld [vmem:[%s2326 + $0x164] sm:$0xf]
    %v2417 = vld [vmem:[%s2326 + $0x168] sm:$0xf]
    %v2418 = vld [vmem:[%s2326 + $0x16c] sm:$0xf]
    %v2419 = vld [vmem:[%s2326 + $0x170] sm:$0xf]
    %v2420 = vld [vmem:[%s2326 + $0x174] sm:$0xf]
    %v2421 = vld [vmem:[%s2326 + $0x178] sm:$0xf]
    %v2422 = vld [vmem:[%s2326 + $0x17c] sm:$0xf]
    %v2423 = vld [vmem:[%s2326 + $0x180] sm:$0xf]
    %v2424 = vld [vmem:[%s2326 + $0x184] sm:$0xf]
    %v2425 = vld [vmem:[%s2326 + $0x188] sm:$0xf]
    %v2426 = vld [vmem:[%s2326 + $0x18c] sm:$0xf]
    %v2427 = vld [vmem:[%s2326 + $0x190] sm:$0xf]
    %v2428 = vld [vmem:[%s2326 + $0x194] sm:$0xf]
    %v2429 = vld [vmem:[%s2326 + $0x198] sm:$0xf]
    %v2430 = vld [vmem:[%s2326 + $0x19c] sm:$0xf]
    %v2431 = vld [vmem:[%s2326 + $0x1a0] sm:$0xf]
    %v2432 = vld [vmem:[%s2326 + $0x1a4] sm:$0xf]
    %v2433 = vld [vmem:[%s2326 + $0x1a8] sm:$0xf]
    %v2434 = vld [vmem:[%s2326 + $0x1ac] sm:$0xf]
    %v2435 = vld [vmem:[%s2326 + $0x1b0] sm:$0xf]
    %v2436 = vld [vmem:[%s2326 + $0x1b4] sm:$0xf]
    %v2437 = vld [vmem:[%s2326 + $0x1b8] sm:$0xf]
    %v2438 = vld [vmem:[%s2326 + $0x1bc] sm:$0xf]
    %v2439 = vld [vmem:[%s2326 + $0x1c0] sm:$0xf]
    %v2440 = vld [vmem:[%s2326 + $0x1c4] sm:$0xf]
    %v2441 = vld [vmem:[%s2326 + $0x1c8] sm:$0xf]
    %v2442 = vld [vmem:[%s2326 + $0x1cc] sm:$0xf]
    %v2443 = vld [vmem:[%s2326 + $0x1d0] sm:$0xf]
    %v2444 = vld [vmem:[%s2326 + $0x1d4] sm:$0xf]
    %v2445 = vld [vmem:[%s2326 + $0x1d8] sm:$0xf]
    %v2446 = vld [vmem:[%s2326 + $0x1dc] sm:$0xf]
    %v2447 = vld [vmem:[%s2326 + $0x1e0] sm:$0xf]
    %v2448 = vld [vmem:[%s2326 + $0x1e4] sm:$0xf]
    %v2449 = vld [vmem:[%s2326 + $0x1e8] sm:$0xf]
    %v2450 = vld [vmem:[%s2326 + $0x1ec] sm:$0xf]
    %v2451 = vld [vmem:[%s2326 + $0x1f0] sm:$0xf]
    %v2452 = vld [vmem:[%s2326 + $0x1f4] sm:$0xf]
    %v2453 = vld [vmem:[%s2326 + $0x1f8] sm:$0xf]
    %v2454 = vld [vmem:[%s2326 + $0x1fc] sm:$0xf]
    %v2455 = vld [vmem:[%s2326 + $0x200] sm:$0xf]
    %v2456 = vld [vmem:[%s2326 + $0x204] sm:$0xf]
    %v2457 = vld [vmem:[%s2326 + $0x208] sm:$0xf]
    %v2458 = vld [vmem:[%s2326 + $0x20c] sm:$0xf]
    %v2459 = vld [vmem:[%s2326 + $0x210] sm:$0xf]
    %v2460 = vld [vmem:[%s2326 + $0x214] sm:$0xf]
    %v2461 = vld [vmem:[%s2326 + $0x218] sm:$0xf]
    %v2462 = vld [vmem:[%s2326 + $0x21c] sm:$0xf]
    %v2463 = vld [vmem:[%s2326 + $0x220] sm:$0xf]
    %v2464 = vld [vmem:[%s2326 + $0x224] sm:$0xf]
    %v2465 = vld [vmem:[%s2326 + $0x228] sm:$0xf]
    %v2466 = vld [vmem:[%s2326 + $0x22c] sm:$0xf]
    %v2467 = vld [vmem:[%s2326 + $0x230] sm:$0xf]
    %v2468 = vld [vmem:[%s2326 + $0x234] sm:$0xf]
    %v2469 = vld [vmem:[%s2326 + $0x238] sm:$0xf]
    %v2470 = vld [vmem:[%s2326 + $0x23c] sm:$0xf]
    %v2471 = vld [vmem:[%s2326 + $0x240] sm:$0xf]
    %v2472 = vld [vmem:[%s2326 + $0x244] sm:$0xf]
    %v2473 = vld [vmem:[%s2326 + $0x248] sm:$0xf]
    %v2474 = vld [vmem:[%s2326 + $0x24c] sm:$0xf]
    %v2475 = vld [vmem:[%s2326 + $0x250] sm:$0xf]
    %v2476 = vld [vmem:[%s2326 + $0x254] sm:$0xf]
    %v2477 = vld [vmem:[%s2326 + $0x258] sm:$0xf]
    %v2478 = vld [vmem:[%s2326 + $0x25c] sm:$0xf]
    %v2479 = vld [vmem:[%s2326 + $0x260] sm:$0xf]
    %v2480 = vld [vmem:[%s2326 + $0x264] sm:$0xf]
    %v2481 = vld [vmem:[%s2326 + $0x268] sm:$0xf]
    %v2482 = vld [vmem:[%s2326 + $0x26c] sm:$0xf]
    %v2483 = vld [vmem:[%s2326 + $0x270] sm:$0xf]
    %v2484 = vld [vmem:[%s2326 + $0x274] sm:$0xf]
    %v2485 = vld [vmem:[%s2326 + $0x278] sm:$0xf]
    %v2486 = vld [vmem:[%s2326 + $0x27c] sm:$0xf]
    %v2487 = vld [vmem:[%s2326 + $0x280] sm:$0xf]
    %v2488 = vld [vmem:[%s2326 + $0x284] sm:$0xf]
    %v2489 = vld [vmem:[%s2326 + $0x288] sm:$0xf]
    %v2490 = vld [vmem:[%s2326 + $0x28c] sm:$0xf]
    %v2491 = vld [vmem:[%s2326 + $0x290] sm:$0xf]
    %v2492 = vld [vmem:[%s2326 + $0x294] sm:$0xf]
    %v2493 = vld [vmem:[%s2326 + $0x298] sm:$0xf]
    %v2494 = vld [vmem:[%s2326 + $0x29c] sm:$0xf]
    %v2495 = vld [vmem:[%s2326 + $0x2a0] sm:$0xf]
    %v2496 = vld [vmem:[%s2326 + $0x2a4] sm:$0xf]
    %v2497 = vld [vmem:[%s2326 + $0x2a8] sm:$0xf]
    %v2498 = vld [vmem:[%s2326 + $0x2ac] sm:$0xf]
    %v2499 = vld [vmem:[%s2326 + $0x2b0] sm:$0xf]
    %v2500 = vld [vmem:[%s2326 + $0x2b4] sm:$0xf]
    %v2501 = vld [vmem:[%s2326 + $0x2b8] sm:$0xf]
    %v2502 = vld [vmem:[%s2326 + $0x2bc] sm:$0xf]
    %v2503 = vld [vmem:[%s2326 + $0x2c0] sm:$0xf]
    %v2504 = vld [vmem:[%s2326 + $0x2c4] sm:$0xf]
    %v2505 = vld [vmem:[%s2326 + $0x2c8] sm:$0xf]
    %v2506 = vld [vmem:[%s2326 + $0x2cc] sm:$0xf]
    %v2507 = vld [vmem:[%s2326 + $0x2d0] sm:$0xf]
    %v2508 = vld [vmem:[%s2326 + $0x2d4] sm:$0xf]
    %v2509 = vld [vmem:[%s2326 + $0x2d8] sm:$0xf]
    %v2510 = vld [vmem:[%s2326 + $0x2dc] sm:$0xf]
    %v2511 = vld [vmem:[%s2326 + $0x2e0] sm:$0xf]
    %v2512 = vld [vmem:[%s2326 + $0x2e4] sm:$0xf]
    %v2513 = vld [vmem:[%s2326 + $0x2e8] sm:$0xf]
    %v2514 = vld [vmem:[%s2326 + $0x2ec] sm:$0xf]
    %v2515 = vld [vmem:[%s2326 + $0x2f0] sm:$0xf]
    %v2516 = vld [vmem:[%s2326 + $0x2f4] sm:$0xf]
    %v2517 = vld [vmem:[%s2326 + $0x2f8] sm:$0xf]
    %v2518 = vld [vmem:[%s2326 + $0x2fc] sm:$0xf]
    %v2519 = vld [vmem:[%s2326 + $0x300] sm:$0xf]
    %v2520 = vld [vmem:[%s2326 + $0x304] sm:$0xf]
    %v2521 = vld [vmem:[%s2326 + $0x308] sm:$0xf]
    %v2522 = vld [vmem:[%s2326 + $0x30c] sm:$0xf]
    %v2523 = vld [vmem:[%s2326 + $0x310] sm:$0xf]
    %v2524 = vld [vmem:[%s2326 + $0x314] sm:$0xf]
    %v2525 = vld [vmem:[%s2326 + $0x318] sm:$0xf]
    %v2526 = vld [vmem:[%s2326 + $0x31c] sm:$0xf]
    %v2527 = vld [vmem:[%s2326 + $0x320] sm:$0xf]
    %v2528 = vld [vmem:[%s2326 + $0x324] sm:$0xf]
    %v2529 = vld [vmem:[%s2326 + $0x328] sm:$0xf]
    %v2530 = vld [vmem:[%s2326 + $0x32c] sm:$0xf]
    %v2531 = vld [vmem:[%s2326 + $0x330] sm:$0xf]
    %v2532 = vld [vmem:[%s2326 + $0x334] sm:$0xf]
    %v2533 = vld [vmem:[%s2326 + $0x338] sm:$0xf]
    %v2534 = vld [vmem:[%s2326 + $0x33c] sm:$0xf]
    %v2535 = vld [vmem:[%s2326 + $0x340] sm:$0xf]
    %v2536 = vld [vmem:[%s2326 + $0x344] sm:$0xf]
    %v2537 = vld [vmem:[%s2326 + $0x348] sm:$0xf]
    %v2538 = vld [vmem:[%s2326 + $0x34c] sm:$0xf]
    %v2539 = vld [vmem:[%s2326 + $0x350] sm:$0xf]
    %v2540 = vld [vmem:[%s2326 + $0x354] sm:$0xf]
    %v2541 = vld [vmem:[%s2326 + $0x358] sm:$0xf]
    %v2542 = vld [vmem:[%s2326 + $0x35c] sm:$0xf]
    %v2543 = vld [vmem:[%s2326 + $0x360] sm:$0xf]
    %v2544 = vld [vmem:[%s2326 + $0x364] sm:$0xf]
    %v2545 = vld [vmem:[%s2326 + $0x368] sm:$0xf]
    %v2546 = vld [vmem:[%s2326 + $0x36c] sm:$0xf]
    %v2547 = vld [vmem:[%s2326 + $0x370] sm:$0xf]
    %v2548 = vld [vmem:[%s2326 + $0x374] sm:$0xf]
    %v2549 = vld [vmem:[%s2326 + $0x378] sm:$0xf]
    %v2550 = vld [vmem:[%s2326 + $0x37c] sm:$0xf]
    %v2551 = vld [vmem:[%s2326 + $0x380] sm:$0xf]
    %v2552 = vld [vmem:[%s2326 + $0x384] sm:$0xf]
    %v2553 = vld [vmem:[%s2326 + $0x388] sm:$0xf]
    %v2554 = vld [vmem:[%s2326 + $0x38c] sm:$0xf]
    %v2555 = vld [vmem:[%s2326 + $0x390] sm:$0xf]
    %v2556 = vld [vmem:[%s2326 + $0x394] sm:$0xf]
    %v2557 = vld [vmem:[%s2326 + $0x398] sm:$0xf]
    %v2558 = vld [vmem:[%s2326 + $0x39c] sm:$0xf]
    %v2559 = vld [vmem:[%s2326 + $0x3a0] sm:$0xf]
    %v2560 = vld [vmem:[%s2326 + $0x3a4] sm:$0xf]
    %v2561 = vld [vmem:[%s2326 + $0x3a8] sm:$0xf]
    %v2562 = vld [vmem:[%s2326 + $0x3ac] sm:$0xf]
    %v2563 = vld [vmem:[%s2326 + $0x3b0] sm:$0xf]
    %v2564 = vld [vmem:[%s2326 + $0x3b4] sm:$0xf]
    %v2565 = vld [vmem:[%s2326 + $0x3b8] sm:$0xf]
    %v2566 = vld [vmem:[%s2326 + $0x3bc] sm:$0xf]
    %v2567 = vld [vmem:[%s2326 + $0x3c0] sm:$0xf]
    %v2568 = vld [vmem:[%s2326 + $0x3c4] sm:$0xf]
    %v2569 = vld [vmem:[%s2326 + $0x3c8] sm:$0xf]
    %v2570 = vld [vmem:[%s2326 + $0x3cc] sm:$0xf]
    %v2571 = vld [vmem:[%s2326 + $0x3d0] sm:$0xf]
    %v2572 = vld [vmem:[%s2326 + $0x3d4] sm:$0xf]
    %v2573 = vld [vmem:[%s2326 + $0x3d8] sm:$0xf]
    %v2574 = vld [vmem:[%s2326 + $0x3dc] sm:$0xf]
    %v2575 = vld [vmem:[%s2326 + $0x3e0] sm:$0xf]
    %v2576 = vld [vmem:[%s2326 + $0x3e4] sm:$0xf]
    %v2577 = vld [vmem:[%s2326 + $0x3e8] sm:$0xf]
    %v2578 = vld [vmem:[%s2326 + $0x3ec] sm:$0xf]
    %v2579 = vld [vmem:[%s2326 + $0x3f0] sm:$0xf]
    %v2580 = vld [vmem:[%s2326 + $0x3f4] sm:$0xf]
    %v2581 = vld [vmem:[%s2326 + $0x3f8] sm:$0xf]
    %v2582 = vld [vmem:[%s2326 + $0x3fc] sm:$0xf]
    %v2583 = vld [vmem:[%s2326 + $0x400] sm:$0xf]
    %v2584 = vld [vmem:[%s2326 + $0x404] sm:$0xf]
    %v2585 = vld [vmem:[%s2326 + $0x408] sm:$0xf]
    %v2586 = vld [vmem:[%s2326 + $0x40c] sm:$0xf]
    %v2587 = vld [vmem:[%s2326 + $0x410] sm:$0xf]
    %v2588 = vld [vmem:[%s2326 + $0x414] sm:$0xf]
    %v2589 = vld [vmem:[%s2326 + $0x418] sm:$0xf]
    %v2590 = vld [vmem:[%s2326 + $0x41c] sm:$0xf]
    %v2591 = vld [vmem:[%s2326 + $0x420] sm:$0xf]
    %v2592 = vld [vmem:[%s2326 + $0x424] sm:$0xf]
    %v2593 = vld [vmem:[%s2326 + $0x428] sm:$0xf]
    %v2594 = vld [vmem:[%s2326 + $0x42c] sm:$0xf]
    %v2595 = vld [vmem:[%s2326 + $0x430] sm:$0xf]
    %v2596 = vld [vmem:[%s2326 + $0x434] sm:$0xf]
    %v2597 = vld [vmem:[%s2326 + $0x438] sm:$0xf]
    %v2598 = vld [vmem:[%s2326 + $0x43c] sm:$0xf]
    %v2599 = vld [vmem:[%s2326 + $0x440] sm:$0xf]
    %v2600 = vld [vmem:[%s2326 + $0x444] sm:$0xf]
    %v2601 = vld [vmem:[%s2326 + $0x448] sm:$0xf]
    %v2602 = vld [vmem:[%s2326 + $0x44c] sm:$0xf]
    %v2603 = vld [vmem:[%s2326 + $0x450] sm:$0xf]
    %v2604 = vld [vmem:[%s2326 + $0x454] sm:$0xf]
    %v2605 = vld [vmem:[%s2326 + $0x458] sm:$0xf]
    %v2606 = vld [vmem:[%s2326 + $0x45c] sm:$0xf]
    %v2607 = vld [vmem:[%s2326 + $0x460] sm:$0xf]
    %v2608 = vld [vmem:[%s2326 + $0x464] sm:$0xf]
    %v2609 = vld [vmem:[%s2326 + $0x468] sm:$0xf]
    %v2610 = vld [vmem:[%s2326 + $0x46c] sm:$0xf]
    %v2611 = vld [vmem:[%s2326 + $0x470] sm:$0xf]
    %v2612 = vld [vmem:[%s2326 + $0x474] sm:$0xf]
    %v2613 = vld [vmem:[%s2326 + $0x478] sm:$0xf]
    %v2614 = vld [vmem:[%s2326 + $0x47c] sm:$0xf]
    %v2615 = vld [vmem:[%s2326 + $0x480] sm:$0xf]
    %v2616 = vld [vmem:[%s2326 + $0x484] sm:$0xf]
    %v2617 = vld [vmem:[%s2326 + $0x488] sm:$0xf]
    %v2618 = vld [vmem:[%s2326 + $0x48c] sm:$0xf]
    %v2619 = vld [vmem:[%s2326 + $0x490] sm:$0xf]
    %v2620 = vld [vmem:[%s2326 + $0x494] sm:$0xf]
    %v2621 = vld [vmem:[%s2326 + $0x498] sm:$0xf]
    %v2622 = vld [vmem:[%s2326 + $0x49c] sm:$0xf]
    %v2623 = vld [vmem:[%s2326 + $0x4a0] sm:$0xf]
    %v2624 = vld [vmem:[%s2326 + $0x4a4] sm:$0xf]
    %v2625 = vld [vmem:[%s2326 + $0x4a8] sm:$0xf]
    %v2626 = vld [vmem:[%s2326 + $0x4ac] sm:$0xf]
    %v2627 = vld [vmem:[%s2326 + $0x4b0] sm:$0xf]
    %v2628 = vld [vmem:[%s2326 + $0x4b4] sm:$0xf]
    %v2629 = vld [vmem:[%s2326 + $0x4b8] sm:$0xf]
    %v2630 = vld [vmem:[%s2326 + $0x4bc] sm:$0xf]
    %v2631 = vld [vmem:[%s2326 + $0x4c0] sm:$0xf]
    %v2632 = vld [vmem:[%s2326 + $0x4c4] sm:$0xf]
    %v2633 = vld [vmem:[%s2326 + $0x4c8] sm:$0xf]
    %v2634 = vld [vmem:[%s2326 + $0x4cc] sm:$0xf]
    %v2635 = vld [vmem:[%s2326 + $0x4d0] sm:$0xf]
    %v2636 = vld [vmem:[%s2326 + $0x4d4] sm:$0xf]
    %v2637 = vld [vmem:[%s2326 + $0x4d8] sm:$0xf]
    %v2638 = vld [vmem:[%s2326 + $0x4dc] sm:$0xf]
    %v2639 = vld [vmem:[%s2326 + $0x4e0] sm:$0xf]
    %v2640 = vld [vmem:[%s2326 + $0x4e4] sm:$0xf]
    %v2641 = vld [vmem:[%s2326 + $0x4e8] sm:$0xf]
    %v2642 = vld [vmem:[%s2326 + $0x4ec] sm:$0xf]
    %v2643 = vld [vmem:[%s2326 + $0x4f0] sm:$0xf]
    %v2644 = vld [vmem:[%s2326 + $0x4f4] sm:$0xf]
    %v2645 = vld [vmem:[%s2326 + $0x4f8] sm:$0xf]
    %v2646 = vld [vmem:[%s2326 + $0x4fc] sm:$0xf]
    %v2647 = vld [vmem:[%s2326 + $0x500] sm:$0xf]
    %v2648 = vld [vmem:[%s2326 + $0x504] sm:$0xf]
    %v2649 = vld [vmem:[%s2326 + $0x508] sm:$0xf]
    %v2650 = vld [vmem:[%s2326 + $0x50c] sm:$0xf]
    %v2651 = vld [vmem:[%s2326 + $0x510] sm:$0xf]
    %v2652 = vld [vmem:[%s2326 + $0x514] sm:$0xf]
    %v2653 = vld [vmem:[%s2326 + $0x518] sm:$0xf]
    %v2654 = vld [vmem:[%s2326 + $0x51c] sm:$0xf]
    %v2655 = vld [vmem:[%s2326 + $0x520] sm:$0xf]
    %v2656 = vld [vmem:[%s2326 + $0x524] sm:$0xf]
    %v2657 = vld [vmem:[%s2326 + $0x528] sm:$0xf]
    %v2658 = vld [vmem:[%s2326 + $0x52c] sm:$0xf]
    %v2659 = vld [vmem:[%s2326 + $0x530] sm:$0xf]
    %v2660 = vld [vmem:[%s2326 + $0x534] sm:$0xf]
    %v2661 = vld [vmem:[%s2326 + $0x538] sm:$0xf]
    %v2662 = vld [vmem:[%s2326 + $0x53c] sm:$0xf]
    %v2663 = vld [vmem:[%s2326 + $0x540] sm:$0xf]
    %v2664 = vld [vmem:[%s2326 + $0x544] sm:$0xf]
    %v2665 = vld [vmem:[%s2326 + $0x548] sm:$0xf]
    %v2666 = vld [vmem:[%s2326 + $0x54c] sm:$0xf]
    %v2667 = vld [vmem:[%s2326 + $0x550] sm:$0xf]
    %v2668 = vld [vmem:[%s2326 + $0x554] sm:$0xf]
    %v2669 = vld [vmem:[%s2326 + $0x558] sm:$0xf]
    %v2670 = vld [vmem:[%s2326 + $0x55c] sm:$0xf]
    %v2671 = vld [vmem:[%s2326 + $0x560] sm:$0xf]
    %v2672 = vld [vmem:[%s2326 + $0x564] sm:$0xf]
    %v2673 = vld [vmem:[%s2326 + $0x568] sm:$0xf]
    %v2674 = vld [vmem:[%s2326 + $0x56c] sm:$0xf]
    %v2675 = vld [vmem:[%s2326 + $0x570] sm:$0xf]
    %v2676 = vld [vmem:[%s2326 + $0x574] sm:$0xf]
    %v2677 = vld [vmem:[%s2326 + $0x578] sm:$0xf]
    %v2678 = vld [vmem:[%s2326 + $0x57c] sm:$0xf]
    %v2679 = vld [vmem:[%s2326 + $0x580] sm:$0xf]
    %v2680 = vld [vmem:[%s2326 + $0x584] sm:$0xf]
    %v2681 = vld [vmem:[%s2326 + $0x588] sm:$0xf]
    %v2682 = vld [vmem:[%s2326 + $0x58c] sm:$0xf]
    %v2683 = vld [vmem:[%s2326 + $0x590] sm:$0xf]
    %v2684 = vld [vmem:[%s2326 + $0x594] sm:$0xf]
    %v2685 = vld [vmem:[%s2326 + $0x598] sm:$0xf]
    %v2686 = vld [vmem:[%s2326 + $0x59c] sm:$0xf]
    %v2687 = vld [vmem:[%s2326 + $0x5a0] sm:$0xf]
    %v2688 = vld [vmem:[%s2326 + $0x5a4] sm:$0xf]
    %v2689 = vld [vmem:[%s2326 + $0x5a8] sm:$0xf]
    %v2690 = vld [vmem:[%s2326 + $0x5ac] sm:$0xf]
    %v2691 = vld [vmem:[%s2326 + $0x5b0] sm:$0xf]
    %v2692 = vld [vmem:[%s2326 + $0x5b4] sm:$0xf]
    %v2693 = vld [vmem:[%s2326 + $0x5b8] sm:$0xf]
    %v2694 = vld [vmem:[%s2326 + $0x5bc] sm:$0xf]
    %v2695 = vld [vmem:[%s2326 + $0x5c0] sm:$0xf]
    %v2696 = vld [vmem:[%s2326 + $0x5c4] sm:$0xf]
    %v2697 = vld [vmem:[%s2326 + $0x5c8] sm:$0xf]
    %v2698 = vld [vmem:[%s2326 + $0x5cc] sm:$0xf]
    %v2699 = vld [vmem:[%s2326 + $0x5d0] sm:$0xf]
    %v2700 = vld [vmem:[%s2326 + $0x5d4] sm:$0xf]
    %v2701 = vld [vmem:[%s2326 + $0x5d8] sm:$0xf]
    %v2702 = vld [vmem:[%s2326 + $0x5dc] sm:$0xf]
    %v2703 = vld [vmem:[%s2326 + $0x5e0] sm:$0xf]
    %v2704 = vld [vmem:[%s2326 + $0x5e4] sm:$0xf]
    %v2705 = vld [vmem:[%s2326 + $0x5e8] sm:$0xf]
    %v2706 = vld [vmem:[%s2326 + $0x5ec] sm:$0xf]
    %v2707 = vld [vmem:[%s2326 + $0x5f0] sm:$0xf]
    %v2708 = vld [vmem:[%s2326 + $0x5f4] sm:$0xf]
    %v2709 = vld [vmem:[%s2326 + $0x5f8] sm:$0xf]
    %v2710 = vld [vmem:[%s2326 + $0x5fc] sm:$0xf]
    %v2711 = vld [vmem:[%s2326 + $0x600] sm:$0xf]
    %v2712 = vld [vmem:[%s2326 + $0x604] sm:$0xf]
    %v2713 = vld [vmem:[%s2326 + $0x608] sm:$0xf]
    %v2714 = vld [vmem:[%s2326 + $0x60c] sm:$0xf]
    %v2715 = vld [vmem:[%s2326 + $0x610] sm:$0xf]
    %v2716 = vld [vmem:[%s2326 + $0x614] sm:$0xf]
    %v2717 = vld [vmem:[%s2326 + $0x618] sm:$0xf]
    %v2718 = vld [vmem:[%s2326 + $0x61c] sm:$0xf]
    %s2719 = scalar_lea.vmem %s2, 1
    %v2720 = vld [vmem:[%s2719] sm:$0x1]
    %v2722 = vlaneseq
    %v2723 = vshrl.u32 %v2722, 7
    %v2724 = vsub.s32 0, %v2723
    %v2725 = vrot.slane %v2720, %v2724
    %v2731 = vcombine.high %v2322, %v2322
    %v2733 = vunpack.c.l.s4 1966171168
    %v2734 = vunpack.c.0.s8 %v2733
    %v2735 = vlaneseq
    %v2736 = vshrl.u32 %v2735, 7
    %v2737 = vsub.s32 %v2734, %v2736
    %v2738 = vrot.slane %v2322, %v2737
    %v2740 = vunpack.c.l.s4 1966171168
    %v2741 = vunpack.c.0.s8 %v2740
    %v2742 = vlaneseq
    %v2743 = vshrl.u32 %v2742, 7
    %v2744 = vsub.s32 %v2741, %v2743
    %v2745 = vrot.slane %v2731, %v2744
    %v2746 = vcombine.high %v2738, %v2738
    %v2747 = vcombine.high %v2745, %v2745
    %v2749 = vunpack.c.l.s4 1966171168
    %v2750 = vunpack.c.0.s8 %v2749
    %v2751 = vlaneseq
    %v2752 = vshrl.u32 %v2751, 7
    %v2753 = vsub.s32 %v2750, %v2752
    %v2754 = vrot.slane %v2738, %v2753
    %v2756 = vunpack.c.l.s4 1966171168
    %v2757 = vunpack.c.0.s8 %v2756
    %v2758 = vlaneseq
    %v2759 = vshrl.u32 %v2758, 7
    %v2760 = vsub.s32 %v2757, %v2759
    %v2761 = vrot.slane %v2745, %v2760
    %v2763 = vunpack.c.l.s4 1966171168
    %v2764 = vunpack.c.0.s8 %v2763
    %v2765 = vlaneseq
    %v2766 = vshrl.u32 %v2765, 7
    %v2767 = vsub.s32 %v2764, %v2766
    %v2768 = vrot.slane %v2746, %v2767
    %v2770 = vunpack.c.l.s4 1966171168
    %v2771 = vunpack.c.0.s8 %v2770
    %v2772 = vlaneseq
    %v2773 = vshrl.u32 %v2772, 7
    %v2774 = vsub.s32 %v2771, %v2773
    %v2775 = vrot.slane %v2747, %v2774
    %v2776 = vcombine.high %v2754, %v2754
    %v2777 = vcombine.high %v2761, %v2761
    %v2778 = vcombine.high %v2768, %v2768
    %v2779 = vcombine.high %v2775, %v2775
    %v2780 = vcombine.high %v2323, %v2323
    %v2782 = vunpack.c.l.s4 1966171168
    %v2783 = vunpack.c.0.s8 %v2782
    %v2784 = vlaneseq
    %v2785 = vshrl.u32 %v2784, 7
    %v2786 = vsub.s32 %v2783, %v2785
    %v2787 = vrot.slane %v2323, %v2786
    %v2789 = vunpack.c.l.s4 1966171168
    %v2790 = vunpack.c.0.s8 %v2789
    %v2791 = vlaneseq
    %v2792 = vshrl.u32 %v2791, 7
    %v2793 = vsub.s32 %v2790, %v2792
    %v2794 = vrot.slane %v2780, %v2793
    %v2795 = vcombine.high %v2787, %v2787
    %v2796 = vcombine.high %v2794, %v2794
    %v2798 = vunpack.c.l.s4 1966171168
    %v2799 = vunpack.c.0.s8 %v2798
    %v2800 = vlaneseq
    %v2801 = vshrl.u32 %v2800, 7
    %v2802 = vsub.s32 %v2799, %v2801
    %v2803 = vrot.slane %v2787, %v2802
    %v2805 = vunpack.c.l.s4 1966171168
    %v2806 = vunpack.c.0.s8 %v2805
    %v2807 = vlaneseq
    %v2808 = vshrl.u32 %v2807, 7
    %v2809 = vsub.s32 %v2806, %v2808
    %v2810 = vrot.slane %v2794, %v2809
    %v2812 = vunpack.c.l.s4 1966171168
    %v2813 = vunpack.c.0.s8 %v2812
    %v2814 = vlaneseq
    %v2815 = vshrl.u32 %v2814, 7
    %v2816 = vsub.s32 %v2813, %v2815
    %v2817 = vrot.slane %v2795, %v2816
    %v2819 = vunpack.c.l.s4 1966171168
    %v2820 = vunpack.c.0.s8 %v2819
    %v2821 = vlaneseq
    %v2822 = vshrl.u32 %v2821, 7
    %v2823 = vsub.s32 %v2820, %v2822
    %v2824 = vrot.slane %v2796, %v2823
    %v2825 = vcombine.high %v2803, %v2803
    %v2826 = vcombine.high %v2810, %v2810
    %v2827 = vcombine.high %v2817, %v2817
    %v2828 = vcombine.high %v2824, %v2824
    %v2829 = vcombine.high %v2324, %v2324
    %v2831 = vunpack.c.l.s4 1966171168
    %v2832 = vunpack.c.0.s8 %v2831
    %v2833 = vlaneseq
    %v2834 = vshrl.u32 %v2833, 7
    %v2835 = vsub.s32 %v2832, %v2834
    %v2836 = vrot.slane %v2324, %v2835
    %v2838 = vunpack.c.l.s4 1966171168
    %v2839 = vunpack.c.0.s8 %v2838
    %v2840 = vlaneseq
    %v2841 = vshrl.u32 %v2840, 7
    %v2842 = vsub.s32 %v2839, %v2841
    %v2843 = vrot.slane %v2829, %v2842
    %v2844 = vcombine.high %v2836, %v2836
    %v2845 = vcombine.high %v2843, %v2843
    %v2847 = vunpack.c.l.s4 1966171168
    %v2848 = vunpack.c.0.s8 %v2847
    %v2849 = vlaneseq
    %v2850 = vshrl.u32 %v2849, 7
    %v2851 = vsub.s32 %v2848, %v2850
    %v2852 = vrot.slane %v2836, %v2851
    %v2854 = vunpack.c.l.s4 1966171168
    %v2855 = vunpack.c.0.s8 %v2854
    %v2856 = vlaneseq
    %v2857 = vshrl.u32 %v2856, 7
    %v2858 = vsub.s32 %v2855, %v2857
    %v2859 = vrot.slane %v2843, %v2858
    %v2861 = vunpack.c.l.s4 1966171168
    %v2862 = vunpack.c.0.s8 %v2861
    %v2863 = vlaneseq
    %v2864 = vshrl.u32 %v2863, 7
    %v2865 = vsub.s32 %v2862, %v2864
    %v2866 = vrot.slane %v2844, %v2865
    %v2868 = vunpack.c.l.s4 1966171168
    %v2869 = vunpack.c.0.s8 %v2868
    %v2870 = vlaneseq
    %v2871 = vshrl.u32 %v2870, 7
    %v2872 = vsub.s32 %v2869, %v2871
    %v2873 = vrot.slane %v2845, %v2872
    %v2874 = vcombine.high %v2852, %v2852
    %v2875 = vcombine.high %v2859, %v2859
    %v2876 = vcombine.high %v2866, %v2866
    %v2877 = vcombine.high %v2873, %v2873
    %v2879 = vunpack.c.l.s4 1966171168
    %v2880 = vunpack.c.0.s8 %v2879
    %v2881 = vlaneseq
    %v2882 = vshrl.u32 %v2881, 7
    %v2883 = vsub.s32 %v2880, %v2882
    %v2884 = vrot.slane %v2325, %v2883
    %v2886 = vunpack.c.l.s4 1966171168
    %v2887 = vunpack.c.0.s8 %v2886
    %v2888 = vlaneseq
    %v2889 = vshrl.u32 %v2888, 7
    %v2890 = vsub.s32 %v2887, %v2889
    %v2891 = vrot.slane %v2884, %v2890
    %v3308 = vunpack.c.l.b16 %v2327
    %v3309 = vunpack.c.l.b16 %v2328
    %v3310 = vunpack.c.l.b16 %v2329
    %v3311 = vunpack.c.l.b16 %v2330
    %v3312 = vunpack.c.l.b16 %v2331
    %v3313 = vunpack.c.l.b16 %v2332
    %v3314 = vunpack.c.l.b16 %v2333
    %v3315 = vunpack.c.l.b16 %v2334
    %v3316 = vunpack.c.l.b16 %v2335
    %v3317 = vunpack.c.l.b16 %v2336
    %v3318 = vunpack.c.l.b16 %v2337
    %v3319 = vunpack.c.l.b16 %v2338
    %v3320 = vunpack.c.l.b16 %v2339
    %v3321 = vunpack.c.l.b16 %v2340
    %v3322 = vunpack.c.l.b16 %v2341
    %v3323 = vunpack.c.l.b16 %v2342
    %v3324 = vunpack.c.l.b16 %v2343
    %v3325 = vunpack.c.l.b16 %v2344
    %v3326 = vunpack.c.l.b16 %v2345
    %v3327 = vunpack.c.l.b16 %v2346
    %v3328 = vunpack.c.l.b16 %v2347
    %v3329 = vunpack.c.l.b16 %v2348
    %v3330 = vunpack.c.l.b16 %v2349
    %v3331 = vunpack.c.l.b16 %v2350
    %v3332 = vunpack.c.l.b16 %v2351
    %v3333 = vunpack.c.l.b16 %v2352
    %v3334 = vunpack.c.l.b16 %v2353
    %v3335 = vunpack.c.l.b16 %v2354
    %v3336 = vunpack.c.l.b16 %v2355
    %v3337 = vunpack.c.l.b16 %v2356
    %v3338 = vunpack.c.l.b16 %v2357
    %v3339 = vunpack.c.l.b16 %v2358
    %v3340 = vunpack.c.l.b16 %v2359
    %v3341 = vunpack.c.l.b16 %v2360
    %v3342 = vunpack.c.l.b16 %v2361
    %v3343 = vunpack.c.l.b16 %v2362
    %v3344 = vunpack.c.l.b16 %v2363
    %v3345 = vunpack.c.l.b16 %v2364
    %v3346 = vunpack.c.l.b16 %v2365
    %v3347 = vunpack.c.l.b16 %v2366
    %v3348 = vunpack.c.l.b16 %v2367
    %v3349 = vunpack.c.l.b16 %v2368
    %v3350 = vunpack.c.l.b16 %v2369
    %v3351 = vunpack.c.l.b16 %v2370
    %v3352 = vunpack.c.l.b16 %v2371
    %v3353 = vunpack.c.l.b16 %v2372
    %v3354 = vunpack.c.l.b16 %v2373
    %v3355 = vunpack.c.l.b16 %v2374
    %v3356 = vunpack.c.l.b16 %v2375
    %v3357 = vunpack.c.l.b16 %v2376
    %v3358 = vunpack.c.l.b16 %v2377
    %v3359 = vunpack.c.l.b16 %v2378
    %v3360 = vunpack.c.l.b16 %v2379
    %v3361 = vunpack.c.l.b16 %v2380
    %v3362 = vunpack.c.l.b16 %v2381
    %v3363 = vunpack.c.l.b16 %v2382
    %v3364 = vunpack.c.l.b16 %v2383
    %v3365 = vunpack.c.l.b16 %v2384
    %v3366 = vunpack.c.l.b16 %v2385
    %v3367 = vunpack.c.l.b16 %v2386
    %v3368 = vunpack.c.l.b16 %v2387
    %v3369 = vunpack.c.l.b16 %v2388
    %v3370 = vunpack.c.l.b16 %v2389
    %v3371 = vunpack.c.l.b16 %v2390
    %v3372 = vunpack.c.l.b16 %v2391
    %v3373 = vunpack.c.l.b16 %v2392
    %v3374 = vunpack.c.l.b16 %v2393
    %v3375 = vunpack.c.l.b16 %v2394
    %v3376 = vunpack.c.l.b16 %v2395
    %v3377 = vunpack.c.l.b16 %v2396
    %v3378 = vunpack.c.l.b16 %v2397
    %v3379 = vunpack.c.l.b16 %v2398
    %v3380 = vunpack.c.l.b16 %v2399
    %v3381 = vunpack.c.l.b16 %v2400
    %v3382 = vunpack.c.l.b16 %v2401
    %v3383 = vunpack.c.l.b16 %v2402
    %v3384 = vunpack.c.l.b16 %v2403
    %v3385 = vunpack.c.l.b16 %v2404
    %v3386 = vunpack.c.l.b16 %v2405
    %v3387 = vunpack.c.l.b16 %v2406
    %v3388 = vunpack.c.l.b16 %v2407
    %v3389 = vunpack.c.l.b16 %v2408
    %v3390 = vunpack.c.l.b16 %v2409
    %v3391 = vunpack.c.l.b16 %v2410
    %v3392 = vunpack.c.l.b16 %v2411
    %v3393 = vunpack.c.l.b16 %v2412
    %v3394 = vunpack.c.l.b16 %v2413
    %v3395 = vunpack.c.l.b16 %v2414
    %v3396 = vunpack.c.l.b16 %v2415
    %v3397 = vunpack.c.l.b16 %v2416
    %v3398 = vunpack.c.l.b16 %v2417
    %v3399 = vunpack.c.l.b16 %v2418
    %v3400 = vunpack.c.l.b16 %v2419
    %v3401 = vunpack.c.l.b16 %v2420
    %v3402 = vunpack.c.l.b16 %v2421
    %v3403 = vunpack.c.l.b16 %v2422
    %v3404 = vunpack.c.l.b16 %v2423
    %v3405 = vunpack.c.l.b16 %v2424
    %v3406 = vunpack.c.l.b16 %v2425
    %v3407 = vunpack.c.l.b16 %v2426
    %v3408 = vunpack.c.l.b16 %v2427
    %v3409 = vunpack.c.l.b16 %v2428
    %v3410 = vunpack.c.l.b16 %v2429
    %v3411 = vunpack.c.l.b16 %v2430
    %v3412 = vunpack.c.l.b16 %v2431
    %v3413 = vunpack.c.l.b16 %v2432
    %v3414 = vunpack.c.l.b16 %v2433
    %v3415 = vunpack.c.l.b16 %v2434
    %v3416 = vunpack.c.l.b16 %v2435
    %v3417 = vunpack.c.l.b16 %v2436
    %v3418 = vunpack.c.l.b16 %v2437
    %v3419 = vunpack.c.l.b16 %v2438
    %v3420 = vunpack.c.l.b16 %v2439
    %v3421 = vunpack.c.l.b16 %v2440
    %v3422 = vunpack.c.l.b16 %v2441
    %v3423 = vunpack.c.l.b16 %v2442
    %v3424 = vunpack.c.l.b16 %v2443
    %v3425 = vunpack.c.l.b16 %v2444
    %v3426 = vunpack.c.l.b16 %v2445
    %v3427 = vunpack.c.l.b16 %v2446
    %v3428 = vunpack.c.l.b16 %v2447
    %v3429 = vunpack.c.l.b16 %v2448
    %v3430 = vunpack.c.l.b16 %v2449
    %v3431 = vunpack.c.l.b16 %v2450
    %v3432 = vunpack.c.l.b16 %v2451
    %v3433 = vunpack.c.l.b16 %v2452
    %v3434 = vunpack.c.l.b16 %v2453
    %v3435 = vunpack.c.l.b16 %v2454
    %v3436 = vunpack.c.l.b16 %v2455
    %v3437 = vunpack.c.l.b16 %v2456
    %v3438 = vunpack.c.l.b16 %v2457
    %v3439 = vunpack.c.l.b16 %v2458
    %v3440 = vunpack.c.l.b16 %v2459
    %v3441 = vunpack.c.l.b16 %v2460
    %v3442 = vunpack.c.l.b16 %v2461
    %v3443 = vunpack.c.l.b16 %v2462
    %v3444 = vunpack.c.l.b16 %v2463
    %v3445 = vunpack.c.l.b16 %v2464
    %v3446 = vunpack.c.l.b16 %v2465
    %v3447 = vunpack.c.l.b16 %v2466
    %v3448 = vunpack.c.l.b16 %v2467
    %v3449 = vunpack.c.l.b16 %v2468
    %v3450 = vunpack.c.l.b16 %v2469
    %v3451 = vunpack.c.l.b16 %v2470
    %v3452 = vunpack.c.l.b16 %v2471
    %v3453 = vunpack.c.l.b16 %v2472
    %v3454 = vunpack.c.l.b16 %v2473
    %v3455 = vunpack.c.l.b16 %v2474
    %v3456 = vunpack.c.l.b16 %v2475
    %v3457 = vunpack.c.l.b16 %v2476
    %v3458 = vunpack.c.l.b16 %v2477
    %v3459 = vunpack.c.l.b16 %v2478
    %v3460 = vunpack.c.l.b16 %v2479
    %v3461 = vunpack.c.l.b16 %v2480
    %v3462 = vunpack.c.l.b16 %v2481
    %v3463 = vunpack.c.l.b16 %v2482
    %v3464 = vunpack.c.l.b16 %v2483
    %v3465 = vunpack.c.l.b16 %v2484
    %v3466 = vunpack.c.l.b16 %v2485
    %v3467 = vunpack.c.l.b16 %v2486
    %v3468 = vunpack.c.l.b16 %v2487
    %v3469 = vunpack.c.l.b16 %v2488
    %v3470 = vunpack.c.l.b16 %v2489
    %v3471 = vunpack.c.l.b16 %v2490
    %v3472 = vunpack.c.l.b16 %v2491
    %v3473 = vunpack.c.l.b16 %v2492
    %v3474 = vunpack.c.l.b16 %v2493
    %v3475 = vunpack.c.l.b16 %v2494
    %v3476 = vunpack.c.l.b16 %v2495
    %v3477 = vunpack.c.l.b16 %v2496
    %v3478 = vunpack.c.l.b16 %v2497
    %v3479 = vunpack.c.l.b16 %v2498
    %v3480 = vunpack.c.l.b16 %v2499
    %v3481 = vunpack.c.l.b16 %v2500
    %v3482 = vunpack.c.l.b16 %v2501
    %v3483 = vunpack.c.l.b16 %v2502
    %v3484 = vunpack.c.l.b16 %v2503
    %v3485 = vunpack.c.l.b16 %v2504
    %v3486 = vunpack.c.l.b16 %v2505
    %v3487 = vunpack.c.l.b16 %v2506
    %v3488 = vunpack.c.l.b16 %v2507
    %v3489 = vunpack.c.l.b16 %v2508
    %v3490 = vunpack.c.l.b16 %v2509
    %v3491 = vunpack.c.l.b16 %v2510
    %v3492 = vunpack.c.l.b16 %v2511
    %v3493 = vunpack.c.l.b16 %v2512
    %v3494 = vunpack.c.l.b16 %v2513
    %v3495 = vunpack.c.l.b16 %v2514
    %v3496 = vunpack.c.l.b16 %v2515
    %v3497 = vunpack.c.l.b16 %v2516
    %v3498 = vunpack.c.l.b16 %v2517
    %v3499 = vunpack.c.l.b16 %v2518
    %v3500 = vunpack.c.l.b16 %v2519
    %v3501 = vunpack.c.l.b16 %v2520
    %v3502 = vunpack.c.l.b16 %v2521
    %v3503 = vunpack.c.l.b16 %v2522
    %v3504 = vunpack.c.l.b16 %v2523
    %v3505 = vunpack.c.l.b16 %v2524
    %v3506 = vunpack.c.l.b16 %v2525
    %v3507 = vunpack.c.l.b16 %v2526
    %v3508 = vunpack.c.l.b16 %v2527
    %v3509 = vunpack.c.l.b16 %v2528
    %v3510 = vunpack.c.l.b16 %v2529
    %v3511 = vunpack.c.l.b16 %v2530
    %v3512 = vunpack.c.l.b16 %v2531
    %v3513 = vunpack.c.l.b16 %v2532
    %v3514 = vunpack.c.l.b16 %v2533
    %v3515 = vunpack.c.l.b16 %v2534
    %v3516 = vunpack.c.l.b16 %v2535
    %v3517 = vunpack.c.l.b16 %v2536
    %v3518 = vunpack.c.l.b16 %v2537
    %v3519 = vunpack.c.l.b16 %v2538
    %v3520 = vunpack.c.l.b16 %v2539
    %v3521 = vunpack.c.l.b16 %v2540
    %v3522 = vunpack.c.l.b16 %v2541
    %v3523 = vunpack.c.l.b16 %v2542
    %v3524 = vunpack.c.l.b16 %v2543
    %v3525 = vunpack.c.l.b16 %v2544
    %v3526 = vunpack.c.l.b16 %v2545
    %v3527 = vunpack.c.l.b16 %v2546
    %v3528 = vunpack.c.l.b16 %v2547
    %v3529 = vunpack.c.l.b16 %v2548
    %v3530 = vunpack.c.l.b16 %v2549
    %v3531 = vunpack.c.l.b16 %v2550
    %v3532 = vunpack.c.l.b16 %v2551
    %v3533 = vunpack.c.l.b16 %v2552
    %v3534 = vunpack.c.l.b16 %v2553
    %v3535 = vunpack.c.l.b16 %v2554
    %v3536 = vunpack.c.l.b16 %v2555
    %v3537 = vunpack.c.l.b16 %v2556
    %v3538 = vunpack.c.l.b16 %v2557
    %v3539 = vunpack.c.l.b16 %v2558
    %v3540 = vunpack.c.l.b16 %v2559
    %v3541 = vunpack.c.l.b16 %v2560
    %v3542 = vunpack.c.l.b16 %v2561
    %v3543 = vunpack.c.l.b16 %v2562
    %v3544 = vunpack.c.l.b16 %v2563
    %v3545 = vunpack.c.l.b16 %v2564
    %v3546 = vunpack.c.l.b16 %v2565
    %v3547 = vunpack.c.l.b16 %v2566
    %v3548 = vunpack.c.l.b16 %v2567
    %v3549 = vunpack.c.l.b16 %v2568
    %v3550 = vunpack.c.l.b16 %v2569
    %v3551 = vunpack.c.l.b16 %v2570
    %v3552 = vunpack.c.l.b16 %v2571
    %v3553 = vunpack.c.l.b16 %v2572
    %v3554 = vunpack.c.l.b16 %v2573
    %v3555 = vunpack.c.l.b16 %v2574
    %v3556 = vunpack.c.l.b16 %v2575
    %v3557 = vunpack.c.l.b16 %v2576
    %v3558 = vunpack.c.l.b16 %v2577
    %v3559 = vunpack.c.l.b16 %v2578
    %v3560 = vunpack.c.l.b16 %v2579
    %v3561 = vunpack.c.l.b16 %v2580
    %v3562 = vunpack.c.l.b16 %v2581
    %v3563 = vunpack.c.l.b16 %v2582
    %v3564 = vunpack.c.l.b16 %v2583
    %v3565 = vunpack.c.l.b16 %v2584
    %v3566 = vunpack.c.l.b16 %v2585
    %v3567 = vunpack.c.l.b16 %v2586
    %v3568 = vunpack.c.l.b16 %v2587
    %v3569 = vunpack.c.l.b16 %v2588
    %v3570 = vunpack.c.l.b16 %v2589
    %v3571 = vunpack.c.l.b16 %v2590
    %v3572 = vunpack.c.l.b16 %v2591
    %v3573 = vunpack.c.l.b16 %v2592
    %v3574 = vunpack.c.l.b16 %v2593
    %v3575 = vunpack.c.l.b16 %v2594
    %v3576 = vunpack.c.l.b16 %v2595
    %v3577 = vunpack.c.l.b16 %v2596
    %v3578 = vunpack.c.l.b16 %v2597
    %v3579 = vunpack.c.l.b16 %v2598
    %v3580 = vunpack.c.l.b16 %v2599
    %v3581 = vunpack.c.l.b16 %v2600
    %v3582 = vunpack.c.l.b16 %v2601
    %v3583 = vunpack.c.l.b16 %v2602
    %v3584 = vunpack.c.l.b16 %v2603
    %v3585 = vunpack.c.l.b16 %v2604
    %v3586 = vunpack.c.l.b16 %v2605
    %v3587 = vunpack.c.l.b16 %v2606
    %v3588 = vunpack.c.l.b16 %v2607
    %v3589 = vunpack.c.l.b16 %v2608
    %v3590 = vunpack.c.l.b16 %v2609
    %v3591 = vunpack.c.l.b16 %v2610
    %v3592 = vunpack.c.l.b16 %v2611
    %v3593 = vunpack.c.l.b16 %v2612
    %v3594 = vunpack.c.l.b16 %v2613
    %v3595 = vunpack.c.l.b16 %v2614
    %v3596 = vunpack.c.l.b16 %v2615
    %v3597 = vunpack.c.l.b16 %v2616
    %v3598 = vunpack.c.l.b16 %v2617
    %v3599 = vunpack.c.l.b16 %v2618
    %v3600 = vunpack.c.l.b16 %v2619
    %v3601 = vunpack.c.l.b16 %v2620
    %v3602 = vunpack.c.l.b16 %v2621
    %v3603 = vunpack.c.l.b16 %v2622
    %v3604 = vunpack.c.l.b16 %v2623
    %v3605 = vunpack.c.l.b16 %v2624
    %v3606 = vunpack.c.l.b16 %v2625
    %v3607 = vunpack.c.l.b16 %v2626
    %v3608 = vunpack.c.l.b16 %v2627
    %v3609 = vunpack.c.l.b16 %v2628
    %v3610 = vunpack.c.l.b16 %v2629
    %v3611 = vunpack.c.l.b16 %v2630
    %v3612 = vunpack.c.l.b16 %v2631
    %v3613 = vunpack.c.l.b16 %v2632
    %v3614 = vunpack.c.l.b16 %v2633
    %v3615 = vunpack.c.l.b16 %v2634
    %v3616 = vunpack.c.l.b16 %v2635
    %v3617 = vunpack.c.l.b16 %v2636
    %v3618 = vunpack.c.l.b16 %v2637
    %v3619 = vunpack.c.l.b16 %v2638
    %v3620 = vunpack.c.l.b16 %v2639
    %v3621 = vunpack.c.l.b16 %v2640
    %v3622 = vunpack.c.l.b16 %v2641
    %v3623 = vunpack.c.l.b16 %v2642
    %v3624 = vunpack.c.l.b16 %v2643
    %v3625 = vunpack.c.l.b16 %v2644
    %v3626 = vunpack.c.l.b16 %v2645
    %v3627 = vunpack.c.l.b16 %v2646
    %v3628 = vunpack.c.l.b16 %v2647
    %v3629 = vunpack.c.l.b16 %v2648
    %v3630 = vunpack.c.l.b16 %v2649
    %v3631 = vunpack.c.l.b16 %v2650
    %v3632 = vunpack.c.l.b16 %v2651
    %v3633 = vunpack.c.l.b16 %v2652
    %v3634 = vunpack.c.l.b16 %v2653
    %v3635 = vunpack.c.l.b16 %v2654
    %v3636 = vunpack.c.l.b16 %v2655
    %v3637 = vunpack.c.l.b16 %v2656
    %v3638 = vunpack.c.l.b16 %v2657
    %v3639 = vunpack.c.l.b16 %v2658
    %v3640 = vunpack.c.l.b16 %v2659
    %v3641 = vunpack.c.l.b16 %v2660
    %v3642 = vunpack.c.l.b16 %v2661
    %v3643 = vunpack.c.l.b16 %v2662
    %v3644 = vunpack.c.l.b16 %v2663
    %v3645 = vunpack.c.l.b16 %v2664
    %v3646 = vunpack.c.l.b16 %v2665
    %v3647 = vunpack.c.l.b16 %v2666
    %v3648 = vunpack.c.l.b16 %v2667
    %v3649 = vunpack.c.l.b16 %v2668
    %v3650 = vunpack.c.l.b16 %v2669
    %v3651 = vunpack.c.l.b16 %v2670
    %v3652 = vunpack.c.l.b16 %v2671
    %v3653 = vunpack.c.l.b16 %v2672
    %v3654 = vunpack.c.l.b16 %v2673
    %v3655 = vunpack.c.l.b16 %v2674
    %v3656 = vunpack.c.l.b16 %v2675
    %v3657 = vunpack.c.l.b16 %v2676
    %v3658 = vunpack.c.l.b16 %v2677
    %v3659 = vunpack.c.l.b16 %v2678
    %v3660 = vunpack.c.l.b16 %v2679
    %v3661 = vunpack.c.l.b16 %v2680
    %v3662 = vunpack.c.l.b16 %v2681
    %v3663 = vunpack.c.l.b16 %v2682
    %v3664 = vunpack.c.l.b16 %v2683
    %v3665 = vunpack.c.l.b16 %v2684
    %v3666 = vunpack.c.l.b16 %v2685
    %v3667 = vunpack.c.l.b16 %v2686
    %v3668 = vunpack.c.l.b16 %v2687
    %v3669 = vunpack.c.l.b16 %v2688
    %v3670 = vunpack.c.l.b16 %v2689
    %v3671 = vunpack.c.l.b16 %v2690
    %v3672 = vunpack.c.l.b16 %v2691
    %v3673 = vunpack.c.l.b16 %v2692
    %v3674 = vunpack.c.l.b16 %v2693
    %v3675 = vunpack.c.l.b16 %v2694
    %v3676 = vunpack.c.l.b16 %v2695
    %v3677 = vunpack.c.l.b16 %v2696
    %v3678 = vunpack.c.l.b16 %v2697
    %v3679 = vunpack.c.l.b16 %v2698
    %v3680 = vunpack.c.l.b16 %v2699
    %v3681 = vunpack.c.l.b16 %v2700
    %v3682 = vunpack.c.l.b16 %v2701
    %v3683 = vunpack.c.l.b16 %v2702
    %v3684 = vunpack.c.l.b16 %v2703
    %v3685 = vunpack.c.l.b16 %v2704
    %v3686 = vunpack.c.l.b16 %v2705
    %v3687 = vunpack.c.l.b16 %v2706
    %v3688 = vunpack.c.l.b16 %v2707
    %v3689 = vunpack.c.l.b16 %v2708
    %v3690 = vunpack.c.l.b16 %v2709
    %v3691 = vunpack.c.l.b16 %v2710
    %v3692 = vunpack.c.l.b16 %v2711
    %v3693 = vunpack.c.l.b16 %v2712
    %v3694 = vunpack.c.l.b16 %v2713
    %v3695 = vunpack.c.l.b16 %v2714
    %v3696 = vunpack.c.l.b16 %v2715
    %v3697 = vunpack.c.l.b16 %v2716
    %v3698 = vunpack.c.l.b16 %v2717
    %v3699 = vunpack.c.l.b16 %v2718
    %v3700 = vpack.c.b16 %v3309, %v3308
    %v3701 = vpack.c.b16 %v3311, %v3310
    %v3702 = vpack.c.b16 %v3313, %v3312
    %v3703 = vpack.c.b16 %v3315, %v3314
    %v3704 = vpack.c.b16 %v3317, %v3316
    %v3705 = vpack.c.b16 %v3319, %v3318
    %v3706 = vpack.c.b16 %v3321, %v3320
    %v3707 = vpack.c.b16 %v3323, %v3322
    %v3708 = vpack.c.b16 %v3325, %v3324
    %v3709 = vpack.c.b16 %v3327, %v3326
    %v3710 = vpack.c.b16 %v3329, %v3328
    %v3711 = vpack.c.b16 %v3331, %v3330
    %v3712 = vpack.c.b16 %v3333, %v3332
    %v3713 = vpack.c.b16 %v3335, %v3334
    %v3714 = vpack.c.b16 %v3337, %v3336
    %v3715 = vpack.c.b16 %v3339, %v3338
    %v3716 = vpack.c.b16 %v3341, %v3340
    %v3717 = vpack.c.b16 %v3343, %v3342
    %v3718 = vpack.c.b16 %v3345, %v3344
    %v3719 = vpack.c.b16 %v3347, %v3346
    %v3720 = vpack.c.b16 %v3349, %v3348
    %v3721 = vpack.c.b16 %v3351, %v3350
    %v3722 = vpack.c.b16 %v3353, %v3352
    %v3723 = vpack.c.b16 %v3355, %v3354
    %v3724 = vpack.c.b16 %v3357, %v3356
    %v3725 = vpack.c.b16 %v3359, %v3358
    %v3726 = vpack.c.b16 %v3361, %v3360
    %v3727 = vpack.c.b16 %v3363, %v3362
    %v3728 = vpack.c.b16 %v3365, %v3364
    %v3729 = vpack.c.b16 %v3367, %v3366
    %v3730 = vpack.c.b16 %v3369, %v3368
    %v3731 = vpack.c.b16 %v3371, %v3370
    %v3732 = vpack.c.b16 %v3373, %v3372
    %v3733 = vpack.c.b16 %v3375, %v3374
    %v3734 = vpack.c.b16 %v3377, %v3376
    %v3735 = vpack.c.b16 %v3379, %v3378
    %v3736 = vpack.c.b16 %v3381, %v3380
    %v3737 = vpack.c.b16 %v3383, %v3382
    %v3738 = vpack.c.b16 %v3385, %v3384
    %v3739 = vpack.c.b16 %v3387, %v3386
    %v3740 = vpack.c.b16 %v3389, %v3388
    %v3741 = vpack.c.b16 %v3391, %v3390
    %v3742 = vpack.c.b16 %v3393, %v3392
    %v3743 = vpack.c.b16 %v3395, %v3394
    %v3744 = vpack.c.b16 %v3397, %v3396
    %v3745 = vpack.c.b16 %v3399, %v3398
    %v3746 = vpack.c.b16 %v3401, %v3400
    %v3747 = vpack.c.b16 %v3403, %v3402
    %v3748 = vpack.c.b16 %v3405, %v3404
    %v3749 = vpack.c.b16 %v3407, %v3406
    %v3750 = vpack.c.b16 %v3409, %v3408
    %v3751 = vpack.c.b16 %v3411, %v3410
    %v3752 = vpack.c.b16 %v3413, %v3412
    %v3753 = vpack.c.b16 %v3415, %v3414
    %v3754 = vpack.c.b16 %v3417, %v3416
    %v3755 = vpack.c.b16 %v3419, %v3418
    %v3756 = vpack.c.b16 %v3421, %v3420
    %v3757 = vpack.c.b16 %v3423, %v3422
    %v3758 = vpack.c.b16 %v3425, %v3424
    %v3759 = vpack.c.b16 %v3427, %v3426
    %v3760 = vpack.c.b16 %v3429, %v3428
    %v3761 = vpack.c.b16 %v3431, %v3430
    %v3762 = vpack.c.b16 %v3433, %v3432
    %v3763 = vpack.c.b16 %v3435, %v3434
    %v3764 = vpack.c.b16 %v3437, %v3436
    %v3765 = vpack.c.b16 %v3439, %v3438
    %v3766 = vpack.c.b16 %v3441, %v3440
    %v3767 = vpack.c.b16 %v3443, %v3442
    %v3768 = vpack.c.b16 %v3445, %v3444
    %v3769 = vpack.c.b16 %v3447, %v3446
    %v3770 = vpack.c.b16 %v3449, %v3448
    %v3771 = vpack.c.b16 %v3451, %v3450
    %v3772 = vpack.c.b16 %v3453, %v3452
    %v3773 = vpack.c.b16 %v3455, %v3454
    %v3774 = vpack.c.b16 %v3457, %v3456
    %v3775 = vpack.c.b16 %v3459, %v3458
    %v3776 = vpack.c.b16 %v3461, %v3460
    %v3777 = vpack.c.b16 %v3463, %v3462
    %v3778 = vpack.c.b16 %v3465, %v3464
    %v3779 = vpack.c.b16 %v3467, %v3466
    %v3780 = vpack.c.b16 %v3469, %v3468
    %v3781 = vpack.c.b16 %v3471, %v3470
    %v3782 = vpack.c.b16 %v3473, %v3472
    %v3783 = vpack.c.b16 %v3475, %v3474
    %v3784 = vpack.c.b16 %v3477, %v3476
    %v3785 = vpack.c.b16 %v3479, %v3478
    %v3786 = vpack.c.b16 %v3481, %v3480
    %v3787 = vpack.c.b16 %v3483, %v3482
    %v3788 = vpack.c.b16 %v3485, %v3484
    %v3789 = vpack.c.b16 %v3487, %v3486
    %v3790 = vpack.c.b16 %v3489, %v3488
    %v3791 = vpack.c.b16 %v3491, %v3490
    %v3792 = vpack.c.b16 %v3493, %v3492
    %v3793 = vpack.c.b16 %v3495, %v3494
    %v3794 = vpack.c.b16 %v3497, %v3496
    %v3795 = vpack.c.b16 %v3499, %v3498
    %v3796 = vpack.c.b16 %v3501, %v3500
    %v3797 = vpack.c.b16 %v3503, %v3502
    %v3798 = vpack.c.b16 %v3505, %v3504
    %v3799 = vpack.c.b16 %v3507, %v3506
    %v3800 = vpack.c.b16 %v3509, %v3508
    %v3801 = vpack.c.b16 %v3511, %v3510
    %v3802 = vpack.c.b16 %v3513, %v3512
    %v3803 = vpack.c.b16 %v3515, %v3514
    %v3804 = vpack.c.b16 %v3517, %v3516
    %v3805 = vpack.c.b16 %v3519, %v3518
    %v3806 = vpack.c.b16 %v3521, %v3520
    %v3807 = vpack.c.b16 %v3523, %v3522
    %v3808 = vpack.c.b16 %v3525, %v3524
    %v3809 = vpack.c.b16 %v3527, %v3526
    %v3810 = vpack.c.b16 %v3529, %v3528
    %v3811 = vpack.c.b16 %v3531, %v3530
    %v3812 = vpack.c.b16 %v3533, %v3532
    %v3813 = vpack.c.b16 %v3535, %v3534
    %v3814 = vpack.c.b16 %v3537, %v3536
    %v3815 = vpack.c.b16 %v3539, %v3538
    %v3816 = vpack.c.b16 %v3541, %v3540
    %v3817 = vpack.c.b16 %v3543, %v3542
    %v3818 = vpack.c.b16 %v3545, %v3544
    %v3819 = vpack.c.b16 %v3547, %v3546
    %v3820 = vpack.c.b16 %v3549, %v3548
    %v3821 = vpack.c.b16 %v3551, %v3550
    %v3822 = vpack.c.b16 %v3553, %v3552
    %v3823 = vpack.c.b16 %v3555, %v3554
    %v3824 = vpack.c.b16 %v3557, %v3556
    %v3825 = vpack.c.b16 %v3559, %v3558
    %v3826 = vpack.c.b16 %v3561, %v3560
    %v3827 = vpack.c.b16 %v3563, %v3562
    %v3828 = vpack.c.b16 %v3565, %v3564
    %v3829 = vpack.c.b16 %v3567, %v3566
    %v3830 = vpack.c.b16 %v3569, %v3568
    %v3831 = vpack.c.b16 %v3571, %v3570
    %v3832 = vpack.c.b16 %v3573, %v3572
    %v3833 = vpack.c.b16 %v3575, %v3574
    %v3834 = vpack.c.b16 %v3577, %v3576
    %v3835 = vpack.c.b16 %v3579, %v3578
    %v3836 = vpack.c.b16 %v3581, %v3580
    %v3837 = vpack.c.b16 %v3583, %v3582
    %v3838 = vpack.c.b16 %v3585, %v3584
    %v3839 = vpack.c.b16 %v3587, %v3586
    %v3840 = vpack.c.b16 %v3589, %v3588
    %v3841 = vpack.c.b16 %v3591, %v3590
    %v3842 = vpack.c.b16 %v3593, %v3592
    %v3843 = vpack.c.b16 %v3595, %v3594
    %v3844 = vpack.c.b16 %v3597, %v3596
    %v3845 = vpack.c.b16 %v3599, %v3598
    %v3846 = vpack.c.b16 %v3601, %v3600
    %v3847 = vpack.c.b16 %v3603, %v3602
    %v3848 = vpack.c.b16 %v3605, %v3604
    %v3849 = vpack.c.b16 %v3607, %v3606
    %v3850 = vpack.c.b16 %v3609, %v3608
    %v3851 = vpack.c.b16 %v3611, %v3610
    %v3852 = vpack.c.b16 %v3613, %v3612
    %v3853 = vpack.c.b16 %v3615, %v3614
    %v3854 = vpack.c.b16 %v3617, %v3616
    %v3855 = vpack.c.b16 %v3619, %v3618
    %v3856 = vpack.c.b16 %v3621, %v3620
    %v3857 = vpack.c.b16 %v3623, %v3622
    %v3858 = vpack.c.b16 %v3625, %v3624
    %v3859 = vpack.c.b16 %v3627, %v3626
    %v3860 = vpack.c.b16 %v3629, %v3628
    %v3861 = vpack.c.b16 %v3631, %v3630
    %v3862 = vpack.c.b16 %v3633, %v3632
    %v3863 = vpack.c.b16 %v3635, %v3634
    %v3864 = vpack.c.b16 %v3637, %v3636
    %v3865 = vpack.c.b16 %v3639, %v3638
    %v3866 = vpack.c.b16 %v3641, %v3640
    %v3867 = vpack.c.b16 %v3643, %v3642
    %v3868 = vpack.c.b16 %v3645, %v3644
    %v3869 = vpack.c.b16 %v3647, %v3646
    %v3870 = vpack.c.b16 %v3649, %v3648
    %v3871 = vpack.c.b16 %v3651, %v3650
    %v3872 = vpack.c.b16 %v3653, %v3652
    %v3873 = vpack.c.b16 %v3655, %v3654
    %v3874 = vpack.c.b16 %v3657, %v3656
    %v3875 = vpack.c.b16 %v3659, %v3658
    %v3876 = vpack.c.b16 %v3661, %v3660
    %v3877 = vpack.c.b16 %v3663, %v3662
    %v3878 = vpack.c.b16 %v3665, %v3664
    %v3879 = vpack.c.b16 %v3667, %v3666
    %v3880 = vpack.c.b16 %v3669, %v3668
    %v3881 = vpack.c.b16 %v3671, %v3670
    %v3882 = vpack.c.b16 %v3673, %v3672
    %v3883 = vpack.c.b16 %v3675, %v3674
    %v3884 = vpack.c.b16 %v3677, %v3676
    %v3885 = vpack.c.b16 %v3679, %v3678
    %v3886 = vpack.c.b16 %v3681, %v3680
    %v3887 = vpack.c.b16 %v3683, %v3682
    %v3888 = vpack.c.b16 %v3685, %v3684
    %v3889 = vpack.c.b16 %v3687, %v3686
    %v3890 = vpack.c.b16 %v3689, %v3688
    %v3891 = vpack.c.b16 %v3691, %v3690
    %v3892 = vpack.c.b16 %v3693, %v3692
    %v3893 = vpack.c.b16 %v3695, %v3694
    %v3894 = vpack.c.b16 %v3697, %v3696
    %v3895 = vpack.c.b16 %v3699, %v3698
    %v4093 = vsel %vm1796, %v2891, 0
    %4095 = vmatprep.subr.bf16.mxu0 0
    %4096 = vmatpush1.bf16.msra.mxu0 %v3707
    %4097 = vmatprep.subr.bf16.mxu0 0
    %4098 = vmatpush1.bf16.msra.mxu0 %v3706
    %4099 = vmatprep.subr.bf16.mxu0 0
    %4100 = vmatpush1.bf16.msra.mxu0 %v3705
    %4101 = vmatprep.subr.bf16.mxu0 0
    %4102 = vmatpush1.bf16.msra.mxu0 %v3704
    %4103 = vmatprep.subr.bf16.mxu0 0
    %4104 = vmatpush1.bf16.msra.mxu0 %v3703
    %4105 = vmatprep.subr.bf16.mxu0 0
    %4106 = vmatpush1.bf16.msra.mxu0 %v3702
    %4107 = vmatprep.subr.bf16.mxu0 0
    %4108 = vmatpush1.bf16.msra.mxu0 %v3701
    %4109 = vmatprep.subr.bf16.mxu0 0
    %4110 = vmatpush1.bf16.msra.mxu0 %v3700
    %4111 = vmatprep.subr.bf16.mxu0 0
    %4112 = vmatpush2.bf16.msra.mxu0 %v3715
    %4113 = vmatprep.subr.bf16.mxu0 0
    %4114 = vmatpush2.bf16.msra.mxu0 %v3714
    %4115 = vmatprep.subr.bf16.mxu0 0
    %4116 = vmatpush2.bf16.msra.mxu0 %v3713
    %4117 = vmatprep.subr.bf16.mxu0 0
    %4118 = vmatpush2.bf16.msra.mxu0 %v3712
    %4119 = vmatprep.subr.bf16.mxu0 0
    %4120 = vmatpush2.bf16.msra.mxu0 %v3711
    %4121 = vmatprep.subr.bf16.mxu0 0
    %4122 = vmatpush2.bf16.msra.mxu0 %v3710
    %4123 = vmatprep.subr.bf16.mxu0 0
    %4124 = vmatpush2.bf16.msra.mxu0 %v3709
    %4125 = vmatprep.subr.bf16.mxu0 0
    %4126 = vmatpush2.bf16.msra.mxu0 %v3708
    %4127 = vmatprep.mubr.bf16.mxu0 %v2768
    %4128 = vmatmul.mubr.bf16.gmra.mxu0 %v2754
    %v4129 = vpop.f32.mrf.mxu0
    %v4130 = vadd.f32 %v2725, %v4129
    %v4131 = vpop.f32.mrf.mxu0
    %v4132 = vpop.f32.mrf.mxu0
    %v4133 = vpop.f32.mrf.mxu0
    %4134 = vdwg.mxu0
    %4135 = vmatprep.subr.bf16.mxu0 0
    %4136 = vmatpush1.bf16.msra.mxu0 %v3723
    %4137 = vmatprep.subr.bf16.mxu0 0
    %4138 = vmatpush1.bf16.msra.mxu0 %v3722
    %4139 = vmatprep.subr.bf16.mxu0 0
    %4140 = vmatpush1.bf16.msra.mxu0 %v3721
    %4141 = vmatprep.subr.bf16.mxu0 0
    %4142 = vmatpush1.bf16.msra.mxu0 %v3720
    %4143 = vmatprep.subr.bf16.mxu0 0
    %4144 = vmatpush1.bf16.msra.mxu0 %v3719
    %4145 = vmatprep.subr.bf16.mxu0 0
    %4146 = vmatpush1.bf16.msra.mxu0 %v3718
    %4147 = vmatprep.subr.bf16.mxu0 0
    %4148 = vmatpush1.bf16.msra.mxu0 %v3717
    %4149 = vmatprep.subr.bf16.mxu0 0
    %4150 = vmatpush1.bf16.msra.mxu0 %v3716
    %4151 = vmatprep.subr.bf16.mxu0 0
    %4152 = vmatpush2.bf16.msra.mxu0 %v3731
    %4153 = vmatprep.subr.bf16.mxu0 0
    %4154 = vmatpush2.bf16.msra.mxu0 %v3730
    %4155 = vmatprep.subr.bf16.mxu0 0
    %4156 = vmatpush2.bf16.msra.mxu0 %v3729
    %4157 = vmatprep.subr.bf16.mxu0 0
    %4158 = vmatpush2.bf16.msra.mxu0 %v3728
    %4159 = vmatprep.subr.bf16.mxu0 0
    %4160 = vmatpush2.bf16.msra.mxu0 %v3727
    %4161 = vmatprep.subr.bf16.mxu0 0
    %4162 = vmatpush2.bf16.msra.mxu0 %v3726
    %4163 = vmatprep.subr.bf16.mxu0 0
    %4164 = vmatpush2.bf16.msra.mxu0 %v3725
    %4165 = vmatprep.subr.bf16.mxu0 0
    %4166 = vmatpush2.bf16.msra.mxu0 %v3724
    %4167 = vmatprep.mubr.bf16.mxu0 %v2778
    %4168 = vmatmul.mubr.bf16.gmra.mxu0 %v2776
    %v4169 = vpop.f32.mrf.mxu0
    %v4170 = vadd.f32 %v4130, %v4169
    %v4171 = vpop.f32.mrf.mxu0
    %v4172 = vpop.f32.mrf.mxu0
    %v4173 = vpop.f32.mrf.mxu0
    %4174 = vdwg.mxu0
    %4175 = vmatprep.subr.bf16.mxu0 0
    %4176 = vmatpush1.bf16.msra.mxu0 %v3739
    %4177 = vmatprep.subr.bf16.mxu0 0
    %4178 = vmatpush1.bf16.msra.mxu0 %v3738
    %4179 = vmatprep.subr.bf16.mxu0 0
    %4180 = vmatpush1.bf16.msra.mxu0 %v3737
    %4181 = vmatprep.subr.bf16.mxu0 0
    %4182 = vmatpush1.bf16.msra.mxu0 %v3736
    %4183 = vmatprep.subr.bf16.mxu0 0
    %4184 = vmatpush1.bf16.msra.mxu0 %v3735
    %4185 = vmatprep.subr.bf16.mxu0 0
    %4186 = vmatpush1.bf16.msra.mxu0 %v3734
    %4187 = vmatprep.subr.bf16.mxu0 0
    %4188 = vmatpush1.bf16.msra.mxu0 %v3733
    %4189 = vmatprep.subr.bf16.mxu0 0
    %4190 = vmatpush1.bf16.msra.mxu0 %v3732
    %4191 = vmatprep.subr.bf16.mxu0 0
    %4192 = vmatpush2.bf16.msra.mxu0 %v3747
    %4193 = vmatprep.subr.bf16.mxu0 0
    %4194 = vmatpush2.bf16.msra.mxu0 %v3746
    %4195 = vmatprep.subr.bf16.mxu0 0
    %4196 = vmatpush2.bf16.msra.mxu0 %v3745
    %4197 = vmatprep.subr.bf16.mxu0 0
    %4198 = vmatpush2.bf16.msra.mxu0 %v3744
    %4199 = vmatprep.subr.bf16.mxu0 0
    %4200 = vmatpush2.bf16.msra.mxu0 %v3743
    %4201 = vmatprep.subr.bf16.mxu0 0
    %4202 = vmatpush2.bf16.msra.mxu0 %v3742
    %4203 = vmatprep.subr.bf16.mxu0 0
    %4204 = vmatpush2.bf16.msra.mxu0 %v3741
    %4205 = vmatprep.subr.bf16.mxu0 0
    %4206 = vmatpush2.bf16.msra.mxu0 %v3740
    %4207 = vmatprep.mubr.bf16.mxu0 %v2775
    %4208 = vmatmul.mubr.bf16.gmra.mxu0 %v2761
    %v4209 = vpop.f32.mrf.mxu0
    %v4210 = vadd.f32 %v4170, %v4209
    %v4211 = vpop.f32.mrf.mxu0
    %v4212 = vpop.f32.mrf.mxu0
    %v4213 = vpop.f32.mrf.mxu0
    %4214 = vdwg.mxu0
    %4215 = vmatprep.subr.bf16.mxu0 0
    %4216 = vmatpush1.bf16.msra.mxu0 %v3755
    %4217 = vmatprep.subr.bf16.mxu0 0
    %4218 = vmatpush1.bf16.msra.mxu0 %v3754
    %4219 = vmatprep.subr.bf16.mxu0 0
    %4220 = vmatpush1.bf16.msra.mxu0 %v3753
    %4221 = vmatprep.subr.bf16.mxu0 0
    %4222 = vmatpush1.bf16.msra.mxu0 %v3752
    %4223 = vmatprep.subr.bf16.mxu0 0
    %4224 = vmatpush1.bf16.msra.mxu0 %v3751
    %4225 = vmatprep.subr.bf16.mxu0 0
    %4226 = vmatpush1.bf16.msra.mxu0 %v3750
    %4227 = vmatprep.subr.bf16.mxu0 0
    %4228 = vmatpush1.bf16.msra.mxu0 %v3749
    %4229 = vmatprep.subr.bf16.mxu0 0
    %4230 = vmatpush1.bf16.msra.mxu0 %v3748
    %4231 = vmatprep.subr.bf16.mxu0 0
    %4232 = vmatpush2.bf16.msra.mxu0 %v3763
    %4233 = vmatprep.subr.bf16.mxu0 0
    %4234 = vmatpush2.bf16.msra.mxu0 %v3762
    %4235 = vmatprep.subr.bf16.mxu0 0
    %4236 = vmatpush2.bf16.msra.mxu0 %v3761
    %4237 = vmatprep.subr.bf16.mxu0 0
    %4238 = vmatpush2.bf16.msra.mxu0 %v3760
    %4239 = vmatprep.subr.bf16.mxu0 0
    %4240 = vmatpush2.bf16.msra.mxu0 %v3759
    %4241 = vmatprep.subr.bf16.mxu0 0
    %4242 = vmatpush2.bf16.msra.mxu0 %v3758
    %4243 = vmatprep.subr.bf16.mxu0 0
    %4244 = vmatpush2.bf16.msra.mxu0 %v3757
    %4245 = vmatprep.subr.bf16.mxu0 0
    %4246 = vmatpush2.bf16.msra.mxu0 %v3756
    %4247 = vmatprep.mubr.bf16.mxu0 %v2779
    %4248 = vmatmul.mubr.bf16.gmra.mxu0 %v2777
    %v4249 = vpop.f32.mrf.mxu0
    %v4250 = vadd.f32 %v4210, %v4249
    %v4251 = vpop.f32.mrf.mxu0
    %v4252 = vpop.f32.mrf.mxu0
    %v4253 = vpop.f32.mrf.mxu0
    %4254 = vdwg.mxu0
    %4255 = vmatprep.subr.bf16.mxu0 0
    %4256 = vmatpush1.bf16.msra.mxu0 %v3771
    %4257 = vmatprep.subr.bf16.mxu0 0
    %4258 = vmatpush1.bf16.msra.mxu0 %v3770
    %4259 = vmatprep.subr.bf16.mxu0 0
    %4260 = vmatpush1.bf16.msra.mxu0 %v3769
    %4261 = vmatprep.subr.bf16.mxu0 0
    %4262 = vmatpush1.bf16.msra.mxu0 %v3768
    %4263 = vmatprep.subr.bf16.mxu0 0
    %4264 = vmatpush1.bf16.msra.mxu0 %v3767
    %4265 = vmatprep.subr.bf16.mxu0 0
    %4266 = vmatpush1.bf16.msra.mxu0 %v3766
    %4267 = vmatprep.subr.bf16.mxu0 0
    %4268 = vmatpush1.bf16.msra.mxu0 %v3765
    %4269 = vmatprep.subr.bf16.mxu0 0
    %4270 = vmatpush1.bf16.msra.mxu0 %v3764
    %4271 = vmatprep.subr.bf16.mxu0 0
    %4272 = vmatpush2.bf16.msra.mxu0 %v3779
    %4273 = vmatprep.subr.bf16.mxu0 0
    %4274 = vmatpush2.bf16.msra.mxu0 %v3778
    %4275 = vmatprep.subr.bf16.mxu0 0
    %4276 = vmatpush2.bf16.msra.mxu0 %v3777
    %4277 = vmatprep.subr.bf16.mxu0 0
    %4278 = vmatpush2.bf16.msra.mxu0 %v3776
    %4279 = vmatprep.subr.bf16.mxu0 0
    %4280 = vmatpush2.bf16.msra.mxu0 %v3775
    %4281 = vmatprep.subr.bf16.mxu0 0
    %4282 = vmatpush2.bf16.msra.mxu0 %v3774
    %4283 = vmatprep.subr.bf16.mxu0 0
    %4284 = vmatpush2.bf16.msra.mxu0 %v3773
    %4285 = vmatprep.subr.bf16.mxu0 0
    %4286 = vmatpush2.bf16.msra.mxu0 %v3772
    %4287 = vmatprep.mubr.bf16.mxu0 %v2817
    %4288 = vmatmul.mubr.bf16.gmra.mxu0 %v2803
    %v4289 = vpop.f32.mrf.mxu0
    %v4290 = vadd.f32 %v4250, %v4289
    %v4291 = vpop.f32.mrf.mxu0
    %v4292 = vpop.f32.mrf.mxu0
    %v4293 = vpop.f32.mrf.mxu0
    %4294 = vdwg.mxu0
    %4295 = vmatprep.subr.bf16.mxu0 0
    %4296 = vmatpush1.bf16.msra.mxu0 %v3787
    %4297 = vmatprep.subr.bf16.mxu0 0
    %4298 = vmatpush1.bf16.msra.mxu0 %v3786
    %4299 = vmatprep.subr.bf16.mxu0 0
    %4300 = vmatpush1.bf16.msra.mxu0 %v3785
    %4301 = vmatprep.subr.bf16.mxu0 0
    %4302 = vmatpush1.bf16.msra.mxu0 %v3784
    %4303 = vmatprep.subr.bf16.mxu0 0
    %4304 = vmatpush1.bf16.msra.mxu0 %v3783
    %4305 = vmatprep.subr.bf16.mxu0 0
    %4306 = vmatpush1.bf16.msra.mxu0 %v3782
    %4307 = vmatprep.subr.bf16.mxu0 0
    %4308 = vmatpush1.bf16.msra.mxu0 %v3781
    %4309 = vmatprep.subr.bf16.mxu0 0
    %4310 = vmatpush1.bf16.msra.mxu0 %v3780
    %4311 = vmatprep.subr.bf16.mxu0 0
    %4312 = vmatpush2.bf16.msra.mxu0 %v3795
    %4313 = vmatprep.subr.bf16.mxu0 0
    %4314 = vmatpush2.bf16.msra.mxu0 %v3794
    %4315 = vmatprep.subr.bf16.mxu0 0
    %4316 = vmatpush2.bf16.msra.mxu0 %v3793
    %4317 = vmatprep.subr.bf16.mxu0 0
    %4318 = vmatpush2.bf16.msra.mxu0 %v3792
    %4319 = vmatprep.subr.bf16.mxu0 0
    %4320 = vmatpush2.bf16.msra.mxu0 %v3791
    %4321 = vmatprep.subr.bf16.mxu0 0
    %4322 = vmatpush2.bf16.msra.mxu0 %v3790
    %4323 = vmatprep.subr.bf16.mxu0 0
    %4324 = vmatpush2.bf16.msra.mxu0 %v3789
    %4325 = vmatprep.subr.bf16.mxu0 0
    %4326 = vmatpush2.bf16.msra.mxu0 %v3788
    %4327 = vmatprep.mubr.bf16.mxu0 %v2827
    %4328 = vmatmul.mubr.bf16.gmra.mxu0 %v2825
    %v4329 = vpop.f32.mrf.mxu0
    %v4330 = vadd.f32 %v4290, %v4329
    %v4331 = vpop.f32.mrf.mxu0
    %v4332 = vpop.f32.mrf.mxu0
    %v4333 = vpop.f32.mrf.mxu0
    %4334 = vdwg.mxu0
    %4335 = vmatprep.subr.bf16.mxu0 0
    %4336 = vmatpush1.bf16.msra.mxu0 %v3803
    %4337 = vmatprep.subr.bf16.mxu0 0
    %4338 = vmatpush1.bf16.msra.mxu0 %v3802
    %4339 = vmatprep.subr.bf16.mxu0 0
    %4340 = vmatpush1.bf16.msra.mxu0 %v3801
    %4341 = vmatprep.subr.bf16.mxu0 0
    %4342 = vmatpush1.bf16.msra.mxu0 %v3800
    %4343 = vmatprep.subr.bf16.mxu0 0
    %4344 = vmatpush1.bf16.msra.mxu0 %v3799
    %4345 = vmatprep.subr.bf16.mxu0 0
    %4346 = vmatpush1.bf16.msra.mxu0 %v3798
    %4347 = vmatprep.subr.bf16.mxu0 0
    %4348 = vmatpush1.bf16.msra.mxu0 %v3797
    %4349 = vmatprep.subr.bf16.mxu0 0
    %4350 = vmatpush1.bf16.msra.mxu0 %v3796
    %4351 = vmatprep.subr.bf16.mxu0 0
    %4352 = vmatpush2.bf16.msra.mxu0 %v3811
    %4353 = vmatprep.subr.bf16.mxu0 0
    %4354 = vmatpush2.bf16.msra.mxu0 %v3810
    %4355 = vmatprep.subr.bf16.mxu0 0
    %4356 = vmatpush2.bf16.msra.mxu0 %v3809
    %4357 = vmatprep.subr.bf16.mxu0 0
    %4358 = vmatpush2.bf16.msra.mxu0 %v3808
    %4359 = vmatprep.subr.bf16.mxu0 0
    %4360 = vmatpush2.bf16.msra.mxu0 %v3807
    %4361 = vmatprep.subr.bf16.mxu0 0
    %4362 = vmatpush2.bf16.msra.mxu0 %v3806
    %4363 = vmatprep.subr.bf16.mxu0 0
    %4364 = vmatpush2.bf16.msra.mxu0 %v3805
    %4365 = vmatprep.subr.bf16.mxu0 0
    %4366 = vmatpush2.bf16.msra.mxu0 %v3804
    %4367 = vmatprep.mubr.bf16.mxu0 %v2824
    %4368 = vmatmul.mubr.bf16.gmra.mxu0 %v2810
    %v4369 = vpop.f32.mrf.mxu0
    %v4370 = vadd.f32 %v4330, %v4369
    %v4371 = vpop.f32.mrf.mxu0
    %v4372 = vpop.f32.mrf.mxu0
    %v4373 = vpop.f32.mrf.mxu0
    %4374 = vdwg.mxu0
    %4375 = vmatprep.subr.bf16.mxu0 0
    %4376 = vmatpush1.bf16.msra.mxu0 %v3819
    %4377 = vmatprep.subr.bf16.mxu0 0
    %4378 = vmatpush1.bf16.msra.mxu0 %v3818
    %4379 = vmatprep.subr.bf16.mxu0 0
    %4380 = vmatpush1.bf16.msra.mxu0 %v3817
    %4381 = vmatprep.subr.bf16.mxu0 0
    %4382 = vmatpush1.bf16.msra.mxu0 %v3816
    %4383 = vmatprep.subr.bf16.mxu0 0
    %4384 = vmatpush1.bf16.msra.mxu0 %v3815
    %4385 = vmatprep.subr.bf16.mxu0 0
    %4386 = vmatpush1.bf16.msra.mxu0 %v3814
    %4387 = vmatprep.subr.bf16.mxu0 0
    %4388 = vmatpush1.bf16.msra.mxu0 %v3813
    %4389 = vmatprep.subr.bf16.mxu0 0
    %4390 = vmatpush1.bf16.msra.mxu0 %v3812
    %4391 = vmatprep.subr.bf16.mxu0 0
    %4392 = vmatpush2.bf16.msra.mxu0 %v3827
    %4393 = vmatprep.subr.bf16.mxu0 0
    %4394 = vmatpush2.bf16.msra.mxu0 %v3826
    %4395 = vmatprep.subr.bf16.mxu0 0
    %4396 = vmatpush2.bf16.msra.mxu0 %v3825
    %4397 = vmatprep.subr.bf16.mxu0 0
    %4398 = vmatpush2.bf16.msra.mxu0 %v3824
    %4399 = vmatprep.subr.bf16.mxu0 0
    %4400 = vmatpush2.bf16.msra.mxu0 %v3823
    %4401 = vmatprep.subr.bf16.mxu0 0
    %4402 = vmatpush2.bf16.msra.mxu0 %v3822
    %4403 = vmatprep.subr.bf16.mxu0 0
    %4404 = vmatpush2.bf16.msra.mxu0 %v3821
    %4405 = vmatprep.subr.bf16.mxu0 0
    %4406 = vmatpush2.bf16.msra.mxu0 %v3820
    %4407 = vmatprep.mubr.bf16.mxu0 %v2828
    %4408 = vmatmul.mubr.bf16.gmra.mxu0 %v2826
    %v4409 = vpop.f32.mrf.mxu0
    %v4410 = vadd.f32 %v4370, %v4409
    %v4411 = vpop.f32.mrf.mxu0
    %v4412 = vpop.f32.mrf.mxu0
    %v4413 = vpop.f32.mrf.mxu0
    %4414 = vdwg.mxu0
    %4415 = vmatprep.subr.bf16.mxu0 0
    %4416 = vmatpush1.bf16.msra.mxu0 %v3835
    %4417 = vmatprep.subr.bf16.mxu0 0
    %4418 = vmatpush1.bf16.msra.mxu0 %v3834
    %4419 = vmatprep.subr.bf16.mxu0 0
    %4420 = vmatpush1.bf16.msra.mxu0 %v3833
    %4421 = vmatprep.subr.bf16.mxu0 0
    %4422 = vmatpush1.bf16.msra.mxu0 %v3832
    %4423 = vmatprep.subr.bf16.mxu0 0
    %4424 = vmatpush1.bf16.msra.mxu0 %v3831
    %4425 = vmatprep.subr.bf16.mxu0 0
    %4426 = vmatpush1.bf16.msra.mxu0 %v3830
    %4427 = vmatprep.subr.bf16.mxu0 0
    %4428 = vmatpush1.bf16.msra.mxu0 %v3829
    %4429 = vmatprep.subr.bf16.mxu0 0
    %4430 = vmatpush1.bf16.msra.mxu0 %v3828
    %4431 = vmatprep.subr.bf16.mxu0 0
    %4432 = vmatpush2.bf16.msra.mxu0 %v3843
    %4433 = vmatprep.subr.bf16.mxu0 0
    %4434 = vmatpush2.bf16.msra.mxu0 %v3842
    %4435 = vmatprep.subr.bf16.mxu0 0
    %4436 = vmatpush2.bf16.msra.mxu0 %v3841
    %4437 = vmatprep.subr.bf16.mxu0 0
    %4438 = vmatpush2.bf16.msra.mxu0 %v3840
    %4439 = vmatprep.subr.bf16.mxu0 0
    %4440 = vmatpush2.bf16.msra.mxu0 %v3839
    %4441 = vmatprep.subr.bf16.mxu0 0
    %4442 = vmatpush2.bf16.msra.mxu0 %v3838
    %4443 = vmatprep.subr.bf16.mxu0 0
    %4444 = vmatpush2.bf16.msra.mxu0 %v3837
    %4445 = vmatprep.subr.bf16.mxu0 0
    %4446 = vmatpush2.bf16.msra.mxu0 %v3836
    %4447 = vmatprep.mubr.bf16.mxu0 %v2866
    %4448 = vmatmul.mubr.bf16.gmra.mxu0 %v2852
    %v4449 = vpop.f32.mrf.mxu0
    %v4450 = vadd.f32 %v4410, %v4449
    %v4451 = vpop.f32.mrf.mxu0
    %v4452 = vpop.f32.mrf.mxu0
    %v4453 = vpop.f32.mrf.mxu0
    %4454 = vdwg.mxu0
    %4455 = vmatprep.subr.bf16.mxu0 0
    %4456 = vmatpush1.bf16.msra.mxu0 %v3851
    %4457 = vmatprep.subr.bf16.mxu0 0
    %4458 = vmatpush1.bf16.msra.mxu0 %v3850
    %4459 = vmatprep.subr.bf16.mxu0 0
    %4460 = vmatpush1.bf16.msra.mxu0 %v3849
    %4461 = vmatprep.subr.bf16.mxu0 0
    %4462 = vmatpush1.bf16.msra.mxu0 %v3848
    %4463 = vmatprep.subr.bf16.mxu0 0
    %4464 = vmatpush1.bf16.msra.mxu0 %v3847
    %4465 = vmatprep.subr.bf16.mxu0 0
    %4466 = vmatpush1.bf16.msra.mxu0 %v3846
    %4467 = vmatprep.subr.bf16.mxu0 0
    %4468 = vmatpush1.bf16.msra.mxu0 %v3845
    %4469 = vmatprep.subr.bf16.mxu0 0
    %4470 = vmatpush1.bf16.msra.mxu0 %v3844
    %4471 = vmatprep.subr.bf16.mxu0 0
    %4472 = vmatpush2.bf16.msra.mxu0 %v3859
    %4473 = vmatprep.subr.bf16.mxu0 0
    %4474 = vmatpush2.bf16.msra.mxu0 %v3858
    %4475 = vmatprep.subr.bf16.mxu0 0
    %4476 = vmatpush2.bf16.msra.mxu0 %v3857
    %4477 = vmatprep.subr.bf16.mxu0 0
    %4478 = vmatpush2.bf16.msra.mxu0 %v3856
    %4479 = vmatprep.subr.bf16.mxu0 0
    %4480 = vmatpush2.bf16.msra.mxu0 %v3855
    %4481 = vmatprep.subr.bf16.mxu0 0
    %4482 = vmatpush2.bf16.msra.mxu0 %v3854
    %4483 = vmatprep.subr.bf16.mxu0 0
    %4484 = vmatpush2.bf16.msra.mxu0 %v3853
    %4485 = vmatprep.subr.bf16.mxu0 0
    %4486 = vmatpush2.bf16.msra.mxu0 %v3852
    %4487 = vmatprep.mubr.bf16.mxu0 %v2876
    %4488 = vmatmul.mubr.bf16.gmra.mxu0 %v2874
    %v4489 = vpop.f32.mrf.mxu0
    %v4490 = vadd.f32 %v4450, %v4489
    %v4491 = vpop.f32.mrf.mxu0
    %v4492 = vpop.f32.mrf.mxu0
    %v4493 = vpop.f32.mrf.mxu0
    %4494 = vdwg.mxu0
    %4495 = vmatprep.subr.bf16.mxu0 0
    %4496 = vmatpush1.bf16.msra.mxu0 %v3867
    %4497 = vmatprep.subr.bf16.mxu0 0
    %4498 = vmatpush1.bf16.msra.mxu0 %v3866
    %4499 = vmatprep.subr.bf16.mxu0 0
    %4500 = vmatpush1.bf16.msra.mxu0 %v3865
    %4501 = vmatprep.subr.bf16.mxu0 0
    %4502 = vmatpush1.bf16.msra.mxu0 %v3864
    %4503 = vmatprep.subr.bf16.mxu0 0
    %4504 = vmatpush1.bf16.msra.mxu0 %v3863
    %4505 = vmatprep.subr.bf16.mxu0 0
    %4506 = vmatpush1.bf16.msra.mxu0 %v3862
    %4507 = vmatprep.subr.bf16.mxu0 0
    %4508 = vmatpush1.bf16.msra.mxu0 %v3861
    %4509 = vmatprep.subr.bf16.mxu0 0
    %4510 = vmatpush1.bf16.msra.mxu0 %v3860
    %4511 = vmatprep.subr.bf16.mxu0 0
    %4512 = vmatpush2.bf16.msra.mxu0 %v3875
    %4513 = vmatprep.subr.bf16.mxu0 0
    %4514 = vmatpush2.bf16.msra.mxu0 %v3874
    %4515 = vmatprep.subr.bf16.mxu0 0
    %4516 = vmatpush2.bf16.msra.mxu0 %v3873
    %4517 = vmatprep.subr.bf16.mxu0 0
    %4518 = vmatpush2.bf16.msra.mxu0 %v3872
    %4519 = vmatprep.subr.bf16.mxu0 0
    %4520 = vmatpush2.bf16.msra.mxu0 %v3871
    %4521 = vmatprep.subr.bf16.mxu0 0
    %4522 = vmatpush2.bf16.msra.mxu0 %v3870
    %4523 = vmatprep.subr.bf16.mxu0 0
    %4524 = vmatpush2.bf16.msra.mxu0 %v3869
    %4525 = vmatprep.subr.bf16.mxu0 0
    %4526 = vmatpush2.bf16.msra.mxu0 %v3868
    %4527 = vmatprep.mubr.bf16.mxu0 %v2873
    %4528 = vmatmul.mubr.bf16.gmra.mxu0 %v2859
    %v4529 = vpop.f32.mrf.mxu0
    %v4530 = vadd.f32 %v4490, %v4529
    %v4531 = vpop.f32.mrf.mxu0
    %v4532 = vpop.f32.mrf.mxu0
    %v4533 = vpop.f32.mrf.mxu0
    %4534 = vdwg.mxu0
    %4535 = vmatprep.subr.bf16.mxu0 0
    %4536 = vmatpush1.bf16.msra.mxu0 %v3883
    %4537 = vmatprep.subr.bf16.mxu0 0
    %4538 = vmatpush1.bf16.msra.mxu0 %v3882
    %4539 = vmatprep.subr.bf16.mxu0 0
    %4540 = vmatpush1.bf16.msra.mxu0 %v3881
    %4541 = vmatprep.subr.bf16.mxu0 0
    %4542 = vmatpush1.bf16.msra.mxu0 %v3880
    %4543 = vmatprep.subr.bf16.mxu0 0
    %4544 = vmatpush1.bf16.msra.mxu0 %v3879
    %4545 = vmatprep.subr.bf16.mxu0 0
    %4546 = vmatpush1.bf16.msra.mxu0 %v3878
    %4547 = vmatprep.subr.bf16.mxu0 0
    %4548 = vmatpush1.bf16.msra.mxu0 %v3877
    %4549 = vmatprep.subr.bf16.mxu0 0
    %4550 = vmatpush1.bf16.msra.mxu0 %v3876
    %4551 = vmatprep.subr.bf16.mxu0 0
    %4552 = vmatpush2.bf16.msra.mxu0 %v3891
    %4553 = vmatprep.subr.bf16.mxu0 0
    %4554 = vmatpush2.bf16.msra.mxu0 %v3890
    %4555 = vmatprep.subr.bf16.mxu0 0
    %4556 = vmatpush2.bf16.msra.mxu0 %v3889
    %4557 = vmatprep.subr.bf16.mxu0 0
    %4558 = vmatpush2.bf16.msra.mxu0 %v3888
    %4559 = vmatprep.subr.bf16.mxu0 0
    %4560 = vmatpush2.bf16.msra.mxu0 %v3887
    %4561 = vmatprep.subr.bf16.mxu0 0
    %4562 = vmatpush2.bf16.msra.mxu0 %v3886
    %4563 = vmatprep.subr.bf16.mxu0 0
    %4564 = vmatpush2.bf16.msra.mxu0 %v3885
    %4565 = vmatprep.subr.bf16.mxu0 0
    %4566 = vmatpush2.bf16.msra.mxu0 %v3884
    %4567 = vmatprep.mubr.bf16.mxu0 %v2877
    %4568 = vmatmul.mubr.bf16.gmra.mxu0 %v2875
    %v4569 = vpop.f32.mrf.mxu0
    %v4570 = vadd.f32 %v4530, %v4569
    %v4571 = vpop.f32.mrf.mxu0
    %v4572 = vpop.f32.mrf.mxu0
    %v4573 = vpop.f32.mrf.mxu0
    %4574 = vdwg.mxu0
    %4575 = vmatprep.subr.bf16.mxu0 0
    %4576 = vmatpush1.bf16.msra.mxu0 0
    %4577 = vmatprep.subr.bf16.mxu0 0
    %4578 = vmatpush1.bf16.msra.mxu0 0
    %4579 = vmatprep.subr.bf16.mxu0 0
    %4580 = vmatpush1.bf16.msra.mxu0 0
    %4581 = vmatprep.subr.bf16.mxu0 0
    %4582 = vmatpush1.bf16.msra.mxu0 0
    %4583 = vmatprep.subr.bf16.mxu0 0
    %4584 = vmatpush1.bf16.msra.mxu0 %v3895
    %4585 = vmatprep.subr.bf16.mxu0 0
    %4586 = vmatpush1.bf16.msra.mxu0 %v3894
    %4587 = vmatprep.subr.bf16.mxu0 0
    %4588 = vmatpush1.bf16.msra.mxu0 %v3893
    %4589 = vmatprep.subr.bf16.mxu0 0
    %4590 = vmatpush1.bf16.msra.mxu0 %v3892
    %4591 = vmatprep.subr.bf16.mxu0 0
    %4592 = vmatpush2.bf16.msra.mxu0 0
    %4593 = vmatprep.subr.bf16.mxu0 0
    %4594 = vmatpush2.bf16.msra.mxu0 0
    %4595 = vmatprep.subr.bf16.mxu0 0
    %4596 = vmatpush2.bf16.msra.mxu0 0
    %4597 = vmatprep.subr.bf16.mxu0 0
    %4598 = vmatpush2.bf16.msra.mxu0 0
    %4599 = vmatprep.subr.bf16.mxu0 0
    %4600 = vmatpush2.bf16.msra.mxu0 0
    %4601 = vmatprep.subr.bf16.mxu0 0
    %4602 = vmatpush2.bf16.msra.mxu0 0
    %4603 = vmatprep.subr.bf16.mxu0 0
    %4604 = vmatpush2.bf16.msra.mxu0 0
    %4605 = vmatprep.subr.bf16.mxu0 0
    %4606 = vmatpush2.bf16.msra.mxu0 0
    %4607 = vmatprep.mubr.bf16.mxu0 0
    %4608 = vmatmul.mubr.bf16.gmra.mxu0 %v4093
    %v4609 = vpop.f32.mrf.mxu0
    %v4610 = vadd.f32 %v4570, %v4609
    %v4611 = vpop.f32.mrf.mxu0
    %v4612 = vpop.f32.mrf.mxu0
    %v4613 = vpop.f32.mrf.mxu0
    %4614 = vdwg.mxu0
    %v4615 = vmax.f32 %v4610, 0.0
    %s4616 = scalar_lea.vmem %s0, 50
    %v4617 = vld [vmem:[%s4616] sm:$0xff]
    %v4618 = vld [vmem:[%s4616 + $0x8] sm:$0xff]
    %v4619 = vld [vmem:[%s4616 + $0x10] sm:$0xff]
    %v4620 = vld [vmem:[%s4616 + $0x18] sm:$0x1]
    %s4621 = scalar_lea.vmem %s1, 3136
    %v4622 = vld [vmem:[%s4621] sm:$0xf]
    %v4623 = vld [vmem:[%s4621 + $0x4] sm:$0xf]
    %v4624 = vld [vmem:[%s4621 + $0x8] sm:$0xf]
    %v4625 = vld [vmem:[%s4621 + $0xc] sm:$0xf]
    %v4626 = vld [vmem:[%s4621 + $0x10] sm:$0xf]
    %v4627 = vld [vmem:[%s4621 + $0x14] sm:$0xf]
    %v4628 = vld [vmem:[%s4621 + $0x18] sm:$0xf]
    %v4629 = vld [vmem:[%s4621 + $0x1c] sm:$0xf]
    %v4630 = vld [vmem:[%s4621 + $0x20] sm:$0xf]
    %v4631 = vld [vmem:[%s4621 + $0x24] sm:$0xf]
    %v4632 = vld [vmem:[%s4621 + $0x28] sm:$0xf]
    %v4633 = vld [vmem:[%s4621 + $0x2c] sm:$0xf]
    %v4634 = vld [vmem:[%s4621 + $0x30] sm:$0xf]
    %v4635 = vld [vmem:[%s4621 + $0x34] sm:$0xf]
    %v4636 = vld [vmem:[%s4621 + $0x38] sm:$0xf]
    %v4637 = vld [vmem:[%s4621 + $0x3c] sm:$0xf]
    %v4638 = vld [vmem:[%s4621 + $0x40] sm:$0xf]
    %v4639 = vld [vmem:[%s4621 + $0x44] sm:$0xf]
    %v4640 = vld [vmem:[%s4621 + $0x48] sm:$0xf]
    %v4641 = vld [vmem:[%s4621 + $0x4c] sm:$0xf]
    %v4642 = vld [vmem:[%s4621 + $0x50] sm:$0xf]
    %v4643 = vld [vmem:[%s4621 + $0x54] sm:$0xf]
    %v4644 = vld [vmem:[%s4621 + $0x58] sm:$0xf]
    %v4645 = vld [vmem:[%s4621 + $0x5c] sm:$0xf]
    %v4646 = vld [vmem:[%s4621 + $0x60] sm:$0xf]
    %v4647 = vld [vmem:[%s4621 + $0x64] sm:$0xf]
    %v4648 = vld [vmem:[%s4621 + $0x68] sm:$0xf]
    %v4649 = vld [vmem:[%s4621 + $0x6c] sm:$0xf]
    %v4650 = vld [vmem:[%s4621 + $0x70] sm:$0xf]
    %v4651 = vld [vmem:[%s4621 + $0x74] sm:$0xf]
    %v4652 = vld [vmem:[%s4621 + $0x78] sm:$0xf]
    %v4653 = vld [vmem:[%s4621 + $0x7c] sm:$0xf]
    %v4654 = vld [vmem:[%s4621 + $0x80] sm:$0xf]
    %v4655 = vld [vmem:[%s4621 + $0x84] sm:$0xf]
    %v4656 = vld [vmem:[%s4621 + $0x88] sm:$0xf]
    %v4657 = vld [vmem:[%s4621 + $0x8c] sm:$0xf]
    %v4658 = vld [vmem:[%s4621 + $0x90] sm:$0xf]
    %v4659 = vld [vmem:[%s4621 + $0x94] sm:$0xf]
    %v4660 = vld [vmem:[%s4621 + $0x98] sm:$0xf]
    %v4661 = vld [vmem:[%s4621 + $0x9c] sm:$0xf]
    %v4662 = vld [vmem:[%s4621 + $0xa0] sm:$0xf]
    %v4663 = vld [vmem:[%s4621 + $0xa4] sm:$0xf]
    %v4664 = vld [vmem:[%s4621 + $0xa8] sm:$0xf]
    %v4665 = vld [vmem:[%s4621 + $0xac] sm:$0xf]
    %v4666 = vld [vmem:[%s4621 + $0xb0] sm:$0xf]
    %v4667 = vld [vmem:[%s4621 + $0xb4] sm:$0xf]
    %v4668 = vld [vmem:[%s4621 + $0xb8] sm:$0xf]
    %v4669 = vld [vmem:[%s4621 + $0xbc] sm:$0xf]
    %v4670 = vld [vmem:[%s4621 + $0xc0] sm:$0xf]
    %v4671 = vld [vmem:[%s4621 + $0xc4] sm:$0xf]
    %v4672 = vld [vmem:[%s4621 + $0xc8] sm:$0xf]
    %v4673 = vld [vmem:[%s4621 + $0xcc] sm:$0xf]
    %v4674 = vld [vmem:[%s4621 + $0xd0] sm:$0xf]
    %v4675 = vld [vmem:[%s4621 + $0xd4] sm:$0xf]
    %v4676 = vld [vmem:[%s4621 + $0xd8] sm:$0xf]
    %v4677 = vld [vmem:[%s4621 + $0xdc] sm:$0xf]
    %v4678 = vld [vmem:[%s4621 + $0xe0] sm:$0xf]
    %v4679 = vld [vmem:[%s4621 + $0xe4] sm:$0xf]
    %v4680 = vld [vmem:[%s4621 + $0xe8] sm:$0xf]
    %v4681 = vld [vmem:[%s4621 + $0xec] sm:$0xf]
    %v4682 = vld [vmem:[%s4621 + $0xf0] sm:$0xf]
    %v4683 = vld [vmem:[%s4621 + $0xf4] sm:$0xf]
    %v4684 = vld [vmem:[%s4621 + $0xf8] sm:$0xf]
    %v4685 = vld [vmem:[%s4621 + $0xfc] sm:$0xf]
    %v4686 = vld [vmem:[%s4621 + $0x100] sm:$0xf]
    %v4687 = vld [vmem:[%s4621 + $0x104] sm:$0xf]
    %v4688 = vld [vmem:[%s4621 + $0x108] sm:$0xf]
    %v4689 = vld [vmem:[%s4621 + $0x10c] sm:$0xf]
    %v4690 = vld [vmem:[%s4621 + $0x110] sm:$0xf]
    %v4691 = vld [vmem:[%s4621 + $0x114] sm:$0xf]
    %v4692 = vld [vmem:[%s4621 + $0x118] sm:$0xf]
    %v4693 = vld [vmem:[%s4621 + $0x11c] sm:$0xf]
    %v4694 = vld [vmem:[%s4621 + $0x120] sm:$0xf]
    %v4695 = vld [vmem:[%s4621 + $0x124] sm:$0xf]
    %v4696 = vld [vmem:[%s4621 + $0x128] sm:$0xf]
    %v4697 = vld [vmem:[%s4621 + $0x12c] sm:$0xf]
    %v4698 = vld [vmem:[%s4621 + $0x130] sm:$0xf]
    %v4699 = vld [vmem:[%s4621 + $0x134] sm:$0xf]
    %v4700 = vld [vmem:[%s4621 + $0x138] sm:$0xf]
    %v4701 = vld [vmem:[%s4621 + $0x13c] sm:$0xf]
    %v4702 = vld [vmem:[%s4621 + $0x140] sm:$0xf]
    %v4703 = vld [vmem:[%s4621 + $0x144] sm:$0xf]
    %v4704 = vld [vmem:[%s4621 + $0x148] sm:$0xf]
    %v4705 = vld [vmem:[%s4621 + $0x14c] sm:$0xf]
    %v4706 = vld [vmem:[%s4621 + $0x150] sm:$0xf]
    %v4707 = vld [vmem:[%s4621 + $0x154] sm:$0xf]
    %v4708 = vld [vmem:[%s4621 + $0x158] sm:$0xf]
    %v4709 = vld [vmem:[%s4621 + $0x15c] sm:$0xf]
    %v4710 = vld [vmem:[%s4621 + $0x160] sm:$0xf]
    %v4711 = vld [vmem:[%s4621 + $0x164] sm:$0xf]
    %v4712 = vld [vmem:[%s4621 + $0x168] sm:$0xf]
    %v4713 = vld [vmem:[%s4621 + $0x16c] sm:$0xf]
    %v4714 = vld [vmem:[%s4621 + $0x170] sm:$0xf]
    %v4715 = vld [vmem:[%s4621 + $0x174] sm:$0xf]
    %v4716 = vld [vmem:[%s4621 + $0x178] sm:$0xf]
    %v4717 = vld [vmem:[%s4621 + $0x17c] sm:$0xf]
    %v4718 = vld [vmem:[%s4621 + $0x180] sm:$0xf]
    %v4719 = vld [vmem:[%s4621 + $0x184] sm:$0xf]
    %v4720 = vld [vmem:[%s4621 + $0x188] sm:$0xf]
    %v4721 = vld [vmem:[%s4621 + $0x18c] sm:$0xf]
    %v4722 = vld [vmem:[%s4621 + $0x190] sm:$0xf]
    %v4723 = vld [vmem:[%s4621 + $0x194] sm:$0xf]
    %v4724 = vld [vmem:[%s4621 + $0x198] sm:$0xf]
    %v4725 = vld [vmem:[%s4621 + $0x19c] sm:$0xf]
    %v4726 = vld [vmem:[%s4621 + $0x1a0] sm:$0xf]
    %v4727 = vld [vmem:[%s4621 + $0x1a4] sm:$0xf]
    %v4728 = vld [vmem:[%s4621 + $0x1a8] sm:$0xf]
    %v4729 = vld [vmem:[%s4621 + $0x1ac] sm:$0xf]
    %v4730 = vld [vmem:[%s4621 + $0x1b0] sm:$0xf]
    %v4731 = vld [vmem:[%s4621 + $0x1b4] sm:$0xf]
    %v4732 = vld [vmem:[%s4621 + $0x1b8] sm:$0xf]
    %v4733 = vld [vmem:[%s4621 + $0x1bc] sm:$0xf]
    %v4734 = vld [vmem:[%s4621 + $0x1c0] sm:$0xf]
    %v4735 = vld [vmem:[%s4621 + $0x1c4] sm:$0xf]
    %v4736 = vld [vmem:[%s4621 + $0x1c8] sm:$0xf]
    %v4737 = vld [vmem:[%s4621 + $0x1cc] sm:$0xf]
    %v4738 = vld [vmem:[%s4621 + $0x1d0] sm:$0xf]
    %v4739 = vld [vmem:[%s4621 + $0x1d4] sm:$0xf]
    %v4740 = vld [vmem:[%s4621 + $0x1d8] sm:$0xf]
    %v4741 = vld [vmem:[%s4621 + $0x1dc] sm:$0xf]
    %v4742 = vld [vmem:[%s4621 + $0x1e0] sm:$0xf]
    %v4743 = vld [vmem:[%s4621 + $0x1e4] sm:$0xf]
    %v4744 = vld [vmem:[%s4621 + $0x1e8] sm:$0xf]
    %v4745 = vld [vmem:[%s4621 + $0x1ec] sm:$0xf]
    %v4746 = vld [vmem:[%s4621 + $0x1f0] sm:$0xf]
    %v4747 = vld [vmem:[%s4621 + $0x1f4] sm:$0xf]
    %v4748 = vld [vmem:[%s4621 + $0x1f8] sm:$0xf]
    %v4749 = vld [vmem:[%s4621 + $0x1fc] sm:$0xf]
    %v4750 = vld [vmem:[%s4621 + $0x200] sm:$0xf]
    %v4751 = vld [vmem:[%s4621 + $0x204] sm:$0xf]
    %v4752 = vld [vmem:[%s4621 + $0x208] sm:$0xf]
    %v4753 = vld [vmem:[%s4621 + $0x20c] sm:$0xf]
    %v4754 = vld [vmem:[%s4621 + $0x210] sm:$0xf]
    %v4755 = vld [vmem:[%s4621 + $0x214] sm:$0xf]
    %v4756 = vld [vmem:[%s4621 + $0x218] sm:$0xf]
    %v4757 = vld [vmem:[%s4621 + $0x21c] sm:$0xf]
    %v4758 = vld [vmem:[%s4621 + $0x220] sm:$0xf]
    %v4759 = vld [vmem:[%s4621 + $0x224] sm:$0xf]
    %v4760 = vld [vmem:[%s4621 + $0x228] sm:$0xf]
    %v4761 = vld [vmem:[%s4621 + $0x22c] sm:$0xf]
    %v4762 = vld [vmem:[%s4621 + $0x230] sm:$0xf]
    %v4763 = vld [vmem:[%s4621 + $0x234] sm:$0xf]
    %v4764 = vld [vmem:[%s4621 + $0x238] sm:$0xf]
    %v4765 = vld [vmem:[%s4621 + $0x23c] sm:$0xf]
    %v4766 = vld [vmem:[%s4621 + $0x240] sm:$0xf]
    %v4767 = vld [vmem:[%s4621 + $0x244] sm:$0xf]
    %v4768 = vld [vmem:[%s4621 + $0x248] sm:$0xf]
    %v4769 = vld [vmem:[%s4621 + $0x24c] sm:$0xf]
    %v4770 = vld [vmem:[%s4621 + $0x250] sm:$0xf]
    %v4771 = vld [vmem:[%s4621 + $0x254] sm:$0xf]
    %v4772 = vld [vmem:[%s4621 + $0x258] sm:$0xf]
    %v4773 = vld [vmem:[%s4621 + $0x25c] sm:$0xf]
    %v4774 = vld [vmem:[%s4621 + $0x260] sm:$0xf]
    %v4775 = vld [vmem:[%s4621 + $0x264] sm:$0xf]
    %v4776 = vld [vmem:[%s4621 + $0x268] sm:$0xf]
    %v4777 = vld [vmem:[%s4621 + $0x26c] sm:$0xf]
    %v4778 = vld [vmem:[%s4621 + $0x270] sm:$0xf]
    %v4779 = vld [vmem:[%s4621 + $0x274] sm:$0xf]
    %v4780 = vld [vmem:[%s4621 + $0x278] sm:$0xf]
    %v4781 = vld [vmem:[%s4621 + $0x27c] sm:$0xf]
    %v4782 = vld [vmem:[%s4621 + $0x280] sm:$0xf]
    %v4783 = vld [vmem:[%s4621 + $0x284] sm:$0xf]
    %v4784 = vld [vmem:[%s4621 + $0x288] sm:$0xf]
    %v4785 = vld [vmem:[%s4621 + $0x28c] sm:$0xf]
    %v4786 = vld [vmem:[%s4621 + $0x290] sm:$0xf]
    %v4787 = vld [vmem:[%s4621 + $0x294] sm:$0xf]
    %v4788 = vld [vmem:[%s4621 + $0x298] sm:$0xf]
    %v4789 = vld [vmem:[%s4621 + $0x29c] sm:$0xf]
    %v4790 = vld [vmem:[%s4621 + $0x2a0] sm:$0xf]
    %v4791 = vld [vmem:[%s4621 + $0x2a4] sm:$0xf]
    %v4792 = vld [vmem:[%s4621 + $0x2a8] sm:$0xf]
    %v4793 = vld [vmem:[%s4621 + $0x2ac] sm:$0xf]
    %v4794 = vld [vmem:[%s4621 + $0x2b0] sm:$0xf]
    %v4795 = vld [vmem:[%s4621 + $0x2b4] sm:$0xf]
    %v4796 = vld [vmem:[%s4621 + $0x2b8] sm:$0xf]
    %v4797 = vld [vmem:[%s4621 + $0x2bc] sm:$0xf]
    %v4798 = vld [vmem:[%s4621 + $0x2c0] sm:$0xf]
    %v4799 = vld [vmem:[%s4621 + $0x2c4] sm:$0xf]
    %v4800 = vld [vmem:[%s4621 + $0x2c8] sm:$0xf]
    %v4801 = vld [vmem:[%s4621 + $0x2cc] sm:$0xf]
    %v4802 = vld [vmem:[%s4621 + $0x2d0] sm:$0xf]
    %v4803 = vld [vmem:[%s4621 + $0x2d4] sm:$0xf]
    %v4804 = vld [vmem:[%s4621 + $0x2d8] sm:$0xf]
    %v4805 = vld [vmem:[%s4621 + $0x2dc] sm:$0xf]
    %v4806 = vld [vmem:[%s4621 + $0x2e0] sm:$0xf]
    %v4807 = vld [vmem:[%s4621 + $0x2e4] sm:$0xf]
    %v4808 = vld [vmem:[%s4621 + $0x2e8] sm:$0xf]
    %v4809 = vld [vmem:[%s4621 + $0x2ec] sm:$0xf]
    %v4810 = vld [vmem:[%s4621 + $0x2f0] sm:$0xf]
    %v4811 = vld [vmem:[%s4621 + $0x2f4] sm:$0xf]
    %v4812 = vld [vmem:[%s4621 + $0x2f8] sm:$0xf]
    %v4813 = vld [vmem:[%s4621 + $0x2fc] sm:$0xf]
    %v4814 = vld [vmem:[%s4621 + $0x300] sm:$0xf]
    %v4815 = vld [vmem:[%s4621 + $0x304] sm:$0xf]
    %v4816 = vld [vmem:[%s4621 + $0x308] sm:$0xf]
    %v4817 = vld [vmem:[%s4621 + $0x30c] sm:$0xf]
    %v4818 = vld [vmem:[%s4621 + $0x310] sm:$0xf]
    %v4819 = vld [vmem:[%s4621 + $0x314] sm:$0xf]
    %v4820 = vld [vmem:[%s4621 + $0x318] sm:$0xf]
    %v4821 = vld [vmem:[%s4621 + $0x31c] sm:$0xf]
    %v4822 = vld [vmem:[%s4621 + $0x320] sm:$0xf]
    %v4823 = vld [vmem:[%s4621 + $0x324] sm:$0xf]
    %v4824 = vld [vmem:[%s4621 + $0x328] sm:$0xf]
    %v4825 = vld [vmem:[%s4621 + $0x32c] sm:$0xf]
    %v4826 = vld [vmem:[%s4621 + $0x330] sm:$0xf]
    %v4827 = vld [vmem:[%s4621 + $0x334] sm:$0xf]
    %v4828 = vld [vmem:[%s4621 + $0x338] sm:$0xf]
    %v4829 = vld [vmem:[%s4621 + $0x33c] sm:$0xf]
    %v4830 = vld [vmem:[%s4621 + $0x340] sm:$0xf]
    %v4831 = vld [vmem:[%s4621 + $0x344] sm:$0xf]
    %v4832 = vld [vmem:[%s4621 + $0x348] sm:$0xf]
    %v4833 = vld [vmem:[%s4621 + $0x34c] sm:$0xf]
    %v4834 = vld [vmem:[%s4621 + $0x350] sm:$0xf]
    %v4835 = vld [vmem:[%s4621 + $0x354] sm:$0xf]
    %v4836 = vld [vmem:[%s4621 + $0x358] sm:$0xf]
    %v4837 = vld [vmem:[%s4621 + $0x35c] sm:$0xf]
    %v4838 = vld [vmem:[%s4621 + $0x360] sm:$0xf]
    %v4839 = vld [vmem:[%s4621 + $0x364] sm:$0xf]
    %v4840 = vld [vmem:[%s4621 + $0x368] sm:$0xf]
    %v4841 = vld [vmem:[%s4621 + $0x36c] sm:$0xf]
    %v4842 = vld [vmem:[%s4621 + $0x370] sm:$0xf]
    %v4843 = vld [vmem:[%s4621 + $0x374] sm:$0xf]
    %v4844 = vld [vmem:[%s4621 + $0x378] sm:$0xf]
    %v4845 = vld [vmem:[%s4621 + $0x37c] sm:$0xf]
    %v4846 = vld [vmem:[%s4621 + $0x380] sm:$0xf]
    %v4847 = vld [vmem:[%s4621 + $0x384] sm:$0xf]
    %v4848 = vld [vmem:[%s4621 + $0x388] sm:$0xf]
    %v4849 = vld [vmem:[%s4621 + $0x38c] sm:$0xf]
    %v4850 = vld [vmem:[%s4621 + $0x390] sm:$0xf]
    %v4851 = vld [vmem:[%s4621 + $0x394] sm:$0xf]
    %v4852 = vld [vmem:[%s4621 + $0x398] sm:$0xf]
    %v4853 = vld [vmem:[%s4621 + $0x39c] sm:$0xf]
    %v4854 = vld [vmem:[%s4621 + $0x3a0] sm:$0xf]
    %v4855 = vld [vmem:[%s4621 + $0x3a4] sm:$0xf]
    %v4856 = vld [vmem:[%s4621 + $0x3a8] sm:$0xf]
    %v4857 = vld [vmem:[%s4621 + $0x3ac] sm:$0xf]
    %v4858 = vld [vmem:[%s4621 + $0x3b0] sm:$0xf]
    %v4859 = vld [vmem:[%s4621 + $0x3b4] sm:$0xf]
    %v4860 = vld [vmem:[%s4621 + $0x3b8] sm:$0xf]
    %v4861 = vld [vmem:[%s4621 + $0x3bc] sm:$0xf]
    %v4862 = vld [vmem:[%s4621 + $0x3c0] sm:$0xf]
    %v4863 = vld [vmem:[%s4621 + $0x3c4] sm:$0xf]
    %v4864 = vld [vmem:[%s4621 + $0x3c8] sm:$0xf]
    %v4865 = vld [vmem:[%s4621 + $0x3cc] sm:$0xf]
    %v4866 = vld [vmem:[%s4621 + $0x3d0] sm:$0xf]
    %v4867 = vld [vmem:[%s4621 + $0x3d4] sm:$0xf]
    %v4868 = vld [vmem:[%s4621 + $0x3d8] sm:$0xf]
    %v4869 = vld [vmem:[%s4621 + $0x3dc] sm:$0xf]
    %v4870 = vld [vmem:[%s4621 + $0x3e0] sm:$0xf]
    %v4871 = vld [vmem:[%s4621 + $0x3e4] sm:$0xf]
    %v4872 = vld [vmem:[%s4621 + $0x3e8] sm:$0xf]
    %v4873 = vld [vmem:[%s4621 + $0x3ec] sm:$0xf]
    %v4874 = vld [vmem:[%s4621 + $0x3f0] sm:$0xf]
    %v4875 = vld [vmem:[%s4621 + $0x3f4] sm:$0xf]
    %v4876 = vld [vmem:[%s4621 + $0x3f8] sm:$0xf]
    %v4877 = vld [vmem:[%s4621 + $0x3fc] sm:$0xf]
    %v4878 = vld [vmem:[%s4621 + $0x400] sm:$0xf]
    %v4879 = vld [vmem:[%s4621 + $0x404] sm:$0xf]
    %v4880 = vld [vmem:[%s4621 + $0x408] sm:$0xf]
    %v4881 = vld [vmem:[%s4621 + $0x40c] sm:$0xf]
    %v4882 = vld [vmem:[%s4621 + $0x410] sm:$0xf]
    %v4883 = vld [vmem:[%s4621 + $0x414] sm:$0xf]
    %v4884 = vld [vmem:[%s4621 + $0x418] sm:$0xf]
    %v4885 = vld [vmem:[%s4621 + $0x41c] sm:$0xf]
    %v4886 = vld [vmem:[%s4621 + $0x420] sm:$0xf]
    %v4887 = vld [vmem:[%s4621 + $0x424] sm:$0xf]
    %v4888 = vld [vmem:[%s4621 + $0x428] sm:$0xf]
    %v4889 = vld [vmem:[%s4621 + $0x42c] sm:$0xf]
    %v4890 = vld [vmem:[%s4621 + $0x430] sm:$0xf]
    %v4891 = vld [vmem:[%s4621 + $0x434] sm:$0xf]
    %v4892 = vld [vmem:[%s4621 + $0x438] sm:$0xf]
    %v4893 = vld [vmem:[%s4621 + $0x43c] sm:$0xf]
    %v4894 = vld [vmem:[%s4621 + $0x440] sm:$0xf]
    %v4895 = vld [vmem:[%s4621 + $0x444] sm:$0xf]
    %v4896 = vld [vmem:[%s4621 + $0x448] sm:$0xf]
    %v4897 = vld [vmem:[%s4621 + $0x44c] sm:$0xf]
    %v4898 = vld [vmem:[%s4621 + $0x450] sm:$0xf]
    %v4899 = vld [vmem:[%s4621 + $0x454] sm:$0xf]
    %v4900 = vld [vmem:[%s4621 + $0x458] sm:$0xf]
    %v4901 = vld [vmem:[%s4621 + $0x45c] sm:$0xf]
    %v4902 = vld [vmem:[%s4621 + $0x460] sm:$0xf]
    %v4903 = vld [vmem:[%s4621 + $0x464] sm:$0xf]
    %v4904 = vld [vmem:[%s4621 + $0x468] sm:$0xf]
    %v4905 = vld [vmem:[%s4621 + $0x46c] sm:$0xf]
    %v4906 = vld [vmem:[%s4621 + $0x470] sm:$0xf]
    %v4907 = vld [vmem:[%s4621 + $0x474] sm:$0xf]
    %v4908 = vld [vmem:[%s4621 + $0x478] sm:$0xf]
    %v4909 = vld [vmem:[%s4621 + $0x47c] sm:$0xf]
    %v4910 = vld [vmem:[%s4621 + $0x480] sm:$0xf]
    %v4911 = vld [vmem:[%s4621 + $0x484] sm:$0xf]
    %v4912 = vld [vmem:[%s4621 + $0x488] sm:$0xf]
    %v4913 = vld [vmem:[%s4621 + $0x48c] sm:$0xf]
    %v4914 = vld [vmem:[%s4621 + $0x490] sm:$0xf]
    %v4915 = vld [vmem:[%s4621 + $0x494] sm:$0xf]
    %v4916 = vld [vmem:[%s4621 + $0x498] sm:$0xf]
    %v4917 = vld [vmem:[%s4621 + $0x49c] sm:$0xf]
    %v4918 = vld [vmem:[%s4621 + $0x4a0] sm:$0xf]
    %v4919 = vld [vmem:[%s4621 + $0x4a4] sm:$0xf]
    %v4920 = vld [vmem:[%s4621 + $0x4a8] sm:$0xf]
    %v4921 = vld [vmem:[%s4621 + $0x4ac] sm:$0xf]
    %v4922 = vld [vmem:[%s4621 + $0x4b0] sm:$0xf]
    %v4923 = vld [vmem:[%s4621 + $0x4b4] sm:$0xf]
    %v4924 = vld [vmem:[%s4621 + $0x4b8] sm:$0xf]
    %v4925 = vld [vmem:[%s4621 + $0x4bc] sm:$0xf]
    %v4926 = vld [vmem:[%s4621 + $0x4c0] sm:$0xf]
    %v4927 = vld [vmem:[%s4621 + $0x4c4] sm:$0xf]
    %v4928 = vld [vmem:[%s4621 + $0x4c8] sm:$0xf]
    %v4929 = vld [vmem:[%s4621 + $0x4cc] sm:$0xf]
    %v4930 = vld [vmem:[%s4621 + $0x4d0] sm:$0xf]
    %v4931 = vld [vmem:[%s4621 + $0x4d4] sm:$0xf]
    %v4932 = vld [vmem:[%s4621 + $0x4d8] sm:$0xf]
    %v4933 = vld [vmem:[%s4621 + $0x4dc] sm:$0xf]
    %v4934 = vld [vmem:[%s4621 + $0x4e0] sm:$0xf]
    %v4935 = vld [vmem:[%s4621 + $0x4e4] sm:$0xf]
    %v4936 = vld [vmem:[%s4621 + $0x4e8] sm:$0xf]
    %v4937 = vld [vmem:[%s4621 + $0x4ec] sm:$0xf]
    %v4938 = vld [vmem:[%s4621 + $0x4f0] sm:$0xf]
    %v4939 = vld [vmem:[%s4621 + $0x4f4] sm:$0xf]
    %v4940 = vld [vmem:[%s4621 + $0x4f8] sm:$0xf]
    %v4941 = vld [vmem:[%s4621 + $0x4fc] sm:$0xf]
    %v4942 = vld [vmem:[%s4621 + $0x500] sm:$0xf]
    %v4943 = vld [vmem:[%s4621 + $0x504] sm:$0xf]
    %v4944 = vld [vmem:[%s4621 + $0x508] sm:$0xf]
    %v4945 = vld [vmem:[%s4621 + $0x50c] sm:$0xf]
    %v4946 = vld [vmem:[%s4621 + $0x510] sm:$0xf]
    %v4947 = vld [vmem:[%s4621 + $0x514] sm:$0xf]
    %v4948 = vld [vmem:[%s4621 + $0x518] sm:$0xf]
    %v4949 = vld [vmem:[%s4621 + $0x51c] sm:$0xf]
    %v4950 = vld [vmem:[%s4621 + $0x520] sm:$0xf]
    %v4951 = vld [vmem:[%s4621 + $0x524] sm:$0xf]
    %v4952 = vld [vmem:[%s4621 + $0x528] sm:$0xf]
    %v4953 = vld [vmem:[%s4621 + $0x52c] sm:$0xf]
    %v4954 = vld [vmem:[%s4621 + $0x530] sm:$0xf]
    %v4955 = vld [vmem:[%s4621 + $0x534] sm:$0xf]
    %v4956 = vld [vmem:[%s4621 + $0x538] sm:$0xf]
    %v4957 = vld [vmem:[%s4621 + $0x53c] sm:$0xf]
    %v4958 = vld [vmem:[%s4621 + $0x540] sm:$0xf]
    %v4959 = vld [vmem:[%s4621 + $0x544] sm:$0xf]
    %v4960 = vld [vmem:[%s4621 + $0x548] sm:$0xf]
    %v4961 = vld [vmem:[%s4621 + $0x54c] sm:$0xf]
    %v4962 = vld [vmem:[%s4621 + $0x550] sm:$0xf]
    %v4963 = vld [vmem:[%s4621 + $0x554] sm:$0xf]
    %v4964 = vld [vmem:[%s4621 + $0x558] sm:$0xf]
    %v4965 = vld [vmem:[%s4621 + $0x55c] sm:$0xf]
    %v4966 = vld [vmem:[%s4621 + $0x560] sm:$0xf]
    %v4967 = vld [vmem:[%s4621 + $0x564] sm:$0xf]
    %v4968 = vld [vmem:[%s4621 + $0x568] sm:$0xf]
    %v4969 = vld [vmem:[%s4621 + $0x56c] sm:$0xf]
    %v4970 = vld [vmem:[%s4621 + $0x570] sm:$0xf]
    %v4971 = vld [vmem:[%s4621 + $0x574] sm:$0xf]
    %v4972 = vld [vmem:[%s4621 + $0x578] sm:$0xf]
    %v4973 = vld [vmem:[%s4621 + $0x57c] sm:$0xf]
    %v4974 = vld [vmem:[%s4621 + $0x580] sm:$0xf]
    %v4975 = vld [vmem:[%s4621 + $0x584] sm:$0xf]
    %v4976 = vld [vmem:[%s4621 + $0x588] sm:$0xf]
    %v4977 = vld [vmem:[%s4621 + $0x58c] sm:$0xf]
    %v4978 = vld [vmem:[%s4621 + $0x590] sm:$0xf]
    %v4979 = vld [vmem:[%s4621 + $0x594] sm:$0xf]
    %v4980 = vld [vmem:[%s4621 + $0x598] sm:$0xf]
    %v4981 = vld [vmem:[%s4621 + $0x59c] sm:$0xf]
    %v4982 = vld [vmem:[%s4621 + $0x5a0] sm:$0xf]
    %v4983 = vld [vmem:[%s4621 + $0x5a4] sm:$0xf]
    %v4984 = vld [vmem:[%s4621 + $0x5a8] sm:$0xf]
    %v4985 = vld [vmem:[%s4621 + $0x5ac] sm:$0xf]
    %v4986 = vld [vmem:[%s4621 + $0x5b0] sm:$0xf]
    %v4987 = vld [vmem:[%s4621 + $0x5b4] sm:$0xf]
    %v4988 = vld [vmem:[%s4621 + $0x5b8] sm:$0xf]
    %v4989 = vld [vmem:[%s4621 + $0x5bc] sm:$0xf]
    %v4990 = vld [vmem:[%s4621 + $0x5c0] sm:$0xf]
    %v4991 = vld [vmem:[%s4621 + $0x5c4] sm:$0xf]
    %v4992 = vld [vmem:[%s4621 + $0x5c8] sm:$0xf]
    %v4993 = vld [vmem:[%s4621 + $0x5cc] sm:$0xf]
    %v4994 = vld [vmem:[%s4621 + $0x5d0] sm:$0xf]
    %v4995 = vld [vmem:[%s4621 + $0x5d4] sm:$0xf]
    %v4996 = vld [vmem:[%s4621 + $0x5d8] sm:$0xf]
    %v4997 = vld [vmem:[%s4621 + $0x5dc] sm:$0xf]
    %v4998 = vld [vmem:[%s4621 + $0x5e0] sm:$0xf]
    %v4999 = vld [vmem:[%s4621 + $0x5e4] sm:$0xf]
    %v5000 = vld [vmem:[%s4621 + $0x5e8] sm:$0xf]
    %v5001 = vld [vmem:[%s4621 + $0x5ec] sm:$0xf]
    %v5002 = vld [vmem:[%s4621 + $0x5f0] sm:$0xf]
    %v5003 = vld [vmem:[%s4621 + $0x5f4] sm:$0xf]
    %v5004 = vld [vmem:[%s4621 + $0x5f8] sm:$0xf]
    %v5005 = vld [vmem:[%s4621 + $0x5fc] sm:$0xf]
    %v5006 = vld [vmem:[%s4621 + $0x600] sm:$0xf]
    %v5007 = vld [vmem:[%s4621 + $0x604] sm:$0xf]
    %v5008 = vld [vmem:[%s4621 + $0x608] sm:$0xf]
    %v5009 = vld [vmem:[%s4621 + $0x60c] sm:$0xf]
    %v5010 = vld [vmem:[%s4621 + $0x610] sm:$0xf]
    %v5011 = vld [vmem:[%s4621 + $0x614] sm:$0xf]
    %v5012 = vld [vmem:[%s4621 + $0x618] sm:$0xf]
    %v5013 = vld [vmem:[%s4621 + $0x61c] sm:$0xf]
    %s5014 = scalar_lea.vmem %s2, 2
    %v5015 = vld [vmem:[%s5014] sm:$0x1]
    %v5017 = vlaneseq
    %v5018 = vshrl.u32 %v5017, 7
    %v5019 = vsub.s32 0, %v5018
    %v5020 = vrot.slane %v5015, %v5019
    %v5026 = vcombine.high %v4617, %v4617
    %v5028 = vunpack.c.l.s4 1966171168
    %v5029 = vunpack.c.0.s8 %v5028
    %v5030 = vlaneseq
    %v5031 = vshrl.u32 %v5030, 7
    %v5032 = vsub.s32 %v5029, %v5031
    %v5033 = vrot.slane %v4617, %v5032
    %v5035 = vunpack.c.l.s4 1966171168
    %v5036 = vunpack.c.0.s8 %v5035
    %v5037 = vlaneseq
    %v5038 = vshrl.u32 %v5037, 7
    %v5039 = vsub.s32 %v5036, %v5038
    %v5040 = vrot.slane %v5026, %v5039
    %v5041 = vcombine.high %v5033, %v5033
    %v5042 = vcombine.high %v5040, %v5040
    %v5044 = vunpack.c.l.s4 1966171168
    %v5045 = vunpack.c.0.s8 %v5044
    %v5046 = vlaneseq
    %v5047 = vshrl.u32 %v5046, 7
    %v5048 = vsub.s32 %v5045, %v5047
    %v5049 = vrot.slane %v5033, %v5048
    %v5051 = vunpack.c.l.s4 1966171168
    %v5052 = vunpack.c.0.s8 %v5051
    %v5053 = vlaneseq
    %v5054 = vshrl.u32 %v5053, 7
    %v5055 = vsub.s32 %v5052, %v5054
    %v5056 = vrot.slane %v5040, %v5055
    %v5058 = vunpack.c.l.s4 1966171168
    %v5059 = vunpack.c.0.s8 %v5058
    %v5060 = vlaneseq
    %v5061 = vshrl.u32 %v5060, 7
    %v5062 = vsub.s32 %v5059, %v5061
    %v5063 = vrot.slane %v5041, %v5062
    %v5065 = vunpack.c.l.s4 1966171168
    %v5066 = vunpack.c.0.s8 %v5065
    %v5067 = vlaneseq
    %v5068 = vshrl.u32 %v5067, 7
    %v5069 = vsub.s32 %v5066, %v5068
    %v5070 = vrot.slane %v5042, %v5069
    %v5071 = vcombine.high %v5049, %v5049
    %v5072 = vcombine.high %v5056, %v5056
    %v5073 = vcombine.high %v5063, %v5063
    %v5074 = vcombine.high %v5070, %v5070
    %v5075 = vcombine.high %v4618, %v4618
    %v5077 = vunpack.c.l.s4 1966171168
    %v5078 = vunpack.c.0.s8 %v5077
    %v5079 = vlaneseq
    %v5080 = vshrl.u32 %v5079, 7
    %v5081 = vsub.s32 %v5078, %v5080
    %v5082 = vrot.slane %v4618, %v5081
    %v5084 = vunpack.c.l.s4 1966171168
    %v5085 = vunpack.c.0.s8 %v5084
    %v5086 = vlaneseq
    %v5087 = vshrl.u32 %v5086, 7
    %v5088 = vsub.s32 %v5085, %v5087
    %v5089 = vrot.slane %v5075, %v5088
    %v5090 = vcombine.high %v5082, %v5082
    %v5091 = vcombine.high %v5089, %v5089
    %v5093 = vunpack.c.l.s4 1966171168
    %v5094 = vunpack.c.0.s8 %v5093
    %v5095 = vlaneseq
    %v5096 = vshrl.u32 %v5095, 7
    %v5097 = vsub.s32 %v5094, %v5096
    %v5098 = vrot.slane %v5082, %v5097
    %v5100 = vunpack.c.l.s4 1966171168
    %v5101 = vunpack.c.0.s8 %v5100
    %v5102 = vlaneseq
    %v5103 = vshrl.u32 %v5102, 7
    %v5104 = vsub.s32 %v5101, %v5103
    %v5105 = vrot.slane %v5089, %v5104
    %v5107 = vunpack.c.l.s4 1966171168
    %v5108 = vunpack.c.0.s8 %v5107
    %v5109 = vlaneseq
    %v5110 = vshrl.u32 %v5109, 7
    %v5111 = vsub.s32 %v5108, %v5110
    %v5112 = vrot.slane %v5090, %v5111
    %v5114 = vunpack.c.l.s4 1966171168
    %v5115 = vunpack.c.0.s8 %v5114
    %v5116 = vlaneseq
    %v5117 = vshrl.u32 %v5116, 7
    %v5118 = vsub.s32 %v5115, %v5117
    %v5119 = vrot.slane %v5091, %v5118
    %v5120 = vcombine.high %v5098, %v5098
    %v5121 = vcombine.high %v5105, %v5105
    %v5122 = vcombine.high %v5112, %v5112
    %v5123 = vcombine.high %v5119, %v5119
    %v5124 = vcombine.high %v4619, %v4619
    %v5126 = vunpack.c.l.s4 1966171168
    %v5127 = vunpack.c.0.s8 %v5126
    %v5128 = vlaneseq
    %v5129 = vshrl.u32 %v5128, 7
    %v5130 = vsub.s32 %v5127, %v5129
    %v5131 = vrot.slane %v4619, %v5130
    %v5133 = vunpack.c.l.s4 1966171168
    %v5134 = vunpack.c.0.s8 %v5133
    %v5135 = vlaneseq
    %v5136 = vshrl.u32 %v5135, 7
    %v5137 = vsub.s32 %v5134, %v5136
    %v5138 = vrot.slane %v5124, %v5137
    %v5139 = vcombine.high %v5131, %v5131
    %v5140 = vcombine.high %v5138, %v5138
    %v5142 = vunpack.c.l.s4 1966171168
    %v5143 = vunpack.c.0.s8 %v5142
    %v5144 = vlaneseq
    %v5145 = vshrl.u32 %v5144, 7
    %v5146 = vsub.s32 %v5143, %v5145
    %v5147 = vrot.slane %v5131, %v5146
    %v5149 = vunpack.c.l.s4 1966171168
    %v5150 = vunpack.c.0.s8 %v5149
    %v5151 = vlaneseq
    %v5152 = vshrl.u32 %v5151, 7
    %v5153 = vsub.s32 %v5150, %v5152
    %v5154 = vrot.slane %v5138, %v5153
    %v5156 = vunpack.c.l.s4 1966171168
    %v5157 = vunpack.c.0.s8 %v5156
    %v5158 = vlaneseq
    %v5159 = vshrl.u32 %v5158, 7
    %v5160 = vsub.s32 %v5157, %v5159
    %v5161 = vrot.slane %v5139, %v5160
    %v5163 = vunpack.c.l.s4 1966171168
    %v5164 = vunpack.c.0.s8 %v5163
    %v5165 = vlaneseq
    %v5166 = vshrl.u32 %v5165, 7
    %v5167 = vsub.s32 %v5164, %v5166
    %v5168 = vrot.slane %v5140, %v5167
    %v5169 = vcombine.high %v5147, %v5147
    %v5170 = vcombine.high %v5154, %v5154
    %v5171 = vcombine.high %v5161, %v5161
    %v5172 = vcombine.high %v5168, %v5168
    %v5174 = vunpack.c.l.s4 1966171168
    %v5175 = vunpack.c.0.s8 %v5174
    %v5176 = vlaneseq
    %v5177 = vshrl.u32 %v5176, 7
    %v5178 = vsub.s32 %v5175, %v5177
    %v5179 = vrot.slane %v4620, %v5178
    %v5181 = vunpack.c.l.s4 1966171168
    %v5182 = vunpack.c.0.s8 %v5181
    %v5183 = vlaneseq
    %v5184 = vshrl.u32 %v5183, 7
    %v5185 = vsub.s32 %v5182, %v5184
    %v5186 = vrot.slane %v5179, %v5185
    %v5603 = vunpack.c.l.b16 %v4622
    %v5604 = vunpack.c.l.b16 %v4623
    %v5605 = vunpack.c.l.b16 %v4624
    %v5606 = vunpack.c.l.b16 %v4625
    %v5607 = vunpack.c.l.b16 %v4626
    %v5608 = vunpack.c.l.b16 %v4627
    %v5609 = vunpack.c.l.b16 %v4628
    %v5610 = vunpack.c.l.b16 %v4629
    %v5611 = vunpack.c.l.b16 %v4630
    %v5612 = vunpack.c.l.b16 %v4631
    %v5613 = vunpack.c.l.b16 %v4632
    %v5614 = vunpack.c.l.b16 %v4633
    %v5615 = vunpack.c.l.b16 %v4634
    %v5616 = vunpack.c.l.b16 %v4635
    %v5617 = vunpack.c.l.b16 %v4636
    %v5618 = vunpack.c.l.b16 %v4637
    %v5619 = vunpack.c.l.b16 %v4638
    %v5620 = vunpack.c.l.b16 %v4639
    %v5621 = vunpack.c.l.b16 %v4640
    %v5622 = vunpack.c.l.b16 %v4641
    %v5623 = vunpack.c.l.b16 %v4642
    %v5624 = vunpack.c.l.b16 %v4643
    %v5625 = vunpack.c.l.b16 %v4644
    %v5626 = vunpack.c.l.b16 %v4645
    %v5627 = vunpack.c.l.b16 %v4646
    %v5628 = vunpack.c.l.b16 %v4647
    %v5629 = vunpack.c.l.b16 %v4648
    %v5630 = vunpack.c.l.b16 %v4649
    %v5631 = vunpack.c.l.b16 %v4650
    %v5632 = vunpack.c.l.b16 %v4651
    %v5633 = vunpack.c.l.b16 %v4652
    %v5634 = vunpack.c.l.b16 %v4653
    %v5635 = vunpack.c.l.b16 %v4654
    %v5636 = vunpack.c.l.b16 %v4655
    %v5637 = vunpack.c.l.b16 %v4656
    %v5638 = vunpack.c.l.b16 %v4657
    %v5639 = vunpack.c.l.b16 %v4658
    %v5640 = vunpack.c.l.b16 %v4659
    %v5641 = vunpack.c.l.b16 %v4660
    %v5642 = vunpack.c.l.b16 %v4661
    %v5643 = vunpack.c.l.b16 %v4662
    %v5644 = vunpack.c.l.b16 %v4663
    %v5645 = vunpack.c.l.b16 %v4664
    %v5646 = vunpack.c.l.b16 %v4665
    %v5647 = vunpack.c.l.b16 %v4666
    %v5648 = vunpack.c.l.b16 %v4667
    %v5649 = vunpack.c.l.b16 %v4668
    %v5650 = vunpack.c.l.b16 %v4669
    %v5651 = vunpack.c.l.b16 %v4670
    %v5652 = vunpack.c.l.b16 %v4671
    %v5653 = vunpack.c.l.b16 %v4672
    %v5654 = vunpack.c.l.b16 %v4673
    %v5655 = vunpack.c.l.b16 %v4674
    %v5656 = vunpack.c.l.b16 %v4675
    %v5657 = vunpack.c.l.b16 %v4676
    %v5658 = vunpack.c.l.b16 %v4677
    %v5659 = vunpack.c.l.b16 %v4678
    %v5660 = vunpack.c.l.b16 %v4679
    %v5661 = vunpack.c.l.b16 %v4680
    %v5662 = vunpack.c.l.b16 %v4681
    %v5663 = vunpack.c.l.b16 %v4682
    %v5664 = vunpack.c.l.b16 %v4683
    %v5665 = vunpack.c.l.b16 %v4684
    %v5666 = vunpack.c.l.b16 %v4685
    %v5667 = vunpack.c.l.b16 %v4686
    %v5668 = vunpack.c.l.b16 %v4687
    %v5669 = vunpack.c.l.b16 %v4688
    %v5670 = vunpack.c.l.b16 %v4689
    %v5671 = vunpack.c.l.b16 %v4690
    %v5672 = vunpack.c.l.b16 %v4691
    %v5673 = vunpack.c.l.b16 %v4692
    %v5674 = vunpack.c.l.b16 %v4693
    %v5675 = vunpack.c.l.b16 %v4694
    %v5676 = vunpack.c.l.b16 %v4695
    %v5677 = vunpack.c.l.b16 %v4696
    %v5678 = vunpack.c.l.b16 %v4697
    %v5679 = vunpack.c.l.b16 %v4698
    %v5680 = vunpack.c.l.b16 %v4699
    %v5681 = vunpack.c.l.b16 %v4700
    %v5682 = vunpack.c.l.b16 %v4701
    %v5683 = vunpack.c.l.b16 %v4702
    %v5684 = vunpack.c.l.b16 %v4703
    %v5685 = vunpack.c.l.b16 %v4704
    %v5686 = vunpack.c.l.b16 %v4705
    %v5687 = vunpack.c.l.b16 %v4706
    %v5688 = vunpack.c.l.b16 %v4707
    %v5689 = vunpack.c.l.b16 %v4708
    %v5690 = vunpack.c.l.b16 %v4709
    %v5691 = vunpack.c.l.b16 %v4710
    %v5692 = vunpack.c.l.b16 %v4711
    %v5693 = vunpack.c.l.b16 %v4712
    %v5694 = vunpack.c.l.b16 %v4713
    %v5695 = vunpack.c.l.b16 %v4714
    %v5696 = vunpack.c.l.b16 %v4715
    %v5697 = vunpack.c.l.b16 %v4716
    %v5698 = vunpack.c.l.b16 %v4717
    %v5699 = vunpack.c.l.b16 %v4718
    %v5700 = vunpack.c.l.b16 %v4719
    %v5701 = vunpack.c.l.b16 %v4720
    %v5702 = vunpack.c.l.b16 %v4721
    %v5703 = vunpack.c.l.b16 %v4722
    %v5704 = vunpack.c.l.b16 %v4723
    %v5705 = vunpack.c.l.b16 %v4724
    %v5706 = vunpack.c.l.b16 %v4725
    %v5707 = vunpack.c.l.b16 %v4726
    %v5708 = vunpack.c.l.b16 %v4727
    %v5709 = vunpack.c.l.b16 %v4728
    %v5710 = vunpack.c.l.b16 %v4729
    %v5711 = vunpack.c.l.b16 %v4730
    %v5712 = vunpack.c.l.b16 %v4731
    %v5713 = vunpack.c.l.b16 %v4732
    %v5714 = vunpack.c.l.b16 %v4733
    %v5715 = vunpack.c.l.b16 %v4734
    %v5716 = vunpack.c.l.b16 %v4735
    %v5717 = vunpack.c.l.b16 %v4736
    %v5718 = vunpack.c.l.b16 %v4737
    %v5719 = vunpack.c.l.b16 %v4738
    %v5720 = vunpack.c.l.b16 %v4739
    %v5721 = vunpack.c.l.b16 %v4740
    %v5722 = vunpack.c.l.b16 %v4741
    %v5723 = vunpack.c.l.b16 %v4742
    %v5724 = vunpack.c.l.b16 %v4743
    %v5725 = vunpack.c.l.b16 %v4744
    %v5726 = vunpack.c.l.b16 %v4745
    %v5727 = vunpack.c.l.b16 %v4746
    %v5728 = vunpack.c.l.b16 %v4747
    %v5729 = vunpack.c.l.b16 %v4748
    %v5730 = vunpack.c.l.b16 %v4749
    %v5731 = vunpack.c.l.b16 %v4750
    %v5732 = vunpack.c.l.b16 %v4751
    %v5733 = vunpack.c.l.b16 %v4752
    %v5734 = vunpack.c.l.b16 %v4753
    %v5735 = vunpack.c.l.b16 %v4754
    %v5736 = vunpack.c.l.b16 %v4755
    %v5737 = vunpack.c.l.b16 %v4756
    %v5738 = vunpack.c.l.b16 %v4757
    %v5739 = vunpack.c.l.b16 %v4758
    %v5740 = vunpack.c.l.b16 %v4759
    %v5741 = vunpack.c.l.b16 %v4760
    %v5742 = vunpack.c.l.b16 %v4761
    %v5743 = vunpack.c.l.b16 %v4762
    %v5744 = vunpack.c.l.b16 %v4763
    %v5745 = vunpack.c.l.b16 %v4764
    %v5746 = vunpack.c.l.b16 %v4765
    %v5747 = vunpack.c.l.b16 %v4766
    %v5748 = vunpack.c.l.b16 %v4767
    %v5749 = vunpack.c.l.b16 %v4768
    %v5750 = vunpack.c.l.b16 %v4769
    %v5751 = vunpack.c.l.b16 %v4770
    %v5752 = vunpack.c.l.b16 %v4771
    %v5753 = vunpack.c.l.b16 %v4772
    %v5754 = vunpack.c.l.b16 %v4773
    %v5755 = vunpack.c.l.b16 %v4774
    %v5756 = vunpack.c.l.b16 %v4775
    %v5757 = vunpack.c.l.b16 %v4776
    %v5758 = vunpack.c.l.b16 %v4777
    %v5759 = vunpack.c.l.b16 %v4778
    %v5760 = vunpack.c.l.b16 %v4779
    %v5761 = vunpack.c.l.b16 %v4780
    %v5762 = vunpack.c.l.b16 %v4781
    %v5763 = vunpack.c.l.b16 %v4782
    %v5764 = vunpack.c.l.b16 %v4783
    %v5765 = vunpack.c.l.b16 %v4784
    %v5766 = vunpack.c.l.b16 %v4785
    %v5767 = vunpack.c.l.b16 %v4786
    %v5768 = vunpack.c.l.b16 %v4787
    %v5769 = vunpack.c.l.b16 %v4788
    %v5770 = vunpack.c.l.b16 %v4789
    %v5771 = vunpack.c.l.b16 %v4790
    %v5772 = vunpack.c.l.b16 %v4791
    %v5773 = vunpack.c.l.b16 %v4792
    %v5774 = vunpack.c.l.b16 %v4793
    %v5775 = vunpack.c.l.b16 %v4794
    %v5776 = vunpack.c.l.b16 %v4795
    %v5777 = vunpack.c.l.b16 %v4796
    %v5778 = vunpack.c.l.b16 %v4797
    %v5779 = vunpack.c.l.b16 %v4798
    %v5780 = vunpack.c.l.b16 %v4799
    %v5781 = vunpack.c.l.b16 %v4800
    %v5782 = vunpack.c.l.b16 %v4801
    %v5783 = vunpack.c.l.b16 %v4802
    %v5784 = vunpack.c.l.b16 %v4803
    %v5785 = vunpack.c.l.b16 %v4804
    %v5786 = vunpack.c.l.b16 %v4805
    %v5787 = vunpack.c.l.b16 %v4806
    %v5788 = vunpack.c.l.b16 %v4807
    %v5789 = vunpack.c.l.b16 %v4808
    %v5790 = vunpack.c.l.b16 %v4809
    %v5791 = vunpack.c.l.b16 %v4810
    %v5792 = vunpack.c.l.b16 %v4811
    %v5793 = vunpack.c.l.b16 %v4812
    %v5794 = vunpack.c.l.b16 %v4813
    %v5795 = vunpack.c.l.b16 %v4814
    %v5796 = vunpack.c.l.b16 %v4815
    %v5797 = vunpack.c.l.b16 %v4816
    %v5798 = vunpack.c.l.b16 %v4817
    %v5799 = vunpack.c.l.b16 %v4818
    %v5800 = vunpack.c.l.b16 %v4819
    %v5801 = vunpack.c.l.b16 %v4820
    %v5802 = vunpack.c.l.b16 %v4821
    %v5803 = vunpack.c.l.b16 %v4822
    %v5804 = vunpack.c.l.b16 %v4823
    %v5805 = vunpack.c.l.b16 %v4824
    %v5806 = vunpack.c.l.b16 %v4825
    %v5807 = vunpack.c.l.b16 %v4826
    %v5808 = vunpack.c.l.b16 %v4827
    %v5809 = vunpack.c.l.b16 %v4828
    %v5810 = vunpack.c.l.b16 %v4829
    %v5811 = vunpack.c.l.b16 %v4830
    %v5812 = vunpack.c.l.b16 %v4831
    %v5813 = vunpack.c.l.b16 %v4832
    %v5814 = vunpack.c.l.b16 %v4833
    %v5815 = vunpack.c.l.b16 %v4834
    %v5816 = vunpack.c.l.b16 %v4835
    %v5817 = vunpack.c.l.b16 %v4836
    %v5818 = vunpack.c.l.b16 %v4837
    %v5819 = vunpack.c.l.b16 %v4838
    %v5820 = vunpack.c.l.b16 %v4839
    %v5821 = vunpack.c.l.b16 %v4840
    %v5822 = vunpack.c.l.b16 %v4841
    %v5823 = vunpack.c.l.b16 %v4842
    %v5824 = vunpack.c.l.b16 %v4843
    %v5825 = vunpack.c.l.b16 %v4844
    %v5826 = vunpack.c.l.b16 %v4845
    %v5827 = vunpack.c.l.b16 %v4846
    %v5828 = vunpack.c.l.b16 %v4847
    %v5829 = vunpack.c.l.b16 %v4848
    %v5830 = vunpack.c.l.b16 %v4849
    %v5831 = vunpack.c.l.b16 %v4850
    %v5832 = vunpack.c.l.b16 %v4851
    %v5833 = vunpack.c.l.b16 %v4852
    %v5834 = vunpack.c.l.b16 %v4853
    %v5835 = vunpack.c.l.b16 %v4854
    %v5836 = vunpack.c.l.b16 %v4855
    %v5837 = vunpack.c.l.b16 %v4856
    %v5838 = vunpack.c.l.b16 %v4857
    %v5839 = vunpack.c.l.b16 %v4858
    %v5840 = vunpack.c.l.b16 %v4859
    %v5841 = vunpack.c.l.b16 %v4860
    %v5842 = vunpack.c.l.b16 %v4861
    %v5843 = vunpack.c.l.b16 %v4862
    %v5844 = vunpack.c.l.b16 %v4863
    %v5845 = vunpack.c.l.b16 %v4864
    %v5846 = vunpack.c.l.b16 %v4865
    %v5847 = vunpack.c.l.b16 %v4866
    %v5848 = vunpack.c.l.b16 %v4867
    %v5849 = vunpack.c.l.b16 %v4868
    %v5850 = vunpack.c.l.b16 %v4869
    %v5851 = vunpack.c.l.b16 %v4870
    %v5852 = vunpack.c.l.b16 %v4871
    %v5853 = vunpack.c.l.b16 %v4872
    %v5854 = vunpack.c.l.b16 %v4873
    %v5855 = vunpack.c.l.b16 %v4874
    %v5856 = vunpack.c.l.b16 %v4875
    %v5857 = vunpack.c.l.b16 %v4876
    %v5858 = vunpack.c.l.b16 %v4877
    %v5859 = vunpack.c.l.b16 %v4878
    %v5860 = vunpack.c.l.b16 %v4879
    %v5861 = vunpack.c.l.b16 %v4880
    %v5862 = vunpack.c.l.b16 %v4881
    %v5863 = vunpack.c.l.b16 %v4882
    %v5864 = vunpack.c.l.b16 %v4883
    %v5865 = vunpack.c.l.b16 %v4884
    %v5866 = vunpack.c.l.b16 %v4885
    %v5867 = vunpack.c.l.b16 %v4886
    %v5868 = vunpack.c.l.b16 %v4887
    %v5869 = vunpack.c.l.b16 %v4888
    %v5870 = vunpack.c.l.b16 %v4889
    %v5871 = vunpack.c.l.b16 %v4890
    %v5872 = vunpack.c.l.b16 %v4891
    %v5873 = vunpack.c.l.b16 %v4892
    %v5874 = vunpack.c.l.b16 %v4893
    %v5875 = vunpack.c.l.b16 %v4894
    %v5876 = vunpack.c.l.b16 %v4895
    %v5877 = vunpack.c.l.b16 %v4896
    %v5878 = vunpack.c.l.b16 %v4897
    %v5879 = vunpack.c.l.b16 %v4898
    %v5880 = vunpack.c.l.b16 %v4899
    %v5881 = vunpack.c.l.b16 %v4900
    %v5882 = vunpack.c.l.b16 %v4901
    %v5883 = vunpack.c.l.b16 %v4902
    %v5884 = vunpack.c.l.b16 %v4903
    %v5885 = vunpack.c.l.b16 %v4904
    %v5886 = vunpack.c.l.b16 %v4905
    %v5887 = vunpack.c.l.b16 %v4906
    %v5888 = vunpack.c.l.b16 %v4907
    %v5889 = vunpack.c.l.b16 %v4908
    %v5890 = vunpack.c.l.b16 %v4909
    %v5891 = vunpack.c.l.b16 %v4910
    %v5892 = vunpack.c.l.b16 %v4911
    %v5893 = vunpack.c.l.b16 %v4912
    %v5894 = vunpack.c.l.b16 %v4913
    %v5895 = vunpack.c.l.b16 %v4914
    %v5896 = vunpack.c.l.b16 %v4915
    %v5897 = vunpack.c.l.b16 %v4916
    %v5898 = vunpack.c.l.b16 %v4917
    %v5899 = vunpack.c.l.b16 %v4918
    %v5900 = vunpack.c.l.b16 %v4919
    %v5901 = vunpack.c.l.b16 %v4920
    %v5902 = vunpack.c.l.b16 %v4921
    %v5903 = vunpack.c.l.b16 %v4922
    %v5904 = vunpack.c.l.b16 %v4923
    %v5905 = vunpack.c.l.b16 %v4924
    %v5906 = vunpack.c.l.b16 %v4925
    %v5907 = vunpack.c.l.b16 %v4926
    %v5908 = vunpack.c.l.b16 %v4927
    %v5909 = vunpack.c.l.b16 %v4928
    %v5910 = vunpack.c.l.b16 %v4929
    %v5911 = vunpack.c.l.b16 %v4930
    %v5912 = vunpack.c.l.b16 %v4931
    %v5913 = vunpack.c.l.b16 %v4932
    %v5914 = vunpack.c.l.b16 %v4933
    %v5915 = vunpack.c.l.b16 %v4934
    %v5916 = vunpack.c.l.b16 %v4935
    %v5917 = vunpack.c.l.b16 %v4936
    %v5918 = vunpack.c.l.b16 %v4937
    %v5919 = vunpack.c.l.b16 %v4938
    %v5920 = vunpack.c.l.b16 %v4939
    %v5921 = vunpack.c.l.b16 %v4940
    %v5922 = vunpack.c.l.b16 %v4941
    %v5923 = vunpack.c.l.b16 %v4942
    %v5924 = vunpack.c.l.b16 %v4943
    %v5925 = vunpack.c.l.b16 %v4944
    %v5926 = vunpack.c.l.b16 %v4945
    %v5927 = vunpack.c.l.b16 %v4946
    %v5928 = vunpack.c.l.b16 %v4947
    %v5929 = vunpack.c.l.b16 %v4948
    %v5930 = vunpack.c.l.b16 %v4949
    %v5931 = vunpack.c.l.b16 %v4950
    %v5932 = vunpack.c.l.b16 %v4951
    %v5933 = vunpack.c.l.b16 %v4952
    %v5934 = vunpack.c.l.b16 %v4953
    %v5935 = vunpack.c.l.b16 %v4954
    %v5936 = vunpack.c.l.b16 %v4955
    %v5937 = vunpack.c.l.b16 %v4956
    %v5938 = vunpack.c.l.b16 %v4957
    %v5939 = vunpack.c.l.b16 %v4958
    %v5940 = vunpack.c.l.b16 %v4959
    %v5941 = vunpack.c.l.b16 %v4960
    %v5942 = vunpack.c.l.b16 %v4961
    %v5943 = vunpack.c.l.b16 %v4962
    %v5944 = vunpack.c.l.b16 %v4963
    %v5945 = vunpack.c.l.b16 %v4964
    %v5946 = vunpack.c.l.b16 %v4965
    %v5947 = vunpack.c.l.b16 %v4966
    %v5948 = vunpack.c.l.b16 %v4967
    %v5949 = vunpack.c.l.b16 %v4968
    %v5950 = vunpack.c.l.b16 %v4969
    %v5951 = vunpack.c.l.b16 %v4970
    %v5952 = vunpack.c.l.b16 %v4971
    %v5953 = vunpack.c.l.b16 %v4972
    %v5954 = vunpack.c.l.b16 %v4973
    %v5955 = vunpack.c.l.b16 %v4974
    %v5956 = vunpack.c.l.b16 %v4975
    %v5957 = vunpack.c.l.b16 %v4976
    %v5958 = vunpack.c.l.b16 %v4977
    %v5959 = vunpack.c.l.b16 %v4978
    %v5960 = vunpack.c.l.b16 %v4979
    %v5961 = vunpack.c.l.b16 %v4980
    %v5962 = vunpack.c.l.b16 %v4981
    %v5963 = vunpack.c.l.b16 %v4982
    %v5964 = vunpack.c.l.b16 %v4983
    %v5965 = vunpack.c.l.b16 %v4984
    %v5966 = vunpack.c.l.b16 %v4985
    %v5967 = vunpack.c.l.b16 %v4986
    %v5968 = vunpack.c.l.b16 %v4987
    %v5969 = vunpack.c.l.b16 %v4988
    %v5970 = vunpack.c.l.b16 %v4989
    %v5971 = vunpack.c.l.b16 %v4990
    %v5972 = vunpack.c.l.b16 %v4991
    %v5973 = vunpack.c.l.b16 %v4992
    %v5974 = vunpack.c.l.b16 %v4993
    %v5975 = vunpack.c.l.b16 %v4994
    %v5976 = vunpack.c.l.b16 %v4995
    %v5977 = vunpack.c.l.b16 %v4996
    %v5978 = vunpack.c.l.b16 %v4997
    %v5979 = vunpack.c.l.b16 %v4998
    %v5980 = vunpack.c.l.b16 %v4999
    %v5981 = vunpack.c.l.b16 %v5000
    %v5982 = vunpack.c.l.b16 %v5001
    %v5983 = vunpack.c.l.b16 %v5002
    %v5984 = vunpack.c.l.b16 %v5003
    %v5985 = vunpack.c.l.b16 %v5004
    %v5986 = vunpack.c.l.b16 %v5005
    %v5987 = vunpack.c.l.b16 %v5006
    %v5988 = vunpack.c.l.b16 %v5007
    %v5989 = vunpack.c.l.b16 %v5008
    %v5990 = vunpack.c.l.b16 %v5009
    %v5991 = vunpack.c.l.b16 %v5010
    %v5992 = vunpack.c.l.b16 %v5011
    %v5993 = vunpack.c.l.b16 %v5012
    %v5994 = vunpack.c.l.b16 %v5013
    %v5995 = vpack.c.b16 %v5604, %v5603
    %v5996 = vpack.c.b16 %v5606, %v5605
    %v5997 = vpack.c.b16 %v5608, %v5607
    %v5998 = vpack.c.b16 %v5610, %v5609
    %v5999 = vpack.c.b16 %v5612, %v5611
    %v6000 = vpack.c.b16 %v5614, %v5613
    %v6001 = vpack.c.b16 %v5616, %v5615
    %v6002 = vpack.c.b16 %v5618, %v5617
    %v6003 = vpack.c.b16 %v5620, %v5619
    %v6004 = vpack.c.b16 %v5622, %v5621
    %v6005 = vpack.c.b16 %v5624, %v5623
    %v6006 = vpack.c.b16 %v5626, %v5625
    %v6007 = vpack.c.b16 %v5628, %v5627
    %v6008 = vpack.c.b16 %v5630, %v5629
    %v6009 = vpack.c.b16 %v5632, %v5631
    %v6010 = vpack.c.b16 %v5634, %v5633
    %v6011 = vpack.c.b16 %v5636, %v5635
    %v6012 = vpack.c.b16 %v5638, %v5637
    %v6013 = vpack.c.b16 %v5640, %v5639
    %v6014 = vpack.c.b16 %v5642, %v5641
    %v6015 = vpack.c.b16 %v5644, %v5643
    %v6016 = vpack.c.b16 %v5646, %v5645
    %v6017 = vpack.c.b16 %v5648, %v5647
    %v6018 = vpack.c.b16 %v5650, %v5649
    %v6019 = vpack.c.b16 %v5652, %v5651
    %v6020 = vpack.c.b16 %v5654, %v5653
    %v6021 = vpack.c.b16 %v5656, %v5655
    %v6022 = vpack.c.b16 %v5658, %v5657
    %v6023 = vpack.c.b16 %v5660, %v5659
    %v6024 = vpack.c.b16 %v5662, %v5661
    %v6025 = vpack.c.b16 %v5664, %v5663
    %v6026 = vpack.c.b16 %v5666, %v5665
    %v6027 = vpack.c.b16 %v5668, %v5667
    %v6028 = vpack.c.b16 %v5670, %v5669
    %v6029 = vpack.c.b16 %v5672, %v5671
    %v6030 = vpack.c.b16 %v5674, %v5673
    %v6031 = vpack.c.b16 %v5676, %v5675
    %v6032 = vpack.c.b16 %v5678, %v5677
    %v6033 = vpack.c.b16 %v5680, %v5679
    %v6034 = vpack.c.b16 %v5682, %v5681
    %v6035 = vpack.c.b16 %v5684, %v5683
    %v6036 = vpack.c.b16 %v5686, %v5685
    %v6037 = vpack.c.b16 %v5688, %v5687
    %v6038 = vpack.c.b16 %v5690, %v5689
    %v6039 = vpack.c.b16 %v5692, %v5691
    %v6040 = vpack.c.b16 %v5694, %v5693
    %v6041 = vpack.c.b16 %v5696, %v5695
    %v6042 = vpack.c.b16 %v5698, %v5697
    %v6043 = vpack.c.b16 %v5700, %v5699
    %v6044 = vpack.c.b16 %v5702, %v5701
    %v6045 = vpack.c.b16 %v5704, %v5703
    %v6046 = vpack.c.b16 %v5706, %v5705
    %v6047 = vpack.c.b16 %v5708, %v5707
    %v6048 = vpack.c.b16 %v5710, %v5709
    %v6049 = vpack.c.b16 %v5712, %v5711
    %v6050 = vpack.c.b16 %v5714, %v5713
    %v6051 = vpack.c.b16 %v5716, %v5715
    %v6052 = vpack.c.b16 %v5718, %v5717
    %v6053 = vpack.c.b16 %v5720, %v5719
    %v6054 = vpack.c.b16 %v5722, %v5721
    %v6055 = vpack.c.b16 %v5724, %v5723
    %v6056 = vpack.c.b16 %v5726, %v5725
    %v6057 = vpack.c.b16 %v5728, %v5727
    %v6058 = vpack.c.b16 %v5730, %v5729
    %v6059 = vpack.c.b16 %v5732, %v5731
    %v6060 = vpack.c.b16 %v5734, %v5733
    %v6061 = vpack.c.b16 %v5736, %v5735
    %v6062 = vpack.c.b16 %v5738, %v5737
    %v6063 = vpack.c.b16 %v5740, %v5739
    %v6064 = vpack.c.b16 %v5742, %v5741
    %v6065 = vpack.c.b16 %v5744, %v5743
    %v6066 = vpack.c.b16 %v5746, %v5745
    %v6067 = vpack.c.b16 %v5748, %v5747
    %v6068 = vpack.c.b16 %v5750, %v5749
    %v6069 = vpack.c.b16 %v5752, %v5751
    %v6070 = vpack.c.b16 %v5754, %v5753
    %v6071 = vpack.c.b16 %v5756, %v5755
    %v6072 = vpack.c.b16 %v5758, %v5757
    %v6073 = vpack.c.b16 %v5760, %v5759
    %v6074 = vpack.c.b16 %v5762, %v5761
    %v6075 = vpack.c.b16 %v5764, %v5763
    %v6076 = vpack.c.b16 %v5766, %v5765
    %v6077 = vpack.c.b16 %v5768, %v5767
    %v6078 = vpack.c.b16 %v5770, %v5769
    %v6079 = vpack.c.b16 %v5772, %v5771
    %v6080 = vpack.c.b16 %v5774, %v5773
    %v6081 = vpack.c.b16 %v5776, %v5775
    %v6082 = vpack.c.b16 %v5778, %v5777
    %v6083 = vpack.c.b16 %v5780, %v5779
    %v6084 = vpack.c.b16 %v5782, %v5781
    %v6085 = vpack.c.b16 %v5784, %v5783
    %v6086 = vpack.c.b16 %v5786, %v5785
    %v6087 = vpack.c.b16 %v5788, %v5787
    %v6088 = vpack.c.b16 %v5790, %v5789
    %v6089 = vpack.c.b16 %v5792, %v5791
    %v6090 = vpack.c.b16 %v5794, %v5793
    %v6091 = vpack.c.b16 %v5796, %v5795
    %v6092 = vpack.c.b16 %v5798, %v5797
    %v6093 = vpack.c.b16 %v5800, %v5799
    %v6094 = vpack.c.b16 %v5802, %v5801
    %v6095 = vpack.c.b16 %v5804, %v5803
    %v6096 = vpack.c.b16 %v5806, %v5805
    %v6097 = vpack.c.b16 %v5808, %v5807
    %v6098 = vpack.c.b16 %v5810, %v5809
    %v6099 = vpack.c.b16 %v5812, %v5811
    %v6100 = vpack.c.b16 %v5814, %v5813
    %v6101 = vpack.c.b16 %v5816, %v5815
    %v6102 = vpack.c.b16 %v5818, %v5817
    %v6103 = vpack.c.b16 %v5820, %v5819
    %v6104 = vpack.c.b16 %v5822, %v5821
    %v6105 = vpack.c.b16 %v5824, %v5823
    %v6106 = vpack.c.b16 %v5826, %v5825
    %v6107 = vpack.c.b16 %v5828, %v5827
    %v6108 = vpack.c.b16 %v5830, %v5829
    %v6109 = vpack.c.b16 %v5832, %v5831
    %v6110 = vpack.c.b16 %v5834, %v5833
    %v6111 = vpack.c.b16 %v5836, %v5835
    %v6112 = vpack.c.b16 %v5838, %v5837
    %v6113 = vpack.c.b16 %v5840, %v5839
    %v6114 = vpack.c.b16 %v5842, %v5841
    %v6115 = vpack.c.b16 %v5844, %v5843
    %v6116 = vpack.c.b16 %v5846, %v5845
    %v6117 = vpack.c.b16 %v5848, %v5847
    %v6118 = vpack.c.b16 %v5850, %v5849
    %v6119 = vpack.c.b16 %v5852, %v5851
    %v6120 = vpack.c.b16 %v5854, %v5853
    %v6121 = vpack.c.b16 %v5856, %v5855
    %v6122 = vpack.c.b16 %v5858, %v5857
    %v6123 = vpack.c.b16 %v5860, %v5859
    %v6124 = vpack.c.b16 %v5862, %v5861
    %v6125 = vpack.c.b16 %v5864, %v5863
    %v6126 = vpack.c.b16 %v5866, %v5865
    %v6127 = vpack.c.b16 %v5868, %v5867
    %v6128 = vpack.c.b16 %v5870, %v5869
    %v6129 = vpack.c.b16 %v5872, %v5871
    %v6130 = vpack.c.b16 %v5874, %v5873
    %v6131 = vpack.c.b16 %v5876, %v5875
    %v6132 = vpack.c.b16 %v5878, %v5877
    %v6133 = vpack.c.b16 %v5880, %v5879
    %v6134 = vpack.c.b16 %v5882, %v5881
    %v6135 = vpack.c.b16 %v5884, %v5883
    %v6136 = vpack.c.b16 %v5886, %v5885
    %v6137 = vpack.c.b16 %v5888, %v5887
    %v6138 = vpack.c.b16 %v5890, %v5889
    %v6139 = vpack.c.b16 %v5892, %v5891
    %v6140 = vpack.c.b16 %v5894, %v5893
    %v6141 = vpack.c.b16 %v5896, %v5895
    %v6142 = vpack.c.b16 %v5898, %v5897
    %v6143 = vpack.c.b16 %v5900, %v5899
    %v6144 = vpack.c.b16 %v5902, %v5901
    %v6145 = vpack.c.b16 %v5904, %v5903
    %v6146 = vpack.c.b16 %v5906, %v5905
    %v6147 = vpack.c.b16 %v5908, %v5907
    %v6148 = vpack.c.b16 %v5910, %v5909
    %v6149 = vpack.c.b16 %v5912, %v5911
    %v6150 = vpack.c.b16 %v5914, %v5913
    %v6151 = vpack.c.b16 %v5916, %v5915
    %v6152 = vpack.c.b16 %v5918, %v5917
    %v6153 = vpack.c.b16 %v5920, %v5919
    %v6154 = vpack.c.b16 %v5922, %v5921
    %v6155 = vpack.c.b16 %v5924, %v5923
    %v6156 = vpack.c.b16 %v5926, %v5925
    %v6157 = vpack.c.b16 %v5928, %v5927
    %v6158 = vpack.c.b16 %v5930, %v5929
    %v6159 = vpack.c.b16 %v5932, %v5931
    %v6160 = vpack.c.b16 %v5934, %v5933
    %v6161 = vpack.c.b16 %v5936, %v5935
    %v6162 = vpack.c.b16 %v5938, %v5937
    %v6163 = vpack.c.b16 %v5940, %v5939
    %v6164 = vpack.c.b16 %v5942, %v5941
    %v6165 = vpack.c.b16 %v5944, %v5943
    %v6166 = vpack.c.b16 %v5946, %v5945
    %v6167 = vpack.c.b16 %v5948, %v5947
    %v6168 = vpack.c.b16 %v5950, %v5949
    %v6169 = vpack.c.b16 %v5952, %v5951
    %v6170 = vpack.c.b16 %v5954, %v5953
    %v6171 = vpack.c.b16 %v5956, %v5955
    %v6172 = vpack.c.b16 %v5958, %v5957
    %v6173 = vpack.c.b16 %v5960, %v5959
    %v6174 = vpack.c.b16 %v5962, %v5961
    %v6175 = vpack.c.b16 %v5964, %v5963
    %v6176 = vpack.c.b16 %v5966, %v5965
    %v6177 = vpack.c.b16 %v5968, %v5967
    %v6178 = vpack.c.b16 %v5970, %v5969
    %v6179 = vpack.c.b16 %v5972, %v5971
    %v6180 = vpack.c.b16 %v5974, %v5973
    %v6181 = vpack.c.b16 %v5976, %v5975
    %v6182 = vpack.c.b16 %v5978, %v5977
    %v6183 = vpack.c.b16 %v5980, %v5979
    %v6184 = vpack.c.b16 %v5982, %v5981
    %v6185 = vpack.c.b16 %v5984, %v5983
    %v6186 = vpack.c.b16 %v5986, %v5985
    %v6187 = vpack.c.b16 %v5988, %v5987
    %v6188 = vpack.c.b16 %v5990, %v5989
    %v6189 = vpack.c.b16 %v5992, %v5991
    %v6190 = vpack.c.b16 %v5994, %v5993
    %v6388 = vsel %vm1796, %v5186, 0
    %6390 = vmatprep.subr.bf16.mxu0 0
    %6391 = vmatpush1.bf16.msra.mxu0 %v6002
    %6392 = vmatprep.subr.bf16.mxu0 0
    %6393 = vmatpush1.bf16.msra.mxu0 %v6001
    %6394 = vmatprep.subr.bf16.mxu0 0
    %6395 = vmatpush1.bf16.msra.mxu0 %v6000
    %6396 = vmatprep.subr.bf16.mxu0 0
    %6397 = vmatpush1.bf16.msra.mxu0 %v5999
    %6398 = vmatprep.subr.bf16.mxu0 0
    %6399 = vmatpush1.bf16.msra.mxu0 %v5998
    %6400 = vmatprep.subr.bf16.mxu0 0
    %6401 = vmatpush1.bf16.msra.mxu0 %v5997
    %6402 = vmatprep.subr.bf16.mxu0 0
    %6403 = vmatpush1.bf16.msra.mxu0 %v5996
    %6404 = vmatprep.subr.bf16.mxu0 0
    %6405 = vmatpush1.bf16.msra.mxu0 %v5995
    %6406 = vmatprep.subr.bf16.mxu0 0
    %6407 = vmatpush2.bf16.msra.mxu0 %v6010
    %6408 = vmatprep.subr.bf16.mxu0 0
    %6409 = vmatpush2.bf16.msra.mxu0 %v6009
    %6410 = vmatprep.subr.bf16.mxu0 0
    %6411 = vmatpush2.bf16.msra.mxu0 %v6008
    %6412 = vmatprep.subr.bf16.mxu0 0
    %6413 = vmatpush2.bf16.msra.mxu0 %v6007
    %6414 = vmatprep.subr.bf16.mxu0 0
    %6415 = vmatpush2.bf16.msra.mxu0 %v6006
    %6416 = vmatprep.subr.bf16.mxu0 0
    %6417 = vmatpush2.bf16.msra.mxu0 %v6005
    %6418 = vmatprep.subr.bf16.mxu0 0
    %6419 = vmatpush2.bf16.msra.mxu0 %v6004
    %6420 = vmatprep.subr.bf16.mxu0 0
    %6421 = vmatpush2.bf16.msra.mxu0 %v6003
    %6422 = vmatprep.mubr.bf16.mxu0 %v5063
    %6423 = vmatmul.mubr.bf16.gmra.mxu0 %v5049
    %v6424 = vpop.f32.mrf.mxu0
    %v6425 = vadd.f32 %v5020, %v6424
    %v6426 = vpop.f32.mrf.mxu0
    %v6427 = vpop.f32.mrf.mxu0
    %v6428 = vpop.f32.mrf.mxu0
    %6429 = vdwg.mxu0
    %6430 = vmatprep.subr.bf16.mxu0 0
    %6431 = vmatpush1.bf16.msra.mxu0 %v6018
    %6432 = vmatprep.subr.bf16.mxu0 0
    %6433 = vmatpush1.bf16.msra.mxu0 %v6017
    %6434 = vmatprep.subr.bf16.mxu0 0
    %6435 = vmatpush1.bf16.msra.mxu0 %v6016
    %6436 = vmatprep.subr.bf16.mxu0 0
    %6437 = vmatpush1.bf16.msra.mxu0 %v6015
    %6438 = vmatprep.subr.bf16.mxu0 0
    %6439 = vmatpush1.bf16.msra.mxu0 %v6014
    %6440 = vmatprep.subr.bf16.mxu0 0
    %6441 = vmatpush1.bf16.msra.mxu0 %v6013
    %6442 = vmatprep.subr.bf16.mxu0 0
    %6443 = vmatpush1.bf16.msra.mxu0 %v6012
    %6444 = vmatprep.subr.bf16.mxu0 0
    %6445 = vmatpush1.bf16.msra.mxu0 %v6011
    %6446 = vmatprep.subr.bf16.mxu0 0
    %6447 = vmatpush2.bf16.msra.mxu0 %v6026
    %6448 = vmatprep.subr.bf16.mxu0 0
    %6449 = vmatpush2.bf16.msra.mxu0 %v6025
    %6450 = vmatprep.subr.bf16.mxu0 0
    %6451 = vmatpush2.bf16.msra.mxu0 %v6024
    %6452 = vmatprep.subr.bf16.mxu0 0
    %6453 = vmatpush2.bf16.msra.mxu0 %v6023
    %6454 = vmatprep.subr.bf16.mxu0 0
    %6455 = vmatpush2.bf16.msra.mxu0 %v6022
    %6456 = vmatprep.subr.bf16.mxu0 0
    %6457 = vmatpush2.bf16.msra.mxu0 %v6021
    %6458 = vmatprep.subr.bf16.mxu0 0
    %6459 = vmatpush2.bf16.msra.mxu0 %v6020
    %6460 = vmatprep.subr.bf16.mxu0 0
    %6461 = vmatpush2.bf16.msra.mxu0 %v6019
    %6462 = vmatprep.mubr.bf16.mxu0 %v5073
    %6463 = vmatmul.mubr.bf16.gmra.mxu0 %v5071
    %v6464 = vpop.f32.mrf.mxu0
    %v6465 = vadd.f32 %v6425, %v6464
    %v6466 = vpop.f32.mrf.mxu0
    %v6467 = vpop.f32.mrf.mxu0
    %v6468 = vpop.f32.mrf.mxu0
    %6469 = vdwg.mxu0
    %6470 = vmatprep.subr.bf16.mxu0 0
    %6471 = vmatpush1.bf16.msra.mxu0 %v6034
    %6472 = vmatprep.subr.bf16.mxu0 0
    %6473 = vmatpush1.bf16.msra.mxu0 %v6033
    %6474 = vmatprep.subr.bf16.mxu0 0
    %6475 = vmatpush1.bf16.msra.mxu0 %v6032
    %6476 = vmatprep.subr.bf16.mxu0 0
    %6477 = vmatpush1.bf16.msra.mxu0 %v6031
    %6478 = vmatprep.subr.bf16.mxu0 0
    %6479 = vmatpush1.bf16.msra.mxu0 %v6030
    %6480 = vmatprep.subr.bf16.mxu0 0
    %6481 = vmatpush1.bf16.msra.mxu0 %v6029
    %6482 = vmatprep.subr.bf16.mxu0 0
    %6483 = vmatpush1.bf16.msra.mxu0 %v6028
    %6484 = vmatprep.subr.bf16.mxu0 0
    %6485 = vmatpush1.bf16.msra.mxu0 %v6027
    %6486 = vmatprep.subr.bf16.mxu0 0
    %6487 = vmatpush2.bf16.msra.mxu0 %v6042
    %6488 = vmatprep.subr.bf16.mxu0 0
    %6489 = vmatpush2.bf16.msra.mxu0 %v6041
    %6490 = vmatprep.subr.bf16.mxu0 0
    %6491 = vmatpush2.bf16.msra.mxu0 %v6040
    %6492 = vmatprep.subr.bf16.mxu0 0
    %6493 = vmatpush2.bf16.msra.mxu0 %v6039
    %6494 = vmatprep.subr.bf16.mxu0 0
    %6495 = vmatpush2.bf16.msra.mxu0 %v6038
    %6496 = vmatprep.subr.bf16.mxu0 0
    %6497 = vmatpush2.bf16.msra.mxu0 %v6037
    %6498 = vmatprep.subr.bf16.mxu0 0
    %6499 = vmatpush2.bf16.msra.mxu0 %v6036
    %6500 = vmatprep.subr.bf16.mxu0 0
    %6501 = vmatpush2.bf16.msra.mxu0 %v6035
    %6502 = vmatprep.mubr.bf16.mxu0 %v5070
    %6503 = vmatmul.mubr.bf16.gmra.mxu0 %v5056
    %v6504 = vpop.f32.mrf.mxu0
    %v6505 = vadd.f32 %v6465, %v6504
    %v6506 = vpop.f32.mrf.mxu0
    %v6507 = vpop.f32.mrf.mxu0
    %v6508 = vpop.f32.mrf.mxu0
    %6509 = vdwg.mxu0
    %6510 = vmatprep.subr.bf16.mxu0 0
    %6511 = vmatpush1.bf16.msra.mxu0 %v6050
    %6512 = vmatprep.subr.bf16.mxu0 0
    %6513 = vmatpush1.bf16.msra.mxu0 %v6049
    %6514 = vmatprep.subr.bf16.mxu0 0
    %6515 = vmatpush1.bf16.msra.mxu0 %v6048
    %6516 = vmatprep.subr.bf16.mxu0 0
    %6517 = vmatpush1.bf16.msra.mxu0 %v6047
    %6518 = vmatprep.subr.bf16.mxu0 0
    %6519 = vmatpush1.bf16.msra.mxu0 %v6046
    %6520 = vmatprep.subr.bf16.mxu0 0
    %6521 = vmatpush1.bf16.msra.mxu0 %v6045
    %6522 = vmatprep.subr.bf16.mxu0 0
    %6523 = vmatpush1.bf16.msra.mxu0 %v6044
    %6524 = vmatprep.subr.bf16.mxu0 0
    %6525 = vmatpush1.bf16.msra.mxu0 %v6043
    %6526 = vmatprep.subr.bf16.mxu0 0
    %6527 = vmatpush2.bf16.msra.mxu0 %v6058
    %6528 = vmatprep.subr.bf16.mxu0 0
    %6529 = vmatpush2.bf16.msra.mxu0 %v6057
    %6530 = vmatprep.subr.bf16.mxu0 0
    %6531 = vmatpush2.bf16.msra.mxu0 %v6056
    %6532 = vmatprep.subr.bf16.mxu0 0
    %6533 = vmatpush2.bf16.msra.mxu0 %v6055
    %6534 = vmatprep.subr.bf16.mxu0 0
    %6535 = vmatpush2.bf16.msra.mxu0 %v6054
    %6536 = vmatprep.subr.bf16.mxu0 0
    %6537 = vmatpush2.bf16.msra.mxu0 %v6053
    %6538 = vmatprep.subr.bf16.mxu0 0
    %6539 = vmatpush2.bf16.msra.mxu0 %v6052
    %6540 = vmatprep.subr.bf16.mxu0 0
    %6541 = vmatpush2.bf16.msra.mxu0 %v6051
    %6542 = vmatprep.mubr.bf16.mxu0 %v5074
    %6543 = vmatmul.mubr.bf16.gmra.mxu0 %v5072
    %v6544 = vpop.f32.mrf.mxu0
    %v6545 = vadd.f32 %v6505, %v6544
    %v6546 = vpop.f32.mrf.mxu0
    %v6547 = vpop.f32.mrf.mxu0
    %v6548 = vpop.f32.mrf.mxu0
    %6549 = vdwg.mxu0
    %6550 = vmatprep.subr.bf16.mxu0 0
    %6551 = vmatpush1.bf16.msra.mxu0 %v6066
    %6552 = vmatprep.subr.bf16.mxu0 0
    %6553 = vmatpush1.bf16.msra.mxu0 %v6065
    %6554 = vmatprep.subr.bf16.mxu0 0
    %6555 = vmatpush1.bf16.msra.mxu0 %v6064
    %6556 = vmatprep.subr.bf16.mxu0 0
    %6557 = vmatpush1.bf16.msra.mxu0 %v6063
    %6558 = vmatprep.subr.bf16.mxu0 0
    %6559 = vmatpush1.bf16.msra.mxu0 %v6062
    %6560 = vmatprep.subr.bf16.mxu0 0
    %6561 = vmatpush1.bf16.msra.mxu0 %v6061
    %6562 = vmatprep.subr.bf16.mxu0 0
    %6563 = vmatpush1.bf16.msra.mxu0 %v6060
    %6564 = vmatprep.subr.bf16.mxu0 0
    %6565 = vmatpush1.bf16.msra.mxu0 %v6059
    %6566 = vmatprep.subr.bf16.mxu0 0
    %6567 = vmatpush2.bf16.msra.mxu0 %v6074
    %6568 = vmatprep.subr.bf16.mxu0 0
    %6569 = vmatpush2.bf16.msra.mxu0 %v6073
    %6570 = vmatprep.subr.bf16.mxu0 0
    %6571 = vmatpush2.bf16.msra.mxu0 %v6072
    %6572 = vmatprep.subr.bf16.mxu0 0
    %6573 = vmatpush2.bf16.msra.mxu0 %v6071
    %6574 = vmatprep.subr.bf16.mxu0 0
    %6575 = vmatpush2.bf16.msra.mxu0 %v6070
    %6576 = vmatprep.subr.bf16.mxu0 0
    %6577 = vmatpush2.bf16.msra.mxu0 %v6069
    %6578 = vmatprep.subr.bf16.mxu0 0
    %6579 = vmatpush2.bf16.msra.mxu0 %v6068
    %6580 = vmatprep.subr.bf16.mxu0 0
    %6581 = vmatpush2.bf16.msra.mxu0 %v6067
    %6582 = vmatprep.mubr.bf16.mxu0 %v5112
    %6583 = vmatmul.mubr.bf16.gmra.mxu0 %v5098
    %v6584 = vpop.f32.mrf.mxu0
    %v6585 = vadd.f32 %v6545, %v6584
    %v6586 = vpop.f32.mrf.mxu0
    %v6587 = vpop.f32.mrf.mxu0
    %v6588 = vpop.f32.mrf.mxu0
    %6589 = vdwg.mxu0
    %6590 = vmatprep.subr.bf16.mxu0 0
    %6591 = vmatpush1.bf16.msra.mxu0 %v6082
    %6592 = vmatprep.subr.bf16.mxu0 0
    %6593 = vmatpush1.bf16.msra.mxu0 %v6081
    %6594 = vmatprep.subr.bf16.mxu0 0
    %6595 = vmatpush1.bf16.msra.mxu0 %v6080
    %6596 = vmatprep.subr.bf16.mxu0 0
    %6597 = vmatpush1.bf16.msra.mxu0 %v6079
    %6598 = vmatprep.subr.bf16.mxu0 0
    %6599 = vmatpush1.bf16.msra.mxu0 %v6078
    %6600 = vmatprep.subr.bf16.mxu0 0
    %6601 = vmatpush1.bf16.msra.mxu0 %v6077
    %6602 = vmatprep.subr.bf16.mxu0 0
    %6603 = vmatpush1.bf16.msra.mxu0 %v6076
    %6604 = vmatprep.subr.bf16.mxu0 0
    %6605 = vmatpush1.bf16.msra.mxu0 %v6075
    %6606 = vmatprep.subr.bf16.mxu0 0
    %6607 = vmatpush2.bf16.msra.mxu0 %v6090
    %6608 = vmatprep.subr.bf16.mxu0 0
    %6609 = vmatpush2.bf16.msra.mxu0 %v6089
    %6610 = vmatprep.subr.bf16.mxu0 0
    %6611 = vmatpush2.bf16.msra.mxu0 %v6088
    %6612 = vmatprep.subr.bf16.mxu0 0
    %6613 = vmatpush2.bf16.msra.mxu0 %v6087
    %6614 = vmatprep.subr.bf16.mxu0 0
    %6615 = vmatpush2.bf16.msra.mxu0 %v6086
    %6616 = vmatprep.subr.bf16.mxu0 0
    %6617 = vmatpush2.bf16.msra.mxu0 %v6085
    %6618 = vmatprep.subr.bf16.mxu0 0
    %6619 = vmatpush2.bf16.msra.mxu0 %v6084
    %6620 = vmatprep.subr.bf16.mxu0 0
    %6621 = vmatpush2.bf16.msra.mxu0 %v6083
    %6622 = vmatprep.mubr.bf16.mxu0 %v5122
    %6623 = vmatmul.mubr.bf16.gmra.mxu0 %v5120
    %v6624 = vpop.f32.mrf.mxu0
    %v6625 = vadd.f32 %v6585, %v6624
    %v6626 = vpop.f32.mrf.mxu0
    %v6627 = vpop.f32.mrf.mxu0
    %v6628 = vpop.f32.mrf.mxu0
    %6629 = vdwg.mxu0
    %6630 = vmatprep.subr.bf16.mxu0 0
    %6631 = vmatpush1.bf16.msra.mxu0 %v6098
    %6632 = vmatprep.subr.bf16.mxu0 0
    %6633 = vmatpush1.bf16.msra.mxu0 %v6097
    %6634 = vmatprep.subr.bf16.mxu0 0
    %6635 = vmatpush1.bf16.msra.mxu0 %v6096
    %6636 = vmatprep.subr.bf16.mxu0 0
    %6637 = vmatpush1.bf16.msra.mxu0 %v6095
    %6638 = vmatprep.subr.bf16.mxu0 0
    %6639 = vmatpush1.bf16.msra.mxu0 %v6094
    %6640 = vmatprep.subr.bf16.mxu0 0
    %6641 = vmatpush1.bf16.msra.mxu0 %v6093
    %6642 = vmatprep.subr.bf16.mxu0 0
    %6643 = vmatpush1.bf16.msra.mxu0 %v6092
    %6644 = vmatprep.subr.bf16.mxu0 0
    %6645 = vmatpush1.bf16.msra.mxu0 %v6091
    %6646 = vmatprep.subr.bf16.mxu0 0
    %6647 = vmatpush2.bf16.msra.mxu0 %v6106
    %6648 = vmatprep.subr.bf16.mxu0 0
    %6649 = vmatpush2.bf16.msra.mxu0 %v6105
    %6650 = vmatprep.subr.bf16.mxu0 0
    %6651 = vmatpush2.bf16.msra.mxu0 %v6104
    %6652 = vmatprep.subr.bf16.mxu0 0
    %6653 = vmatpush2.bf16.msra.mxu0 %v6103
    %6654 = vmatprep.subr.bf16.mxu0 0
    %6655 = vmatpush2.bf16.msra.mxu0 %v6102
    %6656 = vmatprep.subr.bf16.mxu0 0
    %6657 = vmatpush2.bf16.msra.mxu0 %v6101
    %6658 = vmatprep.subr.bf16.mxu0 0
    %6659 = vmatpush2.bf16.msra.mxu0 %v6100
    %6660 = vmatprep.subr.bf16.mxu0 0
    %6661 = vmatpush2.bf16.msra.mxu0 %v6099
    %6662 = vmatprep.mubr.bf16.mxu0 %v5119
    %6663 = vmatmul.mubr.bf16.gmra.mxu0 %v5105
    %v6664 = vpop.f32.mrf.mxu0
    %v6665 = vadd.f32 %v6625, %v6664
    %v6666 = vpop.f32.mrf.mxu0
    %v6667 = vpop.f32.mrf.mxu0
    %v6668 = vpop.f32.mrf.mxu0
    %6669 = vdwg.mxu0
    %6670 = vmatprep.subr.bf16.mxu0 0
    %6671 = vmatpush1.bf16.msra.mxu0 %v6114
    %6672 = vmatprep.subr.bf16.mxu0 0
    %6673 = vmatpush1.bf16.msra.mxu0 %v6113
    %6674 = vmatprep.subr.bf16.mxu0 0
    %6675 = vmatpush1.bf16.msra.mxu0 %v6112
    %6676 = vmatprep.subr.bf16.mxu0 0
    %6677 = vmatpush1.bf16.msra.mxu0 %v6111
    %6678 = vmatprep.subr.bf16.mxu0 0
    %6679 = vmatpush1.bf16.msra.mxu0 %v6110
    %6680 = vmatprep.subr.bf16.mxu0 0
    %6681 = vmatpush1.bf16.msra.mxu0 %v6109
    %6682 = vmatprep.subr.bf16.mxu0 0
    %6683 = vmatpush1.bf16.msra.mxu0 %v6108
    %6684 = vmatprep.subr.bf16.mxu0 0
    %6685 = vmatpush1.bf16.msra.mxu0 %v6107
    %6686 = vmatprep.subr.bf16.mxu0 0
    %6687 = vmatpush2.bf16.msra.mxu0 %v6122
    %6688 = vmatprep.subr.bf16.mxu0 0
    %6689 = vmatpush2.bf16.msra.mxu0 %v6121
    %6690 = vmatprep.subr.bf16.mxu0 0
    %6691 = vmatpush2.bf16.msra.mxu0 %v6120
    %6692 = vmatprep.subr.bf16.mxu0 0
    %6693 = vmatpush2.bf16.msra.mxu0 %v6119
    %6694 = vmatprep.subr.bf16.mxu0 0
    %6695 = vmatpush2.bf16.msra.mxu0 %v6118
    %6696 = vmatprep.subr.bf16.mxu0 0
    %6697 = vmatpush2.bf16.msra.mxu0 %v6117
    %6698 = vmatprep.subr.bf16.mxu0 0
    %6699 = vmatpush2.bf16.msra.mxu0 %v6116
    %6700 = vmatprep.subr.bf16.mxu0 0
    %6701 = vmatpush2.bf16.msra.mxu0 %v6115
    %6702 = vmatprep.mubr.bf16.mxu0 %v5123
    %6703 = vmatmul.mubr.bf16.gmra.mxu0 %v5121
    %v6704 = vpop.f32.mrf.mxu0
    %v6705 = vadd.f32 %v6665, %v6704
    %v6706 = vpop.f32.mrf.mxu0
    %v6707 = vpop.f32.mrf.mxu0
    %v6708 = vpop.f32.mrf.mxu0
    %6709 = vdwg.mxu0
    %6710 = vmatprep.subr.bf16.mxu0 0
    %6711 = vmatpush1.bf16.msra.mxu0 %v6130
    %6712 = vmatprep.subr.bf16.mxu0 0
    %6713 = vmatpush1.bf16.msra.mxu0 %v6129
    %6714 = vmatprep.subr.bf16.mxu0 0
    %6715 = vmatpush1.bf16.msra.mxu0 %v6128
    %6716 = vmatprep.subr.bf16.mxu0 0
    %6717 = vmatpush1.bf16.msra.mxu0 %v6127
    %6718 = vmatprep.subr.bf16.mxu0 0
    %6719 = vmatpush1.bf16.msra.mxu0 %v6126
    %6720 = vmatprep.subr.bf16.mxu0 0
    %6721 = vmatpush1.bf16.msra.mxu0 %v6125
    %6722 = vmatprep.subr.bf16.mxu0 0
    %6723 = vmatpush1.bf16.msra.mxu0 %v6124
    %6724 = vmatprep.subr.bf16.mxu0 0
    %6725 = vmatpush1.bf16.msra.mxu0 %v6123
    %6726 = vmatprep.subr.bf16.mxu0 0
    %6727 = vmatpush2.bf16.msra.mxu0 %v6138
    %6728 = vmatprep.subr.bf16.mxu0 0
    %6729 = vmatpush2.bf16.msra.mxu0 %v6137
    %6730 = vmatprep.subr.bf16.mxu0 0
    %6731 = vmatpush2.bf16.msra.mxu0 %v6136
    %6732 = vmatprep.subr.bf16.mxu0 0
    %6733 = vmatpush2.bf16.msra.mxu0 %v6135
    %6734 = vmatprep.subr.bf16.mxu0 0
    %6735 = vmatpush2.bf16.msra.mxu0 %v6134
    %6736 = vmatprep.subr.bf16.mxu0 0
    %6737 = vmatpush2.bf16.msra.mxu0 %v6133
    %6738 = vmatprep.subr.bf16.mxu0 0
    %6739 = vmatpush2.bf16.msra.mxu0 %v6132
    %6740 = vmatprep.subr.bf16.mxu0 0
    %6741 = vmatpush2.bf16.msra.mxu0 %v6131
    %6742 = vmatprep.mubr.bf16.mxu0 %v5161
    %6743 = vmatmul.mubr.bf16.gmra.mxu0 %v5147
    %v6744 = vpop.f32.mrf.mxu0
    %v6745 = vadd.f32 %v6705, %v6744
    %v6746 = vpop.f32.mrf.mxu0
    %v6747 = vpop.f32.mrf.mxu0
    %v6748 = vpop.f32.mrf.mxu0
    %6749 = vdwg.mxu0
    %6750 = vmatprep.subr.bf16.mxu0 0
    %6751 = vmatpush1.bf16.msra.mxu0 %v6146
    %6752 = vmatprep.subr.bf16.mxu0 0
    %6753 = vmatpush1.bf16.msra.mxu0 %v6145
    %6754 = vmatprep.subr.bf16.mxu0 0
    %6755 = vmatpush1.bf16.msra.mxu0 %v6144
    %6756 = vmatprep.subr.bf16.mxu0 0
    %6757 = vmatpush1.bf16.msra.mxu0 %v6143
    %6758 = vmatprep.subr.bf16.mxu0 0
    %6759 = vmatpush1.bf16.msra.mxu0 %v6142
    %6760 = vmatprep.subr.bf16.mxu0 0
    %6761 = vmatpush1.bf16.msra.mxu0 %v6141
    %6762 = vmatprep.subr.bf16.mxu0 0
    %6763 = vmatpush1.bf16.msra.mxu0 %v6140
    %6764 = vmatprep.subr.bf16.mxu0 0
    %6765 = vmatpush1.bf16.msra.mxu0 %v6139
    %6766 = vmatprep.subr.bf16.mxu0 0
    %6767 = vmatpush2.bf16.msra.mxu0 %v6154
    %6768 = vmatprep.subr.bf16.mxu0 0
    %6769 = vmatpush2.bf16.msra.mxu0 %v6153
    %6770 = vmatprep.subr.bf16.mxu0 0
    %6771 = vmatpush2.bf16.msra.mxu0 %v6152
    %6772 = vmatprep.subr.bf16.mxu0 0
    %6773 = vmatpush2.bf16.msra.mxu0 %v6151
    %6774 = vmatprep.subr.bf16.mxu0 0
    %6775 = vmatpush2.bf16.msra.mxu0 %v6150
    %6776 = vmatprep.subr.bf16.mxu0 0
    %6777 = vmatpush2.bf16.msra.mxu0 %v6149
    %6778 = vmatprep.subr.bf16.mxu0 0
    %6779 = vmatpush2.bf16.msra.mxu0 %v6148
    %6780 = vmatprep.subr.bf16.mxu0 0
    %6781 = vmatpush2.bf16.msra.mxu0 %v6147
    %6782 = vmatprep.mubr.bf16.mxu0 %v5171
    %6783 = vmatmul.mubr.bf16.gmra.mxu0 %v5169
    %v6784 = vpop.f32.mrf.mxu0
    %v6785 = vadd.f32 %v6745, %v6784
    %v6786 = vpop.f32.mrf.mxu0
    %v6787 = vpop.f32.mrf.mxu0
    %v6788 = vpop.f32.mrf.mxu0
    %6789 = vdwg.mxu0
    %6790 = vmatprep.subr.bf16.mxu0 0
    %6791 = vmatpush1.bf16.msra.mxu0 %v6162
    %6792 = vmatprep.subr.bf16.mxu0 0
    %6793 = vmatpush1.bf16.msra.mxu0 %v6161
    %6794 = vmatprep.subr.bf16.mxu0 0
    %6795 = vmatpush1.bf16.msra.mxu0 %v6160
    %6796 = vmatprep.subr.bf16.mxu0 0
    %6797 = vmatpush1.bf16.msra.mxu0 %v6159
    %6798 = vmatprep.subr.bf16.mxu0 0
    %6799 = vmatpush1.bf16.msra.mxu0 %v6158
    %6800 = vmatprep.subr.bf16.mxu0 0
    %6801 = vmatpush1.bf16.msra.mxu0 %v6157
    %6802 = vmatprep.subr.bf16.mxu0 0
    %6803 = vmatpush1.bf16.msra.mxu0 %v6156
    %6804 = vmatprep.subr.bf16.mxu0 0
    %6805 = vmatpush1.bf16.msra.mxu0 %v6155
    %6806 = vmatprep.subr.bf16.mxu0 0
    %6807 = vmatpush2.bf16.msra.mxu0 %v6170
    %6808 = vmatprep.subr.bf16.mxu0 0
    %6809 = vmatpush2.bf16.msra.mxu0 %v6169
    %6810 = vmatprep.subr.bf16.mxu0 0
    %6811 = vmatpush2.bf16.msra.mxu0 %v6168
    %6812 = vmatprep.subr.bf16.mxu0 0
    %6813 = vmatpush2.bf16.msra.mxu0 %v6167
    %6814 = vmatprep.subr.bf16.mxu0 0
    %6815 = vmatpush2.bf16.msra.mxu0 %v6166
    %6816 = vmatprep.subr.bf16.mxu0 0
    %6817 = vmatpush2.bf16.msra.mxu0 %v6165
    %6818 = vmatprep.subr.bf16.mxu0 0
    %6819 = vmatpush2.bf16.msra.mxu0 %v6164
    %6820 = vmatprep.subr.bf16.mxu0 0
    %6821 = vmatpush2.bf16.msra.mxu0 %v6163
    %6822 = vmatprep.mubr.bf16.mxu0 %v5168
    %6823 = vmatmul.mubr.bf16.gmra.mxu0 %v5154
    %v6824 = vpop.f32.mrf.mxu0
    %v6825 = vadd.f32 %v6785, %v6824
    %v6826 = vpop.f32.mrf.mxu0
    %v6827 = vpop.f32.mrf.mxu0
    %v6828 = vpop.f32.mrf.mxu0
    %6829 = vdwg.mxu0
    %6830 = vmatprep.subr.bf16.mxu0 0
    %6831 = vmatpush1.bf16.msra.mxu0 %v6178
    %6832 = vmatprep.subr.bf16.mxu0 0
    %6833 = vmatpush1.bf16.msra.mxu0 %v6177
    %6834 = vmatprep.subr.bf16.mxu0 0
    %6835 = vmatpush1.bf16.msra.mxu0 %v6176
    %6836 = vmatprep.subr.bf16.mxu0 0
    %6837 = vmatpush1.bf16.msra.mxu0 %v6175
    %6838 = vmatprep.subr.bf16.mxu0 0
    %6839 = vmatpush1.bf16.msra.mxu0 %v6174
    %6840 = vmatprep.subr.bf16.mxu0 0
    %6841 = vmatpush1.bf16.msra.mxu0 %v6173
    %6842 = vmatprep.subr.bf16.mxu0 0
    %6843 = vmatpush1.bf16.msra.mxu0 %v6172
    %6844 = vmatprep.subr.bf16.mxu0 0
    %6845 = vmatpush1.bf16.msra.mxu0 %v6171
    %6846 = vmatprep.subr.bf16.mxu0 0
    %6847 = vmatpush2.bf16.msra.mxu0 %v6186
    %6848 = vmatprep.subr.bf16.mxu0 0
    %6849 = vmatpush2.bf16.msra.mxu0 %v6185
    %6850 = vmatprep.subr.bf16.mxu0 0
    %6851 = vmatpush2.bf16.msra.mxu0 %v6184
    %6852 = vmatprep.subr.bf16.mxu0 0
    %6853 = vmatpush2.bf16.msra.mxu0 %v6183
    %6854 = vmatprep.subr.bf16.mxu0 0
    %6855 = vmatpush2.bf16.msra.mxu0 %v6182
    %6856 = vmatprep.subr.bf16.mxu0 0
    %6857 = vmatpush2.bf16.msra.mxu0 %v6181
    %6858 = vmatprep.subr.bf16.mxu0 0
    %6859 = vmatpush2.bf16.msra.mxu0 %v6180
    %6860 = vmatprep.subr.bf16.mxu0 0
    %6861 = vmatpush2.bf16.msra.mxu0 %v6179
    %6862 = vmatprep.mubr.bf16.mxu0 %v5172
    %6863 = vmatmul.mubr.bf16.gmra.mxu0 %v5170
    %v6864 = vpop.f32.mrf.mxu0
    %v6865 = vadd.f32 %v6825, %v6864
    %v6866 = vpop.f32.mrf.mxu0
    %v6867 = vpop.f32.mrf.mxu0
    %v6868 = vpop.f32.mrf.mxu0
    %6869 = vdwg.mxu0
    %6870 = vmatprep.subr.bf16.mxu0 0
    %6871 = vmatpush1.bf16.msra.mxu0 0
    %6872 = vmatprep.subr.bf16.mxu0 0
    %6873 = vmatpush1.bf16.msra.mxu0 0
    %6874 = vmatprep.subr.bf16.mxu0 0
    %6875 = vmatpush1.bf16.msra.mxu0 0
    %6876 = vmatprep.subr.bf16.mxu0 0
    %6877 = vmatpush1.bf16.msra.mxu0 0
    %6878 = vmatprep.subr.bf16.mxu0 0
    %6879 = vmatpush1.bf16.msra.mxu0 %v6190
    %6880 = vmatprep.subr.bf16.mxu0 0
    %6881 = vmatpush1.bf16.msra.mxu0 %v6189
    %6882 = vmatprep.subr.bf16.mxu0 0
    %6883 = vmatpush1.bf16.msra.mxu0 %v6188
    %6884 = vmatprep.subr.bf16.mxu0 0
    %6885 = vmatpush1.bf16.msra.mxu0 %v6187
    %6886 = vmatprep.subr.bf16.mxu0 0
    %6887 = vmatpush2.bf16.msra.mxu0 0
    %6888 = vmatprep.subr.bf16.mxu0 0
    %6889 = vmatpush2.bf16.msra.mxu0 0
    %6890 = vmatprep.subr.bf16.mxu0 0
    %6891 = vmatpush2.bf16.msra.mxu0 0
    %6892 = vmatprep.subr.bf16.mxu0 0
    %6893 = vmatpush2.bf16.msra.mxu0 0
    %6894 = vmatprep.subr.bf16.mxu0 0
    %6895 = vmatpush2.bf16.msra.mxu0 0
    %6896 = vmatprep.subr.bf16.mxu0 0
    %6897 = vmatpush2.bf16.msra.mxu0 0
    %6898 = vmatprep.subr.bf16.mxu0 0
    %6899 = vmatpush2.bf16.msra.mxu0 0
    %6900 = vmatprep.subr.bf16.mxu0 0
    %6901 = vmatpush2.bf16.msra.mxu0 0
    %6902 = vmatprep.mubr.bf16.mxu0 0
    %6903 = vmatmul.mubr.bf16.gmra.mxu0 %v6388
    %v6904 = vpop.f32.mrf.mxu0
    %v6905 = vadd.f32 %v6865, %v6904
    %v6906 = vpop.f32.mrf.mxu0
    %v6907 = vpop.f32.mrf.mxu0
    %v6908 = vpop.f32.mrf.mxu0
    %6909 = vdwg.mxu0
    %v6910 = vmax.f32 %v6905, 0.0
    %v6911 = vpack.c.bf16 %v2320, %v2320
    %v6912 = vpack.c.bf16 %v4615, %v4615
    %v6913 = vpack.c.bf16 %v6910, %v6910
    %v6914 = vld [vmem:[%s3] sm:$0xf]
    %v6915 = vld [vmem:[%s3 + $0x4] sm:$0xf]
    %v6916 = vld [vmem:[%s3 + $0x8] sm:$0xf]
    %v6917 = vld [vmem:[%s3 + $0xc] sm:$0xf]
    %v6918 = vld [vmem:[%s3 + $0x10] sm:$0xf]
    %v6919 = vld [vmem:[%s3 + $0x14] sm:$0xf]
    %v6920 = vld [vmem:[%s3 + $0x18] sm:$0xf]
    %v6921 = vld [vmem:[%s3 + $0x1c] sm:$0xf]
    %v6922 = vld [vmem:[%s3 + $0x20] sm:$0xf]
    %v6923 = vld [vmem:[%s3 + $0x24] sm:$0xf]
    %v6924 = vld [vmem:[%s3 + $0x28] sm:$0xf]
    %v6925 = vld [vmem:[%s3 + $0x2c] sm:$0xf]
    %v6926 = vld [vmem:[%s3 + $0x30] sm:$0xf]
    %v6927 = vld [vmem:[%s3 + $0x34] sm:$0xf]
    %v6928 = vld [vmem:[%s3 + $0x38] sm:$0xf]
    %v6929 = vld [vmem:[%s3 + $0x3c] sm:$0xf]
    %v6930 = vld [vmem:[%s3 + $0x40] sm:$0xf]
    %v6931 = vld [vmem:[%s3 + $0x44] sm:$0xf]
    %v6932 = vld [vmem:[%s3 + $0x48] sm:$0xf]
    %v6933 = vld [vmem:[%s3 + $0x4c] sm:$0xf]
    %v6934 = vld [vmem:[%s3 + $0x50] sm:$0xf]
    %v6935 = vld [vmem:[%s3 + $0x54] sm:$0xf]
    %v6936 = vld [vmem:[%s3 + $0x58] sm:$0xf]
    %v6937 = vld [vmem:[%s3 + $0x5c] sm:$0xf]
    %v6938 = vld [vmem:[%s3 + $0x60] sm:$0xf]
    %v6939 = vld [vmem:[%s3 + $0x64] sm:$0xf]
    %v6940 = vld [vmem:[%s3 + $0x68] sm:$0xf]
    %v6941 = vld [vmem:[%s3 + $0x6c] sm:$0xf]
    %v6942 = vld [vmem:[%s3 + $0x70] sm:$0xf]
    %v6943 = vld [vmem:[%s3 + $0x74] sm:$0xf]
    %v6944 = vld [vmem:[%s3 + $0x78] sm:$0xf]
    %v6945 = vld [vmem:[%s3 + $0x7c] sm:$0xf]
    %v6946 = vld [vmem:[%s3 + $0x80] sm:$0xf]
    %v6947 = vld [vmem:[%s3 + $0x84] sm:$0xf]
    %v6948 = vld [vmem:[%s3 + $0x88] sm:$0xf]
    %v6949 = vld [vmem:[%s3 + $0x8c] sm:$0xf]
    %v6950 = vld [vmem:[%s3 + $0x90] sm:$0xf]
    %v6951 = vld [vmem:[%s3 + $0x94] sm:$0xf]
    %v6952 = vld [vmem:[%s3 + $0x98] sm:$0xf]
    %v6953 = vld [vmem:[%s3 + $0x9c] sm:$0xf]
    %v6954 = vld [vmem:[%s3 + $0xa0] sm:$0xf]
    %v6955 = vld [vmem:[%s3 + $0xa4] sm:$0xf]
    %v6956 = vld [vmem:[%s3 + $0xa8] sm:$0xf]
    %v6957 = vld [vmem:[%s3 + $0xac] sm:$0xf]
    %v6958 = vld [vmem:[%s3 + $0xb0] sm:$0xf]
    %v6959 = vld [vmem:[%s3 + $0xb4] sm:$0xf]
    %v6960 = vld [vmem:[%s3 + $0xb8] sm:$0xf]
    %v6961 = vld [vmem:[%s3 + $0xbc] sm:$0xf]
    %v6962 = vld [vmem:[%s4] sm:$0x1]
    %v6964 = vlaneseq
    %v6965 = vshrl.u32 %v6964, 7
    %v6966 = vsub.s32 0, %v6965
    %v6967 = vrot.slane %v6962, %v6966
    %v7017 = vunpack.c.l.b16 %v6914
    %v7018 = vunpack.c.l.b16 %v6915
    %v7019 = vunpack.c.l.b16 %v6916
    %v7020 = vunpack.c.l.b16 %v6917
    %v7021 = vunpack.c.l.b16 %v6918
    %v7022 = vunpack.c.l.b16 %v6919
    %v7023 = vunpack.c.l.b16 %v6920
    %v7024 = vunpack.c.l.b16 %v6921
    %v7025 = vunpack.c.l.b16 %v6922
    %v7026 = vunpack.c.l.b16 %v6923
    %v7027 = vunpack.c.l.b16 %v6924
    %v7028 = vunpack.c.l.b16 %v6925
    %v7029 = vunpack.c.l.b16 %v6926
    %v7030 = vunpack.c.l.b16 %v6927
    %v7031 = vunpack.c.l.b16 %v6928
    %v7032 = vunpack.c.l.b16 %v6929
    %v7033 = vunpack.c.l.b16 %v6930
    %v7034 = vunpack.c.l.b16 %v6931
    %v7035 = vunpack.c.l.b16 %v6932
    %v7036 = vunpack.c.l.b16 %v6933
    %v7037 = vunpack.c.l.b16 %v6934
    %v7038 = vunpack.c.l.b16 %v6935
    %v7039 = vunpack.c.l.b16 %v6936
    %v7040 = vunpack.c.l.b16 %v6937
    %v7041 = vunpack.c.l.b16 %v6938
    %v7042 = vunpack.c.l.b16 %v6939
    %v7043 = vunpack.c.l.b16 %v6940
    %v7044 = vunpack.c.l.b16 %v6941
    %v7045 = vunpack.c.l.b16 %v6942
    %v7046 = vunpack.c.l.b16 %v6943
    %v7047 = vunpack.c.l.b16 %v6944
    %v7048 = vunpack.c.l.b16 %v6945
    %v7049 = vunpack.c.l.b16 %v6946
    %v7050 = vunpack.c.l.b16 %v6947
    %v7051 = vunpack.c.l.b16 %v6948
    %v7052 = vunpack.c.l.b16 %v6949
    %v7053 = vunpack.c.l.b16 %v6950
    %v7054 = vunpack.c.l.b16 %v6951
    %v7055 = vunpack.c.l.b16 %v6952
    %v7056 = vunpack.c.l.b16 %v6953
    %v7057 = vunpack.c.l.b16 %v6954
    %v7058 = vunpack.c.l.b16 %v6955
    %v7059 = vunpack.c.l.b16 %v6956
    %v7060 = vunpack.c.l.b16 %v6957
    %v7061 = vunpack.c.l.b16 %v6958
    %v7062 = vunpack.c.l.b16 %v6959
    %v7063 = vunpack.c.l.b16 %v6960
    %v7064 = vunpack.c.l.b16 %v6961
    %v7065 = vpack.c.b16 %v7018, %v7017
    %v7066 = vpack.c.b16 %v7020, %v7019
    %v7067 = vpack.c.b16 %v7022, %v7021
    %v7068 = vpack.c.b16 %v7024, %v7023
    %v7069 = vpack.c.b16 %v7026, %v7025
    %v7070 = vpack.c.b16 %v7028, %v7027
    %v7071 = vpack.c.b16 %v7030, %v7029
    %v7072 = vpack.c.b16 %v7032, %v7031
    %v7073 = vpack.c.b16 %v7034, %v7033
    %v7074 = vpack.c.b16 %v7036, %v7035
    %v7075 = vpack.c.b16 %v7038, %v7037
    %v7076 = vpack.c.b16 %v7040, %v7039
    %v7077 = vpack.c.b16 %v7042, %v7041
    %v7078 = vpack.c.b16 %v7044, %v7043
    %v7079 = vpack.c.b16 %v7046, %v7045
    %v7080 = vpack.c.b16 %v7048, %v7047
    %v7081 = vpack.c.b16 %v7050, %v7049
    %v7082 = vpack.c.b16 %v7052, %v7051
    %v7083 = vpack.c.b16 %v7054, %v7053
    %v7084 = vpack.c.b16 %v7056, %v7055
    %v7085 = vpack.c.b16 %v7058, %v7057
    %v7086 = vpack.c.b16 %v7060, %v7059
    %v7087 = vpack.c.b16 %v7062, %v7061
    %v7088 = vpack.c.b16 %v7064, %v7063
    %7113 = vmatprep.subr.bf16.mxu0 0
    %7114 = vmatpush1.bf16.msra.mxu0 %v7072
    %7115 = vmatprep.subr.bf16.mxu0 0
    %7116 = vmatpush1.bf16.msra.mxu0 %v7071
    %7117 = vmatprep.subr.bf16.mxu0 0
    %7118 = vmatpush1.bf16.msra.mxu0 %v7070
    %7119 = vmatprep.subr.bf16.mxu0 0
    %7120 = vmatpush1.bf16.msra.mxu0 %v7069
    %7121 = vmatprep.subr.bf16.mxu0 0
    %7122 = vmatpush1.bf16.msra.mxu0 %v7068
    %7123 = vmatprep.subr.bf16.mxu0 0
    %7124 = vmatpush1.bf16.msra.mxu0 %v7067
    %7125 = vmatprep.subr.bf16.mxu0 0
    %7126 = vmatpush1.bf16.msra.mxu0 %v7066
    %7127 = vmatprep.subr.bf16.mxu0 0
    %7128 = vmatpush1.bf16.msra.mxu0 %v7065
    %7129 = vmatprep.subr.bf16.mxu0 0
    %7130 = vmatpush2.bf16.msra.mxu0 %v7080
    %7131 = vmatprep.subr.bf16.mxu0 0
    %7132 = vmatpush2.bf16.msra.mxu0 %v7079
    %7133 = vmatprep.subr.bf16.mxu0 0
    %7134 = vmatpush2.bf16.msra.mxu0 %v7078
    %7135 = vmatprep.subr.bf16.mxu0 0
    %7136 = vmatpush2.bf16.msra.mxu0 %v7077
    %7137 = vmatprep.subr.bf16.mxu0 0
    %7138 = vmatpush2.bf16.msra.mxu0 %v7076
    %7139 = vmatprep.subr.bf16.mxu0 0
    %7140 = vmatpush2.bf16.msra.mxu0 %v7075
    %7141 = vmatprep.subr.bf16.mxu0 0
    %7142 = vmatpush2.bf16.msra.mxu0 %v7074
    %7143 = vmatprep.subr.bf16.mxu0 0
    %7144 = vmatpush2.bf16.msra.mxu0 %v7073
    %7145 = vmatprep.mubr.bf16.mxu0 %v6912
    %7146 = vmatmul.mubr.bf16.gmra.mxu0 %v6911
    %v7147 = vpop.f32.mrf.mxu0
    %v7148 = vadd.f32 %v6967, %v7147
    %v7149 = vpop.f32.mrf.mxu0
    %v7150 = vpop.f32.mrf.mxu0
    %v7151 = vpop.f32.mrf.mxu0
    %7152 = vdwg.mxu0
    %7153 = vmatprep.subr.bf16.mxu0 0
    %7154 = vmatpush1.bf16.msra.mxu0 %v7088
    %7155 = vmatprep.subr.bf16.mxu0 0
    %7156 = vmatpush1.bf16.msra.mxu0 %v7087
    %7157 = vmatprep.subr.bf16.mxu0 0
    %7158 = vmatpush1.bf16.msra.mxu0 %v7086
    %7159 = vmatprep.subr.bf16.mxu0 0
    %7160 = vmatpush1.bf16.msra.mxu0 %v7085
    %7161 = vmatprep.subr.bf16.mxu0 0
    %7162 = vmatpush1.bf16.msra.mxu0 %v7084
    %7163 = vmatprep.subr.bf16.mxu0 0
    %7164 = vmatpush1.bf16.msra.mxu0 %v7083
    %7165 = vmatprep.subr.bf16.mxu0 0
    %7166 = vmatpush1.bf16.msra.mxu0 %v7082
    %7167 = vmatprep.subr.bf16.mxu0 0
    %7168 = vmatpush1.bf16.msra.mxu0 %v7081
    %7169 = vmatprep.subr.bf16.mxu0 0
    %7170 = vmatpush2.bf16.msra.mxu0 0
    %7171 = vmatprep.subr.bf16.mxu0 0
    %7172 = vmatpush2.bf16.msra.mxu0 0
    %7173 = vmatprep.subr.bf16.mxu0 0
    %7174 = vmatpush2.bf16.msra.mxu0 0
    %7175 = vmatprep.subr.bf16.mxu0 0
    %7176 = vmatpush2.bf16.msra.mxu0 0
    %7177 = vmatprep.subr.bf16.mxu0 0
    %7178 = vmatpush2.bf16.msra.mxu0 0
    %7179 = vmatprep.subr.bf16.mxu0 0
    %7180 = vmatpush2.bf16.msra.mxu0 0
    %7181 = vmatprep.subr.bf16.mxu0 0
    %7182 = vmatpush2.bf16.msra.mxu0 0
    %7183 = vmatprep.subr.bf16.mxu0 0
    %7184 = vmatpush2.bf16.msra.mxu0 0
    %7185 = vmatprep.mubr.bf16.mxu0 0
    %7186 = vmatmul.mubr.bf16.gmra.mxu0 %v6913
    %v7187 = vpop.f32.mrf.mxu0
    %v7188 = vadd.f32 %v7148, %v7187
    %v7189 = vpop.f32.mrf.mxu0
    %v7190 = vpop.f32.mrf.mxu0
    %v7191 = vpop.f32.mrf.mxu0
    %7192 = vdwg.mxu0
    %v7193 = vmax.f32 %v7188, 0.0
    %v7194 = vpack.c.bf16 %v7193, %v7193
    %v7195 = vld [vmem:[%s5] sm:$0xf]
    %v7196 = vld [vmem:[%s5 + $0x4] sm:$0xf]
    %v7197 = vld [vmem:[%s5 + $0x8] sm:$0xf]
    %v7198 = vld [vmem:[%s5 + $0xc] sm:$0xf]
    %v7199 = vld [vmem:[%s5 + $0x10] sm:$0xf]
    %v7200 = vld [vmem:[%s5 + $0x14] sm:$0xf]
    %v7201 = vld [vmem:[%s5 + $0x18] sm:$0xf]
    %v7202 = vld [vmem:[%s5 + $0x1c] sm:$0xf]
    %v7203 = vld [vmem:[%s5 + $0x20] sm:$0xf]
    %v7204 = vld [vmem:[%s5 + $0x24] sm:$0xf]
    %v7205 = vld [vmem:[%s5 + $0x28] sm:$0xf]
    %v7206 = vld [vmem:[%s5 + $0x2c] sm:$0xf]
    %v7207 = vld [vmem:[%s5 + $0x30] sm:$0xf]
    %v7208 = vld [vmem:[%s5 + $0x34] sm:$0xf]
    %v7209 = vld [vmem:[%s5 + $0x38] sm:$0xf]
    %v7210 = vld [vmem:[%s5 + $0x3c] sm:$0xf]
    %v7211 = vld [vmem:[%s6] sm:$0x1]
    %v7213 = vlaneseq
    %v7214 = vshrl.u32 %v7213, 7
    %v7215 = vsub.s32 0, %v7214
    %v7216 = vrot.slane %v7211, %v7215
    %v7234 = vunpack.c.l.b16 %v7195
    %v7235 = vunpack.c.l.b16 %v7196
    %v7236 = vunpack.c.l.b16 %v7197
    %v7237 = vunpack.c.l.b16 %v7198
    %v7238 = vunpack.c.l.b16 %v7199
    %v7239 = vunpack.c.l.b16 %v7200
    %v7240 = vunpack.c.l.b16 %v7201
    %v7241 = vunpack.c.l.b16 %v7202
    %v7242 = vunpack.c.l.b16 %v7203
    %v7243 = vunpack.c.l.b16 %v7204
    %v7244 = vunpack.c.l.b16 %v7205
    %v7245 = vunpack.c.l.b16 %v7206
    %v7246 = vunpack.c.l.b16 %v7207
    %v7247 = vunpack.c.l.b16 %v7208
    %v7248 = vunpack.c.l.b16 %v7209
    %v7249 = vunpack.c.l.b16 %v7210
    %v7250 = vpack.c.b16 %v7235, %v7234
    %v7251 = vpack.c.b16 %v7237, %v7236
    %v7252 = vpack.c.b16 %v7239, %v7238
    %v7253 = vpack.c.b16 %v7241, %v7240
    %v7254 = vpack.c.b16 %v7243, %v7242
    %v7255 = vpack.c.b16 %v7245, %v7244
    %v7256 = vpack.c.b16 %v7247, %v7246
    %v7257 = vpack.c.b16 %v7249, %v7248
    %7266 = vmatprep.subr.bf16.mxu0 0
    %7267 = vmatpush1.bf16.msra.mxu0 %v7257
    %7268 = vmatprep.subr.bf16.mxu0 0
    %7269 = vmatpush1.bf16.msra.mxu0 %v7256
    %7270 = vmatprep.subr.bf16.mxu0 0
    %7271 = vmatpush1.bf16.msra.mxu0 %v7255
    %7272 = vmatprep.subr.bf16.mxu0 0
    %7273 = vmatpush1.bf16.msra.mxu0 %v7254
    %7274 = vmatprep.subr.bf16.mxu0 0
    %7275 = vmatpush1.bf16.msra.mxu0 %v7253
    %7276 = vmatprep.subr.bf16.mxu0 0
    %7277 = vmatpush1.bf16.msra.mxu0 %v7252
    %7278 = vmatprep.subr.bf16.mxu0 0
    %7279 = vmatpush1.bf16.msra.mxu0 %v7251
    %7280 = vmatprep.subr.bf16.mxu0 0
    %7281 = vmatpush1.bf16.msra.mxu0 %v7250
    %7282 = vmatprep.subr.bf16.mxu0 0
    %7283 = vmatpush2.bf16.msra.mxu0 0
    %7284 = vmatprep.subr.bf16.mxu0 0
    %7285 = vmatpush2.bf16.msra.mxu0 0
    %7286 = vmatprep.subr.bf16.mxu0 0
    %7287 = vmatpush2.bf16.msra.mxu0 0
    %7288 = vmatprep.subr.bf16.mxu0 0
    %7289 = vmatpush2.bf16.msra.mxu0 0
    %7290 = vmatprep.subr.bf16.mxu0 0
    %7291 = vmatpush2.bf16.msra.mxu0 0
    %7292 = vmatprep.subr.bf16.mxu0 0
    %7293 = vmatpush2.bf16.msra.mxu0 0
    %7294 = vmatprep.subr.bf16.mxu0 0
    %7295 = vmatpush2.bf16.msra.mxu0 0
    %7296 = vmatprep.subr.bf16.mxu0 0
    %7297 = vmatpush2.bf16.msra.mxu0 0
    %7298 = vmatprep.mubr.bf16.mxu0 0
    %7299 = vmatmul.mubr.bf16.gmra.mxu0 %v7194
    %v7300 = vpop.f32.mrf.mxu0
    %v7301 = vadd.f32 %v7216, %v7300
    %v7302 = vpop.f32.mrf.mxu0
    %v7303 = vpop.f32.mrf.mxu0
    %v7304 = vpop.f32.mrf.mxu0
    %7305 = vdwg.mxu0
    %vm7306 = vcmask 33792
    %7307 = vst.msk [vmem:[#allocation2] sm:$0x3] %vm7306, %v7301
    // Predicated region
    $region30: #{model_forward.5} parent=1 // pred_check
      _
    $region31: #{model_forward.5} parent=1 // pred_check_branch
      %7309 = sbr.rel (0) target = $region33
    $region32: #{model_forward.5} parent=1 // pred_region
      %s7311 = ssub.s32 32, 32
      %7312 = vsyncadd [#allocation3], %s7311
      %s7314 = sshll.u32 [#allocation2], 4
      %s7315 = int_to_ptr.vmem [resolvable:$true] %s7314
      %7317 = dma.vmem_to_hbm [thread:$0]  %s7315, 32, %s7, [#allocation3]
    $region33: #{model_forward.5} parent=1 // pred_fallthru
      _
    // Predicated region
    $region34: #{model_forward.5} parent=1 // pred_check
      _
    $region35: #{model_forward.5} parent=1 // pred_check_branch
      %7319 = sbr.rel (0) target = $region37
    $region36: #{model_forward.5} parent=1 // pred_region
      %7320 = dma.done [#allocation3], 32
    $region37: #{model_forward.5} parent=1 // pred_fallthru
      _
    %7321 = vsyncpa [#allocation3], 1

</llo_original>
